<compile_context>
chip_gen: v6e
topology: v6e:2x2x1
jax: 0.10.0
libtpu: 0.0.40
codegen_flags: <defaults>
</compile_context>

<pallas_src>
import functools
import math

import numpy as np
import jax
import jax.numpy as jnp
from jax.experimental import pallas as pl
from jax.experimental.pallas import tpu as pltpu

MT = 1024   # max row tile (rows = N*OH*OW flattened)


def _round_up(x, m):
    return ((x + m - 1) // m) * m


@functools.lru_cache(maxsize=None)
def _vmem_limit():
    """Generation-aware scoped-VMEM budget: ~75% of physical VMEM, capped at
    100 MiB.  v5e/v6e (128 MiB) -> 96 MiB; v7x (64 MiB) -> 48 MiB."""
    try:
        cap = int(pltpu.get_tpu_info().vmem_capacity_bytes)
    except Exception:
        cap = 64 * 1024 * 1024          # conservative (v7x-sized) fallback
    return min((cap * 3) // 4, 100 * 1024 * 1024)


def _pick_tm(m, max_tile=MT):
    """Row tile: multiple of 8, <= max_tile, and >=2 grid steps whenever m is
    non-trivial so the 'parallel' grid axis can shard across v7x's 2 TCs."""
    if m <= 16:
        return _round_up(max(m, 1), 8)
    n_tiles = max(2, -(-m // max_tile))
    return _round_up(-(-m // n_tiles), 8)


# -----------------------------------------------------------------------------
# Pallas kernels
# -----------------------------------------------------------------------------
def _matmul_stats_kernel(a_ref, w_ref, y_ref, sum_ref, sumsq_ref):
    # a: (tm, K) bf16 patch tile, w: (K, Cout) bf16.  No bias: bias before
    # training-mode BatchNorm cancels exactly, so it is dropped entirely.
    # Stats are computed from the f32 accumulator BEFORE the bf16 store.
    y = jnp.dot(a_ref[...], w_ref[...], preferred_element_type=jnp.float32)
    y_ref[...] = y.astype(y_ref.dtype)
    s = jnp.sum(y, axis=0, keepdims=True)            # (1, Cout) -- XLU reduce
    ss = jnp.sum(y * y, axis=0, keepdims=True)
    # Replicated to 8 sublanes; only sublane 0 is consumed on the host.
    sum_ref[...] = jnp.broadcast_to(s, sum_ref.shape)
    sumsq_ref[...] = jnp.broadcast_to(ss, sumsq_ref.shape)


def _apply_act(z, act):
    if act == "leaky":
        return jnp.where(z >= 0.0, z, 0.2 * z)
    if act == "relu":
        return jnp.maximum(z, 0.0)
    if act == "tanh":
        return jnp.tanh(z)
    return z  # "none"


def _bn_act_kernel(y_ref, s_ref, t_ref, o_ref, *, act):
    # y: (tm, L) lane-dense slab (bf16); s/t: (1, L) per-channel scale/shift.
    z = y_ref[...].astype(jnp.float32) * s_ref[...] + t_ref[...]
    o_ref[...] = _apply_act(z, act).astype(o_ref.dtype)


def _bn_act_res_kernel(y_ref, s_ref, t_ref, r_ref, o_ref, *, act):
    z = y_ref[...].astype(jnp.float32) * s_ref[...] + t_ref[...]
    o_ref[...] = (_apply_act(z, act) + r_ref[...].astype(jnp.float32)).astype(o_ref.dtype)


# -----------------------------------------------------------------------------
# Kernel wrappers
# -----------------------------------------------------------------------------
def matmul_stats(a, w, *, out_dtype=jnp.bfloat16):
    """(M,K) @ (K,N) with fused per-channel sum / sum-of-squares.

    Returns (y[M,N] out_dtype, col_sum[N] f32, col_sumsq[N] f32); zero-padded
    rows contribute exactly 0 to both sums (no bias), so no correction."""
    m, k = a.shape
    n = w.shape[1]
    a = a.astype(jnp.bfloat16)   # bf16 MXU path; halves patch DMA bytes
    w = w.astype(jnp.bfloat16)

    tm = _pick_tm(m)
    mp = _round_up(m, tm)
    if mp != m:
        a = jnp.pad(a, ((0, mp - m), (0, 0)))
    g = mp // tm

    # TODO(synk): do im2col inside the kernel (halo-sized NHWC DMA blocks +
    # kh*kw accumulation grid axis) instead of materializing the duplicated
    # patch matrix in HBM.
    y, sums, sumsq = pl.pallas_call(
        _matmul_stats_kernel,
        out_shape=(
            jax.ShapeDtypeStruct((mp, n), out_dtype),
            jax.ShapeDtypeStruct((g * 8, n), jnp.float32),
            jax.ShapeDtypeStruct((g * 8, n), jnp.float32),
        ),
        grid=(g,),
        in_specs=[
            pl.BlockSpec((tm, k), lambda i: (i, 0)),
            pl.BlockSpec((k, n), lambda i: (0, 0)),
        ],
        out_specs=(
            pl.BlockSpec((tm, n), lambda i: (i, 0)),
            pl.BlockSpec((8, n), lambda i: (i, 0)),
            pl.BlockSpec((8, n), lambda i: (i, 0)),
        ),
        compiler_params=pltpu.CompilerParams(
            dimension_semantics=("parallel",),
            vmem_limit_bytes=_vmem_limit()),
    )(a, w)

    col_sum = jnp.sum(sums.reshape(g, 8, n)[:, 0, :], axis=0)
    col_sumsq = jnp.sum(sumsq.reshape(g, 8, n)[:, 0, :], axis=0)
    if mp != m:
        y = y[:m]
    return y, col_sum, col_sumsq


def _choose_fold(m, c):
    """Fold factor f so that (m, c) -> (m/f, f*c) has a lane-dense last dim
    (multiple of 128, target >= 1024).  Returns 1 if folding is impossible."""
    base = 128 // math.gcd(c, 128)
    if m % base != 0:
        return 1
    f = base
    while c * f < 1024 and m % (f * 2) == 0:
        f *= 2
    return f


def bn_act(y, scale, shift, act, residual=None, *, out_dtype=jnp.bfloat16):
    """Per-channel affine (folded BatchNorm) + activation (+ residual add).

    Pure elementwise, so the (M, C) activation is reshaped to a lane-dense slab
    (last dim a multiple of 128) with scale/shift tiled to match -- unmasked
    vector stores instead of lane-sparse masked stores."""
    m, c = y.shape
    fold = _choose_fold(m, c)
    if fold > 1:
        y = y.reshape(m // fold, fold * c)
        scale = jnp.tile(scale, fold)
        shift = jnp.tile(shift, fold)
        if residual is not None:
            residual = residual.reshape(m // fold, fold * c)
    m2, lanes = y.shape

    tm = _pick_tm(m2)
    mp = _round_up(m2, tm)
    if mp != m2:
        y = jnp.pad(y, ((0, mp - m2), (0, 0)))
        if residual is not None:
            residual = jnp.pad(residual, ((0, mp - m2), (0, 0)))
    g = mp // tm

    scale = scale.reshape(1, lanes).astype(jnp.float32)
    shift = shift.reshape(1, lanes).astype(jnp.float32)

    row_spec = pl.BlockSpec((tm, lanes), lambda i: (i, 0))
    vec_spec = pl.BlockSpec((1, lanes), lambda i: (0, 0))
    cparams = pltpu.CompilerParams(dimension_semantics=("parallel",),
                                   vmem_limit_bytes=_vmem_limit())

    if residual is None:
        out = pl.pallas_call(
            functools.partial(_bn_act_kernel, act=act),
            out_shape=jax.ShapeDtypeStruct((mp, lanes), out_dtype),
            grid=(g,),
            in_specs=[row_spec, vec_spec, vec_spec],
            out_specs=row_spec,
            compiler_params=cparams,
        )(y, scale, shift)
    else:
        out = pl.pallas_call(
            functools.partial(_bn_act_res_kernel, act=act),
            out_shape=jax.ShapeDtypeStruct((mp, lanes), out_dtype),
            grid=(g,),
            in_specs=[row_spec, vec_spec, vec_spec, row_spec],
            out_specs=row_spec,
            compiler_params=cparams,
        )(y, scale, shift, residual)

    if mp != m2:
        out = out[:m2]
    if fold > 1:
        out = out.reshape(m, c)
    return out


# -----------------------------------------------------------------------------
# Conv / ConvTranspose layers built on the kernels
# -----------------------------------------------------------------------------
def _bn_scale_shift(col_sum, col_sumsq, count, gamma, beta, eps):
    """Training-mode (biased) BatchNorm folded into per-channel scale/shift."""
    mean = col_sum / count
    var = jnp.maximum(col_sumsq / count - mean * mean, 0.0)
    scale = gamma / jnp.sqrt(var + eps)
    shift = beta - mean * scale
    return scale, shift


def _im2col(x, kh, kw, stride, pad):
    """x: (N,H,W,C) -> patches (N*OH*OW, kh*kw*C); column order (kh, kw, C)."""
    n, h, w, c = x.shape
    xp = jnp.pad(x, ((0, 0), (pad, pad), (pad, pad), (0, 0)))
    oh = (h + 2 * pad - kh) // stride + 1
    ow = (w + 2 * pad - kw) // stride + 1
    cols = []
    for i in range(kh):
        for j in range(kw):
            cols.append(
                xp[:, i: i + stride * oh: stride, j: j + stride * ow: stride, :]
            )
    patches = jnp.stack(cols, axis=-2)  # (N, OH, OW, kh*kw, C)
    return patches.reshape(n * oh * ow, kh * kw * c), oh, ow


def conv_bn_act(x, W, b, gamma, beta, *, kernel, stride, pad, act,
                residual=None, eps=1e-5, out_dtype=jnp.bfloat16):
    """Conv2d + BatchNorm2d (training-mode batch stats) + activation.
    x: (N,H,W,Cin) NHWC bf16; W: (Cout,Cin,kh,kw) PyTorch layout."""
    del b   # bias before train-mode BatchNorm cancels exactly
    n, _, _, cin = x.shape
    cout = W.shape[0]
    patches, oh, ow = _im2col(x, kernel, kernel, stride, pad)
    w_mat = jnp.transpose(W, (2, 3, 1, 0)).reshape(kernel * kernel * cin, cout)
    y, s, ss = matmul_stats(patches, w_mat)                 # MXU + fused stats
    scale, shift = _bn_scale_shift(s, ss, n * oh * ow, gamma, beta, eps)
    res_flat = None if residual is None else residual.reshape(-1, cout)
    out = bn_act(y, scale, shift, act, res_flat, out_dtype=out_dtype)
    return out.reshape(n, oh, ow, cout)


# Phase tap selection for ConvTranspose2d(k=4, s=2, p=1):
# output (2m+rh, 2k+rw) reads input halo offset d in {-1,0,+1} with kernel tap
#   rh=0: d=-1 -> kh=3, d=0 -> kh=1;   rh=1: d=0 -> kh=2, d=+1 -> kh=0.
_SEL = np.zeros((3, 2, 4), np.float32)
_SEL[0, 0, 3] = 1.0
_SEL[1, 0, 1] = 1.0
_SEL[1, 1, 2] = 1.0
_SEL[2, 1, 0] = 1.0


def deconv_bn_act(x, W, b, gamma, beta, *, act, eps=1e-5, out_dtype=jnp.bfloat16):
    """ConvTranspose2d(k=4,s=2,p=1) + BN + activation as ONE matmul over a
    3x3 halo of the low-res input with phase-packed (2,2,Cout) output columns
    (unused taps zeroed).  Output is lane-dense 4*Cout wide, stats accumulate
    once, and the depth-to-space interleave happens a single time after the
    fused BN/act pass.  x: (N,H,W,Cin) NHWC; W: (Cin,Cout,kh,kw) torch layout."""
    del b   # bias before train-mode BatchNorm cancels exactly
    n, h, w, cin = x.shape
    cout = W.shape[1]

    # 3x3-halo im2col of the low-res input (stride 1, pad 1): (N*H*W, 9*Cin).
    patches, _, _ = _im2col(x, 3, 3, 1, 1)

    # (3,3,Cin,2,2,Cout) sub-pixel weight with phase-unused taps zeroed.
    wbig = jnp.einsum("irk,jsl,nmkl->ijnrsm", _SEL, _SEL, W)
    wmat = wbig.reshape(9 * cin, 4 * cout)                  # cols: (rh, rw, co)

    y, col_sum, col_sumsq = matmul_stats(patches, wmat)     # (N*H*W, 4*Cout)

    # Fold the 4 phases into per-channel BN statistics over N*(2H)*(2W) pixels.
    ch_sum = col_sum.reshape(4, cout).sum(axis=0)
    ch_sumsq = col_sumsq.reshape(4, cout).sum(axis=0)
    count = 4 * n * h * w
    scale, shift = _bn_scale_shift(ch_sum, ch_sumsq, count, gamma, beta, eps)

    out = bn_act(y, jnp.tile(scale, 4), jnp.tile(shift, 4), act,
                 out_dtype=out_dtype)                       # (N*H*W, 4*Cout)

    # Depth-to-space once: (N,H,W,2,2,C) -> (N,2H,2W,C).
    # TODO(synk): fuse this interleave into the next layer's in-kernel im2col.
    out = out.reshape(n, h, w, 2, 2, cout)
    out = jnp.transpose(out, (0, 1, 3, 2, 4, 5)).reshape(n, 2 * h, 2 * w, cout)
    return out


# -----------------------------------------------------------------------------
# Generator parameters + forward
# -----------------------------------------------------------------------------
def _layer_params(key, cin, cout, k, transpose=False):
    k1, k2, k3, k4 = jax.random.split(key, 4)
    w_shape = (cin, cout, k, k) if transpose else (cout, cin, k, k)
    return dict(
        W=0.05 * jax.random.normal(k1, w_shape, jnp.float32),
        b=0.01 * jax.random.normal(k2, (cout,), jnp.float32),
        gamma=1.0 + 0.1 * jax.random.normal(k3, (cout,), jnp.float32),
        beta=0.1 * jax.random.normal(k4, (cout,), jnp.float32),
    )


def init_generator_params(key, conv_dim=8, n_res_blocks=2):
    keys = jax.random.split(key, 6 + 2 * n_res_blocks)
    p = dict(
        conv1=_layer_params(keys[0], 3, conv_dim, 4),
        conv2=_layer_params(keys[1], conv_dim, conv_dim * 2, 4),
        conv3=_layer_params(keys[2], conv_dim * 2, conv_dim * 4, 4),
        deconv1=_layer_params(keys[3], conv_dim * 4, conv_dim * 2, 4, transpose=True),
        deconv2=_layer_params(keys[4], conv_dim * 2, conv_dim, 4, transpose=True),
        deconv3=_layer_params(keys[5], conv_dim, 3, 4, transpose=True),
        res=[],
    )
    for i in range(n_res_blocks):
        p["res"].append(dict(
            c1=_layer_params(keys[6 + 2 * i], conv_dim * 4, conv_dim * 4, 3),
            c2=_layer_params(keys[7 + 2 * i], conv_dim * 4, conv_dim * 4, 3),
        ))
    return p


def generator_forward(params, x, *, img_size):
    """x: any shape reshapeable to (-1, 3, img_size, img_size) (NCHW, like torch).
    Returns NCHW f32 output in tanh range.  Internal activations are bf16."""
    x = x.reshape(-1, 3, img_size, img_size)
    x = jnp.transpose(x, (0, 2, 3, 1)).astype(jnp.bfloat16)  # NCHW -> NHWC bf16

    out = conv_bn_act(x, **params["conv1"], kernel=4, stride=2, pad=1, act="leaky")
    out = conv_bn_act(out, **params["conv2"], kernel=4, stride=2, pad=1, act="leaky")
    out = conv_bn_act(out, **params["conv3"], kernel=4, stride=2, pad=1, act="leaky")

    for rb in params["res"]:
        h = conv_bn_act(out, **rb["c1"], kernel=3, stride=1, pad=1, act="relu")
        out = conv_bn_act(h, **rb["c2"], kernel=3, stride=1, pad=1, act="none",
                          residual=out)

    out = deconv_bn_act(out, **params["deconv1"], act="leaky")
    out = deconv_bn_act(out, **params["deconv2"], act="leaky")
    out = deconv_bn_act(out, **params["deconv3"], act="tanh",
                        out_dtype=jnp.float32)               # final layer in f32

    return jnp.transpose(out, (0, 3, 1, 2))  # back to NCHW


# -----------------------------------------------------------------------------
if __name__ == "__main__":
    key = jax.random.PRNGKey(0)
    k_param, k_x = jax.random.split(key)

    IMG = 32        # scaled-down stand-in for the module's hard-coded 256
    CONV_DIM = 8    # scaled-down stand-in for conv_dim=64
    N_RES = 2       # scaled-down stand-in for n_res_blocks=6

    params = init_generator_params(k_param, conv_dim=CONV_DIM, n_res_blocks=N_RES)
    x = jax.random.normal(k_x, (2, 3, IMG, IMG), jnp.float32)

    fwd = jax.jit(functools.partial(generator_forward, img_size=IMG))
    out = fwd(params, x)
    jax.block_until_ready(out)

    assert out.shape == (2, 3, IMG, IMG), out.shape
    assert bool(jnp.all(jnp.isfinite(out)))
    assert bool(jnp.all(jnp.abs(out) <= 1.0 + 1e-6))  # tanh output range
    print("KERNEL_OK")
</pallas_src>

<mosaic_0001>
module attributes {stable_mosaic.version = 11 : i64} {
  func.func @_matmul_stats_kernel(%arg0: i32, %arg1: memref<256x48xbf16, #tpu.memory_space<vmem>>, %arg2: memref<48x8xbf16, #tpu.memory_space<vmem>>, %arg3: memref<256x8xbf16, #tpu.memory_space<vmem>>, %arg4: memref<8x8xf32, #tpu.memory_space<vmem>>, %arg5: memref<8x8xf32, #tpu.memory_space<vmem>>) attributes {dimension_semantics = [#tpu.dimension_semantics<parallel>], iteration_bounds = array<i64: 2>, scalar_prefetch = 0 : i64, scratch_operands = 0 : i64, tpu.core_type = #tpu.core_type<tc>, window_params = [{transform_indices = @transform_0, window_bounds = array<i64: 256, 48>}, {pipeline_mode = #tpu.pipeline_mode<synchronous>, transform_indices = @transform_1, window_bounds = array<i64: 48, 8>}, {transform_indices = @transform_2, window_bounds = array<i64: 256, 8>}, {transform_indices = @transform_3, window_bounds = array<i64: 8, 8>}, {transform_indices = @transform_4, window_bounds = array<i64: 8, 8>}]} {
    %c0 = arith.constant 0 : index
    %c0_0 = arith.constant 0 : index
    %0 = vector.load %arg1[%c0, %c0_0] : memref<256x48xbf16, #tpu.memory_space<vmem>>, vector<256x48xbf16>
    %c0_1 = arith.constant 0 : index
    %c0_2 = arith.constant 0 : index
    %1 = vector.load %arg2[%c0_1, %c0_2] : memref<48x8xbf16, #tpu.memory_space<vmem>>, vector<48x8xbf16>
    %cst = arith.constant dense<0.000000e+00> : vector<256x8xf32>
    %2 = tpu.matmul %0, %1, %cst {dimension_numbers = #tpu.dot_dimension_numbers<[1], [0], [0], [1], [0, 0, 1, 1], [], []>} : vector<256x48xbf16>, vector<48x8xbf16>, vector<256x8xf32> -> vector<256x8xf32>
    %3 = arith.truncf %2 : vector<256x8xf32> to vector<256x8xbf16>
    %c0_3 = arith.constant 0 : index
    %c0_4 = arith.constant 0 : index
    %4 = vector.load %arg3[%c0_3, %c0_4] : memref<256x8xbf16, #tpu.memory_space<vmem>>, vector<256x8xbf16>
    tpu.vector_store %arg3[%c0_3, %c0_4], %3 {strides = array<i32>} : memref<256x8xbf16, #tpu.memory_space<vmem>>, vector<256x8xbf16>,
    %cst_5 = arith.constant dense<0.000000e+00> : vector<8xf32>
    %5 = vector.multi_reduction <add>, %2, %cst_5 [0] : vector<256x8xf32> to vector<8xf32>
    %6 = vector.shape_cast %5 : vector<8xf32> to vector<1x8xf32>
    %7 = arith.mulf %2, %2 : vector<256x8xf32>
    %cst_6 = arith.constant dense<0.000000e+00> : vector<8xf32>
    %8 = vector.multi_reduction <add>, %7, %cst_6 [0] : vector<256x8xf32> to vector<8xf32>
    %9 = vector.shape_cast %8 : vector<8xf32> to vector<1x8xf32>
    %10 = vector.shape_cast %6 : vector<1x8xf32> to vector<1x8xf32>
    %11 = vector.broadcast %10 : vector<1x8xf32> to vector<8x8xf32>
    %c0_7 = arith.constant 0 : index
    %c0_8 = arith.constant 0 : index
    %12 = vector.load %arg4[%c0_7, %c0_8] : memref<8x8xf32, #tpu.memory_space<vmem>>, vector<8x8xf32>
    tpu.vector_store %arg4[%c0_7, %c0_8], %11 {strides = array<i32>} : memref<8x8xf32, #tpu.memory_space<vmem>>, vector<8x8xf32>,
    %13 = vector.shape_cast %9 : vector<1x8xf32> to vector<1x8xf32>
    %14 = vector.broadcast %13 : vector<1x8xf32> to vector<8x8xf32>
    %c0_9 = arith.constant 0 : index
    %c0_10 = arith.constant 0 : index
    %15 = vector.load %arg5[%c0_9, %c0_10] : memref<8x8xf32, #tpu.memory_space<vmem>>, vector<8x8xf32>
    tpu.vector_store %arg5[%c0_9, %c0_10], %14 {strides = array<i32>} : memref<8x8xf32, #tpu.memory_space<vmem>>, vector<8x8xf32>,
    return
  }
  func.func @transform_0(%arg0: i32) -> (i32, i32) {
    %c0_i32 = arith.constant 0 : i32
    %c0_i32_0 = arith.constant 0 : i32
    return %arg0, %c0_i32 : i32, i32
  }
  func.func @transform_1(%arg0: i32) -> (i32, i32) {
    %c0_i32 = arith.constant 0 : i32
    %c0_i32_0 = arith.constant 0 : i32
    %c0_i32_1 = arith.constant 0 : i32
    return %c0_i32, %c0_i32_0 : i32, i32
  }
  func.func @transform_2(%arg0: i32) -> (i32, i32) {
    %c0_i32 = arith.constant 0 : i32
    %c0_i32_0 = arith.constant 0 : i32
    return %arg0, %c0_i32 : i32, i32
  }
  func.func @transform_3(%arg0: i32) -> (i32, i32) {
    %c0_i32 = arith.constant 0 : i32
    %c0_i32_0 = arith.constant 0 : i32
    return %arg0, %c0_i32 : i32, i32
  }
  func.func @transform_4(%arg0: i32) -> (i32, i32) {
    %c0_i32 = arith.constant 0 : i32
    %c0_i32_0 = arith.constant 0 : i32
    return %arg0, %c0_i32 : i32, i32
  }
}

module attributes {stable_mosaic.version = 11 : i64} {
  func.func @_bn_act_kernel(%arg0: i32, %arg1: memref<8x1024xbf16, #tpu.memory_space<vmem>>, %arg2: memref<1x1024xf32, #tpu.memory_space<vmem>>, %arg3: memref<1x1024xf32, #tpu.memory_space<vmem>>, %arg4: memref<8x1024xbf16, #tpu.memory_space<vmem>>) attributes {dimension_semantics = [#tpu.dimension_semantics<parallel>], iteration_bounds = array<i64: 1>, scalar_prefetch = 0 : i64, scratch_operands = 0 : i64, tpu.core_type = #tpu.core_type<tc>, window_params = [{transform_indices = @transform_0, window_bounds = array<i64: 8, 1024>}, {pipeline_mode = #tpu.pipeline_mode<synchronous>, transform_indices = @transform_1, window_bounds = array<i64: 1, 1024>}, {pipeline_mode = #tpu.pipeline_mode<synchronous>, transform_indices = @transform_2, window_bounds = array<i64: 1, 1024>}, {transform_indices = @transform_3, window_bounds = array<i64: 8, 1024>}]} {
    %c0 = arith.constant 0 : index
    %c0_0 = arith.constant 0 : index
    %0 = vector.load %arg1[%c0, %c0_0] : memref<8x1024xbf16, #tpu.memory_space<vmem>>, vector<8x1024xbf16>
    %1 = arith.extf %0 : vector<8x1024xbf16> to vector<8x1024xf32>
    %c0_1 = arith.constant 0 : index
    %c0_2 = arith.constant 0 : index
    %2 = vector.load %arg2[%c0_1, %c0_2] : memref<1x1024xf32, #tpu.memory_space<vmem>>, vector<1x1024xf32>
    %3 = vector.broadcast %2 : vector<1x1024xf32> to vector<8x1024xf32>
    %4 = arith.mulf %1, %3 : vector<8x1024xf32>
    %c0_3 = arith.constant 0 : index
    %c0_4 = arith.constant 0 : index
    %5 = vector.load %arg3[%c0_3, %c0_4] : memref<1x1024xf32, #tpu.memory_space<vmem>>, vector<1x1024xf32>
    %6 = vector.broadcast %5 : vector<1x1024xf32> to vector<8x1024xf32>
    %7 = arith.addf %4, %6 : vector<8x1024xf32>
    %cst = arith.constant 0.000000e+00 : f32
    %8 = vector.broadcast %cst : f32 to vector<8x1024xf32>
    %9 = arith.cmpf oge, %7, %8 : vector<8x1024xf32>
    %cst_5 = arith.constant 2.000000e-01 : f32
    %10 = vector.broadcast %cst_5 : f32 to vector<8x1024xf32>
    %11 = arith.mulf %10, %7 : vector<8x1024xf32>
    %12 = arith.select %9, %7, %11 : vector<8x1024xi1>, vector<8x1024xf32>
    %13 = arith.truncf %12 : vector<8x1024xf32> to vector<8x1024xbf16>
    %c0_6 = arith.constant 0 : index
    %c0_7 = arith.constant 0 : index
    %14 = vector.load %arg4[%c0_6, %c0_7] : memref<8x1024xbf16, #tpu.memory_space<vmem>>, vector<8x1024xbf16>
    tpu.vector_store %arg4[%c0_6, %c0_7], %13 {strides = array<i32>} : memref<8x1024xbf16, #tpu.memory_space<vmem>>, vector<8x1024xbf16>,
    return
  }
  func.func @transform_0(%arg0: i32) -> (i32, i32) {
    %c0_i32 = arith.constant 0 : i32
    %c0_i32_0 = arith.constant 0 : i32
    return %arg0, %c0_i32 : i32, i32
  }
  func.func @transform_1(%arg0: i32) -> (i32, i32) {
    %c0_i32 = arith.constant 0 : i32
    %c0_i32_0 = arith.constant 0 : i32
    %c0_i32_1 = arith.constant 0 : i32
    return %c0_i32, %c0_i32_0 : i32, i32
  }
  func.func @transform_2(%arg0: i32) -> (i32, i32) {
    %c0_i32 = arith.constant 0 : i32
    %c0_i32_0 = arith.constant 0 : i32
    %c0_i32_1 = arith.constant 0 : i32
    return %c0_i32, %c0_i32_0 : i32, i32
  }
  func.func @transform_3(%arg0: i32) -> (i32, i32) {
    %c0_i32 = arith.constant 0 : i32
    %c0_i32_0 = arith.constant 0 : i32
    return %arg0, %c0_i32 : i32, i32
  }
}

module attributes {stable_mosaic.version = 11 : i64} {
  func.func @_matmul_stats_kernel(%arg0: i32, %arg1: memref<64x128xbf16, #tpu.memory_space<vmem>>, %arg2: memref<128x16xbf16, #tpu.memory_space<vmem>>, %arg3: memref<64x16xbf16, #tpu.memory_space<vmem>>, %arg4: memref<8x16xf32, #tpu.memory_space<vmem>>, %arg5: memref<8x16xf32, #tpu.memory_space<vmem>>) attributes {dimension_semantics = [#tpu.dimension_semantics<parallel>], iteration_bounds = array<i64: 2>, scalar_prefetch = 0 : i64, scratch_operands = 0 : i64, tpu.core_type = #tpu.core_type<tc>, window_params = [{transform_indices = @transform_0, window_bounds = array<i64: 64, 128>}, {pipeline_mode = #tpu.pipeline_mode<synchronous>, transform_indices = @transform_1, window_bounds = array<i64: 128, 16>}, {transform_indices = @transform_2, window_bounds = array<i64: 64, 16>}, {transform_indices = @transform_3, window_bounds = array<i64: 8, 16>}, {transform_indices = @transform_4, window_bounds = array<i64: 8, 16>}]} {
    %c0 = arith.constant 0 : index
    %c0_0 = arith.constant 0 : index
    %0 = vector.load %arg1[%c0, %c0_0] : memref<64x128xbf16, #tpu.memory_space<vmem>>, vector<64x128xbf16>
    %c0_1 = arith.constant 0 : index
    %c0_2 = arith.constant 0 : index
    %1 = vector.load %arg2[%c0_1, %c0_2] : memref<128x16xbf16, #tpu.memory_space<vmem>>, vector<128x16xbf16>
    %cst = arith.constant dense<0.000000e+00> : vector<64x16xf32>
    %2 = tpu.matmul %0, %1, %cst {dimension_numbers = #tpu.dot_dimension_numbers<[1], [0], [0], [1], [0, 0, 1, 1], [], []>} : vector<64x128xbf16>, vector<128x16xbf16>, vector<64x16xf32> -> vector<64x16xf32>
    %3 = arith.truncf %2 : vector<64x16xf32> to vector<64x16xbf16>
    %c0_3 = arith.constant 0 : index
    %c0_4 = arith.constant 0 : index
    %4 = vector.load %arg3[%c0_3, %c0_4] : memref<64x16xbf16, #tpu.memory_space<vmem>>, vector<64x16xbf16>
    tpu.vector_store %arg3[%c0_3, %c0_4], %3 {strides = array<i32>} : memref<64x16xbf16, #tpu.memory_space<vmem>>, vector<64x16xbf16>,
    %cst_5 = arith.constant dense<0.000000e+00> : vector<16xf32>
    %5 = vector.multi_reduction <add>, %2, %cst_5 [0] : vector<64x16xf32> to vector<16xf32>
    %6 = vector.shape_cast %5 : vector<16xf32> to vector<1x16xf32>
    %7 = arith.mulf %2, %2 : vector<64x16xf32>
    %cst_6 = arith.constant dense<0.000000e+00> : vector<16xf32>
    %8 = vector.multi_reduction <add>, %7, %cst_6 [0] : vector<64x16xf32> to vector<16xf32>
    %9 = vector.shape_cast %8 : vector<16xf32> to vector<1x16xf32>
    %10 = vector.shape_cast %6 : vector<1x16xf32> to vector<1x16xf32>
    %11 = vector.broadcast %10 : vector<1x16xf32> to vector<8x16xf32>
    %c0_7 = arith.constant 0 : index
    %c0_8 = arith.constant 0 : index
    %12 = vector.load %arg4[%c0_7, %c0_8] : memref<8x16xf32, #tpu.memory_space<vmem>>, vector<8x16xf32>
    tpu.vector_store %arg4[%c0_7, %c0_8], %11 {strides = array<i32>} : memref<8x16xf32, #tpu.memory_space<vmem>>, vector<8x16xf32>,
    %13 = vector.shape_cast %9 : vector<1x16xf32> to vector<1x16xf32>
    %14 = vector.broadcast %13 : vector<1x16xf32> to vector<8x16xf32>
    %c0_9 = arith.constant 0 : index
    %c0_10 = arith.constant 0 : index
    %15 = vector.load %arg5[%c0_9, %c0_10] : memref<8x16xf32, #tpu.memory_space<vmem>>, vector<8x16xf32>
    tpu.vector_store %arg5[%c0_9, %c0_10], %14 {strides = array<i32>} : memref<8x16xf32, #tpu.memory_space<vmem>>, vector<8x16xf32>,
    return
  }
  func.func @transform_0(%arg0: i32) -> (i32, i32) {
    %c0_i32 = arith.constant 0 : i32
    %c0_i32_0 = arith.constant 0 : i32
    return %arg0, %c0_i32 : i32, i32
  }
  func.func @transform_1(%arg0: i32) -> (i32, i32) {
    %c0_i32 = arith.constant 0 : i32
    %c0_i32_0 = arith.constant 0 : i32
    %c0_i32_1 = arith.constant 0 : i32
    return %c0_i32, %c0_i32_0 : i32, i32
  }
  func.func @transform_2(%arg0: i32) -> (i32, i32) {
    %c0_i32 = arith.constant 0 : i32
    %c0_i32_0 = arith.constant 0 : i32
    return %arg0, %c0_i32 : i32, i32
  }
  func.func @transform_3(%arg0: i32) -> (i32, i32) {
    %c0_i32 = arith.constant 0 : i32
    %c0_i32_0 = arith.constant 0 : i32
    return %arg0, %c0_i32 : i32, i32
  }
  func.func @transform_4(%arg0: i32) -> (i32, i32) {
    %c0_i32 = arith.constant 0 : i32
    %c0_i32_0 = arith.constant 0 : i32
    return %arg0, %c0_i32 : i32, i32
  }
}

module attributes {stable_mosaic.version = 11 : i64} {
  func.func @_matmul_stats_kernel(%arg0: i32, %arg1: memref<16x256xbf16, #tpu.memory_space<vmem>>, %arg2: memref<256x32xbf16, #tpu.memory_space<vmem>>, %arg3: memref<16x32xbf16, #tpu.memory_space<vmem>>, %arg4: memref<8x32xf32, #tpu.memory_space<vmem>>, %arg5: memref<8x32xf32, #tpu.memory_space<vmem>>) attributes {dimension_semantics = [#tpu.dimension_semantics<parallel>], iteration_bounds = array<i64: 2>, scalar_prefetch = 0 : i64, scratch_operands = 0 : i64, tpu.core_type = #tpu.core_type<tc>, window_params = [{transform_indices = @transform_0, window_bounds = array<i64: 16, 256>}, {pipeline_mode = #tpu.pipeline_mode<synchronous>, transform_indices = @transform_1, window_bounds = array<i64: 256, 32>}, {transform_indices = @transform_2, window_bounds = array<i64: 16, 32>}, {transform_indices = @transform_3, window_bounds = array<i64: 8, 32>}, {transform_indices = @transform_4, window_bounds = array<i64: 8, 32>}]} {
    %c0 = arith.constant 0 : index
    %c0_0 = arith.constant 0 : index
    %0 = vector.load %arg1[%c0, %c0_0] : memref<16x256xbf16, #tpu.memory_space<vmem>>, vector<16x256xbf16>
    %c0_1 = arith.constant 0 : index
    %c0_2 = arith.constant 0 : index
    %1 = vector.load %arg2[%c0_1, %c0_2] : memref<256x32xbf16, #tpu.memory_space<vmem>>, vector<256x32xbf16>
    %cst = arith.constant dense<0.000000e+00> : vector<16x32xf32>
    %2 = tpu.matmul %0, %1, %cst {dimension_numbers = #tpu.dot_dimension_numbers<[1], [0], [0], [1], [0, 0, 1, 1], [], []>} : vector<16x256xbf16>, vector<256x32xbf16>, vector<16x32xf32> -> vector<16x32xf32>
    %3 = arith.truncf %2 : vector<16x32xf32> to vector<16x32xbf16>
    %c0_3 = arith.constant 0 : index
    %c0_4 = arith.constant 0 : index
    %4 = vector.load %arg3[%c0_3, %c0_4] : memref<16x32xbf16, #tpu.memory_space<vmem>>, vector<16x32xbf16>
    tpu.vector_store %arg3[%c0_3, %c0_4], %3 {strides = array<i32>} : memref<16x32xbf16, #tpu.memory_space<vmem>>, vector<16x32xbf16>,
    %cst_5 = arith.constant dense<0.000000e+00> : vector<32xf32>
    %5 = vector.multi_reduction <add>, %2, %cst_5 [0] : vector<16x32xf32> to vector<32xf32>
    %6 = vector.shape_cast %5 : vector<32xf32> to vector<1x32xf32>
    %7 = arith.mulf %2, %2 : vector<16x32xf32>
    %cst_6 = arith.constant dense<0.000000e+00> : vector<32xf32>
    %8 = vector.multi_reduction <add>, %7, %cst_6 [0] : vector<16x32xf32> to vector<32xf32>
    %9 = vector.shape_cast %8 : vector<32xf32> to vector<1x32xf32>
    %10 = vector.shape_cast %6 : vector<1x32xf32> to vector<1x32xf32>
    %11 = vector.broadcast %10 : vector<1x32xf32> to vector<8x32xf32>
    %c0_7 = arith.constant 0 : index
    %c0_8 = arith.constant 0 : index
    %12 = vector.load %arg4[%c0_7, %c0_8] : memref<8x32xf32, #tpu.memory_space<vmem>>, vector<8x32xf32>
    tpu.vector_store %arg4[%c0_7, %c0_8], %11 {strides = array<i32>} : memref<8x32xf32, #tpu.memory_space<vmem>>, vector<8x32xf32>,
    %13 = vector.shape_cast %9 : vector<1x32xf32> to vector<1x32xf32>
    %14 = vector.broadcast %13 : vector<1x32xf32> to vector<8x32xf32>
    %c0_9 = arith.constant 0 : index
    %c0_10 = arith.constant 0 : index
    %15 = vector.load %arg5[%c0_9, %c0_10] : memref<8x32xf32, #tpu.memory_space<vmem>>, vector<8x32xf32>
    tpu.vector_store %arg5[%c0_9, %c0_10], %14 {strides = array<i32>} : memref<8x32xf32, #tpu.memory_space<vmem>>, vector<8x32xf32>,
    return
  }
  func.func @transform_0(%arg0: i32) -> (i32, i32) {
    %c0_i32 = arith.constant 0 : i32
    %c0_i32_0 = arith.constant 0 : i32
    return %arg0, %c0_i32 : i32, i32
  }
  func.func @transform_1(%arg0: i32) -> (i32, i32) {
    %c0_i32 = arith.constant 0 : i32
    %c0_i32_0 = arith.constant 0 : i32
    %c0_i32_1 = arith.constant 0 : i32
    return %c0_i32, %c0_i32_0 : i32, i32
  }
  func.func @transform_2(%arg0: i32) -> (i32, i32) {
    %c0_i32 = arith.constant 0 : i32
    %c0_i32_0 = arith.constant 0 : i32
    return %arg0, %c0_i32 : i32, i32
  }
  func.func @transform_3(%arg0: i32) -> (i32, i32) {
    %c0_i32 = arith.constant 0 : i32
    %c0_i32_0 = arith.constant 0 : i32
    return %arg0, %c0_i32 : i32, i32
  }
  func.func @transform_4(%arg0: i32) -> (i32, i32) {
    %c0_i32 = arith.constant 0 : i32
    %c0_i32_0 = arith.constant 0 : i32
    return %arg0, %c0_i32 : i32, i32
  }
}

module attributes {stable_mosaic.version = 11 : i64} {
  func.func @_matmul_stats_kernel(%arg0: i32, %arg1: memref<16x288xbf16, #tpu.memory_space<vmem>>, %arg2: memref<288x32xbf16, #tpu.memory_space<vmem>>, %arg3: memref<16x32xbf16, #tpu.memory_space<vmem>>, %arg4: memref<8x32xf32, #tpu.memory_space<vmem>>, %arg5: memref<8x32xf32, #tpu.memory_space<vmem>>) attributes {dimension_semantics = [#tpu.dimension_semantics<parallel>], iteration_bounds = array<i64: 2>, scalar_prefetch = 0 : i64, scratch_operands = 0 : i64, tpu.core_type = #tpu.core_type<tc>, window_params = [{transform_indices = @transform_0, window_bounds = array<i64: 16, 288>}, {pipeline_mode = #tpu.pipeline_mode<synchronous>, transform_indices = @transform_1, window_bounds = array<i64: 288, 32>}, {transform_indices = @transform_2, window_bounds = array<i64: 16, 32>}, {transform_indices = @transform_3, window_bounds = array<i64: 8, 32>}, {transform_indices = @transform_4, window_bounds = array<i64: 8, 32>}]} {
    %c0 = arith.constant 0 : index
    %c0_0 = arith.constant 0 : index
    %0 = vector.load %arg1[%c0, %c0_0] : memref<16x288xbf16, #tpu.memory_space<vmem>>, vector<16x288xbf16>
    %c0_1 = arith.constant 0 : index
    %c0_2 = arith.constant 0 : index
    %1 = vector.load %arg2[%c0_1, %c0_2] : memref<288x32xbf16, #tpu.memory_space<vmem>>, vector<288x32xbf16>
    %cst = arith.constant dense<0.000000e+00> : vector<16x32xf32>
    %2 = tpu.matmul %0, %1, %cst {dimension_numbers = #tpu.dot_dimension_numbers<[1], [0], [0], [1], [0, 0, 1, 1], [], []>} : vector<16x288xbf16>, vector<288x32xbf16>, vector<16x32xf32> -> vector<16x32xf32>
    %3 = arith.truncf %2 : vector<16x32xf32> to vector<16x32xbf16>
    %c0_3 = arith.constant 0 : index
    %c0_4 = arith.constant 0 : index
    %4 = vector.load %arg3[%c0_3, %c0_4] : memref<16x32xbf16, #tpu.memory_space<vmem>>, vector<16x32xbf16>
    tpu.vector_store %arg3[%c0_3, %c0_4], %3 {strides = array<i32>} : memref<16x32xbf16, #tpu.memory_space<vmem>>, vector<16x32xbf16>,
    %cst_5 = arith.constant dense<0.000000e+00> : vector<32xf32>
    %5 = vector.multi_reduction <add>, %2, %cst_5 [0] : vector<16x32xf32> to vector<32xf32>
    %6 = vector.shape_cast %5 : vector<32xf32> to vector<1x32xf32>
    %7 = arith.mulf %2, %2 : vector<16x32xf32>
    %cst_6 = arith.constant dense<0.000000e+00> : vector<32xf32>
    %8 = vector.multi_reduction <add>, %7, %cst_6 [0] : vector<16x32xf32> to vector<32xf32>
    %9 = vector.shape_cast %8 : vector<32xf32> to vector<1x32xf32>
    %10 = vector.shape_cast %6 : vector<1x32xf32> to vector<1x32xf32>
    %11 = vector.broadcast %10 : vector<1x32xf32> to vector<8x32xf32>
    %c0_7 = arith.constant 0 : index
    %c0_8 = arith.constant 0 : index
    %12 = vector.load %arg4[%c0_7, %c0_8] : memref<8x32xf32, #tpu.memory_space<vmem>>, vector<8x32xf32>
    tpu.vector_store %arg4[%c0_7, %c0_8], %11 {strides = array<i32>} : memref<8x32xf32, #tpu.memory_space<vmem>>, vector<8x32xf32>,
    %13 = vector.shape_cast %9 : vector<1x32xf32> to vector<1x32xf32>
    %14 = vector.broadcast %13 : vector<1x32xf32> to vector<8x32xf32>
    %c0_9 = arith.constant 0 : index
    %c0_10 = arith.constant 0 : index
    %15 = vector.load %arg5[%c0_9, %c0_10] : memref<8x32xf32, #tpu.memory_space<vmem>>, vector<8x32xf32>
    tpu.vector_store %arg5[%c0_9, %c0_10], %14 {strides = array<i32>} : memref<8x32xf32, #tpu.memory_space<vmem>>, vector<8x32xf32>,
    return
  }
  func.func @transform_0(%arg0: i32) -> (i32, i32) {
    %c0_i32 = arith.constant 0 : i32
    %c0_i32_0 = arith.constant 0 : i32
    return %arg0, %c0_i32 : i32, i32
  }
  func.func @transform_1(%arg0: i32) -> (i32, i32) {
    %c0_i32 = arith.constant 0 : i32
    %c0_i32_0 = arith.constant 0 : i32
    %c0_i32_1 = arith.constant 0 : i32
    return %c0_i32, %c0_i32_0 : i32, i32
  }
  func.func @transform_2(%arg0: i32) -> (i32, i32) {
    %c0_i32 = arith.constant 0 : i32
    %c0_i32_0 = arith.constant 0 : i32
    return %arg0, %c0_i32 : i32, i32
  }
  func.func @transform_3(%arg0: i32) -> (i32, i32) {
    %c0_i32 = arith.constant 0 : i32
    %c0_i32_0 = arith.constant 0 : i32
    return %arg0, %c0_i32 : i32, i32
  }
  func.func @transform_4(%arg0: i32) -> (i32, i32) {
    %c0_i32 = arith.constant 0 : i32
    %c0_i32_0 = arith.constant 0 : i32
    return %arg0, %c0_i32 : i32, i32
  }
}

module attributes {stable_mosaic.version = 11 : i64} {
  func.func @_bn_act_res_kernel(%arg0: i32, %arg1: memref<8x1024xbf16, #tpu.memory_space<vmem>>, %arg2: memref<1x1024xf32, #tpu.memory_space<vmem>>, %arg3: memref<1x1024xf32, #tpu.memory_space<vmem>>, %arg4: memref<8x1024xbf16, #tpu.memory_space<vmem>>, %arg5: memref<8x1024xbf16, #tpu.memory_space<vmem>>) attributes {dimension_semantics = [#tpu.dimension_semantics<parallel>], iteration_bounds = array<i64: 1>, scalar_prefetch = 0 : i64, scratch_operands = 0 : i64, tpu.core_type = #tpu.core_type<tc>, window_params = [{transform_indices = @transform_0, window_bounds = array<i64: 8, 1024>}, {pipeline_mode = #tpu.pipeline_mode<synchronous>, transform_indices = @transform_1, window_bounds = array<i64: 1, 1024>}, {pipeline_mode = #tpu.pipeline_mode<synchronous>, transform_indices = @transform_2, window_bounds = array<i64: 1, 1024>}, {transform_indices = @transform_3, window_bounds = array<i64: 8, 1024>}, {transform_indices = @transform_4, window_bounds = array<i64: 8, 1024>}]} {
    %c0 = arith.constant 0 : index
    %c0_0 = arith.constant 0 : index
    %0 = vector.load %arg1[%c0, %c0_0] : memref<8x1024xbf16, #tpu.memory_space<vmem>>, vector<8x1024xbf16>
    %1 = arith.extf %0 : vector<8x1024xbf16> to vector<8x1024xf32>
    %c0_1 = arith.constant 0 : index
    %c0_2 = arith.constant 0 : index
    %2 = vector.load %arg2[%c0_1, %c0_2] : memref<1x1024xf32, #tpu.memory_space<vmem>>, vector<1x1024xf32>
    %3 = vector.broadcast %2 : vector<1x1024xf32> to vector<8x1024xf32>
    %4 = arith.mulf %1, %3 : vector<8x1024xf32>
    %c0_3 = arith.constant 0 : index
    %c0_4 = arith.constant 0 : index
    %5 = vector.load %arg3[%c0_3, %c0_4] : memref<1x1024xf32, #tpu.memory_space<vmem>>, vector<1x1024xf32>
    %6 = vector.broadcast %5 : vector<1x1024xf32> to vector<8x1024xf32>
    %7 = arith.addf %4, %6 : vector<8x1024xf32>
    %c0_5 = arith.constant 0 : index
    %c0_6 = arith.constant 0 : index
    %8 = vector.load %arg4[%c0_5, %c0_6] : memref<8x1024xbf16, #tpu.memory_space<vmem>>, vector<8x1024xbf16>
    %9 = arith.extf %8 : vector<8x1024xbf16> to vector<8x1024xf32>
    %10 = arith.addf %7, %9 : vector<8x1024xf32>
    %11 = arith.truncf %10 : vector<8x1024xf32> to vector<8x1024xbf16>
    %c0_7 = arith.constant 0 : index
    %c0_8 = arith.constant 0 : index
    %12 = vector.load %arg5[%c0_7, %c0_8] : memref<8x1024xbf16, #tpu.memory_space<vmem>>, vector<8x1024xbf16>
    tpu.vector_store %arg5[%c0_7, %c0_8], %11 {strides = array<i32>} : memref<8x1024xbf16, #tpu.memory_space<vmem>>, vector<8x1024xbf16>,
    return
  }
  func.func @transform_0(%arg0: i32) -> (i32, i32) {
    %c0_i32 = arith.constant 0 : i32
    %c0_i32_0 = arith.constant 0 : i32
    return %arg0, %c0_i32 : i32, i32
  }
  func.func @transform_1(%arg0: i32) -> (i32, i32) {
    %c0_i32 = arith.constant 0 : i32
    %c0_i32_0 = arith.constant 0 : i32
    %c0_i32_1 = arith.constant 0 : i32
    return %c0_i32, %c0_i32_0 : i32, i32
  }
  func.func @transform_2(%arg0: i32) -> (i32, i32) {
    %c0_i32 = arith.constant 0 : i32
    %c0_i32_0 = arith.constant 0 : i32
    %c0_i32_1 = arith.constant 0 : i32
    return %c0_i32, %c0_i32_0 : i32, i32
  }
  func.func @transform_3(%arg0: i32) -> (i32, i32) {
    %c0_i32 = arith.constant 0 : i32
    %c0_i32_0 = arith.constant 0 : i32
    return %arg0, %c0_i32 : i32, i32
  }
  func.func @transform_4(%arg0: i32) -> (i32, i32) {
    %c0_i32 = arith.constant 0 : i32
    %c0_i32_0 = arith.constant 0 : i32
    return %arg0, %c0_i32 : i32, i32
  }
}

module attributes {stable_mosaic.version = 11 : i64} {
  func.func @_bn_act_kernel(%arg0: i32, %arg1: memref<8x1024xbf16, #tpu.memory_space<vmem>>, %arg2: memref<1x1024xf32, #tpu.memory_space<vmem>>, %arg3: memref<1x1024xf32, #tpu.memory_space<vmem>>, %arg4: memref<8x1024xbf16, #tpu.memory_space<vmem>>) attributes {dimension_semantics = [#tpu.dimension_semantics<parallel>], iteration_bounds = array<i64: 1>, scalar_prefetch = 0 : i64, scratch_operands = 0 : i64, tpu.core_type = #tpu.core_type<tc>, window_params = [{transform_indices = @transform_0, window_bounds = array<i64: 8, 1024>}, {pipeline_mode = #tpu.pipeline_mode<synchronous>, transform_indices = @transform_1, window_bounds = array<i64: 1, 1024>}, {pipeline_mode = #tpu.pipeline_mode<synchronous>, transform_indices = @transform_2, window_bounds = array<i64: 1, 1024>}, {transform_indices = @transform_3, window_bounds = array<i64: 8, 1024>}]} {
    %c0 = arith.constant 0 : index
    %c0_0 = arith.constant 0 : index
    %0 = vector.load %arg1[%c0, %c0_0] : memref<8x1024xbf16, #tpu.memory_space<vmem>>, vector<8x1024xbf16>
    %1 = arith.extf %0 : vector<8x1024xbf16> to vector<8x1024xf32>
    %c0_1 = arith.constant 0 : index
    %c0_2 = arith.constant 0 : index
    %2 = vector.load %arg2[%c0_1, %c0_2] : memref<1x1024xf32, #tpu.memory_space<vmem>>, vector<1x1024xf32>
    %3 = vector.broadcast %2 : vector<1x1024xf32> to vector<8x1024xf32>
    %4 = arith.mulf %1, %3 : vector<8x1024xf32>
    %c0_3 = arith.constant 0 : index
    %c0_4 = arith.constant 0 : index
    %5 = vector.load %arg3[%c0_3, %c0_4] : memref<1x1024xf32, #tpu.memory_space<vmem>>, vector<1x1024xf32>
    %6 = vector.broadcast %5 : vector<1x1024xf32> to vector<8x1024xf32>
    %7 = arith.addf %4, %6 : vector<8x1024xf32>
    %cst = arith.constant 0.000000e+00 : f32
    %8 = vector.broadcast %cst : f32 to vector<8x1024xf32>
    %9 = arith.maximumf %7, %8 : vector<8x1024xf32>
    %10 = arith.truncf %9 : vector<8x1024xf32> to vector<8x1024xbf16>
    %c0_5 = arith.constant 0 : index
    %c0_6 = arith.constant 0 : index
    %11 = vector.load %arg4[%c0_5, %c0_6] : memref<8x1024xbf16, #tpu.memory_space<vmem>>, vector<8x1024xbf16>
    tpu.vector_store %arg4[%c0_5, %c0_6], %10 {strides = array<i32>} : memref<8x1024xbf16, #tpu.memory_space<vmem>>, vector<8x1024xbf16>,
    return
  }
  func.func @transform_0(%arg0: i32) -> (i32, i32) {
    %c0_i32 = arith.constant 0 : i32
    %c0_i32_0 = arith.constant 0 : i32
    return %arg0, %c0_i32 : i32, i32
  }
  func.func @transform_1(%arg0: i32) -> (i32, i32) {
    %c0_i32 = arith.constant 0 : i32
    %c0_i32_0 = arith.constant 0 : i32
    %c0_i32_1 = arith.constant 0 : i32
    return %c0_i32, %c0_i32_0 : i32, i32
  }
  func.func @transform_2(%arg0: i32) -> (i32, i32) {
    %c0_i32 = arith.constant 0 : i32
    %c0_i32_0 = arith.constant 0 : i32
    %c0_i32_1 = arith.constant 0 : i32
    return %c0_i32, %c0_i32_0 : i32, i32
  }
  func.func @transform_3(%arg0: i32) -> (i32, i32) {
    %c0_i32 = arith.constant 0 : i32
    %c0_i32_0 = arith.constant 0 : i32
    return %arg0, %c0_i32 : i32, i32
  }
}

module attributes {stable_mosaic.version = 11 : i64} {
  func.func @_matmul_stats_kernel(%arg0: i32, %arg1: memref<16x288xbf16, #tpu.memory_space<vmem>>, %arg2: memref<288x64xbf16, #tpu.memory_space<vmem>>, %arg3: memref<16x64xbf16, #tpu.memory_space<vmem>>, %arg4: memref<8x64xf32, #tpu.memory_space<vmem>>, %arg5: memref<8x64xf32, #tpu.memory_space<vmem>>) attributes {dimension_semantics = [#tpu.dimension_semantics<parallel>], iteration_bounds = array<i64: 2>, scalar_prefetch = 0 : i64, scratch_operands = 0 : i64, tpu.core_type = #tpu.core_type<tc>, window_params = [{transform_indices = @transform_0, window_bounds = array<i64: 16, 288>}, {pipeline_mode = #tpu.pipeline_mode<synchronous>, transform_indices = @transform_1, window_bounds = array<i64: 288, 64>}, {transform_indices = @transform_2, window_bounds = array<i64: 16, 64>}, {transform_indices = @transform_3, window_bounds = array<i64: 8, 64>}, {transform_indices = @transform_4, window_bounds = array<i64: 8, 64>}]} {
    %c0 = arith.constant 0 : index
    %c0_0 = arith.constant 0 : index
    %0 = vector.load %arg1[%c0, %c0_0] : memref<16x288xbf16, #tpu.memory_space<vmem>>, vector<16x288xbf16>
    %c0_1 = arith.constant 0 : index
    %c0_2 = arith.constant 0 : index
    %1 = vector.load %arg2[%c0_1, %c0_2] : memref<288x64xbf16, #tpu.memory_space<vmem>>, vector<288x64xbf16>
    %cst = arith.constant dense<0.000000e+00> : vector<16x64xf32>
    %2 = tpu.matmul %0, %1, %cst {dimension_numbers = #tpu.dot_dimension_numbers<[1], [0], [0], [1], [0, 0, 1, 1], [], []>} : vector<16x288xbf16>, vector<288x64xbf16>, vector<16x64xf32> -> vector<16x64xf32>
    %3 = arith.truncf %2 : vector<16x64xf32> to vector<16x64xbf16>
    %c0_3 = arith.constant 0 : index
    %c0_4 = arith.constant 0 : index
    %4 = vector.load %arg3[%c0_3, %c0_4] : memref<16x64xbf16, #tpu.memory_space<vmem>>, vector<16x64xbf16>
    tpu.vector_store %arg3[%c0_3, %c0_4], %3 {strides = array<i32>} : memref<16x64xbf16, #tpu.memory_space<vmem>>, vector<16x64xbf16>,
    %cst_5 = arith.constant dense<0.000000e+00> : vector<64xf32>
    %5 = vector.multi_reduction <add>, %2, %cst_5 [0] : vector<16x64xf32> to vector<64xf32>
    %6 = vector.shape_cast %5 : vector<64xf32> to vector<1x64xf32>
    %7 = arith.mulf %2, %2 : vector<16x64xf32>
    %cst_6 = arith.constant dense<0.000000e+00> : vector<64xf32>
    %8 = vector.multi_reduction <add>, %7, %cst_6 [0] : vector<16x64xf32> to vector<64xf32>
    %9 = vector.shape_cast %8 : vector<64xf32> to vector<1x64xf32>
    %10 = vector.shape_cast %6 : vector<1x64xf32> to vector<1x64xf32>
    %11 = vector.broadcast %10 : vector<1x64xf32> to vector<8x64xf32>
    %c0_7 = arith.constant 0 : index
    %c0_8 = arith.constant 0 : index
    %12 = vector.load %arg4[%c0_7, %c0_8] : memref<8x64xf32, #tpu.memory_space<vmem>>, vector<8x64xf32>
    tpu.vector_store %arg4[%c0_7, %c0_8], %11 {strides = array<i32>} : memref<8x64xf32, #tpu.memory_space<vmem>>, vector<8x64xf32>,
    %13 = vector.shape_cast %9 : vector<1x64xf32> to vector<1x64xf32>
    %14 = vector.broadcast %13 : vector<1x64xf32> to vector<8x64xf32>
    %c0_9 = arith.constant 0 : index
    %c0_10 = arith.constant 0 : index
    %15 = vector.load %arg5[%c0_9, %c0_10] : memref<8x64xf32, #tpu.memory_space<vmem>>, vector<8x64xf32>
    tpu.vector_store %arg5[%c0_9, %c0_10], %14 {strides = array<i32>} : memref<8x64xf32, #tpu.memory_space<vmem>>, vector<8x64xf32>,
    return
  }
  func.func @transform_0(%arg0: i32) -> (i32, i32) {
    %c0_i32 = arith.constant 0 : i32
    %c0_i32_0 = arith.constant 0 : i32
    return %arg0, %c0_i32 : i32, i32
  }
  func.func @transform_1(%arg0: i32) -> (i32, i32) {
    %c0_i32 = arith.constant 0 : i32
    %c0_i32_0 = arith.constant 0 : i32
    %c0_i32_1 = arith.constant 0 : i32
    return %c0_i32, %c0_i32_0 : i32, i32
  }
  func.func @transform_2(%arg0: i32) -> (i32, i32) {
    %c0_i32 = arith.constant 0 : i32
    %c0_i32_0 = arith.constant 0 : i32
    return %arg0, %c0_i32 : i32, i32
  }
  func.func @transform_3(%arg0: i32) -> (i32, i32) {
    %c0_i32 = arith.constant 0 : i32
    %c0_i32_0 = arith.constant 0 : i32
    return %arg0, %c0_i32 : i32, i32
  }
  func.func @transform_4(%arg0: i32) -> (i32, i32) {
    %c0_i32 = arith.constant 0 : i32
    %c0_i32_0 = arith.constant 0 : i32
    return %arg0, %c0_i32 : i32, i32
  }
}

module attributes {stable_mosaic.version = 11 : i64} {
  func.func @_matmul_stats_kernel(%arg0: i32, %arg1: memref<64x144xbf16, #tpu.memory_space<vmem>>, %arg2: memref<144x32xbf16, #tpu.memory_space<vmem>>, %arg3: memref<64x32xbf16, #tpu.memory_space<vmem>>, %arg4: memref<8x32xf32, #tpu.memory_space<vmem>>, %arg5: memref<8x32xf32, #tpu.memory_space<vmem>>) attributes {dimension_semantics = [#tpu.dimension_semantics<parallel>], iteration_bounds = array<i64: 2>, scalar_prefetch = 0 : i64, scratch_operands = 0 : i64, tpu.core_type = #tpu.core_type<tc>, window_params = [{transform_indices = @transform_0, window_bounds = array<i64: 64, 144>}, {pipeline_mode = #tpu.pipeline_mode<synchronous>, transform_indices = @transform_1, window_bounds = array<i64: 144, 32>}, {transform_indices = @transform_2, window_bounds = array<i64: 64, 32>}, {transform_indices = @transform_3, window_bounds = array<i64: 8, 32>}, {transform_indices = @transform_4, window_bounds = array<i64: 8, 32>}]} {
    %c0 = arith.constant 0 : index
    %c0_0 = arith.constant 0 : index
    %0 = vector.load %arg1[%c0, %c0_0] : memref<64x144xbf16, #tpu.memory_space<vmem>>, vector<64x144xbf16>
    %c0_1 = arith.constant 0 : index
    %c0_2 = arith.constant 0 : index
    %1 = vector.load %arg2[%c0_1, %c0_2] : memref<144x32xbf16, #tpu.memory_space<vmem>>, vector<144x32xbf16>
    %cst = arith.constant dense<0.000000e+00> : vector<64x32xf32>
    %2 = tpu.matmul %0, %1, %cst {dimension_numbers = #tpu.dot_dimension_numbers<[1], [0], [0], [1], [0, 0, 1, 1], [], []>} : vector<64x144xbf16>, vector<144x32xbf16>, vector<64x32xf32> -> vector<64x32xf32>
    %3 = arith.truncf %2 : vector<64x32xf32> to vector<64x32xbf16>
    %c0_3 = arith.constant 0 : index
    %c0_4 = arith.constant 0 : index
    %4 = vector.load %arg3[%c0_3, %c0_4] : memref<64x32xbf16, #tpu.memory_space<vmem>>, vector<64x32xbf16>
    tpu.vector_store %arg3[%c0_3, %c0_4], %3 {strides = array<i32>} : memref<64x32xbf16, #tpu.memory_space<vmem>>, vector<64x32xbf16>,
    %cst_5 = arith.constant dense<0.000000e+00> : vector<32xf32>
    %5 = vector.multi_reduction <add>, %2, %cst_5 [0] : vector<64x32xf32> to vector<32xf32>
    %6 = vector.shape_cast %5 : vector<32xf32> to vector<1x32xf32>
    %7 = arith.mulf %2, %2 : vector<64x32xf32>
    %cst_6 = arith.constant dense<0.000000e+00> : vector<32xf32>
    %8 = vector.multi_reduction <add>, %7, %cst_6 [0] : vector<64x32xf32> to vector<32xf32>
    %9 = vector.shape_cast %8 : vector<32xf32> to vector<1x32xf32>
    %10 = vector.shape_cast %6 : vector<1x32xf32> to vector<1x32xf32>
    %11 = vector.broadcast %10 : vector<1x32xf32> to vector<8x32xf32>
    %c0_7 = arith.constant 0 : index
    %c0_8 = arith.constant 0 : index
    %12 = vector.load %arg4[%c0_7, %c0_8] : memref<8x32xf32, #tpu.memory_space<vmem>>, vector<8x32xf32>
    tpu.vector_store %arg4[%c0_7, %c0_8], %11 {strides = array<i32>} : memref<8x32xf32, #tpu.memory_space<vmem>>, vector<8x32xf32>,
    %13 = vector.shape_cast %9 : vector<1x32xf32> to vector<1x32xf32>
    %14 = vector.broadcast %13 : vector<1x32xf32> to vector<8x32xf32>
    %c0_9 = arith.constant 0 : index
    %c0_10 = arith.constant 0 : index
    %15 = vector.load %arg5[%c0_9, %c0_10] : memref<8x32xf32, #tpu.memory_space<vmem>>, vector<8x32xf32>
    tpu.vector_store %arg5[%c0_9, %c0_10], %14 {strides = array<i32>} : memref<8x32xf32, #tpu.memory_space<vmem>>, vector<8x32xf32>,
    return
  }
  func.func @transform_0(%arg0: i32) -> (i32, i32) {
    %c0_i32 = arith.constant 0 : i32
    %c0_i32_0 = arith.constant 0 : i32
    return %arg0, %c0_i32 : i32, i32
  }
  func.func @transform_1(%arg0: i32) -> (i32, i32) {
    %c0_i32 = arith.constant 0 : i32
    %c0_i32_0 = arith.constant 0 : i32
    %c0_i32_1 = arith.constant 0 : i32
    return %c0_i32, %c0_i32_0 : i32, i32
  }
  func.func @transform_2(%arg0: i32) -> (i32, i32) {
    %c0_i32 = arith.constant 0 : i32
    %c0_i32_0 = arith.constant 0 : i32
    return %arg0, %c0_i32 : i32, i32
  }
  func.func @transform_3(%arg0: i32) -> (i32, i32) {
    %c0_i32 = arith.constant 0 : i32
    %c0_i32_0 = arith.constant 0 : i32
    return %arg0, %c0_i32 : i32, i32
  }
  func.func @transform_4(%arg0: i32) -> (i32, i32) {
    %c0_i32 = arith.constant 0 : i32
    %c0_i32_0 = arith.constant 0 : i32
    return %arg0, %c0_i32 : i32, i32
  }
}

module attributes {stable_mosaic.version = 11 : i64} {
  func.func @_matmul_stats_kernel(%arg0: i32, %arg1: memref<256x72xbf16, #tpu.memory_space<vmem>>, %arg2: memref<72x12xbf16, #tpu.memory_space<vmem>>, %arg3: memref<256x12xbf16, #tpu.memory_space<vmem>>, %arg4: memref<8x12xf32, #tpu.memory_space<vmem>>, %arg5: memref<8x12xf32, #tpu.memory_space<vmem>>) attributes {dimension_semantics = [#tpu.dimension_semantics<parallel>], iteration_bounds = array<i64: 2>, scalar_prefetch = 0 : i64, scratch_operands = 0 : i64, tpu.core_type = #tpu.core_type<tc>, window_params = [{transform_indices = @transform_0, window_bounds = array<i64: 256, 72>}, {pipeline_mode = #tpu.pipeline_mode<synchronous>, transform_indices = @transform_1, window_bounds = array<i64: 72, 12>}, {transform_indices = @transform_2, window_bounds = array<i64: 256, 12>}, {transform_indices = @transform_3, window_bounds = array<i64: 8, 12>}, {transform_indices = @transform_4, window_bounds = array<i64: 8, 12>}]} {
    %c0 = arith.constant 0 : index
    %c0_0 = arith.constant 0 : index
    %0 = vector.load %arg1[%c0, %c0_0] : memref<256x72xbf16, #tpu.memory_space<vmem>>, vector<256x72xbf16>
    %c0_1 = arith.constant 0 : index
    %c0_2 = arith.constant 0 : index
    %1 = vector.load %arg2[%c0_1, %c0_2] : memref<72x12xbf16, #tpu.memory_space<vmem>>, vector<72x12xbf16>
    %cst = arith.constant dense<0.000000e+00> : vector<256x12xf32>
    %2 = tpu.matmul %0, %1, %cst {dimension_numbers = #tpu.dot_dimension_numbers<[1], [0], [0], [1], [0, 0, 1, 1], [], []>} : vector<256x72xbf16>, vector<72x12xbf16>, vector<256x12xf32> -> vector<256x12xf32>
    %3 = arith.truncf %2 : vector<256x12xf32> to vector<256x12xbf16>
    %c0_3 = arith.constant 0 : index
    %c0_4 = arith.constant 0 : index
    %4 = vector.load %arg3[%c0_3, %c0_4] : memref<256x12xbf16, #tpu.memory_space<vmem>>, vector<256x12xbf16>
    tpu.vector_store %arg3[%c0_3, %c0_4], %3 {strides = array<i32>} : memref<256x12xbf16, #tpu.memory_space<vmem>>, vector<256x12xbf16>,
    %cst_5 = arith.constant dense<0.000000e+00> : vector<12xf32>
    %5 = vector.multi_reduction <add>, %2, %cst_5 [0] : vector<256x12xf32> to vector<12xf32>
    %6 = vector.shape_cast %5 : vector<12xf32> to vector<1x12xf32>
    %7 = arith.mulf %2, %2 : vector<256x12xf32>
    %cst_6 = arith.constant dense<0.000000e+00> : vector<12xf32>
    %8 = vector.multi_reduction <add>, %7, %cst_6 [0] : vector<256x12xf32> to vector<12xf32>
    %9 = vector.shape_cast %8 : vector<12xf32> to vector<1x12xf32>
    %10 = vector.shape_cast %6 : vector<1x12xf32> to vector<1x12xf32>
    %11 = vector.broadcast %10 : vector<1x12xf32> to vector<8x12xf32>
    %c0_7 = arith.constant 0 : index
    %c0_8 = arith.constant 0 : index
    %12 = vector.load %arg4[%c0_7, %c0_8] : memref<8x12xf32, #tpu.memory_space<vmem>>, vector<8x12xf32>
    tpu.vector_store %arg4[%c0_7, %c0_8], %11 {strides = array<i32>} : memref<8x12xf32, #tpu.memory_space<vmem>>, vector<8x12xf32>,
    %13 = vector.shape_cast %9 : vector<1x12xf32> to vector<1x12xf32>
    %14 = vector.broadcast %13 : vector<1x12xf32> to vector<8x12xf32>
    %c0_9 = arith.constant 0 : index
    %c0_10 = arith.constant 0 : index
    %15 = vector.load %arg5[%c0_9, %c0_10] : memref<8x12xf32, #tpu.memory_space<vmem>>, vector<8x12xf32>
    tpu.vector_store %arg5[%c0_9, %c0_10], %14 {strides = array<i32>} : memref<8x12xf32, #tpu.memory_space<vmem>>, vector<8x12xf32>,
    return
  }
  func.func @transform_0(%arg0: i32) -> (i32, i32) {
    %c0_i32 = arith.constant 0 : i32
    %c0_i32_0 = arith.constant 0 : i32
    return %arg0, %c0_i32 : i32, i32
  }
  func.func @transform_1(%arg0: i32) -> (i32, i32) {
    %c0_i32 = arith.constant 0 : i32
    %c0_i32_0 = arith.constant 0 : i32
    %c0_i32_1 = arith.constant 0 : i32
    return %c0_i32, %c0_i32_0 : i32, i32
  }
  func.func @transform_2(%arg0: i32) -> (i32, i32) {
    %c0_i32 = arith.constant 0 : i32
    %c0_i32_0 = arith.constant 0 : i32
    return %arg0, %c0_i32 : i32, i32
  }
  func.func @transform_3(%arg0: i32) -> (i32, i32) {
    %c0_i32 = arith.constant 0 : i32
    %c0_i32_0 = arith.constant 0 : i32
    return %arg0, %c0_i32 : i32, i32
  }
  func.func @transform_4(%arg0: i32) -> (i32, i32) {
    %c0_i32 = arith.constant 0 : i32
    %c0_i32_0 = arith.constant 0 : i32
    return %arg0, %c0_i32 : i32, i32
  }
}

module attributes {stable_mosaic.version = 11 : i64} {
  func.func @_bn_act_kernel(%arg0: i32, %arg1: memref<8x1536xbf16, #tpu.memory_space<vmem>>, %arg2: memref<1x1536xf32, #tpu.memory_space<vmem>>, %arg3: memref<1x1536xf32, #tpu.memory_space<vmem>>, %arg4: memref<8x1536xf32, #tpu.memory_space<vmem>>) attributes {dimension_semantics = [#tpu.dimension_semantics<parallel>], iteration_bounds = array<i64: 1>, scalar_prefetch = 0 : i64, scratch_operands = 0 : i64, tpu.core_type = #tpu.core_type<tc>, window_params = [{transform_indices = @transform_0, window_bounds = array<i64: 8, 1536>}, {pipeline_mode = #tpu.pipeline_mode<synchronous>, transform_indices = @transform_1, window_bounds = array<i64: 1, 1536>}, {pipeline_mode = #tpu.pipeline_mode<synchronous>, transform_indices = @transform_2, window_bounds = array<i64: 1, 1536>}, {transform_indices = @transform_3, window_bounds = array<i64: 8, 1536>}]} {
    %c0 = arith.constant 0 : index
    %c0_0 = arith.constant 0 : index
    %0 = vector.load %arg1[%c0, %c0_0] : memref<8x1536xbf16, #tpu.memory_space<vmem>>, vector<8x1536xbf16>
    %1 = arith.extf %0 : vector<8x1536xbf16> to vector<8x1536xf32>
    %c0_1 = arith.constant 0 : index
    %c0_2 = arith.constant 0 : index
    %2 = vector.load %arg2[%c0_1, %c0_2] : memref<1x1536xf32, #tpu.memory_space<vmem>>, vector<1x1536xf32>
    %3 = vector.broadcast %2 : vector<1x1536xf32> to vector<8x1536xf32>
    %4 = arith.mulf %1, %3 : vector<8x1536xf32>
    %c0_3 = arith.constant 0 : index
    %c0_4 = arith.constant 0 : index
    %5 = vector.load %arg3[%c0_3, %c0_4] : memref<1x1536xf32, #tpu.memory_space<vmem>>, vector<1x1536xf32>
    %6 = vector.broadcast %5 : vector<1x1536xf32> to vector<8x1536xf32>
    %7 = arith.addf %4, %6 : vector<8x1536xf32>
    %8 = math.tanh %7 : vector<8x1536xf32>
    %c0_5 = arith.constant 0 : index
    %c0_6 = arith.constant 0 : index
    %9 = vector.load %arg4[%c0_5, %c0_6] : memref<8x1536xf32, #tpu.memory_space<vmem>>, vector<8x1536xf32>
    tpu.vector_store %arg4[%c0_5, %c0_6], %8 {strides = array<i32>} : memref<8x1536xf32, #tpu.memory_space<vmem>>, vector<8x1536xf32>,
    return
  }
  func.func @transform_0(%arg0: i32) -> (i32, i32) {
    %c0_i32 = arith.constant 0 : i32
    %c0_i32_0 = arith.constant 0 : i32
    return %arg0, %c0_i32 : i32, i32
  }
  func.func @transform_1(%arg0: i32) -> (i32, i32) {
    %c0_i32 = arith.constant 0 : i32
    %c0_i32_0 = arith.constant 0 : i32
    %c0_i32_1 = arith.constant 0 : i32
    return %c0_i32, %c0_i32_0 : i32, i32
  }
  func.func @transform_2(%arg0: i32) -> (i32, i32) {
    %c0_i32 = arith.constant 0 : i32
    %c0_i32_0 = arith.constant 0 : i32
    %c0_i32_1 = arith.constant 0 : i32
    return %c0_i32, %c0_i32_0 : i32, i32
  }
  func.func @transform_3(%arg0: i32) -> (i32, i32) {
    %c0_i32 = arith.constant 0 : i32
    %c0_i32_0 = arith.constant 0 : i32
    return %arg0, %c0_i32 : i32, i32
  }
}

</mosaic_0001>

<llo_original>
// kernel: tile.131
$region0: #{tile.131}
  #allocation0 [shape = 's32[1]{0}', space=sflag, size = 0x4, scoped, tag = 'scoped memory for tile.131']
  %s0 = inlined_call_operand.vmem [shape: f32[8], index: 0, kind: input, shape index: {}]
  %s1 = inlined_call_operand.vmem [shape: f32[128,8], index: 1, kind: output, shape index: {}]
  // Predicated region
  $region2: #{tile.131} parent=0 // pred_check
    _
  $region3: #{tile.131} parent=0 // pred_check_branch
    %3 = sbr.rel (0) target = $region5
  $region4: #{tile.131} parent=0 // pred_region
    _
  $region5: #{tile.131} parent=0 // pred_fallthru
    _
  %v4 = vld [vmem:[%s0] ss:$0 sm:$0xff]
  %5 = vst [vmem:[%s1] sm:$0xff] %v4
  %s6 = scalar_lea.vmem %s1, 8
  %7 = vst [vmem:[%s6] sm:$0xff] %v4
  %s8 = scalar_lea.vmem %s1, 16
  %9 = vst [vmem:[%s8] sm:$0xff] %v4
  %s10 = scalar_lea.vmem %s1, 24
  %11 = vst [vmem:[%s10] sm:$0xff] %v4
  %s12 = scalar_lea.vmem %s1, 32
  %13 = vst [vmem:[%s12] sm:$0xff] %v4
  %s14 = scalar_lea.vmem %s1, 40
  %15 = vst [vmem:[%s14] sm:$0xff] %v4
  %s16 = scalar_lea.vmem %s1, 48
  %17 = vst [vmem:[%s16] sm:$0xff] %v4
  %s18 = scalar_lea.vmem %s1, 56
  %19 = vst [vmem:[%s18] sm:$0xff] %v4
  %s20 = scalar_lea.vmem %s1, 64
  %21 = vst [vmem:[%s20] sm:$0xff] %v4
  %s22 = scalar_lea.vmem %s1, 72
  %23 = vst [vmem:[%s22] sm:$0xff] %v4
  %s24 = scalar_lea.vmem %s1, 80
  %25 = vst [vmem:[%s24] sm:$0xff] %v4
  %s26 = scalar_lea.vmem %s1, 88
  %27 = vst [vmem:[%s26] sm:$0xff] %v4
  %s28 = scalar_lea.vmem %s1, 96
  %29 = vst [vmem:[%s28] sm:$0xff] %v4
  %s30 = scalar_lea.vmem %s1, 104
  %31 = vst [vmem:[%s30] sm:$0xff] %v4
  %s32 = scalar_lea.vmem %s1, 112
  %33 = vst [vmem:[%s32] sm:$0xff] %v4
  %s34 = scalar_lea.vmem %s1, 120
  %35 = vst [vmem:[%s34] sm:$0xff] %v4

// kernel: tile.133
$region0: #{tile.133}
  %s0 = inlined_call_operand.vmem [shape: f32[128,8], index: 0, kind: input, shape index: {}]
  %s1 = inlined_call_operand.vmem [shape: f32[1,1024], index: 1, kind: output, shape index: {}]
  $region1: #{tile.133} parent=0
    #allocation0 [shape = 'u8[32768]{0}', space=vmem, size = 0x8000, scoped, tag = 'scoped mem for output reshape']
    %s2 = smov 3
    %v3 = vld [vmem:[%s0] ss:$16 sm:%s2]
    %s4 = smov 12
    %v5 = vld [vmem:[%s0] ss:$16 sm:%s4]
    %vm6 = vcmask 1043458
    %v7 = vsel %vm6, %v5, %v3
    %s8 = smov 48
    %v9 = vld [vmem:[%s0] ss:$16 sm:%s8]
    %vm10 = vcmask 1045508
    %v11 = vsel %vm10, %v9, %v7
    %s12 = smov 192
    %v13 = vld [vmem:[%s0] ss:$16 sm:%s12]
    %vm14 = vcmask 1047558
    %v15 = vsel %vm14, %v13, %v11
    %vm16 = vcmask 64512
    %17 = vst.msk [vmem:[#allocation0] ss:$8 sm:$0xf] %vm16, %v15
    %18 = vst.msk [vmem:[#allocation0] ss:$8 sm:$0xf0] %vm16, %v15
    %s19 = scalar_lea.vmem %s0, 15
    %s20 = smov 3
    %v21 = vld [vmem:[%s19] ss:$16 sm:%s20]
    %s22 = scalar_lea.vmem %s0, 15
    %s23 = smov 12
    %v24 = vld [vmem:[%s22] ss:$16 sm:%s23]
    %vm25 = vcmask 1043458
    %v26 = vsel %vm25, %v24, %v21
    %s27 = scalar_lea.vmem %s0, 15
    %s28 = smov 48
    %v29 = vld [vmem:[%s27] ss:$16 sm:%s28]
    %vm30 = vcmask 1045508
    %v31 = vsel %vm30, %v29, %v26
    %s32 = scalar_lea.vmem %s0, 15
    %s33 = smov 192
    %v34 = vld [vmem:[%s32] ss:$16 sm:%s33]
    %vm35 = vcmask 1047558
    %v36 = vsel %vm35, %v34, %v31
    %37 = vrot.lane.b32.xlu0 %v36, 120
    %v38 = vpop.permute.xlu0 %37
    %vm39 = vcmask 1048512
    %40 = vst.msk [vmem:[#allocation0] ss:$8 sm:$0xf] %vm39, %v38
    %41 = vst.msk [vmem:[#allocation0] ss:$8 sm:$0xf0] %vm39, %v38
    %s42 = scalar_lea.vmem %s0, 14
    %s43 = smov 3
    %v44 = vld [vmem:[%s42] ss:$16 sm:%s43]
    %s45 = scalar_lea.vmem %s0, 14
    %s46 = smov 12
    %v47 = vld [vmem:[%s45] ss:$16 sm:%s46]
    %vm48 = vcmask 1043458
    %v49 = vsel %vm48, %v47, %v44
    %s50 = scalar_lea.vmem %s0, 14
    %s51 = smov 48
    %v52 = vld [vmem:[%s50] ss:$16 sm:%s51]
    %vm53 = vcmask 1045508
    %v54 = vsel %vm53, %v52, %v49
    %s55 = scalar_lea.vmem %s0, 14
    %s56 = smov 192
    %v57 = vld [vmem:[%s55] ss:$16 sm:%s56]
    %vm58 = vcmask 1047558
    %v59 = vsel %vm58, %v57, %v54
    %60 = vrot.lane.b32.xlu0 %v59, 112
    %v61 = vpop.permute.xlu0 %60
    %vm62 = vcmask 982912
    %63 = vst.msk [vmem:[#allocation0] ss:$8 sm:$0xf] %vm62, %v61
    %64 = vst.msk [vmem:[#allocation0] ss:$8 sm:$0xf0] %vm62, %v61
    %s65 = scalar_lea.vmem %s0, 13
    %s66 = smov 3
    %v67 = vld [vmem:[%s65] ss:$16 sm:%s66]
    %s68 = scalar_lea.vmem %s0, 13
    %s69 = smov 12
    %v70 = vld [vmem:[%s68] ss:$16 sm:%s69]
    %vm71 = vcmask 1043458
    %v72 = vsel %vm71, %v70, %v67
    %s73 = scalar_lea.vmem %s0, 13
    %s74 = smov 48
    %v75 = vld [vmem:[%s73] ss:$16 sm:%s74]
    %vm76 = vcmask 1045508
    %v77 = vsel %vm76, %v75, %v72
    %s78 = scalar_lea.vmem %s0, 13
    %s79 = smov 192
    %v80 = vld [vmem:[%s78] ss:$16 sm:%s79]
    %vm81 = vcmask 1047558
    %v82 = vsel %vm81, %v80, %v77
    %83 = vrot.lane.b32.xlu0 %v82, 104
    %v84 = vpop.permute.xlu0 %83
    %vm85 = vcmask 917312
    %86 = vst.msk [vmem:[#allocation0] ss:$8 sm:$0xf] %vm85, %v84
    %87 = vst.msk [vmem:[#allocation0] ss:$8 sm:$0xf0] %vm85, %v84
    %s88 = scalar_lea.vmem %s0, 12
    %s89 = smov 3
    %v90 = vld [vmem:[%s88] ss:$16 sm:%s89]
    %s91 = scalar_lea.vmem %s0, 12
    %s92 = smov 12
    %v93 = vld [vmem:[%s91] ss:$16 sm:%s92]
    %vm94 = vcmask 1043458
    %v95 = vsel %vm94, %v93, %v90
    %s96 = scalar_lea.vmem %s0, 12
    %s97 = smov 48
    %v98 = vld [vmem:[%s96] ss:$16 sm:%s97]
    %vm99 = vcmask 1045508
    %v100 = vsel %vm99, %v98, %v95
    %s101 = scalar_lea.vmem %s0, 12
    %s102 = smov 192
    %v103 = vld [vmem:[%s101] ss:$16 sm:%s102]
    %vm104 = vcmask 1047558
    %v105 = vsel %vm104, %v103, %v100
    %106 = vrot.lane.b32.xlu0 %v105, 96
    %v107 = vpop.permute.xlu0 %106
    %vm108 = vcmask 851712
    %109 = vst.msk [vmem:[#allocation0] ss:$8 sm:$0xf] %vm108, %v107
    %110 = vst.msk [vmem:[#allocation0] ss:$8 sm:$0xf0] %vm108, %v107
    %s111 = scalar_lea.vmem %s0, 11
    %s112 = smov 3
    %v113 = vld [vmem:[%s111] ss:$16 sm:%s112]
    %s114 = scalar_lea.vmem %s0, 11
    %s115 = smov 12
    %v116 = vld [vmem:[%s114] ss:$16 sm:%s115]
    %vm117 = vcmask 1043458
    %v118 = vsel %vm117, %v116, %v113
    %s119 = scalar_lea.vmem %s0, 11
    %s120 = smov 48
    %v121 = vld [vmem:[%s119] ss:$16 sm:%s120]
    %vm122 = vcmask 1045508
    %v123 = vsel %vm122, %v121, %v118
    %s124 = scalar_lea.vmem %s0, 11
    %s125 = smov 192
    %v126 = vld [vmem:[%s124] ss:$16 sm:%s125]
    %vm127 = vcmask 1047558
    %v128 = vsel %vm127, %v126, %v123
    %129 = vrot.lane.b32.xlu0 %v128, 88
    %v130 = vpop.permute.xlu0 %129
    %vm131 = vcmask 786112
    %132 = vst.msk [vmem:[#allocation0] ss:$8 sm:$0xf] %vm131, %v130
    %133 = vst.msk [vmem:[#allocation0] ss:$8 sm:$0xf0] %vm131, %v130
    %s134 = scalar_lea.vmem %s0, 10
    %s135 = smov 3
    %v136 = vld [vmem:[%s134] ss:$16 sm:%s135]
    %s137 = scalar_lea.vmem %s0, 10
    %s138 = smov 12
    %v139 = vld [vmem:[%s137] ss:$16 sm:%s138]
    %vm140 = vcmask 1043458
    %v141 = vsel %vm140, %v139, %v136
    %s142 = scalar_lea.vmem %s0, 10
    %s143 = smov 48
    %v144 = vld [vmem:[%s142] ss:$16 sm:%s143]
    %vm145 = vcmask 1045508
    %v146 = vsel %vm145, %v144, %v141
    %s147 = scalar_lea.vmem %s0, 10
    %s148 = smov 192
    %v149 = vld [vmem:[%s147] ss:$16 sm:%s148]
    %vm150 = vcmask 1047558
    %v151 = vsel %vm150, %v149, %v146
    %152 = vrot.lane.b32.xlu0 %v151, 80
    %v153 = vpop.permute.xlu0 %152
    %vm154 = vcmask 720512
    %155 = vst.msk [vmem:[#allocation0] ss:$8 sm:$0xf] %vm154, %v153
    %156 = vst.msk [vmem:[#allocation0] ss:$8 sm:$0xf0] %vm154, %v153
    %s157 = scalar_lea.vmem %s0, 9
    %s158 = smov 3
    %v159 = vld [vmem:[%s157] ss:$16 sm:%s158]
    %s160 = scalar_lea.vmem %s0, 9
    %s161 = smov 12
    %v162 = vld [vmem:[%s160] ss:$16 sm:%s161]
    %vm163 = vcmask 1043458
    %v164 = vsel %vm163, %v162, %v159
    %s165 = scalar_lea.vmem %s0, 9
    %s166 = smov 48
    %v167 = vld [vmem:[%s165] ss:$16 sm:%s166]
    %vm168 = vcmask 1045508
    %v169 = vsel %vm168, %v167, %v164
    %s170 = scalar_lea.vmem %s0, 9
    %s171 = smov 192
    %v172 = vld [vmem:[%s170] ss:$16 sm:%s171]
    %vm173 = vcmask 1047558
    %v174 = vsel %vm173, %v172, %v169
    %175 = vrot.lane.b32.xlu0 %v174, 72
    %v176 = vpop.permute.xlu0 %175
    %vm177 = vcmask 654912
    %178 = vst.msk [vmem:[#allocation0] ss:$8 sm:$0xf] %vm177, %v176
    %179 = vst.msk [vmem:[#allocation0] ss:$8 sm:$0xf0] %vm177, %v176
    %s180 = scalar_lea.vmem %s0, 8
    %s181 = smov 3
    %v182 = vld [vmem:[%s180] ss:$16 sm:%s181]
    %s183 = scalar_lea.vmem %s0, 8
    %s184 = smov 12
    %v185 = vld [vmem:[%s183] ss:$16 sm:%s184]
    %vm186 = vcmask 1043458
    %v187 = vsel %vm186, %v185, %v182
    %s188 = scalar_lea.vmem %s0, 8
    %s189 = smov 48
    %v190 = vld [vmem:[%s188] ss:$16 sm:%s189]
    %vm191 = vcmask 1045508
    %v192 = vsel %vm191, %v190, %v187
    %s193 = scalar_lea.vmem %s0, 8
    %s194 = smov 192
    %v195 = vld [vmem:[%s193] ss:$16 sm:%s194]
    %vm196 = vcmask 1047558
    %v197 = vsel %vm196, %v195, %v192
    %198 = vrot.lane.b32.xlu0 %v197, 64
    %v199 = vpop.permute.xlu0 %198
    %vm200 = vcmask 589312
    %201 = vst.msk [vmem:[#allocation0] ss:$8 sm:$0xf] %vm200, %v199
    %202 = vst.msk [vmem:[#allocation0] ss:$8 sm:$0xf0] %vm200, %v199
    %s203 = scalar_lea.vmem %s0, 7
    %s204 = smov 3
    %v205 = vld [vmem:[%s203] ss:$16 sm:%s204]
    %s206 = scalar_lea.vmem %s0, 7
    %s207 = smov 12
    %v208 = vld [vmem:[%s206] ss:$16 sm:%s207]
    %vm209 = vcmask 1043458
    %v210 = vsel %vm209, %v208, %v205
    %s211 = scalar_lea.vmem %s0, 7
    %s212 = smov 48
    %v213 = vld [vmem:[%s211] ss:$16 sm:%s212]
    %vm214 = vcmask 1045508
    %v215 = vsel %vm214, %v213, %v210
    %s216 = scalar_lea.vmem %s0, 7
    %s217 = smov 192
    %v218 = vld [vmem:[%s216] ss:$16 sm:%s217]
    %vm219 = vcmask 1047558
    %v220 = vsel %vm219, %v218, %v215
    %221 = vrot.lane.b32.xlu0 %v220, 56
    %v222 = vpop.permute.xlu0 %221
    %vm223 = vcmask 523712
    %224 = vst.msk [vmem:[#allocation0] ss:$8 sm:$0xf] %vm223, %v222
    %225 = vst.msk [vmem:[#allocation0] ss:$8 sm:$0xf0] %vm223, %v222
    %s226 = scalar_lea.vmem %s0, 6
    %s227 = smov 3
    %v228 = vld [vmem:[%s226] ss:$16 sm:%s227]
    %s229 = scalar_lea.vmem %s0, 6
    %s230 = smov 12
    %v231 = vld [vmem:[%s229] ss:$16 sm:%s230]
    %vm232 = vcmask 1043458
    %v233 = vsel %vm232, %v231, %v228
    %s234 = scalar_lea.vmem %s0, 6
    %s235 = smov 48
    %v236 = vld [vmem:[%s234] ss:$16 sm:%s235]
    %vm237 = vcmask 1045508
    %v238 = vsel %vm237, %v236, %v233
    %s239 = scalar_lea.vmem %s0, 6
    %s240 = smov 192
    %v241 = vld [vmem:[%s239] ss:$16 sm:%s240]
    %vm242 = vcmask 1047558
    %v243 = vsel %vm242, %v241, %v238
    %244 = vrot.lane.b32.xlu0 %v243, 48
    %v245 = vpop.permute.xlu0 %244
    %vm246 = vcmask 458112
    %247 = vst.msk [vmem:[#allocation0] ss:$8 sm:$0xf] %vm246, %v245
    %248 = vst.msk [vmem:[#allocation0] ss:$8 sm:$0xf0] %vm246, %v245
    %s249 = scalar_lea.vmem %s0, 5
    %s250 = smov 3
    %v251 = vld [vmem:[%s249] ss:$16 sm:%s250]
    %s252 = scalar_lea.vmem %s0, 5
    %s253 = smov 12
    %v254 = vld [vmem:[%s252] ss:$16 sm:%s253]
    %vm255 = vcmask 1043458
    %v256 = vsel %vm255, %v254, %v251
    %s257 = scalar_lea.vmem %s0, 5
    %s258 = smov 48
    %v259 = vld [vmem:[%s257] ss:$16 sm:%s258]
    %vm260 = vcmask 1045508
    %v261 = vsel %vm260, %v259, %v256
    %s262 = scalar_lea.vmem %s0, 5
    %s263 = smov 192
    %v264 = vld [vmem:[%s262] ss:$16 sm:%s263]
    %vm265 = vcmask 1047558
    %v266 = vsel %vm265, %v264, %v261
    %267 = vrot.lane.b32.xlu0 %v266, 40
    %v268 = vpop.permute.xlu0 %267
    %vm269 = vcmask 392512
    %270 = vst.msk [vmem:[#allocation0] ss:$8 sm:$0xf] %vm269, %v268
    %271 = vst.msk [vmem:[#allocation0] ss:$8 sm:$0xf0] %vm269, %v268
    %s272 = scalar_lea.vmem %s0, 4
    %s273 = smov 3
    %v274 = vld [vmem:[%s272] ss:$16 sm:%s273]
    %s275 = scalar_lea.vmem %s0, 4
    %s276 = smov 12
    %v277 = vld [vmem:[%s275] ss:$16 sm:%s276]
    %vm278 = vcmask 1043458
    %v279 = vsel %vm278, %v277, %v274
    %s280 = scalar_lea.vmem %s0, 4
    %s281 = smov 48
    %v282 = vld [vmem:[%s280] ss:$16 sm:%s281]
    %vm283 = vcmask 1045508
    %v284 = vsel %vm283, %v282, %v279
    %s285 = scalar_lea.vmem %s0, 4
    %s286 = smov 192
    %v287 = vld [vmem:[%s285] ss:$16 sm:%s286]
    %vm288 = vcmask 1047558
    %v289 = vsel %vm288, %v287, %v284
    %290 = vrot.lane.b32.xlu0 %v289, 32
    %v291 = vpop.permute.xlu0 %290
    %vm292 = vcmask 326912
    %293 = vst.msk [vmem:[#allocation0] ss:$8 sm:$0xf] %vm292, %v291
    %294 = vst.msk [vmem:[#allocation0] ss:$8 sm:$0xf0] %vm292, %v291
    %s295 = scalar_lea.vmem %s0, 3
    %s296 = smov 3
    %v297 = vld [vmem:[%s295] ss:$16 sm:%s296]
    %s298 = scalar_lea.vmem %s0, 3
    %s299 = smov 12
    %v300 = vld [vmem:[%s298] ss:$16 sm:%s299]
    %vm301 = vcmask 1043458
    %v302 = vsel %vm301, %v300, %v297
    %s303 = scalar_lea.vmem %s0, 3
    %s304 = smov 48
    %v305 = vld [vmem:[%s303] ss:$16 sm:%s304]
    %vm306 = vcmask 1045508
    %v307 = vsel %vm306, %v305, %v302
    %s308 = scalar_lea.vmem %s0, 3
    %s309 = smov 192
    %v310 = vld [vmem:[%s308] ss:$16 sm:%s309]
    %vm311 = vcmask 1047558
    %v312 = vsel %vm311, %v310, %v307
    %313 = vrot.lane.b32.xlu0 %v312, 24
    %v314 = vpop.permute.xlu0 %313
    %vm315 = vcmask 261312
    %316 = vst.msk [vmem:[#allocation0] ss:$8 sm:$0xf] %vm315, %v314
    %317 = vst.msk [vmem:[#allocation0] ss:$8 sm:$0xf0] %vm315, %v314
    %s318 = scalar_lea.vmem %s0, 2
    %s319 = smov 3
    %v320 = vld [vmem:[%s318] ss:$16 sm:%s319]
    %s321 = scalar_lea.vmem %s0, 2
    %s322 = smov 12
    %v323 = vld [vmem:[%s321] ss:$16 sm:%s322]
    %vm324 = vcmask 1043458
    %v325 = vsel %vm324, %v323, %v320
    %s326 = scalar_lea.vmem %s0, 2
    %s327 = smov 48
    %v328 = vld [vmem:[%s326] ss:$16 sm:%s327]
    %vm329 = vcmask 1045508
    %v330 = vsel %vm329, %v328, %v325
    %s331 = scalar_lea.vmem %s0, 2
    %s332 = smov 192
    %v333 = vld [vmem:[%s331] ss:$16 sm:%s332]
    %vm334 = vcmask 1047558
    %v335 = vsel %vm334, %v333, %v330
    %336 = vrot.lane.b32.xlu0 %v335, 16
    %v337 = vpop.permute.xlu0 %336
    %vm338 = vcmask 195712
    %339 = vst.msk [vmem:[#allocation0] ss:$8 sm:$0xf] %vm338, %v337
    %340 = vst.msk [vmem:[#allocation0] ss:$8 sm:$0xf0] %vm338, %v337
    %s341 = scalar_lea.vmem %s0, 1
    %s342 = smov 3
    %v343 = vld [vmem:[%s341] ss:$16 sm:%s342]
    %s344 = scalar_lea.vmem %s0, 1
    %s345 = smov 12
    %v346 = vld [vmem:[%s344] ss:$16 sm:%s345]
    %vm347 = vcmask 1043458
    %v348 = vsel %vm347, %v346, %v343
    %s349 = scalar_lea.vmem %s0, 1
    %s350 = smov 48
    %v351 = vld [vmem:[%s349] ss:$16 sm:%s350]
    %vm352 = vcmask 1045508
    %v353 = vsel %vm352, %v351, %v348
    %s354 = scalar_lea.vmem %s0, 1
    %s355 = smov 192
    %v356 = vld [vmem:[%s354] ss:$16 sm:%s355]
    %vm357 = vcmask 1047558
    %v358 = vsel %vm357, %v356, %v353
    %359 = vrot.lane.b32.xlu0 %v358, 8
    %v360 = vpop.permute.xlu0 %359
    %vm361 = vcmask 130112
    %362 = vst.msk [vmem:[#allocation0] ss:$8 sm:$0xf] %vm361, %v360
    %363 = vst.msk [vmem:[#allocation0] ss:$8 sm:$0xf0] %vm361, %v360
    %s365 = sshll.u32 1, 1
    %s366 = ssub.s32 %s365, 1
    %v368 = vld [vmem:[#allocation0] sm:%s366]
    %s369 = sshll.u32 1, 1
    %s370 = ssub.s32 %s369, 1
    %371 = vst [vmem:[%s1] sm:%s370] %v368
    %s372 = scalar_lea.vmem [#allocation0], 8
    %v373 = vld [vmem:[%s372] sm:%s366]
    %s374 = sshll.u32 1, 1
    %s375 = ssub.s32 %s374, 1
    %s376 = scalar_lea.vmem %s1, 1
    %377 = vst [vmem:[%s376] sm:%s375] %v373
    %s378 = scalar_lea.vmem [#allocation0], 16
    %v379 = vld [vmem:[%s378] sm:%s366]
    %s380 = sshll.u32 1, 1
    %s381 = ssub.s32 %s380, 1
    %s382 = smul.addr 1, 2
    %s383 = scalar_lea.vmem %s1, %s382
    %384 = vst [vmem:[%s383] sm:%s381] %v379
    %s385 = scalar_lea.vmem [#allocation0], 24
    %v386 = vld [vmem:[%s385] sm:%s366]
    %s387 = sshll.u32 1, 1
    %s388 = ssub.s32 %s387, 1
    %s389 = smul.addr 1, 3
    %s390 = scalar_lea.vmem %s1, %s389
    %391 = vst [vmem:[%s390] sm:%s388] %v386
    %s392 = scalar_lea.vmem [#allocation0], 32
    %v393 = vld [vmem:[%s392] sm:%s366]
    %s394 = sshll.u32 1, 1
    %s395 = ssub.s32 %s394, 1
    %s396 = smul.addr 1, 4
    %s397 = scalar_lea.vmem %s1, %s396
    %398 = vst [vmem:[%s397] sm:%s395] %v393
    %s399 = scalar_lea.vmem [#allocation0], 40
    %v400 = vld [vmem:[%s399] sm:%s366]
    %s401 = sshll.u32 1, 1
    %s402 = ssub.s32 %s401, 1
    %s403 = smul.addr 1, 5
    %s404 = scalar_lea.vmem %s1, %s403
    %405 = vst [vmem:[%s404] sm:%s402] %v400
    %s406 = scalar_lea.vmem [#allocation0], 48
    %v407 = vld [vmem:[%s406] sm:%s366]
    %s408 = sshll.u32 1, 1
    %s409 = ssub.s32 %s408, 1
    %s410 = smul.addr 1, 6
    %s411 = scalar_lea.vmem %s1, %s410
    %412 = vst [vmem:[%s411] sm:%s409] %v407
    %s413 = scalar_lea.vmem [#allocation0], 56
    %v414 = vld [vmem:[%s413] sm:%s366]
    %s415 = sshll.u32 1, 1
    %s416 = ssub.s32 %s415, 1
    %s417 = smul.addr 1, 7
    %s418 = scalar_lea.vmem %s1, %s417
    %419 = vst [vmem:[%s418] sm:%s416] %v414

// kernel: generator_forward.21
$region0: #{generator_forward.21}
  #allocation0 [shape = 'u32[]', space=smem, size = 0x4, offset = 0x4, fixed_abs, tag = 'smem constant byte address 0x4 - core index']
  #allocation1 [shape = 'u32[144,128]{1,0:T(1,128)}', space=vmem, size = 0x12000, scoped, tag = 'internal scratch']
  %s0 = inlined_call_operand.vmem [shape: bf16[8,1024], index: 0, kind: input, shape index: {}]
  %s1 = inlined_call_operand.vmem [shape: f32[1,1024], index: 1, kind: input, shape index: {}]
  %s2 = inlined_call_operand.vmem [shape: f32[1,1024], index: 2, kind: input, shape index: {}]
  %s3 = inlined_call_operand.vmem [shape: bf16[8,1024], index: 3, kind: output, shape index: {}]
  %s4 = sld [smem:[#allocation0]]
  $region22: #{generator_forward.21} parent=0
    _
  %s6 = ssub.s32 1, %s4
  %s7 = scalar_select 0, %s6, %s4
  // Predicated region
  $region2: #{generator_forward.21} parent=0 // pred_check
    _
  $region3: #{generator_forward.21} parent=0 // pred_check_branch
    %9 = sbr.rel (0) target = $region5
  $region4: #{generator_forward.21} parent=0 // pred_region
    _
  $region5: #{generator_forward.21} parent=0 // pred_fallthru
    _
  // Predicated region
  $region6: #{generator_forward.21} parent=0 // pred_check
    _
  $region7: #{generator_forward.21} parent=0 // pred_check_branch
    %11 = sbr.rel (0) target = $region9
  $region8: #{generator_forward.21} parent=0 // pred_region
    _
  $region9: #{generator_forward.21} parent=0 // pred_fallthru
    _
  // Predicated region
  $region10: #{generator_forward.21} parent=0 // pred_check
    _
  $region11: #{generator_forward.21} parent=0 // pred_check_branch
    %13 = sbr.rel (0) target = $region13
  $region12: #{generator_forward.21} parent=0 // pred_region
    _
  $region13: #{generator_forward.21} parent=0 // pred_fallthru
    _
  %v14 = vld [vmem:[%s0] sm:$0xff]
  %v15 = vld [vmem:[%s0 + $0x8] sm:$0xff]
  %v16 = vld [vmem:[%s0 + $0x10] sm:$0xff]
  %v17 = vld [vmem:[%s0 + $0x18] sm:$0xff]
  %v18 = vunpack.c.l.bf16 %v14
  %v19 = vunpack.c.h.bf16 %v14
  %v20 = vunpack.c.l.bf16 %v15
  %v21 = vunpack.c.h.bf16 %v15
  %v22 = vunpack.c.l.bf16 %v16
  %v23 = vunpack.c.h.bf16 %v16
  %v24 = vunpack.c.l.bf16 %v17
  %v25 = vunpack.c.h.bf16 %v17
  %v26 = vld [vmem:[%s1] sm:$0xff]
  %v28 = vlaneseq
  %v29 = vshrl.u32 %v28, 7
  %v30 = vsub.s32 0, %v29
  %v31 = vrot.slane %v26, %v30
  %v32 = vlaneseq
  %v33 = vshrl.u32 %v32, 7
  %v34 = vsub.s32 1, %v33
  %v35 = vrot.slane %v26, %v34
  %v36 = vlaneseq
  %v37 = vshrl.u32 %v36, 7
  %v38 = vsub.s32 2, %v37
  %v39 = vrot.slane %v26, %v38
  %v40 = vlaneseq
  %v41 = vshrl.u32 %v40, 7
  %v42 = vsub.s32 3, %v41
  %v43 = vrot.slane %v26, %v42
  %v44 = vlaneseq
  %v45 = vshrl.u32 %v44, 7
  %v46 = vsub.s32 4, %v45
  %v47 = vrot.slane %v26, %v46
  %v48 = vlaneseq
  %v49 = vshrl.u32 %v48, 7
  %v50 = vsub.s32 5, %v49
  %v51 = vrot.slane %v26, %v50
  %v52 = vlaneseq
  %v53 = vshrl.u32 %v52, 7
  %v54 = vsub.s32 6, %v53
  %v55 = vrot.slane %v26, %v54
  %v56 = vlaneseq
  %v57 = vshrl.u32 %v56, 7
  %v58 = vsub.s32 7, %v57
  %v59 = vrot.slane %v26, %v58
  %v68 = vmul.f32 %v18, %v31
  %v69 = vmul.f32 %v19, %v35
  %v70 = vmul.f32 %v20, %v39
  %v71 = vmul.f32 %v21, %v43
  %v72 = vmul.f32 %v22, %v47
  %v73 = vmul.f32 %v23, %v51
  %v74 = vmul.f32 %v24, %v55
  %v75 = vmul.f32 %v25, %v59
  %v76 = vld [vmem:[%s2] sm:$0xff]
  %v78 = vlaneseq
  %v79 = vshrl.u32 %v78, 7
  %v80 = vsub.s32 0, %v79
  %v81 = vrot.slane %v76, %v80
  %v82 = vlaneseq
  %v83 = vshrl.u32 %v82, 7
  %v84 = vsub.s32 1, %v83
  %v85 = vrot.slane %v76, %v84
  %v86 = vlaneseq
  %v87 = vshrl.u32 %v86, 7
  %v88 = vsub.s32 2, %v87
  %v89 = vrot.slane %v76, %v88
  %v90 = vlaneseq
  %v91 = vshrl.u32 %v90, 7
  %v92 = vsub.s32 3, %v91
  %v93 = vrot.slane %v76, %v92
  %v94 = vlaneseq
  %v95 = vshrl.u32 %v94, 7
  %v96 = vsub.s32 4, %v95
  %v97 = vrot.slane %v76, %v96
  %v98 = vlaneseq
  %v99 = vshrl.u32 %v98, 7
  %v100 = vsub.s32 5, %v99
  %v101 = vrot.slane %v76, %v100
  %v102 = vlaneseq
  %v103 = vshrl.u32 %v102, 7
  %v104 = vsub.s32 6, %v103
  %v105 = vrot.slane %v76, %v104
  %v106 = vlaneseq
  %v107 = vshrl.u32 %v106, 7
  %v108 = vsub.s32 7, %v107
  %v109 = vrot.slane %v76, %v108
  %v118 = vadd.f32 %v68, %v81
  %v119 = vadd.f32 %v69, %v85
  %v120 = vadd.f32 %v70, %v89
  %v121 = vadd.f32 %v71, %v93
  %v122 = vadd.f32 %v72, %v97
  %v123 = vadd.f32 %v73, %v101
  %v124 = vadd.f32 %v74, %v105
  %v125 = vadd.f32 %v75, %v109
  %vm126 = vcmp.ge.f32.partialorder %v118, 0.0
  %vm127 = vcmp.ge.f32.partialorder %v119, 0.0
  %vm128 = vcmp.ge.f32.partialorder %v120, 0.0
  %vm129 = vcmp.ge.f32.partialorder %v121, 0.0
  %vm130 = vcmp.ge.f32.partialorder %v122, 0.0
  %vm131 = vcmp.ge.f32.partialorder %v123, 0.0
  %vm132 = vcmp.ge.f32.partialorder %v124, 0.0
  %vm133 = vcmp.ge.f32.partialorder %v125, 0.0
  %v134 = vmul.f32 %v118, 0.2
  %v135 = vmul.f32 %v119, 0.2
  %v136 = vmul.f32 %v120, 0.2
  %v137 = vmul.f32 %v121, 0.2
  %v138 = vmul.f32 %v122, 0.2
  %v139 = vmul.f32 %v123, 0.2
  %v140 = vmul.f32 %v124, 0.2
  %v141 = vmul.f32 %v125, 0.2
  %v142 = vsel %vm126, %v118, %v134
  %v143 = vsel %vm127, %v119, %v135
  %v144 = vsel %vm128, %v120, %v136
  %v145 = vsel %vm129, %v121, %v137
  %v146 = vsel %vm130, %v122, %v138
  %v147 = vsel %vm131, %v123, %v139
  %v148 = vsel %vm132, %v124, %v140
  %v149 = vsel %vm133, %v125, %v141
  %v150 = vpack.c.bf16 %v142, %v142
  %v151 = vpack.c.bf16 %v143, %v143
  %v152 = vpack.c.bf16 %v144, %v144
  %v153 = vpack.c.bf16 %v145, %v145
  %v154 = vpack.c.bf16 %v146, %v146
  %v155 = vpack.c.bf16 %v147, %v147
  %v156 = vpack.c.bf16 %v148, %v148
  %v157 = vpack.c.bf16 %v149, %v149
  %v166 = vunpack.c.l.b16 %v150
  %v167 = vunpack.c.l.b16 %v151
  %v168 = vunpack.c.l.b16 %v152
  %v169 = vunpack.c.l.b16 %v153
  %v170 = vunpack.c.l.b16 %v154
  %v171 = vunpack.c.l.b16 %v155
  %v172 = vunpack.c.l.b16 %v156
  %v173 = vunpack.c.l.b16 %v157
  %v174 = vpack.c.b16 %v167, %v166
  %v175 = vpack.c.b16 %v169, %v168
  %v176 = vpack.c.b16 %v171, %v170
  %v177 = vpack.c.b16 %v173, %v172
  %182 = vst [vmem:[%s3] sm:$0xff] %v174
  %183 = vst [vmem:[%s3 + $0x8] sm:$0xff] %v175
  %184 = vst [vmem:[%s3 + $0x10] sm:$0xff] %v176
  %185 = vst [vmem:[%s3 + $0x18] sm:$0xff] %v177
  // Predicated region
  $region14: #{generator_forward.21} parent=0 // pred_check
    _
  $region15: #{generator_forward.21} parent=0 // pred_check_branch
    %187 = sbr.rel (0) target = $region17
  $region16: #{generator_forward.21} parent=0 // pred_region
    _
  $region17: #{generator_forward.21} parent=0 // pred_fallthru
    _
  // Predicated region
  $region18: #{generator_forward.21} parent=0 // pred_check
    _
  $region19: #{generator_forward.21} parent=0 // pred_check_branch
    %189 = sbr.rel (0) target = $region21
  $region20: #{generator_forward.21} parent=0 // pred_region
    _
  $region21: #{generator_forward.21} parent=0 // pred_fallthru
    _

// kernel: generator_forward.20
$region0: #{generator_forward.20}
  #allocation0 [shape = 'u32[]', space=smem, size = 0x4, offset = 0x4, fixed_abs, tag = 'smem constant byte address 0x4 - core index']
  #allocation1 [shape = 'u32[144,128]{1,0:T(1,128)}', space=vmem, size = 0x12000, scoped, tag = 'internal scratch']
  %s0 = inlined_call_operand.vmem [shape: bf16[512,48], index: 0, kind: input, shape index: {}]
  %s1 = inlined_call_operand.vmem [shape: bf16[48,8], index: 1, kind: input, shape index: {}]
  %s2 = inlined_call_operand.vmem [shape: bf16[512,8], index: 2, kind: output, shape index: {0}]
  %s3 = inlined_call_operand.vmem [shape: f32[16,8], index: 3, kind: output, shape index: {1}]
  %s4 = inlined_call_operand.vmem [shape: f32[16,8], index: 4, kind: output, shape index: {2}]
  %5 = xla_tuple %s2, %s3, %s4
  %s6 = sld [smem:[#allocation0]]
  $region57: #{generator_forward.20} parent=0
    _
  %s8 = ssub.s32 1, %s6
  %s9 = scalar_select 0, %s8, %s6
  loop: start=0, step=1, limit=4
  $region2: #{generator_forward.20} parent=0 // loop_pre_header
    _
  $region3: #{generator_forward.20} parent=0 // loop_header
    %s11 = sphi 0, %s15
    %p12 = scmp.ge.s32.totalorder %s11, 4
    %s21 = sphi 0, %s23
    %s24 = sphi 0, %s21
    %s25 = sphi 0, %s24
    %s41 = sphi 0, %s25
    %s45 = sphi 0, %s45
    %s47 = sphi 0, %s45
    %s48 = sphi 0, %s47
    %s62 = sphi 0, %s48
    %s68 = sphi 0, %s70
    %s71 = sphi 0, %s68
    %s72 = sphi 0, %s71
    %s88 = sphi 0, %s72
    %s94 = sphi 0, %s96
    %s97 = sphi 0, %s94
    %s98 = sphi 0, %s97
    %s114 = sphi 0, %s98
    %s120 = sphi 0, %s122
    %s123 = sphi 0, %s120
    %s124 = sphi 0, %s123
    %s140 = sphi 0, %s124
  $region4: #{generator_forward.20} parent=0 // loop_header_branch
    %14 = sbr.rel (%p12) target = $region8
  $region5: #{generator_forward.20} parent=0 // loop_body
    %s16 = ssub.s32 %s11, 1
    %s17 = ssub.s32 %s11, 2
    %s18 = sadd.s32 %s11, 1
    %s19 = ssub.s32 %s11, %s18
    %p20 = scmp.eq.s32.totalorder %s19, 0
    %s22 = sadd.s32 %s21, 1
    %s23 = scalar_select %p20, %s21, %s22
    %p26 = pneg %p20
    %p27 = scmp.eq.s32.totalorder %s11, 1
    %p28 = por %p26, %p27
    %p29 = scmp.ne.s32.totalorder %s21, %s24
    %p30 = scmp.eq.s32.totalorder %s11, 0
    %p31 = por %p29, %p30
    %p32 = scmp.ne.s32.totalorder %s21, %s24
    %p33 = scmp.eq.s32.totalorder %s16, 1
    %p34 = por %p32, %p33
    %p35 = scmp.ne.s32.totalorder %s24, %s25
    %p36 = scmp.eq.s32.totalorder %s16, 0
    %p37 = por %p35, %p36
    %p38 = scmp.ne.s32.totalorder %s24, %s25
    %p39 = scmp.eq.s32.totalorder %s17, 1
    %p40 = por %p38, %p39
    %p42 = scmp.ne.s32.totalorder %s25, %s41
    %p43 = scmp.eq.s32.totalorder %s17, 0
    %p44 = por %p42, %p43
    %s46 = sadd.s32 %s45, 1
    %p49 = scmp.eq.s32.totalorder %s11, 1
    %p50 = scmp.ne.s32.totalorder %s45, %s47
    %p51 = scmp.eq.s32.totalorder %s11, 0
    %p52 = por %p50, %p51
    %p53 = scmp.ne.s32.totalorder %s45, %s47
    %p54 = scmp.eq.s32.totalorder %s16, 1
    %p55 = por %p53, %p54
    %p56 = scmp.ne.s32.totalorder %s47, %s48
    %p57 = scmp.eq.s32.totalorder %s16, 0
    %p58 = por %p56, %p57
    %p59 = scmp.ne.s32.totalorder %s47, %s48
    %p60 = scmp.eq.s32.totalorder %s17, 1
    %p61 = por %p59, %p60
    %p63 = scmp.ne.s32.totalorder %s48, %s62
    %p64 = scmp.eq.s32.totalorder %s17, 0
    %p65 = por %p63, %p64
    %s66 = ssub.s32 %s11, %s18
    %p67 = scmp.eq.s32.totalorder %s66, 0
    %s69 = sadd.s32 %s68, 1
    %s70 = scalar_select %p67, %s68, %s69
    %p73 = pneg %p67
    %p74 = scmp.eq.s32.totalorder %s11, 1
    %p75 = por %p73, %p74
    %p76 = scmp.ne.s32.totalorder %s68, %s71
    %p77 = scmp.eq.s32.totalorder %s11, 0
    %p78 = por %p76, %p77
    %p79 = scmp.ne.s32.totalorder %s68, %s71
    %p80 = scmp.eq.s32.totalorder %s16, 1
    %p81 = por %p79, %p80
    %p82 = scmp.ne.s32.totalorder %s71, %s72
    %p83 = scmp.eq.s32.totalorder %s16, 0
    %p84 = por %p82, %p83
    %p85 = scmp.ne.s32.totalorder %s71, %s72
    %p86 = scmp.eq.s32.totalorder %s17, 1
    %p87 = por %p85, %p86
    %p89 = scmp.ne.s32.totalorder %s72, %s88
    %p90 = scmp.eq.s32.totalorder %s17, 0
    %p91 = por %p89, %p90
    %s92 = ssub.s32 %s11, %s18
    %p93 = scmp.eq.s32.totalorder %s92, 0
    %s95 = sadd.s32 %s94, 1
    %s96 = scalar_select %p93, %s94, %s95
    %p99 = pneg %p93
    %p100 = scmp.eq.s32.totalorder %s11, 1
    %p101 = por %p99, %p100
    %p102 = scmp.ne.s32.totalorder %s94, %s97
    %p103 = scmp.eq.s32.totalorder %s11, 0
    %p104 = por %p102, %p103
    %p105 = scmp.ne.s32.totalorder %s94, %s97
    %p106 = scmp.eq.s32.totalorder %s16, 1
    %p107 = por %p105, %p106
    %p108 = scmp.ne.s32.totalorder %s97, %s98
    %p109 = scmp.eq.s32.totalorder %s16, 0
    %p110 = por %p108, %p109
    %p111 = scmp.ne.s32.totalorder %s97, %s98
    %p112 = scmp.eq.s32.totalorder %s17, 1
    %p113 = por %p111, %p112
    %p115 = scmp.ne.s32.totalorder %s98, %s114
    %p116 = scmp.eq.s32.totalorder %s17, 0
    %p117 = por %p115, %p116
    %s118 = ssub.s32 %s11, %s18
    %p119 = scmp.eq.s32.totalorder %s118, 0
    %s121 = sadd.s32 %s120, 1
    %s122 = scalar_select %p119, %s120, %s121
    %p125 = pneg %p119
    %p126 = scmp.eq.s32.totalorder %s11, 1
    %p127 = por %p125, %p126
    %p128 = scmp.ne.s32.totalorder %s120, %s123
    %p129 = scmp.eq.s32.totalorder %s11, 0
    %p130 = por %p128, %p129
    %p131 = scmp.ne.s32.totalorder %s120, %s123
    %p132 = scmp.eq.s32.totalorder %s16, 1
    %p133 = por %p131, %p132
    %p134 = scmp.ne.s32.totalorder %s123, %s124
    %p135 = scmp.eq.s32.totalorder %s16, 0
    %p136 = por %p134, %p135
    %p137 = scmp.ne.s32.totalorder %s123, %s124
    %p138 = scmp.eq.s32.totalorder %s17, 1
    %p139 = por %p137, %p138
    %p141 = scmp.ne.s32.totalorder %s124, %s140
    %p142 = scmp.eq.s32.totalorder %s17, 0
    %p143 = por %p141, %p142
    %p144 = scmp.le.s32.totalorder 1, %s11
    %p145 = scmp.lt.s32.totalorder %s11, 3
    %p146 = pnand %p144, %p145
    %p147 = pneg %p146
    // Predicated region
    $region9: #{generator_forward.20} parent=5 // pred_check
      _
    $region10: #{generator_forward.20} parent=5 // pred_check_branch
      %149 = sbr.rel (%p146) target = $region12
    $region11: #{generator_forward.20} parent=5 // pred_region
      %s150 = ssub.s32 %s11, 1
      // Predicated region
      $region13: #{generator_forward.20} parent=11 // pred_check
        %p151 = pneg %p58
      $region14: #{generator_forward.20} parent=11 // pred_check_branch
        %153 = sbr.rel (%p151) target = $region16
      $region15: #{generator_forward.20} parent=11 // pred_region
        _
      $region16: #{generator_forward.20} parent=11 // pred_fallthru
        _
    $region12: #{generator_forward.20} parent=5 // pred_fallthru
      _
    %p154 = scmp.lt.s32.totalorder %s11, 2
    // Predicated region
    $region17: #{generator_forward.20} parent=5 // pred_check
      %p155 = pneg %p154
    $region18: #{generator_forward.20} parent=5 // pred_check_branch
      %157 = sbr.rel (%p155) target = $region20
    $region19: #{generator_forward.20} parent=5 // pred_region
      // Predicated region
      $region21: #{generator_forward.20} parent=19 // pred_check
        %p158 = pneg %p31
      $region22: #{generator_forward.20} parent=19 // pred_check_branch
        %160 = sbr.rel (%p158) target = $region24
      $region23: #{generator_forward.20} parent=19 // pred_region
        %s161 = smul.u32 32, %s11
        %p162 = scmp.lt.s32.totalorder %s161, 63
        %s163 = scalar_select %p162, %s161, 63
        %s164 = smul.addr %s163, 4
        %s165 = scalar_lea.vmem %s0, %s164
        %s166 = smul.u32 32, %s11
      $region24: #{generator_forward.20} parent=19 // pred_fallthru
        _
    $region20: #{generator_forward.20} parent=5 // pred_fallthru
      _
    %p167 = scmp.le.s32.totalorder 1, %s11
    %p168 = scmp.lt.s32.totalorder %s11, 3
    %p169 = pnand %p167, %p168
    %p170 = pneg %p169
    // Predicated region
    $region25: #{generator_forward.20} parent=5 // pred_check
      _
    $region26: #{generator_forward.20} parent=5 // pred_check_branch
      %172 = sbr.rel (%p169) target = $region28
    $region27: #{generator_forward.20} parent=5 // pred_region
      %s173 = ssub.s32 %s11, 1
      %s174 = smul.u32 32, %s16
      %p175 = scmp.lt.s32.totalorder %s174, 63
      %s176 = scalar_select %p175, %s174, 63
      %s177 = smul.addr %s176, 4
      %s178 = scalar_lea.vmem %s0, %s177
      %p179 = pneg %p37
      %p180 = pneg %p34
      %p181 = pneg %p58
      %p182 = pneg %p55
      %p183 = pneg %p84
      %p184 = pneg %p81
      %s185 = smul.u32 32, %s16
      %p186 = scmp.lt.s32.totalorder %s185, 63
      %s187 = scalar_select %p186, %s185, 63
      %s188 = smul.addr %s187, 4
      %s189 = scalar_lea.vmem %s2, %s188
      %p190 = pneg %p110
      %p191 = pneg %p107
      %p192 = scmp.lt.s32.totalorder %s16, 1
      %s193 = scalar_select %p192, %s16, 1
      %s194 = smul.addr %s193, 8
      %s195 = scalar_lea.vmem %s3, %s194
      %p196 = pneg %p136
      %p197 = pneg %p133
      %p198 = scmp.lt.s32.totalorder %s16, 1
      %s199 = scalar_select %p198, %s16, 1
      %s200 = smul.addr %s199, 8
      %s201 = scalar_lea.vmem %s4, %s200
      %s202 = smul.u32 32, %s16
      %p203 = scmp.lt.s32.totalorder %s202, 63
      %s204 = scalar_select %p203, %s202, 63
      %s205 = smul.addr %s204, 4
      %s206 = scalar_lea.vmem %s0, %s205
      %s207 = smul.u32 32, %s16
      %s208 = smul.u32 32, %s16
      %p209 = scmp.lt.s32.totalorder %s208, 63
      %s210 = scalar_select %p209, %s208, 63
      %s211 = smul.addr %s210, 4
      %s212 = scalar_lea.vmem %s2, %s211
      %s213 = smul.u32 32, %s16
      %p214 = scmp.lt.s32.totalorder %s16, 1
      %s215 = scalar_select %p214, %s16, 1
      %s216 = smul.addr %s215, 8
      %s217 = scalar_lea.vmem %s3, %s216
      %p218 = scmp.lt.s32.totalorder %s16, 1
      %s219 = scalar_select %p218, %s16, 1
      %s220 = smul.addr %s219, 8
      %s221 = scalar_lea.vmem %s4, %s220
      %v223 = vld [vmem:[%s206] sm:$0xf]
      %v224 = vld [vmem:[%s206 + $0x4] sm:$0xf]
      %v225 = vld [vmem:[%s206 + $0x8] sm:$0xf]
      %v226 = vld [vmem:[%s206 + $0xc] sm:$0xf]
      %v227 = vld [vmem:[%s206 + $0x10] sm:$0xf]
      %v228 = vld [vmem:[%s206 + $0x14] sm:$0xf]
      %v229 = vld [vmem:[%s206 + $0x18] sm:$0xf]
      %v230 = vld [vmem:[%s206 + $0x1c] sm:$0xf]
      %v231 = vld [vmem:[%s206 + $0x20] sm:$0xf]
      %v232 = vld [vmem:[%s206 + $0x24] sm:$0xf]
      %v233 = vld [vmem:[%s206 + $0x28] sm:$0xf]
      %v234 = vld [vmem:[%s206 + $0x2c] sm:$0xf]
      %v235 = vld [vmem:[%s206 + $0x30] sm:$0xf]
      %v236 = vld [vmem:[%s206 + $0x34] sm:$0xf]
      %v237 = vld [vmem:[%s206 + $0x38] sm:$0xf]
      %v238 = vld [vmem:[%s206 + $0x3c] sm:$0xf]
      %v239 = vld [vmem:[%s206 + $0x40] sm:$0xf]
      %v240 = vld [vmem:[%s206 + $0x44] sm:$0xf]
      %v241 = vld [vmem:[%s206 + $0x48] sm:$0xf]
      %v242 = vld [vmem:[%s206 + $0x4c] sm:$0xf]
      %v243 = vld [vmem:[%s206 + $0x50] sm:$0xf]
      %v244 = vld [vmem:[%s206 + $0x54] sm:$0xf]
      %v245 = vld [vmem:[%s206 + $0x58] sm:$0xf]
      %v246 = vld [vmem:[%s206 + $0x5c] sm:$0xf]
      %v247 = vld [vmem:[%s206 + $0x60] sm:$0xf]
      %v248 = vld [vmem:[%s206 + $0x64] sm:$0xf]
      %v249 = vld [vmem:[%s206 + $0x68] sm:$0xf]
      %v250 = vld [vmem:[%s206 + $0x6c] sm:$0xf]
      %v251 = vld [vmem:[%s206 + $0x70] sm:$0xf]
      %v252 = vld [vmem:[%s206 + $0x74] sm:$0xf]
      %v253 = vld [vmem:[%s206 + $0x78] sm:$0xf]
      %v254 = vld [vmem:[%s206 + $0x7c] sm:$0xf]
      %v255 = vld [vmem:[%s1] sm:$0xf]
      %v256 = vld [vmem:[%s1 + $0x4] sm:$0xf]
      %v257 = vld [vmem:[%s1 + $0x8] sm:$0xf]
      %v258 = vld [vmem:[%s1 + $0xc] sm:$0xf]
      %v259 = vld [vmem:[%s1 + $0x10] sm:$0xf]
      %v260 = vld [vmem:[%s1 + $0x14] sm:$0xf]
      %v293 = vunpack.c.l.b16 %v223
      %v294 = vunpack.c.l.b16 %v224
      %v295 = vunpack.c.l.b16 %v225
      %v296 = vunpack.c.l.b16 %v226
      %v297 = vunpack.c.l.b16 %v227
      %v298 = vunpack.c.l.b16 %v228
      %v299 = vunpack.c.l.b16 %v229
      %v300 = vunpack.c.l.b16 %v230
      %v301 = vunpack.c.l.b16 %v231
      %v302 = vunpack.c.l.b16 %v232
      %v303 = vunpack.c.l.b16 %v233
      %v304 = vunpack.c.l.b16 %v234
      %v305 = vunpack.c.l.b16 %v235
      %v306 = vunpack.c.l.b16 %v236
      %v307 = vunpack.c.l.b16 %v237
      %v308 = vunpack.c.l.b16 %v238
      %v309 = vunpack.c.l.b16 %v239
      %v310 = vunpack.c.l.b16 %v240
      %v311 = vunpack.c.l.b16 %v241
      %v312 = vunpack.c.l.b16 %v242
      %v313 = vunpack.c.l.b16 %v243
      %v314 = vunpack.c.l.b16 %v244
      %v315 = vunpack.c.l.b16 %v245
      %v316 = vunpack.c.l.b16 %v246
      %v317 = vunpack.c.l.b16 %v247
      %v318 = vunpack.c.l.b16 %v248
      %v319 = vunpack.c.l.b16 %v249
      %v320 = vunpack.c.l.b16 %v250
      %v321 = vunpack.c.l.b16 %v251
      %v322 = vunpack.c.l.b16 %v252
      %v323 = vunpack.c.l.b16 %v253
      %v324 = vunpack.c.l.b16 %v254
      %v325 = vpack.c.b16 %v294, %v293
      %v326 = vpack.c.b16 %v296, %v295
      %v327 = vpack.c.b16 %v298, %v297
      %v328 = vpack.c.b16 %v300, %v299
      %v329 = vpack.c.b16 %v302, %v301
      %v330 = vpack.c.b16 %v304, %v303
      %v331 = vpack.c.b16 %v306, %v305
      %v332 = vpack.c.b16 %v308, %v307
      %v333 = vpack.c.b16 %v310, %v309
      %v334 = vpack.c.b16 %v312, %v311
      %v335 = vpack.c.b16 %v314, %v313
      %v336 = vpack.c.b16 %v316, %v315
      %v337 = vpack.c.b16 %v318, %v317
      %v338 = vpack.c.b16 %v320, %v319
      %v339 = vpack.c.b16 %v322, %v321
      %v340 = vpack.c.b16 %v324, %v323
      %v347 = vunpack.c.l.b16 %v255
      %v348 = vunpack.c.l.b16 %v256
      %v349 = vunpack.c.l.b16 %v257
      %v350 = vunpack.c.l.b16 %v258
      %v351 = vunpack.c.l.b16 %v259
      %v352 = vunpack.c.l.b16 %v260
      %v353 = vpack.c.b16 %v348, %v347
      %v354 = vpack.c.b16 %v350, %v349
      %v355 = vpack.c.b16 %v352, %v351
      %vm359 = vcmask 392192
      %v361 = vsel %vm359, %v325, 0
      %v364 = vsel %vm359, %v326, 0
      %v367 = vsel %vm359, %v327, 0
      %v370 = vsel %vm359, %v328, 0
      %v373 = vsel %vm359, %v329, 0
      %v376 = vsel %vm359, %v330, 0
      %v379 = vsel %vm359, %v331, 0
      %v382 = vsel %vm359, %v332, 0
      %v385 = vsel %vm359, %v333, 0
      %v388 = vsel %vm359, %v334, 0
      %v391 = vsel %vm359, %v335, 0
      %v394 = vsel %vm359, %v336, 0
      %v397 = vsel %vm359, %v337, 0
      %v400 = vsel %vm359, %v338, 0
      %v403 = vsel %vm359, %v339, 0
      %v406 = vsel %vm359, %v340, 0
      %408 = vmatprep.subr.bf16.mxu0 0
      %409 = vmatpush1.bf16.msra.mxu0 0
      %410 = vmatprep.subr.bf16.mxu0 0
      %411 = vmatpush1.bf16.msra.mxu0 0
      %412 = vmatprep.subr.bf16.mxu0 0
      %413 = vmatpush1.bf16.msra.mxu0 0
      %414 = vmatprep.subr.bf16.mxu0 0
      %415 = vmatpush1.bf16.msra.mxu0 0
      %416 = vmatprep.subr.bf16.mxu0 0
      %417 = vmatpush1.bf16.msra.mxu0 0
      %418 = vmatprep.subr.bf16.mxu0 0
      %419 = vmatpush1.bf16.msra.mxu0 %v355
      %420 = vmatprep.subr.bf16.mxu0 0
      %421 = vmatpush1.bf16.msra.mxu0 %v354
      %422 = vmatprep.subr.bf16.mxu0 0
      %423 = vmatpush1.bf16.msra.mxu0 %v353
      %424 = vmatprep.subr.bf16.mxu0 0
      %425 = vmatpush2.bf16.msra.mxu0 0
      %426 = vmatprep.subr.bf16.mxu0 0
      %427 = vmatpush2.bf16.msra.mxu0 0
      %428 = vmatprep.subr.bf16.mxu0 0
      %429 = vmatpush2.bf16.msra.mxu0 0
      %430 = vmatprep.subr.bf16.mxu0 0
      %431 = vmatpush2.bf16.msra.mxu0 0
      %432 = vmatprep.subr.bf16.mxu0 0
      %433 = vmatpush2.bf16.msra.mxu0 0
      %434 = vmatprep.subr.bf16.mxu0 0
      %435 = vmatpush2.bf16.msra.mxu0 0
      %436 = vmatprep.subr.bf16.mxu0 0
      %437 = vmatpush2.bf16.msra.mxu0 0
      %438 = vmatprep.subr.bf16.mxu0 0
      %439 = vmatpush2.bf16.msra.mxu0 0
      %440 = vmatprep.mubr.bf16.mxu0 0
      %441 = vmatmul.mubr.bf16.gmra.mxu0 %v361
      %v442 = vpop.f32.mrf.mxu0
      %v443 = vadd.f32 0.0, %v442
      %v444 = vpop.f32.mrf.mxu0
      %v445 = vpop.f32.mrf.mxu0
      %v446 = vadd.f32 0.0, %v445
      %v447 = vpop.f32.mrf.mxu0
      %448 = vmatprep.mubr.bf16.mxu0 0
      %449 = vmatmul.mubr.bf16.gmra.mxu0 %v364
      %v450 = vpop.f32.mrf.mxu0
      %v451 = vadd.f32 0.0, %v450
      %v452 = vpop.f32.mrf.mxu0
      %v453 = vpop.f32.mrf.mxu0
      %v454 = vadd.f32 0.0, %v453
      %v455 = vpop.f32.mrf.mxu0
      %456 = vmatprep.mubr.bf16.mxu0 0
      %457 = vmatmul.mubr.bf16.gmra.mxu0 %v367
      %v458 = vpop.f32.mrf.mxu0
      %v459 = vadd.f32 0.0, %v458
      %v460 = vpop.f32.mrf.mxu0
      %v461 = vpop.f32.mrf.mxu0
      %v462 = vadd.f32 0.0, %v461
      %v463 = vpop.f32.mrf.mxu0
      %464 = vmatprep.mubr.bf16.mxu0 0
      %465 = vmatmul.mubr.bf16.gmra.mxu0 %v370
      %v466 = vpop.f32.mrf.mxu0
      %v467 = vadd.f32 0.0, %v466
      %v468 = vpop.f32.mrf.mxu0
      %v469 = vpop.f32.mrf.mxu0
      %v470 = vadd.f32 0.0, %v469
      %v471 = vpop.f32.mrf.mxu0
      %472 = vmatprep.mubr.bf16.mxu0 0
      %473 = vmatmul.mubr.bf16.gmra.mxu0 %v373
      %v474 = vpop.f32.mrf.mxu0
      %v475 = vadd.f32 0.0, %v474
      %v476 = vpop.f32.mrf.mxu0
      %v477 = vpop.f32.mrf.mxu0
      %v478 = vadd.f32 0.0, %v477
      %v479 = vpop.f32.mrf.mxu0
      %480 = vmatprep.mubr.bf16.mxu0 0
      %481 = vmatmul.mubr.bf16.gmra.mxu0 %v376
      %v482 = vpop.f32.mrf.mxu0
      %v483 = vadd.f32 0.0, %v482
      %v484 = vpop.f32.mrf.mxu0
      %v485 = vpop.f32.mrf.mxu0
      %v486 = vadd.f32 0.0, %v485
      %v487 = vpop.f32.mrf.mxu0
      %488 = vmatprep.mubr.bf16.mxu0 0
      %489 = vmatmul.mubr.bf16.gmra.mxu0 %v379
      %v490 = vpop.f32.mrf.mxu0
      %v491 = vadd.f32 0.0, %v490
      %v492 = vpop.f32.mrf.mxu0
      %v493 = vpop.f32.mrf.mxu0
      %v494 = vadd.f32 0.0, %v493
      %v495 = vpop.f32.mrf.mxu0
      %496 = vmatprep.mubr.bf16.mxu0 0
      %497 = vmatmul.mubr.bf16.gmra.mxu0 %v382
      %v498 = vpop.f32.mrf.mxu0
      %v499 = vadd.f32 0.0, %v498
      %v500 = vpop.f32.mrf.mxu0
      %v501 = vpop.f32.mrf.mxu0
      %v502 = vadd.f32 0.0, %v501
      %v503 = vpop.f32.mrf.mxu0
      %504 = vmatprep.mubr.bf16.mxu0 0
      %505 = vmatmul.mubr.bf16.gmra.mxu0 %v385
      %v506 = vpop.f32.mrf.mxu0
      %v507 = vadd.f32 0.0, %v506
      %v508 = vpop.f32.mrf.mxu0
      %v509 = vpop.f32.mrf.mxu0
      %v510 = vadd.f32 0.0, %v509
      %v511 = vpop.f32.mrf.mxu0
      %512 = vmatprep.mubr.bf16.mxu0 0
      %513 = vmatmul.mubr.bf16.gmra.mxu0 %v388
      %v514 = vpop.f32.mrf.mxu0
      %v515 = vadd.f32 0.0, %v514
      %v516 = vpop.f32.mrf.mxu0
      %v517 = vpop.f32.mrf.mxu0
      %v518 = vadd.f32 0.0, %v517
      %v519 = vpop.f32.mrf.mxu0
      %520 = vmatprep.mubr.bf16.mxu0 0
      %521 = vmatmul.mubr.bf16.gmra.mxu0 %v391
      %v522 = vpop.f32.mrf.mxu0
      %v523 = vadd.f32 0.0, %v522
      %v524 = vpop.f32.mrf.mxu0
      %v525 = vpop.f32.mrf.mxu0
      %v526 = vadd.f32 0.0, %v525
      %v527 = vpop.f32.mrf.mxu0
      %528 = vmatprep.mubr.bf16.mxu0 0
      %529 = vmatmul.mubr.bf16.gmra.mxu0 %v394
      %v530 = vpop.f32.mrf.mxu0
      %v531 = vadd.f32 0.0, %v530
      %v532 = vpop.f32.mrf.mxu0
      %v533 = vpop.f32.mrf.mxu0
      %v534 = vadd.f32 0.0, %v533
      %v535 = vpop.f32.mrf.mxu0
      %536 = vmatprep.mubr.bf16.mxu0 0
      %537 = vmatmul.mubr.bf16.gmra.mxu0 %v397
      %v538 = vpop.f32.mrf.mxu0
      %v539 = vadd.f32 0.0, %v538
      %v540 = vpop.f32.mrf.mxu0
      %v541 = vpop.f32.mrf.mxu0
      %v542 = vadd.f32 0.0, %v541
      %v543 = vpop.f32.mrf.mxu0
      %544 = vmatprep.mubr.bf16.mxu0 0
      %545 = vmatmul.mubr.bf16.gmra.mxu0 %v400
      %v546 = vpop.f32.mrf.mxu0
      %v547 = vadd.f32 0.0, %v546
      %v548 = vpop.f32.mrf.mxu0
      %v549 = vpop.f32.mrf.mxu0
      %v550 = vadd.f32 0.0, %v549
      %v551 = vpop.f32.mrf.mxu0
      %552 = vmatprep.mubr.bf16.mxu0 0
      %553 = vmatmul.mubr.bf16.gmra.mxu0 %v403
      %v554 = vpop.f32.mrf.mxu0
      %v555 = vadd.f32 0.0, %v554
      %v556 = vpop.f32.mrf.mxu0
      %v557 = vpop.f32.mrf.mxu0
      %v558 = vadd.f32 0.0, %v557
      %v559 = vpop.f32.mrf.mxu0
      %560 = vmatprep.mubr.bf16.mxu0 0
      %561 = vmatmul.mubr.bf16.gmra.mxu0 %v406
      %v562 = vpop.f32.mrf.mxu0
      %v563 = vadd.f32 0.0, %v562
      %v564 = vpop.f32.mrf.mxu0
      %v565 = vpop.f32.mrf.mxu0
      %v566 = vadd.f32 0.0, %v565
      %v567 = vpop.f32.mrf.mxu0
      %568 = vdwg.mxu0
      %v569 = vpack.c.bf16 %v446, %v443
      %v570 = vpack.c.bf16 %v454, %v451
      %v571 = vpack.c.bf16 %v462, %v459
      %v572 = vpack.c.bf16 %v470, %v467
      %v573 = vpack.c.bf16 %v478, %v475
      %v574 = vpack.c.bf16 %v486, %v483
      %v575 = vpack.c.bf16 %v494, %v491
      %v576 = vpack.c.bf16 %v502, %v499
      %v577 = vpack.c.bf16 %v510, %v507
      %v578 = vpack.c.bf16 %v518, %v515
      %v579 = vpack.c.bf16 %v526, %v523
      %v580 = vpack.c.bf16 %v534, %v531
      %v581 = vpack.c.bf16 %v542, %v539
      %v582 = vpack.c.bf16 %v550, %v547
      %v583 = vpack.c.bf16 %v558, %v555
      %v584 = vpack.c.bf16 %v566, %v563
      %v601 = vunpack.c.l.b16 %v569
      %v602 = vunpack.c.h.b16 %v569
      %v603 = vunpack.c.l.b16 %v570
      %v604 = vunpack.c.h.b16 %v570
      %v605 = vunpack.c.l.b16 %v571
      %v606 = vunpack.c.h.b16 %v571
      %v607 = vunpack.c.l.b16 %v572
      %v608 = vunpack.c.h.b16 %v572
      %v609 = vunpack.c.l.b16 %v573
      %v610 = vunpack.c.h.b16 %v573
      %v611 = vunpack.c.l.b16 %v574
      %v612 = vunpack.c.h.b16 %v574
      %v613 = vunpack.c.l.b16 %v575
      %v614 = vunpack.c.h.b16 %v575
      %v615 = vunpack.c.l.b16 %v576
      %v616 = vunpack.c.h.b16 %v576
      %v617 = vunpack.c.l.b16 %v577
      %v618 = vunpack.c.h.b16 %v577
      %v619 = vunpack.c.l.b16 %v578
      %v620 = vunpack.c.h.b16 %v578
      %v621 = vunpack.c.l.b16 %v579
      %v622 = vunpack.c.h.b16 %v579
      %v623 = vunpack.c.l.b16 %v580
      %v624 = vunpack.c.h.b16 %v580
      %v625 = vunpack.c.l.b16 %v581
      %v626 = vunpack.c.h.b16 %v581
      %v627 = vunpack.c.l.b16 %v582
      %v628 = vunpack.c.h.b16 %v582
      %v629 = vunpack.c.l.b16 %v583
      %v630 = vunpack.c.h.b16 %v583
      %v631 = vunpack.c.l.b16 %v584
      %v632 = vunpack.c.h.b16 %v584
      %v633 = vpack.c.b16 %v601, %v601
      %v634 = vpack.c.b16 %v602, %v602
      %v635 = vpack.c.b16 %v603, %v603
      %v636 = vpack.c.b16 %v604, %v604
      %v637 = vpack.c.b16 %v605, %v605
      %v638 = vpack.c.b16 %v606, %v606
      %v639 = vpack.c.b16 %v607, %v607
      %v640 = vpack.c.b16 %v608, %v608
      %v641 = vpack.c.b16 %v609, %v609
      %v642 = vpack.c.b16 %v610, %v610
      %v643 = vpack.c.b16 %v611, %v611
      %v644 = vpack.c.b16 %v612, %v612
      %v645 = vpack.c.b16 %v613, %v613
      %v646 = vpack.c.b16 %v614, %v614
      %v647 = vpack.c.b16 %v615, %v615
      %v648 = vpack.c.b16 %v616, %v616
      %v649 = vpack.c.b16 %v617, %v617
      %v650 = vpack.c.b16 %v618, %v618
      %v651 = vpack.c.b16 %v619, %v619
      %v652 = vpack.c.b16 %v620, %v620
      %v653 = vpack.c.b16 %v621, %v621
      %v654 = vpack.c.b16 %v622, %v622
      %v655 = vpack.c.b16 %v623, %v623
      %v656 = vpack.c.b16 %v624, %v624
      %v657 = vpack.c.b16 %v625, %v625
      %v658 = vpack.c.b16 %v626, %v626
      %v659 = vpack.c.b16 %v627, %v627
      %v660 = vpack.c.b16 %v628, %v628
      %v661 = vpack.c.b16 %v629, %v629
      %v662 = vpack.c.b16 %v630, %v630
      %v663 = vpack.c.b16 %v631, %v631
      %v664 = vpack.c.b16 %v632, %v632
      %vm697 = vcmask 60416
      %698 = vst.msk [vmem:[%s212] sm:$0xf] %vm697, %v633
      %699 = vst.msk [vmem:[%s212 + $0x4] sm:$0xf] %vm697, %v634
      %700 = vst.msk [vmem:[%s212 + $0x8] sm:$0xf] %vm697, %v635
      %701 = vst.msk [vmem:[%s212 + $0xc] sm:$0xf] %vm697, %v636
      %702 = vst.msk [vmem:[%s212 + $0x10] sm:$0xf] %vm697, %v637
      %703 = vst.msk [vmem:[%s212 + $0x14] sm:$0xf] %vm697, %v638
      %704 = vst.msk [vmem:[%s212 + $0x18] sm:$0xf] %vm697, %v639
      %705 = vst.msk [vmem:[%s212 + $0x1c] sm:$0xf] %vm697, %v640
      %706 = vst.msk [vmem:[%s212 + $0x20] sm:$0xf] %vm697, %v641
      %707 = vst.msk [vmem:[%s212 + $0x24] sm:$0xf] %vm697, %v642
      %708 = vst.msk [vmem:[%s212 + $0x28] sm:$0xf] %vm697, %v643
      %709 = vst.msk [vmem:[%s212 + $0x2c] sm:$0xf] %vm697, %v644
      %710 = vst.msk [vmem:[%s212 + $0x30] sm:$0xf] %vm697, %v645
      %711 = vst.msk [vmem:[%s212 + $0x34] sm:$0xf] %vm697, %v646
      %712 = vst.msk [vmem:[%s212 + $0x38] sm:$0xf] %vm697, %v647
      %713 = vst.msk [vmem:[%s212 + $0x3c] sm:$0xf] %vm697, %v648
      %714 = vst.msk [vmem:[%s212 + $0x40] sm:$0xf] %vm697, %v649
      %715 = vst.msk [vmem:[%s212 + $0x44] sm:$0xf] %vm697, %v650
      %716 = vst.msk [vmem:[%s212 + $0x48] sm:$0xf] %vm697, %v651
      %717 = vst.msk [vmem:[%s212 + $0x4c] sm:$0xf] %vm697, %v652
      %718 = vst.msk [vmem:[%s212 + $0x50] sm:$0xf] %vm697, %v653
      %719 = vst.msk [vmem:[%s212 + $0x54] sm:$0xf] %vm697, %v654
      %720 = vst.msk [vmem:[%s212 + $0x58] sm:$0xf] %vm697, %v655
      %721 = vst.msk [vmem:[%s212 + $0x5c] sm:$0xf] %vm697, %v656
      %722 = vst.msk [vmem:[%s212 + $0x60] sm:$0xf] %vm697, %v657
      %723 = vst.msk [vmem:[%s212 + $0x64] sm:$0xf] %vm697, %v658
      %724 = vst.msk [vmem:[%s212 + $0x68] sm:$0xf] %vm697, %v659
      %725 = vst.msk [vmem:[%s212 + $0x6c] sm:$0xf] %vm697, %v660
      %726 = vst.msk [vmem:[%s212 + $0x70] sm:$0xf] %vm697, %v661
      %727 = vst.msk [vmem:[%s212 + $0x74] sm:$0xf] %vm697, %v662
      %728 = vst.msk [vmem:[%s212 + $0x78] sm:$0xf] %vm697, %v663
      %729 = vst.msk [vmem:[%s212 + $0x7c] sm:$0xf] %vm697, %v664
      %vm730 = vcmask 64512
      %v731 = vsel %vm730, %v443, 0.0
      %v732 = vsel %vm730, %v446, 0.0
      %v733 = vadd.f32 %v731, %v732
      %v734 = vsel %vm730, %v451, 0.0
      %v735 = vadd.f32 %v733, %v734
      %v736 = vsel %vm730, %v454, 0.0
      %v737 = vadd.f32 %v735, %v736
      %v738 = vsel %vm730, %v459, 0.0
      %v739 = vadd.f32 %v737, %v738
      %v740 = vsel %vm730, %v462, 0.0
      %v741 = vadd.f32 %v739, %v740
      %v742 = vsel %vm730, %v467, 0.0
      %v743 = vadd.f32 %v741, %v742
      %v744 = vsel %vm730, %v470, 0.0
      %v745 = vadd.f32 %v743, %v744
      %v746 = vsel %vm730, %v475, 0.0
      %v747 = vadd.f32 %v745, %v746
      %v748 = vsel %vm730, %v478, 0.0
      %v749 = vadd.f32 %v747, %v748
      %v750 = vsel %vm730, %v483, 0.0
      %v751 = vadd.f32 %v749, %v750
      %v752 = vsel %vm730, %v486, 0.0
      %v753 = vadd.f32 %v751, %v752
      %v754 = vsel %vm730, %v491, 0.0
      %v755 = vadd.f32 %v753, %v754
      %v756 = vsel %vm730, %v494, 0.0
      %v757 = vadd.f32 %v755, %v756
      %v758 = vsel %vm730, %v499, 0.0
      %v759 = vadd.f32 %v757, %v758
      %v760 = vsel %vm730, %v502, 0.0
      %v761 = vadd.f32 %v759, %v760
      %v762 = vsel %vm730, %v507, 0.0
      %v763 = vadd.f32 %v761, %v762
      %v764 = vsel %vm730, %v510, 0.0
      %v765 = vadd.f32 %v763, %v764
      %v766 = vsel %vm730, %v515, 0.0
      %v767 = vadd.f32 %v765, %v766
      %v768 = vsel %vm730, %v518, 0.0
      %v769 = vadd.f32 %v767, %v768
      %v770 = vsel %vm730, %v523, 0.0
      %v771 = vadd.f32 %v769, %v770
      %v772 = vsel %vm730, %v526, 0.0
      %v773 = vadd.f32 %v771, %v772
      %v774 = vsel %vm730, %v531, 0.0
      %v775 = vadd.f32 %v773, %v774
      %v776 = vsel %vm730, %v534, 0.0
      %v777 = vadd.f32 %v775, %v776
      %v778 = vsel %vm730, %v539, 0.0
      %v779 = vadd.f32 %v777, %v778
      %v780 = vsel %vm730, %v542, 0.0
      %v781 = vadd.f32 %v779, %v780
      %v782 = vsel %vm730, %v547, 0.0
      %v783 = vadd.f32 %v781, %v782
      %v784 = vsel %vm730, %v550, 0.0
      %v785 = vadd.f32 %v783, %v784
      %v786 = vsel %vm730, %v555, 0.0
      %v787 = vadd.f32 %v785, %v786
      %v788 = vsel %vm730, %v558, 0.0
      %v789 = vadd.f32 %v787, %v788
      %v790 = vsel %vm730, %v563, 0.0
      %v791 = vadd.f32 %v789, %v790
      %v792 = vsel %vm730, %v566, 0.0
      %v793 = vadd.f32 %v791, %v792
      %v794 = vrot.slane %v793, 4
      %v795 = vadd.f32 %v793, %v794
      %v796 = vrot.slane %v795, 2
      %v797 = vadd.f32 %v795, %v796
      %v798 = vrot.slane %v797, 1
      %v799 = vadd.f32 %v797, %v798
      %v800 = vmul.f32 %v443, %v443
      %v801 = vmul.f32 %v446, %v446
      %v802 = vmul.f32 %v451, %v451
      %v803 = vmul.f32 %v454, %v454
      %v804 = vmul.f32 %v459, %v459
      %v805 = vmul.f32 %v462, %v462
      %v806 = vmul.f32 %v467, %v467
      %v807 = vmul.f32 %v470, %v470
      %v808 = vmul.f32 %v475, %v475
      %v809 = vmul.f32 %v478, %v478
      %v810 = vmul.f32 %v483, %v483
      %v811 = vmul.f32 %v486, %v486
      %v812 = vmul.f32 %v491, %v491
      %v813 = vmul.f32 %v494, %v494
      %v814 = vmul.f32 %v499, %v499
      %v815 = vmul.f32 %v502, %v502
      %v816 = vmul.f32 %v507, %v507
      %v817 = vmul.f32 %v510, %v510
      %v818 = vmul.f32 %v515, %v515
      %v819 = vmul.f32 %v518, %v518
      %v820 = vmul.f32 %v523, %v523
      %v821 = vmul.f32 %v526, %v526
      %v822 = vmul.f32 %v531, %v531
      %v823 = vmul.f32 %v534, %v534
      %v824 = vmul.f32 %v539, %v539
      %v825 = vmul.f32 %v542, %v542
      %v826 = vmul.f32 %v547, %v547
      %v827 = vmul.f32 %v550, %v550
      %v828 = vmul.f32 %v555, %v555
      %v829 = vmul.f32 %v558, %v558
      %v830 = vmul.f32 %v563, %v563
      %v831 = vmul.f32 %v566, %v566
      %v832 = vsel %vm730, %v800, 0.0
      %v833 = vsel %vm730, %v801, 0.0
      %v834 = vadd.f32 %v832, %v833
      %v835 = vsel %vm730, %v802, 0.0
      %v836 = vadd.f32 %v834, %v835
      %v837 = vsel %vm730, %v803, 0.0
      %v838 = vadd.f32 %v836, %v837
      %v839 = vsel %vm730, %v804, 0.0
      %v840 = vadd.f32 %v838, %v839
      %v841 = vsel %vm730, %v805, 0.0
      %v842 = vadd.f32 %v840, %v841
      %v843 = vsel %vm730, %v806, 0.0
      %v844 = vadd.f32 %v842, %v843
      %v845 = vsel %vm730, %v807, 0.0
      %v846 = vadd.f32 %v844, %v845
      %v847 = vsel %vm730, %v808, 0.0
      %v848 = vadd.f32 %v846, %v847
      %v849 = vsel %vm730, %v809, 0.0
      %v850 = vadd.f32 %v848, %v849
      %v851 = vsel %vm730, %v810, 0.0
      %v852 = vadd.f32 %v850, %v851
      %v853 = vsel %vm730, %v811, 0.0
      %v854 = vadd.f32 %v852, %v853
      %v855 = vsel %vm730, %v812, 0.0
      %v856 = vadd.f32 %v854, %v855
      %v857 = vsel %vm730, %v813, 0.0
      %v858 = vadd.f32 %v856, %v857
      %v859 = vsel %vm730, %v814, 0.0
      %v860 = vadd.f32 %v858, %v859
      %v861 = vsel %vm730, %v815, 0.0
      %v862 = vadd.f32 %v860, %v861
      %v863 = vsel %vm730, %v816, 0.0
      %v864 = vadd.f32 %v862, %v863
      %v865 = vsel %vm730, %v817, 0.0
      %v866 = vadd.f32 %v864, %v865
      %v867 = vsel %vm730, %v818, 0.0
      %v868 = vadd.f32 %v866, %v867
      %v869 = vsel %vm730, %v819, 0.0
      %v870 = vadd.f32 %v868, %v869
      %v871 = vsel %vm730, %v820, 0.0
      %v872 = vadd.f32 %v870, %v871
      %v873 = vsel %vm730, %v821, 0.0
      %v874 = vadd.f32 %v872, %v873
      %v875 = vsel %vm730, %v822, 0.0
      %v876 = vadd.f32 %v874, %v875
      %v877 = vsel %vm730, %v823, 0.0
      %v878 = vadd.f32 %v876, %v877
      %v879 = vsel %vm730, %v824, 0.0
      %v880 = vadd.f32 %v878, %v879
      %v881 = vsel %vm730, %v825, 0.0
      %v882 = vadd.f32 %v880, %v881
      %v883 = vsel %vm730, %v826, 0.0
      %v884 = vadd.f32 %v882, %v883
      %v885 = vsel %vm730, %v827, 0.0
      %v886 = vadd.f32 %v884, %v885
      %v887 = vsel %vm730, %v828, 0.0
      %v888 = vadd.f32 %v886, %v887
      %v889 = vsel %vm730, %v829, 0.0
      %v890 = vadd.f32 %v888, %v889
      %v891 = vsel %vm730, %v830, 0.0
      %v892 = vadd.f32 %v890, %v891
      %v893 = vsel %vm730, %v831, 0.0
      %v894 = vadd.f32 %v892, %v893
      %v895 = vrot.slane %v894, 4
      %v896 = vadd.f32 %v894, %v895
      %v897 = vrot.slane %v896, 2
      %v898 = vadd.f32 %v896, %v897
      %v899 = vrot.slane %v898, 1
      %v900 = vadd.f32 %v898, %v899
      %901 = vst.msk [vmem:[%s217] sm:$0xff] %vm730, %v799
      %902 = vst.msk [vmem:[%s221] sm:$0xff] %vm730, %v900
      %s903 = smul.u32 32, %s16
      %p904 = scmp.lt.s32.totalorder %s903, 63
      %s905 = scalar_select %p904, %s903, 63
      %s906 = smul.addr %s905, 4
      %s907 = scalar_lea.vmem %s2, %s906
      %p908 = scmp.lt.s32.totalorder %s16, 1
      %s909 = scalar_select %p908, %s16, 1
      %s910 = smul.addr %s909, 8
      %s911 = scalar_lea.vmem %s3, %s910
      %p912 = scmp.lt.s32.totalorder %s16, 1
      %s913 = scalar_select %p912, %s16, 1
      %s914 = smul.addr %s913, 8
      %s915 = scalar_lea.vmem %s4, %s914
      // Predicated region
      $region29: #{generator_forward.20} parent=27 // pred_check
        %p916 = pneg %p81
      $region30: #{generator_forward.20} parent=27 // pred_check_branch
        %918 = sbr.rel (%p916) target = $region32
      $region31: #{generator_forward.20} parent=27 // pred_region
        %s919 = smul.u32 32, %s16
      $region32: #{generator_forward.20} parent=27 // pred_fallthru
        _
      // Predicated region
      $region33: #{generator_forward.20} parent=27 // pred_check
        %p920 = pneg %p107
      $region34: #{generator_forward.20} parent=27 // pred_check_branch
        %922 = sbr.rel (%p920) target = $region36
      $region35: #{generator_forward.20} parent=27 // pred_region
        _
      $region36: #{generator_forward.20} parent=27 // pred_fallthru
        _
      // Predicated region
      $region37: #{generator_forward.20} parent=27 // pred_check
        %p923 = pneg %p133
      $region38: #{generator_forward.20} parent=27 // pred_check_branch
        %925 = sbr.rel (%p923) target = $region40
      $region39: #{generator_forward.20} parent=27 // pred_region
        _
      $region40: #{generator_forward.20} parent=27 // pred_fallthru
        _
    $region28: #{generator_forward.20} parent=5 // pred_fallthru
      _
    %p926 = scmp.le.s32.totalorder 2, %s11
    // Predicated region
    $region41: #{generator_forward.20} parent=5 // pred_check
      %p927 = pneg %p926
    $region42: #{generator_forward.20} parent=5 // pred_check_branch
      %929 = sbr.rel (%p927) target = $region44
    $region43: #{generator_forward.20} parent=5 // pred_region
      %s930 = ssub.s32 %s11, 2
      // Predicated region
      $region45: #{generator_forward.20} parent=43 // pred_check
        %p931 = pneg %p87
      $region46: #{generator_forward.20} parent=43 // pred_check_branch
        %933 = sbr.rel (%p931) target = $region48
      $region47: #{generator_forward.20} parent=43 // pred_region
        %s934 = smul.u32 32, %s17
        %p935 = scmp.lt.s32.totalorder %s934, 63
        %s936 = scalar_select %p935, %s934, 63
        %s937 = smul.addr %s936, 4
        %s938 = scalar_lea.vmem %s2, %s937
      $region48: #{generator_forward.20} parent=43 // pred_fallthru
        _
      // Predicated region
      $region49: #{generator_forward.20} parent=43 // pred_check
        %p939 = pneg %p113
      $region50: #{generator_forward.20} parent=43 // pred_check_branch
        %941 = sbr.rel (%p939) target = $region52
      $region51: #{generator_forward.20} parent=43 // pred_region
        %p942 = scmp.lt.s32.totalorder %s17, 1
        %s943 = scalar_select %p942, %s17, 1
        %s944 = smul.addr %s943, 8
        %s945 = scalar_lea.vmem %s3, %s944
      $region52: #{generator_forward.20} parent=43 // pred_fallthru
        _
      // Predicated region
      $region53: #{generator_forward.20} parent=43 // pred_check
        %p946 = pneg %p139
      $region54: #{generator_forward.20} parent=43 // pred_check_branch
        %948 = sbr.rel (%p946) target = $region56
      $region55: #{generator_forward.20} parent=43 // pred_region
        %p949 = scmp.lt.s32.totalorder %s17, 1
        %s950 = scalar_select %p949, %s17, 1
        %s951 = smul.addr %s950, 8
        %s952 = scalar_lea.vmem %s4, %s951
      $region56: #{generator_forward.20} parent=43 // pred_fallthru
        _
    $region44: #{generator_forward.20} parent=5 // pred_fallthru
      _
  $region6: #{generator_forward.20} parent=0 // loop_footer
    %s15 = sadd.s32 1, %s11
  $region7: #{generator_forward.20} parent=0 // loop_footer_branch
    %10 = sbr.rel target = $region3
  $region8: #{generator_forward.20} parent=0 // loop_exit
    _

// kernel: generator_forward.22
$region0: #{generator_forward.22}
  #allocation0 [shape = 'u32[]', space=smem, size = 0x4, offset = 0x4, fixed_abs, tag = 'smem constant byte address 0x4 - core index']
  #allocation1 [shape = 'u32[144,128]{1,0:T(1,128)}', space=vmem, size = 0x12000, scoped, tag = 'internal scratch']
  %s0 = inlined_call_operand.vmem [shape: bf16[128,128], index: 0, kind: input, shape index: {}]
  %s1 = inlined_call_operand.vmem [shape: bf16[128,16], index: 1, kind: input, shape index: {}]
  %s2 = inlined_call_operand.vmem [shape: bf16[128,16], index: 2, kind: output, shape index: {0}]
  %s3 = inlined_call_operand.vmem [shape: f32[16,16], index: 3, kind: output, shape index: {1}]
  %s4 = inlined_call_operand.vmem [shape: f32[16,16], index: 4, kind: output, shape index: {2}]
  %5 = xla_tuple %s2, %s3, %s4
  %s6 = sld [smem:[#allocation0]]
  $region57: #{generator_forward.22} parent=0
    _
  %s8 = ssub.s32 1, %s6
  %s9 = scalar_select 0, %s8, %s6
  loop: start=0, step=1, limit=4
  $region2: #{generator_forward.22} parent=0 // loop_pre_header
    _
  $region3: #{generator_forward.22} parent=0 // loop_header
    %s11 = sphi 0, %s15
    %p12 = scmp.ge.s32.totalorder %s11, 4
    %s21 = sphi 0, %s23
    %s24 = sphi 0, %s21
    %s25 = sphi 0, %s24
    %s41 = sphi 0, %s25
    %s45 = sphi 0, %s45
    %s47 = sphi 0, %s45
    %s48 = sphi 0, %s47
    %s62 = sphi 0, %s48
    %s68 = sphi 0, %s70
    %s71 = sphi 0, %s68
    %s72 = sphi 0, %s71
    %s88 = sphi 0, %s72
    %s94 = sphi 0, %s96
    %s97 = sphi 0, %s94
    %s98 = sphi 0, %s97
    %s114 = sphi 0, %s98
    %s120 = sphi 0, %s122
    %s123 = sphi 0, %s120
    %s124 = sphi 0, %s123
    %s140 = sphi 0, %s124
  $region4: #{generator_forward.22} parent=0 // loop_header_branch
    %14 = sbr.rel (%p12) target = $region8
  $region5: #{generator_forward.22} parent=0 // loop_body
    %s16 = ssub.s32 %s11, 1
    %s17 = ssub.s32 %s11, 2
    %s18 = sadd.s32 %s11, 1
    %s19 = ssub.s32 %s11, %s18
    %p20 = scmp.eq.s32.totalorder %s19, 0
    %s22 = sadd.s32 %s21, 1
    %s23 = scalar_select %p20, %s21, %s22
    %p26 = pneg %p20
    %p27 = scmp.eq.s32.totalorder %s11, 1
    %p28 = por %p26, %p27
    %p29 = scmp.ne.s32.totalorder %s21, %s24
    %p30 = scmp.eq.s32.totalorder %s11, 0
    %p31 = por %p29, %p30
    %p32 = scmp.ne.s32.totalorder %s21, %s24
    %p33 = scmp.eq.s32.totalorder %s16, 1
    %p34 = por %p32, %p33
    %p35 = scmp.ne.s32.totalorder %s24, %s25
    %p36 = scmp.eq.s32.totalorder %s16, 0
    %p37 = por %p35, %p36
    %p38 = scmp.ne.s32.totalorder %s24, %s25
    %p39 = scmp.eq.s32.totalorder %s17, 1
    %p40 = por %p38, %p39
    %p42 = scmp.ne.s32.totalorder %s25, %s41
    %p43 = scmp.eq.s32.totalorder %s17, 0
    %p44 = por %p42, %p43
    %s46 = sadd.s32 %s45, 1
    %p49 = scmp.eq.s32.totalorder %s11, 1
    %p50 = scmp.ne.s32.totalorder %s45, %s47
    %p51 = scmp.eq.s32.totalorder %s11, 0
    %p52 = por %p50, %p51
    %p53 = scmp.ne.s32.totalorder %s45, %s47
    %p54 = scmp.eq.s32.totalorder %s16, 1
    %p55 = por %p53, %p54
    %p56 = scmp.ne.s32.totalorder %s47, %s48
    %p57 = scmp.eq.s32.totalorder %s16, 0
    %p58 = por %p56, %p57
    %p59 = scmp.ne.s32.totalorder %s47, %s48
    %p60 = scmp.eq.s32.totalorder %s17, 1
    %p61 = por %p59, %p60
    %p63 = scmp.ne.s32.totalorder %s48, %s62
    %p64 = scmp.eq.s32.totalorder %s17, 0
    %p65 = por %p63, %p64
    %s66 = ssub.s32 %s11, %s18
    %p67 = scmp.eq.s32.totalorder %s66, 0
    %s69 = sadd.s32 %s68, 1
    %s70 = scalar_select %p67, %s68, %s69
    %p73 = pneg %p67
    %p74 = scmp.eq.s32.totalorder %s11, 1
    %p75 = por %p73, %p74
    %p76 = scmp.ne.s32.totalorder %s68, %s71
    %p77 = scmp.eq.s32.totalorder %s11, 0
    %p78 = por %p76, %p77
    %p79 = scmp.ne.s32.totalorder %s68, %s71
    %p80 = scmp.eq.s32.totalorder %s16, 1
    %p81 = por %p79, %p80
    %p82 = scmp.ne.s32.totalorder %s71, %s72
    %p83 = scmp.eq.s32.totalorder %s16, 0
    %p84 = por %p82, %p83
    %p85 = scmp.ne.s32.totalorder %s71, %s72
    %p86 = scmp.eq.s32.totalorder %s17, 1
    %p87 = por %p85, %p86
    %p89 = scmp.ne.s32.totalorder %s72, %s88
    %p90 = scmp.eq.s32.totalorder %s17, 0
    %p91 = por %p89, %p90
    %s92 = ssub.s32 %s11, %s18
    %p93 = scmp.eq.s32.totalorder %s92, 0
    %s95 = sadd.s32 %s94, 1
    %s96 = scalar_select %p93, %s94, %s95
    %p99 = pneg %p93
    %p100 = scmp.eq.s32.totalorder %s11, 1
    %p101 = por %p99, %p100
    %p102 = scmp.ne.s32.totalorder %s94, %s97
    %p103 = scmp.eq.s32.totalorder %s11, 0
    %p104 = por %p102, %p103
    %p105 = scmp.ne.s32.totalorder %s94, %s97
    %p106 = scmp.eq.s32.totalorder %s16, 1
    %p107 = por %p105, %p106
    %p108 = scmp.ne.s32.totalorder %s97, %s98
    %p109 = scmp.eq.s32.totalorder %s16, 0
    %p110 = por %p108, %p109
    %p111 = scmp.ne.s32.totalorder %s97, %s98
    %p112 = scmp.eq.s32.totalorder %s17, 1
    %p113 = por %p111, %p112
    %p115 = scmp.ne.s32.totalorder %s98, %s114
    %p116 = scmp.eq.s32.totalorder %s17, 0
    %p117 = por %p115, %p116
    %s118 = ssub.s32 %s11, %s18
    %p119 = scmp.eq.s32.totalorder %s118, 0
    %s121 = sadd.s32 %s120, 1
    %s122 = scalar_select %p119, %s120, %s121
    %p125 = pneg %p119
    %p126 = scmp.eq.s32.totalorder %s11, 1
    %p127 = por %p125, %p126
    %p128 = scmp.ne.s32.totalorder %s120, %s123
    %p129 = scmp.eq.s32.totalorder %s11, 0
    %p130 = por %p128, %p129
    %p131 = scmp.ne.s32.totalorder %s120, %s123
    %p132 = scmp.eq.s32.totalorder %s16, 1
    %p133 = por %p131, %p132
    %p134 = scmp.ne.s32.totalorder %s123, %s124
    %p135 = scmp.eq.s32.totalorder %s16, 0
    %p136 = por %p134, %p135
    %p137 = scmp.ne.s32.totalorder %s123, %s124
    %p138 = scmp.eq.s32.totalorder %s17, 1
    %p139 = por %p137, %p138
    %p141 = scmp.ne.s32.totalorder %s124, %s140
    %p142 = scmp.eq.s32.totalorder %s17, 0
    %p143 = por %p141, %p142
    %p144 = scmp.le.s32.totalorder 1, %s11
    %p145 = scmp.lt.s32.totalorder %s11, 3
    %p146 = pnand %p144, %p145
    %p147 = pneg %p146
    // Predicated region
    $region9: #{generator_forward.22} parent=5 // pred_check
      _
    $region10: #{generator_forward.22} parent=5 // pred_check_branch
      %149 = sbr.rel (%p146) target = $region12
    $region11: #{generator_forward.22} parent=5 // pred_region
      %s150 = ssub.s32 %s11, 1
      // Predicated region
      $region13: #{generator_forward.22} parent=11 // pred_check
        %p151 = pneg %p58
      $region14: #{generator_forward.22} parent=11 // pred_check_branch
        %153 = sbr.rel (%p151) target = $region16
      $region15: #{generator_forward.22} parent=11 // pred_region
        _
      $region16: #{generator_forward.22} parent=11 // pred_fallthru
        _
    $region12: #{generator_forward.22} parent=5 // pred_fallthru
      _
    %p154 = scmp.lt.s32.totalorder %s11, 2
    // Predicated region
    $region17: #{generator_forward.22} parent=5 // pred_check
      %p155 = pneg %p154
    $region18: #{generator_forward.22} parent=5 // pred_check_branch
      %157 = sbr.rel (%p155) target = $region20
    $region19: #{generator_forward.22} parent=5 // pred_region
      // Predicated region
      $region21: #{generator_forward.22} parent=19 // pred_check
        %p158 = pneg %p31
      $region22: #{generator_forward.22} parent=19 // pred_check_branch
        %160 = sbr.rel (%p158) target = $region24
      $region23: #{generator_forward.22} parent=19 // pred_region
        %s161 = smul.u32 8, %s11
        %p162 = scmp.lt.s32.totalorder %s161, 15
        %s163 = scalar_select %p162, %s161, 15
        %s164 = smul.addr %s163, 4
        %s165 = scalar_lea.vmem %s0, %s164
        %s166 = smul.u32 8, %s11
      $region24: #{generator_forward.22} parent=19 // pred_fallthru
        _
    $region20: #{generator_forward.22} parent=5 // pred_fallthru
      _
    %p167 = scmp.le.s32.totalorder 1, %s11
    %p168 = scmp.lt.s32.totalorder %s11, 3
    %p169 = pnand %p167, %p168
    %p170 = pneg %p169
    // Predicated region
    $region25: #{generator_forward.22} parent=5 // pred_check
      _
    $region26: #{generator_forward.22} parent=5 // pred_check_branch
      %172 = sbr.rel (%p169) target = $region28
    $region27: #{generator_forward.22} parent=5 // pred_region
      %s173 = ssub.s32 %s11, 1
      %s174 = smul.u32 8, %s16
      %p175 = scmp.lt.s32.totalorder %s174, 15
      %s176 = scalar_select %p175, %s174, 15
      %s177 = smul.addr %s176, 4
      %s178 = scalar_lea.vmem %s0, %s177
      %p179 = pneg %p37
      %p180 = pneg %p34
      %p181 = pneg %p58
      %p182 = pneg %p55
      %p183 = pneg %p84
      %p184 = pneg %p81
      %s185 = smul.u32 8, %s16
      %p186 = scmp.lt.s32.totalorder %s185, 15
      %s187 = scalar_select %p186, %s185, 15
      %s188 = smul.addr %s187, 4
      %s189 = scalar_lea.vmem %s2, %s188
      %p190 = pneg %p110
      %p191 = pneg %p107
      %p192 = scmp.lt.s32.totalorder %s16, 1
      %s193 = scalar_select %p192, %s16, 1
      %s194 = smul.addr %s193, 8
      %s195 = scalar_lea.vmem %s3, %s194
      %p196 = pneg %p136
      %p197 = pneg %p133
      %p198 = scmp.lt.s32.totalorder %s16, 1
      %s199 = scalar_select %p198, %s16, 1
      %s200 = smul.addr %s199, 8
      %s201 = scalar_lea.vmem %s4, %s200
      %s202 = smul.u32 8, %s16
      %p203 = scmp.lt.s32.totalorder %s202, 15
      %s204 = scalar_select %p203, %s202, 15
      %s205 = smul.addr %s204, 4
      %s206 = scalar_lea.vmem %s0, %s205
      %s207 = smul.u32 8, %s16
      %s208 = smul.u32 8, %s16
      %p209 = scmp.lt.s32.totalorder %s208, 15
      %s210 = scalar_select %p209, %s208, 15
      %s211 = smul.addr %s210, 4
      %s212 = scalar_lea.vmem %s2, %s211
      %s213 = smul.u32 8, %s16
      %p214 = scmp.lt.s32.totalorder %s16, 1
      %s215 = scalar_select %p214, %s16, 1
      %s216 = smul.addr %s215, 8
      %s217 = scalar_lea.vmem %s3, %s216
      %p218 = scmp.lt.s32.totalorder %s16, 1
      %s219 = scalar_select %p218, %s16, 1
      %s220 = smul.addr %s219, 8
      %s221 = scalar_lea.vmem %s4, %s220
      %v223 = vld [vmem:[%s206] sm:$0xf]
      %v224 = vld [vmem:[%s206 + $0x4] sm:$0xf]
      %v225 = vld [vmem:[%s206 + $0x8] sm:$0xf]
      %v226 = vld [vmem:[%s206 + $0xc] sm:$0xf]
      %v227 = vld [vmem:[%s206 + $0x10] sm:$0xf]
      %v228 = vld [vmem:[%s206 + $0x14] sm:$0xf]
      %v229 = vld [vmem:[%s206 + $0x18] sm:$0xf]
      %v230 = vld [vmem:[%s206 + $0x1c] sm:$0xf]
      %v231 = vld [vmem:[%s1] sm:$0xf]
      %v232 = vld [vmem:[%s1 + $0x4] sm:$0xf]
      %v233 = vld [vmem:[%s1 + $0x8] sm:$0xf]
      %v234 = vld [vmem:[%s1 + $0xc] sm:$0xf]
      %v235 = vld [vmem:[%s1 + $0x10] sm:$0xf]
      %v236 = vld [vmem:[%s1 + $0x14] sm:$0xf]
      %v237 = vld [vmem:[%s1 + $0x18] sm:$0xf]
      %v238 = vld [vmem:[%s1 + $0x1c] sm:$0xf]
      %v239 = vld [vmem:[%s1 + $0x20] sm:$0xf]
      %v240 = vld [vmem:[%s1 + $0x24] sm:$0xf]
      %v241 = vld [vmem:[%s1 + $0x28] sm:$0xf]
      %v242 = vld [vmem:[%s1 + $0x2c] sm:$0xf]
      %v243 = vld [vmem:[%s1 + $0x30] sm:$0xf]
      %v244 = vld [vmem:[%s1 + $0x34] sm:$0xf]
      %v245 = vld [vmem:[%s1 + $0x38] sm:$0xf]
      %v246 = vld [vmem:[%s1 + $0x3c] sm:$0xf]
      %v255 = vunpack.c.l.b16 %v223
      %v256 = vunpack.c.l.b16 %v224
      %v257 = vunpack.c.l.b16 %v225
      %v258 = vunpack.c.l.b16 %v226
      %v259 = vunpack.c.l.b16 %v227
      %v260 = vunpack.c.l.b16 %v228
      %v261 = vunpack.c.l.b16 %v229
      %v262 = vunpack.c.l.b16 %v230
      %v263 = vpack.c.b16 %v256, %v255
      %v264 = vpack.c.b16 %v258, %v257
      %v265 = vpack.c.b16 %v260, %v259
      %v266 = vpack.c.b16 %v262, %v261
      %v287 = vunpack.c.l.b16 %v231
      %v288 = vunpack.c.l.b16 %v232
      %v289 = vunpack.c.l.b16 %v233
      %v290 = vunpack.c.l.b16 %v234
      %v291 = vunpack.c.l.b16 %v235
      %v292 = vunpack.c.l.b16 %v236
      %v293 = vunpack.c.l.b16 %v237
      %v294 = vunpack.c.l.b16 %v238
      %v295 = vunpack.c.l.b16 %v239
      %v296 = vunpack.c.l.b16 %v240
      %v297 = vunpack.c.l.b16 %v241
      %v298 = vunpack.c.l.b16 %v242
      %v299 = vunpack.c.l.b16 %v243
      %v300 = vunpack.c.l.b16 %v244
      %v301 = vunpack.c.l.b16 %v245
      %v302 = vunpack.c.l.b16 %v246
      %v303 = vpack.c.b16 %v288, %v287
      %v304 = vpack.c.b16 %v290, %v289
      %v305 = vpack.c.b16 %v292, %v291
      %v306 = vpack.c.b16 %v294, %v293
      %v307 = vpack.c.b16 %v296, %v295
      %v308 = vpack.c.b16 %v298, %v297
      %v309 = vpack.c.b16 %v300, %v299
      %v310 = vpack.c.b16 %v302, %v301
      %319 = vmatprep.subr.bf16.mxu0 0
      %320 = vmatpush1.bf16.msra.mxu0 %v310
      %321 = vmatprep.subr.bf16.mxu0 0
      %322 = vmatpush1.bf16.msra.mxu0 %v309
      %323 = vmatprep.subr.bf16.mxu0 0
      %324 = vmatpush1.bf16.msra.mxu0 %v308
      %325 = vmatprep.subr.bf16.mxu0 0
      %326 = vmatpush1.bf16.msra.mxu0 %v307
      %327 = vmatprep.subr.bf16.mxu0 0
      %328 = vmatpush1.bf16.msra.mxu0 %v306
      %329 = vmatprep.subr.bf16.mxu0 0
      %330 = vmatpush1.bf16.msra.mxu0 %v305
      %331 = vmatprep.subr.bf16.mxu0 0
      %332 = vmatpush1.bf16.msra.mxu0 %v304
      %333 = vmatprep.subr.bf16.mxu0 0
      %334 = vmatpush1.bf16.msra.mxu0 %v303
      %335 = vmatprep.subr.bf16.mxu0 0
      %336 = vmatpush2.bf16.msra.mxu0 0
      %337 = vmatprep.subr.bf16.mxu0 0
      %338 = vmatpush2.bf16.msra.mxu0 0
      %339 = vmatprep.subr.bf16.mxu0 0
      %340 = vmatpush2.bf16.msra.mxu0 0
      %341 = vmatprep.subr.bf16.mxu0 0
      %342 = vmatpush2.bf16.msra.mxu0 0
      %343 = vmatprep.subr.bf16.mxu0 0
      %344 = vmatpush2.bf16.msra.mxu0 0
      %345 = vmatprep.subr.bf16.mxu0 0
      %346 = vmatpush2.bf16.msra.mxu0 0
      %347 = vmatprep.subr.bf16.mxu0 0
      %348 = vmatpush2.bf16.msra.mxu0 0
      %349 = vmatprep.subr.bf16.mxu0 0
      %350 = vmatpush2.bf16.msra.mxu0 0
      %351 = vmatprep.mubr.bf16.mxu0 0
      %352 = vmatmul.mubr.bf16.gmra.mxu0 %v263
      %v353 = vpop.f32.mrf.mxu0
      %v354 = vadd.f32 0.0, %v353
      %v355 = vpop.f32.mrf.mxu0
      %v356 = vpop.f32.mrf.mxu0
      %v357 = vadd.f32 0.0, %v356
      %v358 = vpop.f32.mrf.mxu0
      %359 = vmatprep.mubr.bf16.mxu0 0
      %360 = vmatmul.mubr.bf16.gmra.mxu0 %v264
      %v361 = vpop.f32.mrf.mxu0
      %v362 = vadd.f32 0.0, %v361
      %v363 = vpop.f32.mrf.mxu0
      %v364 = vpop.f32.mrf.mxu0
      %v365 = vadd.f32 0.0, %v364
      %v366 = vpop.f32.mrf.mxu0
      %367 = vmatprep.mubr.bf16.mxu0 0
      %368 = vmatmul.mubr.bf16.gmra.mxu0 %v265
      %v369 = vpop.f32.mrf.mxu0
      %v370 = vadd.f32 0.0, %v369
      %v371 = vpop.f32.mrf.mxu0
      %v372 = vpop.f32.mrf.mxu0
      %v373 = vadd.f32 0.0, %v372
      %v374 = vpop.f32.mrf.mxu0
      %375 = vmatprep.mubr.bf16.mxu0 0
      %376 = vmatmul.mubr.bf16.gmra.mxu0 %v266
      %v377 = vpop.f32.mrf.mxu0
      %v378 = vadd.f32 0.0, %v377
      %v379 = vpop.f32.mrf.mxu0
      %v380 = vpop.f32.mrf.mxu0
      %v381 = vadd.f32 0.0, %v380
      %v382 = vpop.f32.mrf.mxu0
      %383 = vdwg.mxu0
      %v384 = vpack.c.bf16 %v357, %v354
      %v385 = vpack.c.bf16 %v365, %v362
      %v386 = vpack.c.bf16 %v373, %v370
      %v387 = vpack.c.bf16 %v381, %v378
      %v392 = vunpack.c.l.b16 %v384
      %v393 = vunpack.c.h.b16 %v384
      %v394 = vunpack.c.l.b16 %v385
      %v395 = vunpack.c.h.b16 %v385
      %v396 = vunpack.c.l.b16 %v386
      %v397 = vunpack.c.h.b16 %v386
      %v398 = vunpack.c.l.b16 %v387
      %v399 = vunpack.c.h.b16 %v387
      %v400 = vpack.c.b16 %v392, %v392
      %v401 = vpack.c.b16 %v393, %v393
      %v402 = vpack.c.b16 %v394, %v394
      %v403 = vpack.c.b16 %v395, %v395
      %v404 = vpack.c.b16 %v396, %v396
      %v405 = vpack.c.b16 %v397, %v397
      %v406 = vpack.c.b16 %v398, %v398
      %v407 = vpack.c.b16 %v399, %v399
      %vm416 = vcmask 125952
      %417 = vst.msk [vmem:[%s212] sm:$0xf] %vm416, %v400
      %418 = vst.msk [vmem:[%s212 + $0x4] sm:$0xf] %vm416, %v401
      %419 = vst.msk [vmem:[%s212 + $0x8] sm:$0xf] %vm416, %v402
      %420 = vst.msk [vmem:[%s212 + $0xc] sm:$0xf] %vm416, %v403
      %421 = vst.msk [vmem:[%s212 + $0x10] sm:$0xf] %vm416, %v404
      %422 = vst.msk [vmem:[%s212 + $0x14] sm:$0xf] %vm416, %v405
      %423 = vst.msk [vmem:[%s212 + $0x18] sm:$0xf] %vm416, %v406
      %424 = vst.msk [vmem:[%s212 + $0x1c] sm:$0xf] %vm416, %v407
      %vm425 = vcmask 130048
      %v426 = vsel %vm425, %v354, 0.0
      %v427 = vsel %vm425, %v357, 0.0
      %v428 = vadd.f32 %v426, %v427
      %v429 = vsel %vm425, %v362, 0.0
      %v430 = vadd.f32 %v428, %v429
      %v431 = vsel %vm425, %v365, 0.0
      %v432 = vadd.f32 %v430, %v431
      %v433 = vsel %vm425, %v370, 0.0
      %v434 = vadd.f32 %v432, %v433
      %v435 = vsel %vm425, %v373, 0.0
      %v436 = vadd.f32 %v434, %v435
      %v437 = vsel %vm425, %v378, 0.0
      %v438 = vadd.f32 %v436, %v437
      %v439 = vsel %vm425, %v381, 0.0
      %v440 = vadd.f32 %v438, %v439
      %v441 = vrot.slane %v440, 4
      %v442 = vadd.f32 %v440, %v441
      %v443 = vrot.slane %v442, 2
      %v444 = vadd.f32 %v442, %v443
      %v445 = vrot.slane %v444, 1
      %v446 = vadd.f32 %v444, %v445
      %v447 = vmul.f32 %v354, %v354
      %v448 = vmul.f32 %v357, %v357
      %v449 = vmul.f32 %v362, %v362
      %v450 = vmul.f32 %v365, %v365
      %v451 = vmul.f32 %v370, %v370
      %v452 = vmul.f32 %v373, %v373
      %v453 = vmul.f32 %v378, %v378
      %v454 = vmul.f32 %v381, %v381
      %v455 = vsel %vm425, %v447, 0.0
      %v456 = vsel %vm425, %v448, 0.0
      %v457 = vadd.f32 %v455, %v456
      %v458 = vsel %vm425, %v449, 0.0
      %v459 = vadd.f32 %v457, %v458
      %v460 = vsel %vm425, %v450, 0.0
      %v461 = vadd.f32 %v459, %v460
      %v462 = vsel %vm425, %v451, 0.0
      %v463 = vadd.f32 %v461, %v462
      %v464 = vsel %vm425, %v452, 0.0
      %v465 = vadd.f32 %v463, %v464
      %v466 = vsel %vm425, %v453, 0.0
      %v467 = vadd.f32 %v465, %v466
      %v468 = vsel %vm425, %v454, 0.0
      %v469 = vadd.f32 %v467, %v468
      %v470 = vrot.slane %v469, 4
      %v471 = vadd.f32 %v469, %v470
      %v472 = vrot.slane %v471, 2
      %v473 = vadd.f32 %v471, %v472
      %v474 = vrot.slane %v473, 1
      %v475 = vadd.f32 %v473, %v474
      %476 = vst.msk [vmem:[%s217] sm:$0xff] %vm425, %v446
      %477 = vst.msk [vmem:[%s221] sm:$0xff] %vm425, %v475
      %s478 = smul.u32 8, %s16
      %p479 = scmp.lt.s32.totalorder %s478, 15
      %s480 = scalar_select %p479, %s478, 15
      %s481 = smul.addr %s480, 4
      %s482 = scalar_lea.vmem %s2, %s481
      %p483 = scmp.lt.s32.totalorder %s16, 1
      %s484 = scalar_select %p483, %s16, 1
      %s485 = smul.addr %s484, 8
      %s486 = scalar_lea.vmem %s3, %s485
      %p487 = scmp.lt.s32.totalorder %s16, 1
      %s488 = scalar_select %p487, %s16, 1
      %s489 = smul.addr %s488, 8
      %s490 = scalar_lea.vmem %s4, %s489
      // Predicated region
      $region29: #{generator_forward.22} parent=27 // pred_check
        %p491 = pneg %p81
      $region30: #{generator_forward.22} parent=27 // pred_check_branch
        %493 = sbr.rel (%p491) target = $region32
      $region31: #{generator_forward.22} parent=27 // pred_region
        %s494 = smul.u32 8, %s16
      $region32: #{generator_forward.22} parent=27 // pred_fallthru
        _
      // Predicated region
      $region33: #{generator_forward.22} parent=27 // pred_check
        %p495 = pneg %p107
      $region34: #{generator_forward.22} parent=27 // pred_check_branch
        %497 = sbr.rel (%p495) target = $region36
      $region35: #{generator_forward.22} parent=27 // pred_region
        _
      $region36: #{generator_forward.22} parent=27 // pred_fallthru
        _
      // Predicated region
      $region37: #{generator_forward.22} parent=27 // pred_check
        %p498 = pneg %p133
      $region38: #{generator_forward.22} parent=27 // pred_check_branch
        %500 = sbr.rel (%p498) target = $region40
      $region39: #{generator_forward.22} parent=27 // pred_region
        _
      $region40: #{generator_forward.22} parent=27 // pred_fallthru
        _
    $region28: #{generator_forward.22} parent=5 // pred_fallthru
      _
    %p501 = scmp.le.s32.totalorder 2, %s11
    // Predicated region
    $region41: #{generator_forward.22} parent=5 // pred_check
      %p502 = pneg %p501
    $region42: #{generator_forward.22} parent=5 // pred_check_branch
      %504 = sbr.rel (%p502) target = $region44
    $region43: #{generator_forward.22} parent=5 // pred_region
      %s505 = ssub.s32 %s11, 2
      // Predicated region
      $region45: #{generator_forward.22} parent=43 // pred_check
        %p506 = pneg %p87
      $region46: #{generator_forward.22} parent=43 // pred_check_branch
        %508 = sbr.rel (%p506) target = $region48
      $region47: #{generator_forward.22} parent=43 // pred_region
        %s509 = smul.u32 8, %s17
        %p510 = scmp.lt.s32.totalorder %s509, 15
        %s511 = scalar_select %p510, %s509, 15
        %s512 = smul.addr %s511, 4
        %s513 = scalar_lea.vmem %s2, %s512
      $region48: #{generator_forward.22} parent=43 // pred_fallthru
        _
      // Predicated region
      $region49: #{generator_forward.22} parent=43 // pred_check
        %p514 = pneg %p113
      $region50: #{generator_forward.22} parent=43 // pred_check_branch
        %516 = sbr.rel (%p514) target = $region52
      $region51: #{generator_forward.22} parent=43 // pred_region
        %p517 = scmp.lt.s32.totalorder %s17, 1
        %s518 = scalar_select %p517, %s17, 1
        %s519 = smul.addr %s518, 8
        %s520 = scalar_lea.vmem %s3, %s519
      $region52: #{generator_forward.22} parent=43 // pred_fallthru
        _
      // Predicated region
      $region53: #{generator_forward.22} parent=43 // pred_check
        %p521 = pneg %p139
      $region54: #{generator_forward.22} parent=43 // pred_check_branch
        %523 = sbr.rel (%p521) target = $region56
      $region55: #{generator_forward.22} parent=43 // pred_region
        %p524 = scmp.lt.s32.totalorder %s17, 1
        %s525 = scalar_select %p524, %s17, 1
        %s526 = smul.addr %s525, 8
        %s527 = scalar_lea.vmem %s4, %s526
      $region56: #{generator_forward.22} parent=43 // pred_fallthru
        _
    $region44: #{generator_forward.22} parent=5 // pred_fallthru
      _
  $region6: #{generator_forward.22} parent=0 // loop_footer
    %s15 = sadd.s32 1, %s11
  $region7: #{generator_forward.22} parent=0 // loop_footer_branch
    %10 = sbr.rel target = $region3
  $region8: #{generator_forward.22} parent=0 // loop_exit
    _

// kernel: tile.141
$region0: #{tile.141}
  #allocation0 [shape = 's32[1]{0}', space=sflag, size = 0x4, scoped, tag = 'scoped memory for tile.141']
  %s0 = inlined_call_operand.vmem [shape: f32[16], index: 0, kind: input, shape index: {}]
  %s1 = inlined_call_operand.vmem [shape: f32[64,16], index: 1, kind: output, shape index: {}]
  // Predicated region
  $region2: #{tile.141} parent=0 // pred_check
    _
  $region3: #{tile.141} parent=0 // pred_check_branch
    %3 = sbr.rel (0) target = $region5
  $region4: #{tile.141} parent=0 // pred_region
    _
  $region5: #{tile.141} parent=0 // pred_fallthru
    _
  %v4 = vld [vmem:[%s0] ss:$0 sm:$0xff]
  %5 = vst [vmem:[%s1] sm:$0xff] %v4
  %s6 = scalar_lea.vmem %s1, 8
  %7 = vst [vmem:[%s6] sm:$0xff] %v4
  %s8 = scalar_lea.vmem %s1, 16
  %9 = vst [vmem:[%s8] sm:$0xff] %v4
  %s10 = scalar_lea.vmem %s1, 24
  %11 = vst [vmem:[%s10] sm:$0xff] %v4
  %s12 = scalar_lea.vmem %s1, 32
  %13 = vst [vmem:[%s12] sm:$0xff] %v4
  %s14 = scalar_lea.vmem %s1, 40
  %15 = vst [vmem:[%s14] sm:$0xff] %v4
  %s16 = scalar_lea.vmem %s1, 48
  %17 = vst [vmem:[%s16] sm:$0xff] %v4
  %s18 = scalar_lea.vmem %s1, 56
  %19 = vst [vmem:[%s18] sm:$0xff] %v4

// kernel: tile.143
$region0: #{tile.143}
  %s0 = inlined_call_operand.vmem [shape: f32[64,16], index: 0, kind: input, shape index: {}]
  %s1 = inlined_call_operand.vmem [shape: f32[1,1024], index: 1, kind: output, shape index: {}]
  $region1: #{tile.143} parent=0
    #allocation0 [shape = 'u8[32768]{0}', space=vmem, size = 0x8000, scoped, tag = 'scoped mem for output reshape']
    %v2 = vld [vmem:[%s0] ss:$8 sm:$0xf]
    %v3 = vld [vmem:[%s0] ss:$8 sm:$0xf0]
    %vm4 = vcmask 1047556
    %v5 = vsel %vm4, %v3, %v2
    %vm6 = vcmask 130048
    %7 = vst.msk [vmem:[#allocation0] ss:$8 sm:$0xf] %vm6, %v5
    %8 = vst.msk [vmem:[#allocation0] ss:$8 sm:$0xf0] %vm6, %v5
    %s9 = scalar_lea.vmem %s0, 7
    %v10 = vld [vmem:[%s9] ss:$8 sm:$0xf]
    %s11 = scalar_lea.vmem %s0, 7
    %v12 = vld [vmem:[%s11] ss:$8 sm:$0xf0]
    %vm13 = vcmask 1047556
    %v14 = vsel %vm13, %v12, %v10
    %15 = vrot.lane.b32.xlu0 %v14, 112
    %v16 = vpop.permute.xlu0 %15
    %vm17 = vcmask 1048448
    %18 = vst.msk [vmem:[#allocation0] ss:$8 sm:$0xf] %vm17, %v16
    %19 = vst.msk [vmem:[#allocation0] ss:$8 sm:$0xf0] %vm17, %v16
    %s20 = scalar_lea.vmem %s0, 6
    %v21 = vld [vmem:[%s20] ss:$8 sm:$0xf]
    %s22 = scalar_lea.vmem %s0, 6
    %v23 = vld [vmem:[%s22] ss:$8 sm:$0xf0]
    %vm24 = vcmask 1047556
    %v25 = vsel %vm24, %v23, %v21
    %26 = vrot.lane.b32.xlu0 %v25, 96
    %v27 = vpop.permute.xlu0 %26
    %vm28 = vcmask 917248
    %29 = vst.msk [vmem:[#allocation0] ss:$8 sm:$0xf] %vm28, %v27
    %30 = vst.msk [vmem:[#allocation0] ss:$8 sm:$0xf0] %vm28, %v27
    %s31 = scalar_lea.vmem %s0, 5
    %v32 = vld [vmem:[%s31] ss:$8 sm:$0xf]
    %s33 = scalar_lea.vmem %s0, 5
    %v34 = vld [vmem:[%s33] ss:$8 sm:$0xf0]
    %vm35 = vcmask 1047556
    %v36 = vsel %vm35, %v34, %v32
    %37 = vrot.lane.b32.xlu0 %v36, 80
    %v38 = vpop.permute.xlu0 %37
    %vm39 = vcmask 786048
    %40 = vst.msk [vmem:[#allocation0] ss:$8 sm:$0xf] %vm39, %v38
    %41 = vst.msk [vmem:[#allocation0] ss:$8 sm:$0xf0] %vm39, %v38
    %s42 = scalar_lea.vmem %s0, 4
    %v43 = vld [vmem:[%s42] ss:$8 sm:$0xf]
    %s44 = scalar_lea.vmem %s0, 4
    %v45 = vld [vmem:[%s44] ss:$8 sm:$0xf0]
    %vm46 = vcmask 1047556
    %v47 = vsel %vm46, %v45, %v43
    %48 = vrot.lane.b32.xlu0 %v47, 64
    %v49 = vpop.permute.xlu0 %48
    %vm50 = vcmask 654848
    %51 = vst.msk [vmem:[#allocation0] ss:$8 sm:$0xf] %vm50, %v49
    %52 = vst.msk [vmem:[#allocation0] ss:$8 sm:$0xf0] %vm50, %v49
    %s53 = scalar_lea.vmem %s0, 3
    %v54 = vld [vmem:[%s53] ss:$8 sm:$0xf]
    %s55 = scalar_lea.vmem %s0, 3
    %v56 = vld [vmem:[%s55] ss:$8 sm:$0xf0]
    %vm57 = vcmask 1047556
    %v58 = vsel %vm57, %v56, %v54
    %59 = vrot.lane.b32.xlu0 %v58, 48
    %v60 = vpop.permute.xlu0 %59
    %vm61 = vcmask 523648
    %62 = vst.msk [vmem:[#allocation0] ss:$8 sm:$0xf] %vm61, %v60
    %63 = vst.msk [vmem:[#allocation0] ss:$8 sm:$0xf0] %vm61, %v60
    %s64 = scalar_lea.vmem %s0, 2
    %v65 = vld [vmem:[%s64] ss:$8 sm:$0xf]
    %s66 = scalar_lea.vmem %s0, 2
    %v67 = vld [vmem:[%s66] ss:$8 sm:$0xf0]
    %vm68 = vcmask 1047556
    %v69 = vsel %vm68, %v67, %v65
    %70 = vrot.lane.b32.xlu0 %v69, 32
    %v71 = vpop.permute.xlu0 %70
    %vm72 = vcmask 392448
    %73 = vst.msk [vmem:[#allocation0] ss:$8 sm:$0xf] %vm72, %v71
    %74 = vst.msk [vmem:[#allocation0] ss:$8 sm:$0xf0] %vm72, %v71
    %s75 = scalar_lea.vmem %s0, 1
    %v76 = vld [vmem:[%s75] ss:$8 sm:$0xf]
    %s77 = scalar_lea.vmem %s0, 1
    %v78 = vld [vmem:[%s77] ss:$8 sm:$0xf0]
    %vm79 = vcmask 1047556
    %v80 = vsel %vm79, %v78, %v76
    %81 = vrot.lane.b32.xlu0 %v80, 16
    %v82 = vpop.permute.xlu0 %81
    %vm83 = vcmask 261248
    %84 = vst.msk [vmem:[#allocation0] ss:$8 sm:$0xf] %vm83, %v82
    %85 = vst.msk [vmem:[#allocation0] ss:$8 sm:$0xf0] %vm83, %v82
    %s87 = sshll.u32 1, 1
    %s88 = ssub.s32 %s87, 1
    %v90 = vld [vmem:[#allocation0] sm:%s88]
    %s91 = sshll.u32 1, 1
    %s92 = ssub.s32 %s91, 1
    %93 = vst [vmem:[%s1] sm:%s92] %v90
    %s94 = scalar_lea.vmem [#allocation0], 8
    %v95 = vld [vmem:[%s94] sm:%s88]
    %s96 = sshll.u32 1, 1
    %s97 = ssub.s32 %s96, 1
    %s98 = scalar_lea.vmem %s1, 1
    %99 = vst [vmem:[%s98] sm:%s97] %v95
    %s100 = scalar_lea.vmem [#allocation0], 16
    %v101 = vld [vmem:[%s100] sm:%s88]
    %s102 = sshll.u32 1, 1
    %s103 = ssub.s32 %s102, 1
    %s104 = smul.addr 1, 2
    %s105 = scalar_lea.vmem %s1, %s104
    %106 = vst [vmem:[%s105] sm:%s103] %v101
    %s107 = scalar_lea.vmem [#allocation0], 24
    %v108 = vld [vmem:[%s107] sm:%s88]
    %s109 = sshll.u32 1, 1
    %s110 = ssub.s32 %s109, 1
    %s111 = smul.addr 1, 3
    %s112 = scalar_lea.vmem %s1, %s111
    %113 = vst [vmem:[%s112] sm:%s110] %v108
    %s114 = scalar_lea.vmem [#allocation0], 32
    %v115 = vld [vmem:[%s114] sm:%s88]
    %s116 = sshll.u32 1, 1
    %s117 = ssub.s32 %s116, 1
    %s118 = smul.addr 1, 4
    %s119 = scalar_lea.vmem %s1, %s118
    %120 = vst [vmem:[%s119] sm:%s117] %v115
    %s121 = scalar_lea.vmem [#allocation0], 40
    %v122 = vld [vmem:[%s121] sm:%s88]
    %s123 = sshll.u32 1, 1
    %s124 = ssub.s32 %s123, 1
    %s125 = smul.addr 1, 5
    %s126 = scalar_lea.vmem %s1, %s125
    %127 = vst [vmem:[%s126] sm:%s124] %v122
    %s128 = scalar_lea.vmem [#allocation0], 48
    %v129 = vld [vmem:[%s128] sm:%s88]
    %s130 = sshll.u32 1, 1
    %s131 = ssub.s32 %s130, 1
    %s132 = smul.addr 1, 6
    %s133 = scalar_lea.vmem %s1, %s132
    %134 = vst [vmem:[%s133] sm:%s131] %v129
    %s135 = scalar_lea.vmem [#allocation0], 56
    %v136 = vld [vmem:[%s135] sm:%s88]
    %s137 = sshll.u32 1, 1
    %s138 = ssub.s32 %s137, 1
    %s139 = smul.addr 1, 7
    %s140 = scalar_lea.vmem %s1, %s139
    %141 = vst [vmem:[%s140] sm:%s138] %v136

// kernel: tile.151
$region0: #{tile.151}
  #allocation0 [shape = 's32[1]{0}', space=sflag, size = 0x4, scoped, tag = 'scoped memory for tile.151']
  %s0 = inlined_call_operand.vmem [shape: f32[32], index: 0, kind: input, shape index: {}]
  %s1 = inlined_call_operand.vmem [shape: f32[32,32], index: 1, kind: output, shape index: {}]
  // Predicated region
  $region2: #{tile.151} parent=0 // pred_check
    _
  $region3: #{tile.151} parent=0 // pred_check_branch
    %3 = sbr.rel (0) target = $region5
  $region4: #{tile.151} parent=0 // pred_region
    _
  $region5: #{tile.151} parent=0 // pred_fallthru
    _
  %v4 = vld [vmem:[%s0] ss:$0 sm:$0xff]
  %5 = vst [vmem:[%s1] sm:$0xff] %v4
  %s6 = scalar_lea.vmem %s1, 8
  %7 = vst [vmem:[%s6] sm:$0xff] %v4
  %s8 = scalar_lea.vmem %s1, 16
  %9 = vst [vmem:[%s8] sm:$0xff] %v4
  %s10 = scalar_lea.vmem %s1, 24
  %11 = vst [vmem:[%s10] sm:$0xff] %v4

// kernel: tile.153
$region0: #{tile.153}
  %s0 = inlined_call_operand.vmem [shape: f32[32,32], index: 0, kind: input, shape index: {}]
  %s1 = inlined_call_operand.vmem [shape: f32[1,1024], index: 1, kind: output, shape index: {}]
  $region1: #{tile.153} parent=0
    #allocation0 [shape = 'u8[32768]{0}', space=vmem, size = 0x8000, scoped, tag = 'scoped mem for output reshape']
    %v2 = vld [vmem:[%s0] ss:$4 sm:$0xff]
    %vm3 = vcmask 261120
    %4 = vst.msk [vmem:[#allocation0] ss:$8 sm:$0xf] %vm3, %v2
    %5 = vst.msk [vmem:[#allocation0] ss:$8 sm:$0xf0] %vm3, %v2
    %s6 = scalar_lea.vmem %s0, 3
    %v7 = vld [vmem:[%s6] ss:$4 sm:$0xff]
    %8 = vrot.lane.b32.xlu0 %v7, 96
    %v9 = vpop.permute.xlu0 %8
    %vm10 = vcmask 1048320
    %11 = vst.msk [vmem:[#allocation0] ss:$8 sm:$0xf] %vm10, %v9
    %12 = vst.msk [vmem:[#allocation0] ss:$8 sm:$0xf0] %vm10, %v9
    %s13 = scalar_lea.vmem %s0, 2
    %v14 = vld [vmem:[%s13] ss:$4 sm:$0xff]
    %15 = vrot.lane.b32.xlu0 %v14, 64
    %v16 = vpop.permute.xlu0 %15
    %vm17 = vcmask 785920
    %18 = vst.msk [vmem:[#allocation0] ss:$8 sm:$0xf] %vm17, %v16
    %19 = vst.msk [vmem:[#allocation0] ss:$8 sm:$0xf0] %vm17, %v16
    %s20 = scalar_lea.vmem %s0, 1
    %v21 = vld [vmem:[%s20] ss:$4 sm:$0xff]
    %22 = vrot.lane.b32.xlu0 %v21, 32
    %v23 = vpop.permute.xlu0 %22
    %vm24 = vcmask 523520
    %25 = vst.msk [vmem:[#allocation0] ss:$8 sm:$0xf] %vm24, %v23
    %26 = vst.msk [vmem:[#allocation0] ss:$8 sm:$0xf0] %vm24, %v23
    %s28 = sshll.u32 1, 1
    %s29 = ssub.s32 %s28, 1
    %v31 = vld [vmem:[#allocation0] sm:%s29]
    %s32 = sshll.u32 1, 1
    %s33 = ssub.s32 %s32, 1
    %34 = vst [vmem:[%s1] sm:%s33] %v31
    %s35 = scalar_lea.vmem [#allocation0], 8
    %v36 = vld [vmem:[%s35] sm:%s29]
    %s37 = sshll.u32 1, 1
    %s38 = ssub.s32 %s37, 1
    %s39 = scalar_lea.vmem %s1, 1
    %40 = vst [vmem:[%s39] sm:%s38] %v36
    %s41 = scalar_lea.vmem [#allocation0], 16
    %v42 = vld [vmem:[%s41] sm:%s29]
    %s43 = sshll.u32 1, 1
    %s44 = ssub.s32 %s43, 1
    %s45 = smul.addr 1, 2
    %s46 = scalar_lea.vmem %s1, %s45
    %47 = vst [vmem:[%s46] sm:%s44] %v42
    %s48 = scalar_lea.vmem [#allocation0], 24
    %v49 = vld [vmem:[%s48] sm:%s29]
    %s50 = sshll.u32 1, 1
    %s51 = ssub.s32 %s50, 1
    %s52 = smul.addr 1, 3
    %s53 = scalar_lea.vmem %s1, %s52
    %54 = vst [vmem:[%s53] sm:%s51] %v49
    %s55 = scalar_lea.vmem [#allocation0], 32
    %v56 = vld [vmem:[%s55] sm:%s29]
    %s57 = sshll.u32 1, 1
    %s58 = ssub.s32 %s57, 1
    %s59 = smul.addr 1, 4
    %s60 = scalar_lea.vmem %s1, %s59
    %61 = vst [vmem:[%s60] sm:%s58] %v56
    %s62 = scalar_lea.vmem [#allocation0], 40
    %v63 = vld [vmem:[%s62] sm:%s29]
    %s64 = sshll.u32 1, 1
    %s65 = ssub.s32 %s64, 1
    %s66 = smul.addr 1, 5
    %s67 = scalar_lea.vmem %s1, %s66
    %68 = vst [vmem:[%s67] sm:%s65] %v63
    %s69 = scalar_lea.vmem [#allocation0], 48
    %v70 = vld [vmem:[%s69] sm:%s29]
    %s71 = sshll.u32 1, 1
    %s72 = ssub.s32 %s71, 1
    %s73 = smul.addr 1, 6
    %s74 = scalar_lea.vmem %s1, %s73
    %75 = vst [vmem:[%s74] sm:%s72] %v70
    %s76 = scalar_lea.vmem [#allocation0], 56
    %v77 = vld [vmem:[%s76] sm:%s29]
    %s78 = sshll.u32 1, 1
    %s79 = ssub.s32 %s78, 1
    %s80 = smul.addr 1, 7
    %s81 = scalar_lea.vmem %s1, %s80
    %82 = vst [vmem:[%s81] sm:%s79] %v77

// kernel: generator_forward.24
$region0: #{generator_forward.24}
  #allocation0 [shape = 'u32[]', space=smem, size = 0x4, offset = 0x4, fixed_abs, tag = 'smem constant byte address 0x4 - core index']
  #allocation1 [shape = 'u32[144,128]{1,0:T(1,128)}', space=vmem, size = 0x12000, scoped, tag = 'internal scratch']
  %s0 = inlined_call_operand.vmem [shape: bf16[32,256], index: 0, kind: input, shape index: {}]
  %s1 = inlined_call_operand.vmem [shape: bf16[256,32], index: 1, kind: input, shape index: {}]
  %s2 = inlined_call_operand.vmem [shape: bf16[32,32], index: 2, kind: output, shape index: {0}]
  %s3 = inlined_call_operand.vmem [shape: f32[16,32], index: 3, kind: output, shape index: {1}]
  %s4 = inlined_call_operand.vmem [shape: f32[16,32], index: 4, kind: output, shape index: {2}]
  %5 = xla_tuple %s2, %s3, %s4
  %s6 = sld [smem:[#allocation0]]
  $region57: #{generator_forward.24} parent=0
    _
  %s8 = ssub.s32 1, %s6
  %s9 = scalar_select 0, %s8, %s6
  loop: start=0, step=1, limit=4
  $region2: #{generator_forward.24} parent=0 // loop_pre_header
    _
  $region3: #{generator_forward.24} parent=0 // loop_header
    %s11 = sphi 0, %s15
    %p12 = scmp.ge.s32.totalorder %s11, 4
    %s21 = sphi 0, %s23
    %s24 = sphi 0, %s21
    %s25 = sphi 0, %s24
    %s41 = sphi 0, %s25
    %s45 = sphi 0, %s45
    %s47 = sphi 0, %s45
    %s48 = sphi 0, %s47
    %s62 = sphi 0, %s48
    %s68 = sphi 0, %s70
    %s71 = sphi 0, %s68
    %s72 = sphi 0, %s71
    %s88 = sphi 0, %s72
    %s94 = sphi 0, %s96
    %s97 = sphi 0, %s94
    %s98 = sphi 0, %s97
    %s114 = sphi 0, %s98
    %s120 = sphi 0, %s122
    %s123 = sphi 0, %s120
    %s124 = sphi 0, %s123
    %s140 = sphi 0, %s124
  $region4: #{generator_forward.24} parent=0 // loop_header_branch
    %14 = sbr.rel (%p12) target = $region8
  $region5: #{generator_forward.24} parent=0 // loop_body
    %s16 = ssub.s32 %s11, 1
    %s17 = ssub.s32 %s11, 2
    %s18 = sadd.s32 %s11, 1
    %s19 = ssub.s32 %s11, %s18
    %p20 = scmp.eq.s32.totalorder %s19, 0
    %s22 = sadd.s32 %s21, 1
    %s23 = scalar_select %p20, %s21, %s22
    %p26 = pneg %p20
    %p27 = scmp.eq.s32.totalorder %s11, 1
    %p28 = por %p26, %p27
    %p29 = scmp.ne.s32.totalorder %s21, %s24
    %p30 = scmp.eq.s32.totalorder %s11, 0
    %p31 = por %p29, %p30
    %p32 = scmp.ne.s32.totalorder %s21, %s24
    %p33 = scmp.eq.s32.totalorder %s16, 1
    %p34 = por %p32, %p33
    %p35 = scmp.ne.s32.totalorder %s24, %s25
    %p36 = scmp.eq.s32.totalorder %s16, 0
    %p37 = por %p35, %p36
    %p38 = scmp.ne.s32.totalorder %s24, %s25
    %p39 = scmp.eq.s32.totalorder %s17, 1
    %p40 = por %p38, %p39
    %p42 = scmp.ne.s32.totalorder %s25, %s41
    %p43 = scmp.eq.s32.totalorder %s17, 0
    %p44 = por %p42, %p43
    %s46 = sadd.s32 %s45, 1
    %p49 = scmp.eq.s32.totalorder %s11, 1
    %p50 = scmp.ne.s32.totalorder %s45, %s47
    %p51 = scmp.eq.s32.totalorder %s11, 0
    %p52 = por %p50, %p51
    %p53 = scmp.ne.s32.totalorder %s45, %s47
    %p54 = scmp.eq.s32.totalorder %s16, 1
    %p55 = por %p53, %p54
    %p56 = scmp.ne.s32.totalorder %s47, %s48
    %p57 = scmp.eq.s32.totalorder %s16, 0
    %p58 = por %p56, %p57
    %p59 = scmp.ne.s32.totalorder %s47, %s48
    %p60 = scmp.eq.s32.totalorder %s17, 1
    %p61 = por %p59, %p60
    %p63 = scmp.ne.s32.totalorder %s48, %s62
    %p64 = scmp.eq.s32.totalorder %s17, 0
    %p65 = por %p63, %p64
    %s66 = ssub.s32 %s11, %s18
    %p67 = scmp.eq.s32.totalorder %s66, 0
    %s69 = sadd.s32 %s68, 1
    %s70 = scalar_select %p67, %s68, %s69
    %p73 = pneg %p67
    %p74 = scmp.eq.s32.totalorder %s11, 1
    %p75 = por %p73, %p74
    %p76 = scmp.ne.s32.totalorder %s68, %s71
    %p77 = scmp.eq.s32.totalorder %s11, 0
    %p78 = por %p76, %p77
    %p79 = scmp.ne.s32.totalorder %s68, %s71
    %p80 = scmp.eq.s32.totalorder %s16, 1
    %p81 = por %p79, %p80
    %p82 = scmp.ne.s32.totalorder %s71, %s72
    %p83 = scmp.eq.s32.totalorder %s16, 0
    %p84 = por %p82, %p83
    %p85 = scmp.ne.s32.totalorder %s71, %s72
    %p86 = scmp.eq.s32.totalorder %s17, 1
    %p87 = por %p85, %p86
    %p89 = scmp.ne.s32.totalorder %s72, %s88
    %p90 = scmp.eq.s32.totalorder %s17, 0
    %p91 = por %p89, %p90
    %s92 = ssub.s32 %s11, %s18
    %p93 = scmp.eq.s32.totalorder %s92, 0
    %s95 = sadd.s32 %s94, 1
    %s96 = scalar_select %p93, %s94, %s95
    %p99 = pneg %p93
    %p100 = scmp.eq.s32.totalorder %s11, 1
    %p101 = por %p99, %p100
    %p102 = scmp.ne.s32.totalorder %s94, %s97
    %p103 = scmp.eq.s32.totalorder %s11, 0
    %p104 = por %p102, %p103
    %p105 = scmp.ne.s32.totalorder %s94, %s97
    %p106 = scmp.eq.s32.totalorder %s16, 1
    %p107 = por %p105, %p106
    %p108 = scmp.ne.s32.totalorder %s97, %s98
    %p109 = scmp.eq.s32.totalorder %s16, 0
    %p110 = por %p108, %p109
    %p111 = scmp.ne.s32.totalorder %s97, %s98
    %p112 = scmp.eq.s32.totalorder %s17, 1
    %p113 = por %p111, %p112
    %p115 = scmp.ne.s32.totalorder %s98, %s114
    %p116 = scmp.eq.s32.totalorder %s17, 0
    %p117 = por %p115, %p116
    %s118 = ssub.s32 %s11, %s18
    %p119 = scmp.eq.s32.totalorder %s118, 0
    %s121 = sadd.s32 %s120, 1
    %s122 = scalar_select %p119, %s120, %s121
    %p125 = pneg %p119
    %p126 = scmp.eq.s32.totalorder %s11, 1
    %p127 = por %p125, %p126
    %p128 = scmp.ne.s32.totalorder %s120, %s123
    %p129 = scmp.eq.s32.totalorder %s11, 0
    %p130 = por %p128, %p129
    %p131 = scmp.ne.s32.totalorder %s120, %s123
    %p132 = scmp.eq.s32.totalorder %s16, 1
    %p133 = por %p131, %p132
    %p134 = scmp.ne.s32.totalorder %s123, %s124
    %p135 = scmp.eq.s32.totalorder %s16, 0
    %p136 = por %p134, %p135
    %p137 = scmp.ne.s32.totalorder %s123, %s124
    %p138 = scmp.eq.s32.totalorder %s17, 1
    %p139 = por %p137, %p138
    %p141 = scmp.ne.s32.totalorder %s124, %s140
    %p142 = scmp.eq.s32.totalorder %s17, 0
    %p143 = por %p141, %p142
    %p144 = scmp.le.s32.totalorder 1, %s11
    %p145 = scmp.lt.s32.totalorder %s11, 3
    %p146 = pnand %p144, %p145
    %p147 = pneg %p146
    // Predicated region
    $region9: #{generator_forward.24} parent=5 // pred_check
      _
    $region10: #{generator_forward.24} parent=5 // pred_check_branch
      %149 = sbr.rel (%p146) target = $region12
    $region11: #{generator_forward.24} parent=5 // pred_region
      %s150 = ssub.s32 %s11, 1
      // Predicated region
      $region13: #{generator_forward.24} parent=11 // pred_check
        %p151 = pneg %p58
      $region14: #{generator_forward.24} parent=11 // pred_check_branch
        %153 = sbr.rel (%p151) target = $region16
      $region15: #{generator_forward.24} parent=11 // pred_region
        _
      $region16: #{generator_forward.24} parent=11 // pred_fallthru
        _
    $region12: #{generator_forward.24} parent=5 // pred_fallthru
      _
    %p154 = scmp.lt.s32.totalorder %s11, 2
    // Predicated region
    $region17: #{generator_forward.24} parent=5 // pred_check
      %p155 = pneg %p154
    $region18: #{generator_forward.24} parent=5 // pred_check_branch
      %157 = sbr.rel (%p155) target = $region20
    $region19: #{generator_forward.24} parent=5 // pred_region
      // Predicated region
      $region21: #{generator_forward.24} parent=19 // pred_check
        %p158 = pneg %p31
      $region22: #{generator_forward.24} parent=19 // pred_check_branch
        %160 = sbr.rel (%p158) target = $region24
      $region23: #{generator_forward.24} parent=19 // pred_region
        %s161 = smul.u32 2, %s11
        %p162 = scmp.lt.s32.totalorder %s161, 3
        %s163 = scalar_select %p162, %s161, 3
        %s164 = smul.addr %s163, 2
        %s165 = smul.addr %s164, 4
        %s166 = scalar_lea.vmem %s0, %s165
        %s167 = smul.u32 2, %s11
      $region24: #{generator_forward.24} parent=19 // pred_fallthru
        _
    $region20: #{generator_forward.24} parent=5 // pred_fallthru
      _
    %p168 = scmp.le.s32.totalorder 1, %s11
    %p169 = scmp.lt.s32.totalorder %s11, 3
    %p170 = pnand %p168, %p169
    %p171 = pneg %p170
    // Predicated region
    $region25: #{generator_forward.24} parent=5 // pred_check
      _
    $region26: #{generator_forward.24} parent=5 // pred_check_branch
      %173 = sbr.rel (%p170) target = $region28
    $region27: #{generator_forward.24} parent=5 // pred_region
      %s174 = ssub.s32 %s11, 1
      %s175 = smul.u32 2, %s16
      %p176 = scmp.lt.s32.totalorder %s175, 3
      %s177 = scalar_select %p176, %s175, 3
      %s178 = smul.addr %s177, 2
      %s179 = smul.addr %s178, 4
      %s180 = scalar_lea.vmem %s0, %s179
      %p181 = pneg %p37
      %p182 = pneg %p34
      %p183 = pneg %p58
      %p184 = pneg %p55
      %p185 = pneg %p84
      %p186 = pneg %p81
      %s187 = smul.u32 2, %s16
      %p188 = scmp.lt.s32.totalorder %s187, 3
      %s189 = scalar_select %p188, %s187, 3
      %s190 = smul.addr %s189, 4
      %s191 = scalar_lea.vmem %s2, %s190
      %p192 = pneg %p110
      %p193 = pneg %p107
      %p194 = scmp.lt.s32.totalorder %s16, 1
      %s195 = scalar_select %p194, %s16, 1
      %s196 = smul.addr %s195, 8
      %s197 = scalar_lea.vmem %s3, %s196
      %p198 = pneg %p136
      %p199 = pneg %p133
      %p200 = scmp.lt.s32.totalorder %s16, 1
      %s201 = scalar_select %p200, %s16, 1
      %s202 = smul.addr %s201, 8
      %s203 = scalar_lea.vmem %s4, %s202
      %s204 = smul.u32 2, %s16
      %p205 = scmp.lt.s32.totalorder %s204, 3
      %s206 = scalar_select %p205, %s204, 3
      %s207 = smul.addr %s206, 2
      %s208 = smul.addr %s207, 4
      %s209 = scalar_lea.vmem %s0, %s208
      %s210 = smul.u32 2, %s16
      %s211 = smul.u32 2, %s16
      %p212 = scmp.lt.s32.totalorder %s211, 3
      %s213 = scalar_select %p212, %s211, 3
      %s214 = smul.addr %s213, 4
      %s215 = scalar_lea.vmem %s2, %s214
      %s216 = smul.u32 2, %s16
      %p217 = scmp.lt.s32.totalorder %s16, 1
      %s218 = scalar_select %p217, %s16, 1
      %s219 = smul.addr %s218, 8
      %s220 = scalar_lea.vmem %s3, %s219
      %p221 = scmp.lt.s32.totalorder %s16, 1
      %s222 = scalar_select %p221, %s16, 1
      %s223 = smul.addr %s222, 8
      %s224 = scalar_lea.vmem %s4, %s223
      %v226 = vld [vmem:[%s209] sm:$0xff]
      %v227 = vld [vmem:[%s209 + $0x8] sm:$0xff]
      %v228 = vld [vmem:[%s1] sm:$0xf]
      %v229 = vld [vmem:[%s1 + $0x4] sm:$0xf]
      %v230 = vld [vmem:[%s1 + $0x8] sm:$0xf]
      %v231 = vld [vmem:[%s1 + $0xc] sm:$0xf]
      %v232 = vld [vmem:[%s1 + $0x10] sm:$0xf]
      %v233 = vld [vmem:[%s1 + $0x14] sm:$0xf]
      %v234 = vld [vmem:[%s1 + $0x18] sm:$0xf]
      %v235 = vld [vmem:[%s1 + $0x1c] sm:$0xf]
      %v236 = vld [vmem:[%s1 + $0x20] sm:$0xf]
      %v237 = vld [vmem:[%s1 + $0x24] sm:$0xf]
      %v238 = vld [vmem:[%s1 + $0x28] sm:$0xf]
      %v239 = vld [vmem:[%s1 + $0x2c] sm:$0xf]
      %v240 = vld [vmem:[%s1 + $0x30] sm:$0xf]
      %v241 = vld [vmem:[%s1 + $0x34] sm:$0xf]
      %v242 = vld [vmem:[%s1 + $0x38] sm:$0xf]
      %v243 = vld [vmem:[%s1 + $0x3c] sm:$0xf]
      %v244 = vld [vmem:[%s1 + $0x40] sm:$0xf]
      %v245 = vld [vmem:[%s1 + $0x44] sm:$0xf]
      %v246 = vld [vmem:[%s1 + $0x48] sm:$0xf]
      %v247 = vld [vmem:[%s1 + $0x4c] sm:$0xf]
      %v248 = vld [vmem:[%s1 + $0x50] sm:$0xf]
      %v249 = vld [vmem:[%s1 + $0x54] sm:$0xf]
      %v250 = vld [vmem:[%s1 + $0x58] sm:$0xf]
      %v251 = vld [vmem:[%s1 + $0x5c] sm:$0xf]
      %v252 = vld [vmem:[%s1 + $0x60] sm:$0xf]
      %v253 = vld [vmem:[%s1 + $0x64] sm:$0xf]
      %v254 = vld [vmem:[%s1 + $0x68] sm:$0xf]
      %v255 = vld [vmem:[%s1 + $0x6c] sm:$0xf]
      %v256 = vld [vmem:[%s1 + $0x70] sm:$0xf]
      %v257 = vld [vmem:[%s1 + $0x74] sm:$0xf]
      %v258 = vld [vmem:[%s1 + $0x78] sm:$0xf]
      %v259 = vld [vmem:[%s1 + $0x7c] sm:$0xf]
      %v262 = vunpack.c.l.b16 %v226
      %v263 = vunpack.c.h.b16 %v226
      %v264 = vunpack.c.l.b16 %v227
      %v265 = vunpack.c.h.b16 %v227
      %v266 = vpack.c.b16 %v264, %v262
      %v267 = vpack.c.b16 %v265, %v263
      %v302 = vunpack.c.l.b16 %v228
      %v303 = vunpack.c.l.b16 %v229
      %v304 = vunpack.c.l.b16 %v230
      %v305 = vunpack.c.l.b16 %v231
      %v306 = vunpack.c.l.b16 %v232
      %v307 = vunpack.c.l.b16 %v233
      %v308 = vunpack.c.l.b16 %v234
      %v309 = vunpack.c.l.b16 %v235
      %v310 = vunpack.c.l.b16 %v236
      %v311 = vunpack.c.l.b16 %v237
      %v312 = vunpack.c.l.b16 %v238
      %v313 = vunpack.c.l.b16 %v239
      %v314 = vunpack.c.l.b16 %v240
      %v315 = vunpack.c.l.b16 %v241
      %v316 = vunpack.c.l.b16 %v242
      %v317 = vunpack.c.l.b16 %v243
      %v318 = vunpack.c.l.b16 %v244
      %v319 = vunpack.c.l.b16 %v245
      %v320 = vunpack.c.l.b16 %v246
      %v321 = vunpack.c.l.b16 %v247
      %v322 = vunpack.c.l.b16 %v248
      %v323 = vunpack.c.l.b16 %v249
      %v324 = vunpack.c.l.b16 %v250
      %v325 = vunpack.c.l.b16 %v251
      %v326 = vunpack.c.l.b16 %v252
      %v327 = vunpack.c.l.b16 %v253
      %v328 = vunpack.c.l.b16 %v254
      %v329 = vunpack.c.l.b16 %v255
      %v330 = vunpack.c.l.b16 %v256
      %v331 = vunpack.c.l.b16 %v257
      %v332 = vunpack.c.l.b16 %v258
      %v333 = vunpack.c.l.b16 %v259
      %v334 = vpack.c.b16 %v303, %v302
      %v335 = vpack.c.b16 %v305, %v304
      %v336 = vpack.c.b16 %v307, %v306
      %v337 = vpack.c.b16 %v309, %v308
      %v338 = vpack.c.b16 %v311, %v310
      %v339 = vpack.c.b16 %v313, %v312
      %v340 = vpack.c.b16 %v315, %v314
      %v341 = vpack.c.b16 %v317, %v316
      %v342 = vpack.c.b16 %v319, %v318
      %v343 = vpack.c.b16 %v321, %v320
      %v344 = vpack.c.b16 %v323, %v322
      %v345 = vpack.c.b16 %v325, %v324
      %v346 = vpack.c.b16 %v327, %v326
      %v347 = vpack.c.b16 %v329, %v328
      %v348 = vpack.c.b16 %v331, %v330
      %v349 = vpack.c.b16 %v333, %v332
      %366 = vmatprep.subr.bf16.mxu0 0
      %367 = vmatpush1.bf16.msra.mxu0 %v341
      %368 = vmatprep.subr.bf16.mxu0 0
      %369 = vmatpush1.bf16.msra.mxu0 %v340
      %370 = vmatprep.subr.bf16.mxu0 0
      %371 = vmatpush1.bf16.msra.mxu0 %v339
      %372 = vmatprep.subr.bf16.mxu0 0
      %373 = vmatpush1.bf16.msra.mxu0 %v338
      %374 = vmatprep.subr.bf16.mxu0 0
      %375 = vmatpush1.bf16.msra.mxu0 %v337
      %376 = vmatprep.subr.bf16.mxu0 0
      %377 = vmatpush1.bf16.msra.mxu0 %v336
      %378 = vmatprep.subr.bf16.mxu0 0
      %379 = vmatpush1.bf16.msra.mxu0 %v335
      %380 = vmatprep.subr.bf16.mxu0 0
      %381 = vmatpush1.bf16.msra.mxu0 %v334
      %382 = vmatprep.subr.bf16.mxu0 0
      %383 = vmatpush2.bf16.msra.mxu0 %v349
      %384 = vmatprep.subr.bf16.mxu0 0
      %385 = vmatpush2.bf16.msra.mxu0 %v348
      %386 = vmatprep.subr.bf16.mxu0 0
      %387 = vmatpush2.bf16.msra.mxu0 %v347
      %388 = vmatprep.subr.bf16.mxu0 0
      %389 = vmatpush2.bf16.msra.mxu0 %v346
      %390 = vmatprep.subr.bf16.mxu0 0
      %391 = vmatpush2.bf16.msra.mxu0 %v345
      %392 = vmatprep.subr.bf16.mxu0 0
      %393 = vmatpush2.bf16.msra.mxu0 %v344
      %394 = vmatprep.subr.bf16.mxu0 0
      %395 = vmatpush2.bf16.msra.mxu0 %v343
      %396 = vmatprep.subr.bf16.mxu0 0
      %397 = vmatpush2.bf16.msra.mxu0 %v342
      %398 = vmatprep.mubr.bf16.mxu0 %v267
      %399 = vmatmul.mubr.bf16.gmra.mxu0 %v266
      %v400 = vpop.f32.mrf.mxu0
      %v401 = vadd.f32 0.0, %v400
      %v402 = vpop.f32.mrf.mxu0
      %v403 = vpop.f32.mrf.mxu0
      %v404 = vadd.f32 0.0, %v403
      %v405 = vpop.f32.mrf.mxu0
      %406 = vdwg.mxu0
      %v407 = vpack.c.bf16 %v404, %v401
      %v409 = vunpack.c.l.b16 %v407
      %v410 = vunpack.c.h.b16 %v407
      %v411 = vpack.c.b16 %v409, %v409
      %v412 = vpack.c.b16 %v410, %v410
      %vm415 = vcmask 257024
      %416 = vst.msk [vmem:[%s215] sm:$0xf] %vm415, %v411
      %417 = vst.msk [vmem:[%s215 + $0x4] sm:$0xf] %vm415, %v412
      %vm418 = vcmask 261120
      %v419 = vsel %vm418, %v401, 0.0
      %v420 = vsel %vm418, %v404, 0.0
      %v421 = vadd.f32 %v419, %v420
      %v422 = vrot.slane %v421, 4
      %v423 = vadd.f32 %v421, %v422
      %v424 = vrot.slane %v423, 2
      %v425 = vadd.f32 %v423, %v424
      %v426 = vrot.slane %v425, 1
      %v427 = vadd.f32 %v425, %v426
      %v428 = vmul.f32 %v401, %v401
      %v429 = vmul.f32 %v404, %v404
      %v430 = vsel %vm418, %v428, 0.0
      %v431 = vsel %vm418, %v429, 0.0
      %v432 = vadd.f32 %v430, %v431
      %v433 = vrot.slane %v432, 4
      %v434 = vadd.f32 %v432, %v433
      %v435 = vrot.slane %v434, 2
      %v436 = vadd.f32 %v434, %v435
      %v437 = vrot.slane %v436, 1
      %v438 = vadd.f32 %v436, %v437
      %439 = vst.msk [vmem:[%s220] sm:$0xff] %vm418, %v427
      %440 = vst.msk [vmem:[%s224] sm:$0xff] %vm418, %v438
      %s441 = smul.u32 2, %s16
      %p442 = scmp.lt.s32.totalorder %s441, 3
      %s443 = scalar_select %p442, %s441, 3
      %s444 = smul.addr %s443, 4
      %s445 = scalar_lea.vmem %s2, %s444
      %p446 = scmp.lt.s32.totalorder %s16, 1
      %s447 = scalar_select %p446, %s16, 1
      %s448 = smul.addr %s447, 8
      %s449 = scalar_lea.vmem %s3, %s448
      %p450 = scmp.lt.s32.totalorder %s16, 1
      %s451 = scalar_select %p450, %s16, 1
      %s452 = smul.addr %s451, 8
      %s453 = scalar_lea.vmem %s4, %s452
      // Predicated region
      $region29: #{generator_forward.24} parent=27 // pred_check
        %p454 = pneg %p81
      $region30: #{generator_forward.24} parent=27 // pred_check_branch
        %456 = sbr.rel (%p454) target = $region32
      $region31: #{generator_forward.24} parent=27 // pred_region
        %s457 = smul.u32 2, %s16
      $region32: #{generator_forward.24} parent=27 // pred_fallthru
        _
      // Predicated region
      $region33: #{generator_forward.24} parent=27 // pred_check
        %p458 = pneg %p107
      $region34: #{generator_forward.24} parent=27 // pred_check_branch
        %460 = sbr.rel (%p458) target = $region36
      $region35: #{generator_forward.24} parent=27 // pred_region
        _
      $region36: #{generator_forward.24} parent=27 // pred_fallthru
        _
      // Predicated region
      $region37: #{generator_forward.24} parent=27 // pred_check
        %p461 = pneg %p133
      $region38: #{generator_forward.24} parent=27 // pred_check_branch
        %463 = sbr.rel (%p461) target = $region40
      $region39: #{generator_forward.24} parent=27 // pred_region
        _
      $region40: #{generator_forward.24} parent=27 // pred_fallthru
        _
    $region28: #{generator_forward.24} parent=5 // pred_fallthru
      _
    %p464 = scmp.le.s32.totalorder 2, %s11
    // Predicated region
    $region41: #{generator_forward.24} parent=5 // pred_check
      %p465 = pneg %p464
    $region42: #{generator_forward.24} parent=5 // pred_check_branch
      %467 = sbr.rel (%p465) target = $region44
    $region43: #{generator_forward.24} parent=5 // pred_region
      %s468 = ssub.s32 %s11, 2
      // Predicated region
      $region45: #{generator_forward.24} parent=43 // pred_check
        %p469 = pneg %p87
      $region46: #{generator_forward.24} parent=43 // pred_check_branch
        %471 = sbr.rel (%p469) target = $region48
      $region47: #{generator_forward.24} parent=43 // pred_region
        %s472 = smul.u32 2, %s17
        %p473 = scmp.lt.s32.totalorder %s472, 3
        %s474 = scalar_select %p473, %s472, 3
        %s475 = smul.addr %s474, 4
        %s476 = scalar_lea.vmem %s2, %s475
      $region48: #{generator_forward.24} parent=43 // pred_fallthru
        _
      // Predicated region
      $region49: #{generator_forward.24} parent=43 // pred_check
        %p477 = pneg %p113
      $region50: #{generator_forward.24} parent=43 // pred_check_branch
        %479 = sbr.rel (%p477) target = $region52
      $region51: #{generator_forward.24} parent=43 // pred_region
        %p480 = scmp.lt.s32.totalorder %s17, 1
        %s481 = scalar_select %p480, %s17, 1
        %s482 = smul.addr %s481, 8
        %s483 = scalar_lea.vmem %s3, %s482
      $region52: #{generator_forward.24} parent=43 // pred_fallthru
        _
      // Predicated region
      $region53: #{generator_forward.24} parent=43 // pred_check
        %p484 = pneg %p139
      $region54: #{generator_forward.24} parent=43 // pred_check_branch
        %486 = sbr.rel (%p484) target = $region56
      $region55: #{generator_forward.24} parent=43 // pred_region
        %p487 = scmp.lt.s32.totalorder %s17, 1
        %s488 = scalar_select %p487, %s17, 1
        %s489 = smul.addr %s488, 8
        %s490 = scalar_lea.vmem %s4, %s489
      $region56: #{generator_forward.24} parent=43 // pred_fallthru
        _
    $region44: #{generator_forward.24} parent=5 // pred_fallthru
      _
  $region6: #{generator_forward.24} parent=0 // loop_footer
    %s15 = sadd.s32 1, %s11
  $region7: #{generator_forward.24} parent=0 // loop_footer_branch
    %10 = sbr.rel target = $region3
  $region8: #{generator_forward.24} parent=0 // loop_exit
    _

// kernel: generator_forward.26
$region0: #{generator_forward.26}
  #allocation0 [shape = 'u32[]', space=smem, size = 0x4, offset = 0x4, fixed_abs, tag = 'smem constant byte address 0x4 - core index']
  #allocation1 [shape = 'u32[144,128]{1,0:T(1,128)}', space=vmem, size = 0x12000, scoped, tag = 'internal scratch']
  %s0 = inlined_call_operand.vmem [shape: bf16[32,288], index: 0, kind: input, shape index: {}]
  %s1 = inlined_call_operand.vmem [shape: bf16[288,32], index: 1, kind: input, shape index: {}]
  %s2 = inlined_call_operand.vmem [shape: bf16[32,32], index: 2, kind: output, shape index: {0}]
  %s3 = inlined_call_operand.vmem [shape: f32[16,32], index: 3, kind: output, shape index: {1}]
  %s4 = inlined_call_operand.vmem [shape: f32[16,32], index: 4, kind: output, shape index: {2}]
  %5 = xla_tuple %s2, %s3, %s4
  %s6 = sld [smem:[#allocation0]]
  $region57: #{generator_forward.26} parent=0
    _
  %s8 = ssub.s32 1, %s6
  %s9 = scalar_select 0, %s8, %s6
  loop: start=0, step=1, limit=4
  $region2: #{generator_forward.26} parent=0 // loop_pre_header
    _
  $region3: #{generator_forward.26} parent=0 // loop_header
    %s11 = sphi 0, %s15
    %p12 = scmp.ge.s32.totalorder %s11, 4
    %s21 = sphi 0, %s23
    %s24 = sphi 0, %s21
    %s25 = sphi 0, %s24
    %s41 = sphi 0, %s25
    %s45 = sphi 0, %s45
    %s47 = sphi 0, %s45
    %s48 = sphi 0, %s47
    %s62 = sphi 0, %s48
    %s68 = sphi 0, %s70
    %s71 = sphi 0, %s68
    %s72 = sphi 0, %s71
    %s88 = sphi 0, %s72
    %s94 = sphi 0, %s96
    %s97 = sphi 0, %s94
    %s98 = sphi 0, %s97
    %s114 = sphi 0, %s98
    %s120 = sphi 0, %s122
    %s123 = sphi 0, %s120
    %s124 = sphi 0, %s123
    %s140 = sphi 0, %s124
  $region4: #{generator_forward.26} parent=0 // loop_header_branch
    %14 = sbr.rel (%p12) target = $region8
  $region5: #{generator_forward.26} parent=0 // loop_body
    %s16 = ssub.s32 %s11, 1
    %s17 = ssub.s32 %s11, 2
    %s18 = sadd.s32 %s11, 1
    %s19 = ssub.s32 %s11, %s18
    %p20 = scmp.eq.s32.totalorder %s19, 0
    %s22 = sadd.s32 %s21, 1
    %s23 = scalar_select %p20, %s21, %s22
    %p26 = pneg %p20
    %p27 = scmp.eq.s32.totalorder %s11, 1
    %p28 = por %p26, %p27
    %p29 = scmp.ne.s32.totalorder %s21, %s24
    %p30 = scmp.eq.s32.totalorder %s11, 0
    %p31 = por %p29, %p30
    %p32 = scmp.ne.s32.totalorder %s21, %s24
    %p33 = scmp.eq.s32.totalorder %s16, 1
    %p34 = por %p32, %p33
    %p35 = scmp.ne.s32.totalorder %s24, %s25
    %p36 = scmp.eq.s32.totalorder %s16, 0
    %p37 = por %p35, %p36
    %p38 = scmp.ne.s32.totalorder %s24, %s25
    %p39 = scmp.eq.s32.totalorder %s17, 1
    %p40 = por %p38, %p39
    %p42 = scmp.ne.s32.totalorder %s25, %s41
    %p43 = scmp.eq.s32.totalorder %s17, 0
    %p44 = por %p42, %p43
    %s46 = sadd.s32 %s45, 1
    %p49 = scmp.eq.s32.totalorder %s11, 1
    %p50 = scmp.ne.s32.totalorder %s45, %s47
    %p51 = scmp.eq.s32.totalorder %s11, 0
    %p52 = por %p50, %p51
    %p53 = scmp.ne.s32.totalorder %s45, %s47
    %p54 = scmp.eq.s32.totalorder %s16, 1
    %p55 = por %p53, %p54
    %p56 = scmp.ne.s32.totalorder %s47, %s48
    %p57 = scmp.eq.s32.totalorder %s16, 0
    %p58 = por %p56, %p57
    %p59 = scmp.ne.s32.totalorder %s47, %s48
    %p60 = scmp.eq.s32.totalorder %s17, 1
    %p61 = por %p59, %p60
    %p63 = scmp.ne.s32.totalorder %s48, %s62
    %p64 = scmp.eq.s32.totalorder %s17, 0
    %p65 = por %p63, %p64
    %s66 = ssub.s32 %s11, %s18
    %p67 = scmp.eq.s32.totalorder %s66, 0
    %s69 = sadd.s32 %s68, 1
    %s70 = scalar_select %p67, %s68, %s69
    %p73 = pneg %p67
    %p74 = scmp.eq.s32.totalorder %s11, 1
    %p75 = por %p73, %p74
    %p76 = scmp.ne.s32.totalorder %s68, %s71
    %p77 = scmp.eq.s32.totalorder %s11, 0
    %p78 = por %p76, %p77
    %p79 = scmp.ne.s32.totalorder %s68, %s71
    %p80 = scmp.eq.s32.totalorder %s16, 1
    %p81 = por %p79, %p80
    %p82 = scmp.ne.s32.totalorder %s71, %s72
    %p83 = scmp.eq.s32.totalorder %s16, 0
    %p84 = por %p82, %p83
    %p85 = scmp.ne.s32.totalorder %s71, %s72
    %p86 = scmp.eq.s32.totalorder %s17, 1
    %p87 = por %p85, %p86
    %p89 = scmp.ne.s32.totalorder %s72, %s88
    %p90 = scmp.eq.s32.totalorder %s17, 0
    %p91 = por %p89, %p90
    %s92 = ssub.s32 %s11, %s18
    %p93 = scmp.eq.s32.totalorder %s92, 0
    %s95 = sadd.s32 %s94, 1
    %s96 = scalar_select %p93, %s94, %s95
    %p99 = pneg %p93
    %p100 = scmp.eq.s32.totalorder %s11, 1
    %p101 = por %p99, %p100
    %p102 = scmp.ne.s32.totalorder %s94, %s97
    %p103 = scmp.eq.s32.totalorder %s11, 0
    %p104 = por %p102, %p103
    %p105 = scmp.ne.s32.totalorder %s94, %s97
    %p106 = scmp.eq.s32.totalorder %s16, 1
    %p107 = por %p105, %p106
    %p108 = scmp.ne.s32.totalorder %s97, %s98
    %p109 = scmp.eq.s32.totalorder %s16, 0
    %p110 = por %p108, %p109
    %p111 = scmp.ne.s32.totalorder %s97, %s98
    %p112 = scmp.eq.s32.totalorder %s17, 1
    %p113 = por %p111, %p112
    %p115 = scmp.ne.s32.totalorder %s98, %s114
    %p116 = scmp.eq.s32.totalorder %s17, 0
    %p117 = por %p115, %p116
    %s118 = ssub.s32 %s11, %s18
    %p119 = scmp.eq.s32.totalorder %s118, 0
    %s121 = sadd.s32 %s120, 1
    %s122 = scalar_select %p119, %s120, %s121
    %p125 = pneg %p119
    %p126 = scmp.eq.s32.totalorder %s11, 1
    %p127 = por %p125, %p126
    %p128 = scmp.ne.s32.totalorder %s120, %s123
    %p129 = scmp.eq.s32.totalorder %s11, 0
    %p130 = por %p128, %p129
    %p131 = scmp.ne.s32.totalorder %s120, %s123
    %p132 = scmp.eq.s32.totalorder %s16, 1
    %p133 = por %p131, %p132
    %p134 = scmp.ne.s32.totalorder %s123, %s124
    %p135 = scmp.eq.s32.totalorder %s16, 0
    %p136 = por %p134, %p135
    %p137 = scmp.ne.s32.totalorder %s123, %s124
    %p138 = scmp.eq.s32.totalorder %s17, 1
    %p139 = por %p137, %p138
    %p141 = scmp.ne.s32.totalorder %s124, %s140
    %p142 = scmp.eq.s32.totalorder %s17, 0
    %p143 = por %p141, %p142
    %p144 = scmp.le.s32.totalorder 1, %s11
    %p145 = scmp.lt.s32.totalorder %s11, 3
    %p146 = pnand %p144, %p145
    %p147 = pneg %p146
    // Predicated region
    $region9: #{generator_forward.26} parent=5 // pred_check
      _
    $region10: #{generator_forward.26} parent=5 // pred_check_branch
      %149 = sbr.rel (%p146) target = $region12
    $region11: #{generator_forward.26} parent=5 // pred_region
      %s150 = ssub.s32 %s11, 1
      // Predicated region
      $region13: #{generator_forward.26} parent=11 // pred_check
        %p151 = pneg %p58
      $region14: #{generator_forward.26} parent=11 // pred_check_branch
        %153 = sbr.rel (%p151) target = $region16
      $region15: #{generator_forward.26} parent=11 // pred_region
        _
      $region16: #{generator_forward.26} parent=11 // pred_fallthru
        _
    $region12: #{generator_forward.26} parent=5 // pred_fallthru
      _
    %p154 = scmp.lt.s32.totalorder %s11, 2
    // Predicated region
    $region17: #{generator_forward.26} parent=5 // pred_check
      %p155 = pneg %p154
    $region18: #{generator_forward.26} parent=5 // pred_check_branch
      %157 = sbr.rel (%p155) target = $region20
    $region19: #{generator_forward.26} parent=5 // pred_region
      // Predicated region
      $region21: #{generator_forward.26} parent=19 // pred_check
        %p158 = pneg %p31
      $region22: #{generator_forward.26} parent=19 // pred_check_branch
        %160 = sbr.rel (%p158) target = $region24
      $region23: #{generator_forward.26} parent=19 // pred_region
        %s161 = smul.u32 2, %s11
        %p162 = scmp.lt.s32.totalorder %s161, 3
        %s163 = scalar_select %p162, %s161, 3
        %s164 = smul.addr %s163, 3
        %s165 = smul.addr %s164, 4
        %s166 = scalar_lea.vmem %s0, %s165
        %s167 = smul.u32 2, %s11
      $region24: #{generator_forward.26} parent=19 // pred_fallthru
        _
    $region20: #{generator_forward.26} parent=5 // pred_fallthru
      _
    %p168 = scmp.le.s32.totalorder 1, %s11
    %p169 = scmp.lt.s32.totalorder %s11, 3
    %p170 = pnand %p168, %p169
    %p171 = pneg %p170
    // Predicated region
    $region25: #{generator_forward.26} parent=5 // pred_check
      _
    $region26: #{generator_forward.26} parent=5 // pred_check_branch
      %173 = sbr.rel (%p170) target = $region28
    $region27: #{generator_forward.26} parent=5 // pred_region
      %s174 = ssub.s32 %s11, 1
      %s175 = smul.u32 2, %s16
      %p176 = scmp.lt.s32.totalorder %s175, 3
      %s177 = scalar_select %p176, %s175, 3
      %s178 = smul.addr %s177, 3
      %s179 = smul.addr %s178, 4
      %s180 = scalar_lea.vmem %s0, %s179
      %p181 = pneg %p37
      %p182 = pneg %p34
      %p183 = pneg %p58
      %p184 = pneg %p55
      %p185 = pneg %p84
      %p186 = pneg %p81
      %s187 = smul.u32 2, %s16
      %p188 = scmp.lt.s32.totalorder %s187, 3
      %s189 = scalar_select %p188, %s187, 3
      %s190 = smul.addr %s189, 4
      %s191 = scalar_lea.vmem %s2, %s190
      %p192 = pneg %p110
      %p193 = pneg %p107
      %p194 = scmp.lt.s32.totalorder %s16, 1
      %s195 = scalar_select %p194, %s16, 1
      %s196 = smul.addr %s195, 8
      %s197 = scalar_lea.vmem %s3, %s196
      %p198 = pneg %p136
      %p199 = pneg %p133
      %p200 = scmp.lt.s32.totalorder %s16, 1
      %s201 = scalar_select %p200, %s16, 1
      %s202 = smul.addr %s201, 8
      %s203 = scalar_lea.vmem %s4, %s202
      %s204 = smul.u32 2, %s16
      %p205 = scmp.lt.s32.totalorder %s204, 3
      %s206 = scalar_select %p205, %s204, 3
      %s207 = smul.addr %s206, 3
      %s208 = smul.addr %s207, 4
      %s209 = scalar_lea.vmem %s0, %s208
      %s210 = smul.u32 2, %s16
      %s211 = smul.u32 2, %s16
      %p212 = scmp.lt.s32.totalorder %s211, 3
      %s213 = scalar_select %p212, %s211, 3
      %s214 = smul.addr %s213, 4
      %s215 = scalar_lea.vmem %s2, %s214
      %s216 = smul.u32 2, %s16
      %p217 = scmp.lt.s32.totalorder %s16, 1
      %s218 = scalar_select %p217, %s16, 1
      %s219 = smul.addr %s218, 8
      %s220 = scalar_lea.vmem %s3, %s219
      %p221 = scmp.lt.s32.totalorder %s16, 1
      %s222 = scalar_select %p221, %s16, 1
      %s223 = smul.addr %s222, 8
      %s224 = scalar_lea.vmem %s4, %s223
      %v226 = vld [vmem:[%s209] sm:$0xff]
      %v227 = vld [vmem:[%s209 + $0x8] sm:$0xf]
      %v228 = vld [vmem:[%s209 + $0xc] sm:$0xff]
      %v229 = vld [vmem:[%s209 + $0x14] sm:$0xf]
      %v230 = vld [vmem:[%s1] sm:$0xf]
      %v231 = vld [vmem:[%s1 + $0x4] sm:$0xf]
      %v232 = vld [vmem:[%s1 + $0x8] sm:$0xf]
      %v233 = vld [vmem:[%s1 + $0xc] sm:$0xf]
      %v234 = vld [vmem:[%s1 + $0x10] sm:$0xf]
      %v235 = vld [vmem:[%s1 + $0x14] sm:$0xf]
      %v236 = vld [vmem:[%s1 + $0x18] sm:$0xf]
      %v237 = vld [vmem:[%s1 + $0x1c] sm:$0xf]
      %v238 = vld [vmem:[%s1 + $0x20] sm:$0xf]
      %v239 = vld [vmem:[%s1 + $0x24] sm:$0xf]
      %v240 = vld [vmem:[%s1 + $0x28] sm:$0xf]
      %v241 = vld [vmem:[%s1 + $0x2c] sm:$0xf]
      %v242 = vld [vmem:[%s1 + $0x30] sm:$0xf]
      %v243 = vld [vmem:[%s1 + $0x34] sm:$0xf]
      %v244 = vld [vmem:[%s1 + $0x38] sm:$0xf]
      %v245 = vld [vmem:[%s1 + $0x3c] sm:$0xf]
      %v246 = vld [vmem:[%s1 + $0x40] sm:$0xf]
      %v247 = vld [vmem:[%s1 + $0x44] sm:$0xf]
      %v248 = vld [vmem:[%s1 + $0x48] sm:$0xf]
      %v249 = vld [vmem:[%s1 + $0x4c] sm:$0xf]
      %v250 = vld [vmem:[%s1 + $0x50] sm:$0xf]
      %v251 = vld [vmem:[%s1 + $0x54] sm:$0xf]
      %v252 = vld [vmem:[%s1 + $0x58] sm:$0xf]
      %v253 = vld [vmem:[%s1 + $0x5c] sm:$0xf]
      %v254 = vld [vmem:[%s1 + $0x60] sm:$0xf]
      %v255 = vld [vmem:[%s1 + $0x64] sm:$0xf]
      %v256 = vld [vmem:[%s1 + $0x68] sm:$0xf]
      %v257 = vld [vmem:[%s1 + $0x6c] sm:$0xf]
      %v258 = vld [vmem:[%s1 + $0x70] sm:$0xf]
      %v259 = vld [vmem:[%s1 + $0x74] sm:$0xf]
      %v260 = vld [vmem:[%s1 + $0x78] sm:$0xf]
      %v261 = vld [vmem:[%s1 + $0x7c] sm:$0xf]
      %v262 = vld [vmem:[%s1 + $0x80] sm:$0xf]
      %v263 = vld [vmem:[%s1 + $0x84] sm:$0xf]
      %v264 = vld [vmem:[%s1 + $0x88] sm:$0xf]
      %v265 = vld [vmem:[%s1 + $0x8c] sm:$0xf]
      %v270 = vunpack.c.l.b16 %v226
      %v271 = vunpack.c.h.b16 %v226
      %v272 = vunpack.c.l.b16 %v227
      %v273 = vunpack.c.l.b16 %v228
      %v274 = vunpack.c.h.b16 %v228
      %v275 = vunpack.c.l.b16 %v229
      %v276 = vpack.c.b16 %v273, %v270
      %v277 = vpack.c.b16 %v274, %v271
      %v278 = vpack.c.b16 %v275, %v272
      %v317 = vunpack.c.l.b16 %v230
      %v318 = vunpack.c.l.b16 %v231
      %v319 = vunpack.c.l.b16 %v232
      %v320 = vunpack.c.l.b16 %v233
      %v321 = vunpack.c.l.b16 %v234
      %v322 = vunpack.c.l.b16 %v235
      %v323 = vunpack.c.l.b16 %v236
      %v324 = vunpack.c.l.b16 %v237
      %v325 = vunpack.c.l.b16 %v238
      %v326 = vunpack.c.l.b16 %v239
      %v327 = vunpack.c.l.b16 %v240
      %v328 = vunpack.c.l.b16 %v241
      %v329 = vunpack.c.l.b16 %v242
      %v330 = vunpack.c.l.b16 %v243
      %v331 = vunpack.c.l.b16 %v244
      %v332 = vunpack.c.l.b16 %v245
      %v333 = vunpack.c.l.b16 %v246
      %v334 = vunpack.c.l.b16 %v247
      %v335 = vunpack.c.l.b16 %v248
      %v336 = vunpack.c.l.b16 %v249
      %v337 = vunpack.c.l.b16 %v250
      %v338 = vunpack.c.l.b16 %v251
      %v339 = vunpack.c.l.b16 %v252
      %v340 = vunpack.c.l.b16 %v253
      %v341 = vunpack.c.l.b16 %v254
      %v342 = vunpack.c.l.b16 %v255
      %v343 = vunpack.c.l.b16 %v256
      %v344 = vunpack.c.l.b16 %v257
      %v345 = vunpack.c.l.b16 %v258
      %v346 = vunpack.c.l.b16 %v259
      %v347 = vunpack.c.l.b16 %v260
      %v348 = vunpack.c.l.b16 %v261
      %v349 = vunpack.c.l.b16 %v262
      %v350 = vunpack.c.l.b16 %v263
      %v351 = vunpack.c.l.b16 %v264
      %v352 = vunpack.c.l.b16 %v265
      %v353 = vpack.c.b16 %v318, %v317
      %v354 = vpack.c.b16 %v320, %v319
      %v355 = vpack.c.b16 %v322, %v321
      %v356 = vpack.c.b16 %v324, %v323
      %v357 = vpack.c.b16 %v326, %v325
      %v358 = vpack.c.b16 %v328, %v327
      %v359 = vpack.c.b16 %v330, %v329
      %v360 = vpack.c.b16 %v332, %v331
      %v361 = vpack.c.b16 %v334, %v333
      %v362 = vpack.c.b16 %v336, %v335
      %v363 = vpack.c.b16 %v338, %v337
      %v364 = vpack.c.b16 %v340, %v339
      %v365 = vpack.c.b16 %v342, %v341
      %v366 = vpack.c.b16 %v344, %v343
      %v367 = vpack.c.b16 %v346, %v345
      %v368 = vpack.c.b16 %v348, %v347
      %v369 = vpack.c.b16 %v350, %v349
      %v370 = vpack.c.b16 %v352, %v351
      %vm389 = vcmask 261120
      %v391 = vsel %vm389, %v278, 0
      %393 = vmatprep.subr.bf16.mxu0 0
      %394 = vmatpush1.bf16.msra.mxu0 %v360
      %395 = vmatprep.subr.bf16.mxu0 0
      %396 = vmatpush1.bf16.msra.mxu0 %v359
      %397 = vmatprep.subr.bf16.mxu0 0
      %398 = vmatpush1.bf16.msra.mxu0 %v358
      %399 = vmatprep.subr.bf16.mxu0 0
      %400 = vmatpush1.bf16.msra.mxu0 %v357
      %401 = vmatprep.subr.bf16.mxu0 0
      %402 = vmatpush1.bf16.msra.mxu0 %v356
      %403 = vmatprep.subr.bf16.mxu0 0
      %404 = vmatpush1.bf16.msra.mxu0 %v355
      %405 = vmatprep.subr.bf16.mxu0 0
      %406 = vmatpush1.bf16.msra.mxu0 %v354
      %407 = vmatprep.subr.bf16.mxu0 0
      %408 = vmatpush1.bf16.msra.mxu0 %v353
      %409 = vmatprep.subr.bf16.mxu0 0
      %410 = vmatpush2.bf16.msra.mxu0 %v368
      %411 = vmatprep.subr.bf16.mxu0 0
      %412 = vmatpush2.bf16.msra.mxu0 %v367
      %413 = vmatprep.subr.bf16.mxu0 0
      %414 = vmatpush2.bf16.msra.mxu0 %v366
      %415 = vmatprep.subr.bf16.mxu0 0
      %416 = vmatpush2.bf16.msra.mxu0 %v365
      %417 = vmatprep.subr.bf16.mxu0 0
      %418 = vmatpush2.bf16.msra.mxu0 %v364
      %419 = vmatprep.subr.bf16.mxu0 0
      %420 = vmatpush2.bf16.msra.mxu0 %v363
      %421 = vmatprep.subr.bf16.mxu0 0
      %422 = vmatpush2.bf16.msra.mxu0 %v362
      %423 = vmatprep.subr.bf16.mxu0 0
      %424 = vmatpush2.bf16.msra.mxu0 %v361
      %425 = vmatprep.mubr.bf16.mxu0 %v277
      %426 = vmatmul.mubr.bf16.gmra.mxu0 %v276
      %v427 = vpop.f32.mrf.mxu0
      %v428 = vadd.f32 0.0, %v427
      %v429 = vpop.f32.mrf.mxu0
      %v430 = vpop.f32.mrf.mxu0
      %v431 = vadd.f32 0.0, %v430
      %v432 = vpop.f32.mrf.mxu0
      %433 = vdwg.mxu0
      %434 = vmatprep.subr.bf16.mxu0 0
      %435 = vmatpush1.bf16.msra.mxu0 0
      %436 = vmatprep.subr.bf16.mxu0 0
      %437 = vmatpush1.bf16.msra.mxu0 0
      %438 = vmatprep.subr.bf16.mxu0 0
      %439 = vmatpush1.bf16.msra.mxu0 0
      %440 = vmatprep.subr.bf16.mxu0 0
      %441 = vmatpush1.bf16.msra.mxu0 0
      %442 = vmatprep.subr.bf16.mxu0 0
      %443 = vmatpush1.bf16.msra.mxu0 0
      %444 = vmatprep.subr.bf16.mxu0 0
      %445 = vmatpush1.bf16.msra.mxu0 0
      %446 = vmatprep.subr.bf16.mxu0 0
      %447 = vmatpush1.bf16.msra.mxu0 %v370
      %448 = vmatprep.subr.bf16.mxu0 0
      %449 = vmatpush1.bf16.msra.mxu0 %v369
      %450 = vmatprep.subr.bf16.mxu0 0
      %451 = vmatpush2.bf16.msra.mxu0 0
      %452 = vmatprep.subr.bf16.mxu0 0
      %453 = vmatpush2.bf16.msra.mxu0 0
      %454 = vmatprep.subr.bf16.mxu0 0
      %455 = vmatpush2.bf16.msra.mxu0 0
      %456 = vmatprep.subr.bf16.mxu0 0
      %457 = vmatpush2.bf16.msra.mxu0 0
      %458 = vmatprep.subr.bf16.mxu0 0
      %459 = vmatpush2.bf16.msra.mxu0 0
      %460 = vmatprep.subr.bf16.mxu0 0
      %461 = vmatpush2.bf16.msra.mxu0 0
      %462 = vmatprep.subr.bf16.mxu0 0
      %463 = vmatpush2.bf16.msra.mxu0 0
      %464 = vmatprep.subr.bf16.mxu0 0
      %465 = vmatpush2.bf16.msra.mxu0 0
      %466 = vmatprep.mubr.bf16.mxu0 0
      %467 = vmatmul.mubr.bf16.gmra.mxu0 %v391
      %v468 = vpop.f32.mrf.mxu0
      %v469 = vadd.f32 %v428, %v468
      %v470 = vpop.f32.mrf.mxu0
      %v471 = vpop.f32.mrf.mxu0
      %v472 = vadd.f32 %v431, %v471
      %v473 = vpop.f32.mrf.mxu0
      %474 = vdwg.mxu0
      %v475 = vpack.c.bf16 %v472, %v469
      %v477 = vunpack.c.l.b16 %v475
      %v478 = vunpack.c.h.b16 %v475
      %v479 = vpack.c.b16 %v477, %v477
      %v480 = vpack.c.b16 %v478, %v478
      %vm483 = vcmask 257024
      %484 = vst.msk [vmem:[%s215] sm:$0xf] %vm483, %v479
      %485 = vst.msk [vmem:[%s215 + $0x4] sm:$0xf] %vm483, %v480
      %v486 = vsel %vm389, %v469, 0.0
      %v487 = vsel %vm389, %v472, 0.0
      %v488 = vadd.f32 %v486, %v487
      %v489 = vrot.slane %v488, 4
      %v490 = vadd.f32 %v488, %v489
      %v491 = vrot.slane %v490, 2
      %v492 = vadd.f32 %v490, %v491
      %v493 = vrot.slane %v492, 1
      %v494 = vadd.f32 %v492, %v493
      %v495 = vmul.f32 %v469, %v469
      %v496 = vmul.f32 %v472, %v472
      %v497 = vsel %vm389, %v495, 0.0
      %v498 = vsel %vm389, %v496, 0.0
      %v499 = vadd.f32 %v497, %v498
      %v500 = vrot.slane %v499, 4
      %v501 = vadd.f32 %v499, %v500
      %v502 = vrot.slane %v501, 2
      %v503 = vadd.f32 %v501, %v502
      %v504 = vrot.slane %v503, 1
      %v505 = vadd.f32 %v503, %v504
      %506 = vst.msk [vmem:[%s220] sm:$0xff] %vm389, %v494
      %507 = vst.msk [vmem:[%s224] sm:$0xff] %vm389, %v505
      %s508 = smul.u32 2, %s16
      %p509 = scmp.lt.s32.totalorder %s508, 3
      %s510 = scalar_select %p509, %s508, 3
      %s511 = smul.addr %s510, 4
      %s512 = scalar_lea.vmem %s2, %s511
      %p513 = scmp.lt.s32.totalorder %s16, 1
      %s514 = scalar_select %p513, %s16, 1
      %s515 = smul.addr %s514, 8
      %s516 = scalar_lea.vmem %s3, %s515
      %p517 = scmp.lt.s32.totalorder %s16, 1
      %s518 = scalar_select %p517, %s16, 1
      %s519 = smul.addr %s518, 8
      %s520 = scalar_lea.vmem %s4, %s519
      // Predicated region
      $region29: #{generator_forward.26} parent=27 // pred_check
        %p521 = pneg %p81
      $region30: #{generator_forward.26} parent=27 // pred_check_branch
        %523 = sbr.rel (%p521) target = $region32
      $region31: #{generator_forward.26} parent=27 // pred_region
        %s524 = smul.u32 2, %s16
      $region32: #{generator_forward.26} parent=27 // pred_fallthru
        _
      // Predicated region
      $region33: #{generator_forward.26} parent=27 // pred_check
        %p525 = pneg %p107
      $region34: #{generator_forward.26} parent=27 // pred_check_branch
        %527 = sbr.rel (%p525) target = $region36
      $region35: #{generator_forward.26} parent=27 // pred_region
        _
      $region36: #{generator_forward.26} parent=27 // pred_fallthru
        _
      // Predicated region
      $region37: #{generator_forward.26} parent=27 // pred_check
        %p528 = pneg %p133
      $region38: #{generator_forward.26} parent=27 // pred_check_branch
        %530 = sbr.rel (%p528) target = $region40
      $region39: #{generator_forward.26} parent=27 // pred_region
        _
      $region40: #{generator_forward.26} parent=27 // pred_fallthru
        _
    $region28: #{generator_forward.26} parent=5 // pred_fallthru
      _
    %p531 = scmp.le.s32.totalorder 2, %s11
    // Predicated region
    $region41: #{generator_forward.26} parent=5 // pred_check
      %p532 = pneg %p531
    $region42: #{generator_forward.26} parent=5 // pred_check_branch
      %534 = sbr.rel (%p532) target = $region44
    $region43: #{generator_forward.26} parent=5 // pred_region
      %s535 = ssub.s32 %s11, 2
      // Predicated region
      $region45: #{generator_forward.26} parent=43 // pred_check
        %p536 = pneg %p87
      $region46: #{generator_forward.26} parent=43 // pred_check_branch
        %538 = sbr.rel (%p536) target = $region48
      $region47: #{generator_forward.26} parent=43 // pred_region
        %s539 = smul.u32 2, %s17
        %p540 = scmp.lt.s32.totalorder %s539, 3
        %s541 = scalar_select %p540, %s539, 3
        %s542 = smul.addr %s541, 4
        %s543 = scalar_lea.vmem %s2, %s542
      $region48: #{generator_forward.26} parent=43 // pred_fallthru
        _
      // Predicated region
      $region49: #{generator_forward.26} parent=43 // pred_check
        %p544 = pneg %p113
      $region50: #{generator_forward.26} parent=43 // pred_check_branch
        %546 = sbr.rel (%p544) target = $region52
      $region51: #{generator_forward.26} parent=43 // pred_region
        %p547 = scmp.lt.s32.totalorder %s17, 1
        %s548 = scalar_select %p547, %s17, 1
        %s549 = smul.addr %s548, 8
        %s550 = scalar_lea.vmem %s3, %s549
      $region52: #{generator_forward.26} parent=43 // pred_fallthru
        _
      // Predicated region
      $region53: #{generator_forward.26} parent=43 // pred_check
        %p551 = pneg %p139
      $region54: #{generator_forward.26} parent=43 // pred_check_branch
        %553 = sbr.rel (%p551) target = $region56
      $region55: #{generator_forward.26} parent=43 // pred_region
        %p554 = scmp.lt.s32.totalorder %s17, 1
        %s555 = scalar_select %p554, %s17, 1
        %s556 = smul.addr %s555, 8
        %s557 = scalar_lea.vmem %s4, %s556
      $region56: #{generator_forward.26} parent=43 // pred_fallthru
        _
    $region44: #{generator_forward.26} parent=5 // pred_fallthru
      _
  $region6: #{generator_forward.26} parent=0 // loop_footer
    %s15 = sadd.s32 1, %s11
  $region7: #{generator_forward.26} parent=0 // loop_footer_branch
    %10 = sbr.rel target = $region3
  $region8: #{generator_forward.26} parent=0 // loop_exit
    _

// kernel: generator_forward.29
$region0: #{generator_forward.29}
  #allocation0 [shape = 'u32[]', space=smem, size = 0x4, offset = 0x4, fixed_abs, tag = 'smem constant byte address 0x4 - core index']
  #allocation1 [shape = 'u32[144,128]{1,0:T(1,128)}', space=vmem, size = 0x12000, scoped, tag = 'internal scratch']
  %s0 = inlined_call_operand.vmem [shape: bf16[8,1024], index: 0, kind: input, shape index: {}]
  %s1 = inlined_call_operand.vmem [shape: f32[1,1024], index: 1, kind: input, shape index: {}]
  %s2 = inlined_call_operand.vmem [shape: f32[1,1024], index: 2, kind: input, shape index: {}]
  %s3 = inlined_call_operand.vmem [shape: bf16[8,1024], index: 3, kind: input, shape index: {}]
  %s4 = inlined_call_operand.vmem [shape: bf16[8,1024], index: 4, kind: output, shape index: {}]
  %s5 = sld [smem:[#allocation0]]
  $region26: #{generator_forward.29} parent=0
    _
  %s7 = ssub.s32 1, %s5
  %s8 = scalar_select 0, %s7, %s5
  // Predicated region
  $region2: #{generator_forward.29} parent=0 // pred_check
    _
  $region3: #{generator_forward.29} parent=0 // pred_check_branch
    %10 = sbr.rel (0) target = $region5
  $region4: #{generator_forward.29} parent=0 // pred_region
    _
  $region5: #{generator_forward.29} parent=0 // pred_fallthru
    _
  // Predicated region
  $region6: #{generator_forward.29} parent=0 // pred_check
    _
  $region7: #{generator_forward.29} parent=0 // pred_check_branch
    %12 = sbr.rel (0) target = $region9
  $region8: #{generator_forward.29} parent=0 // pred_region
    _
  $region9: #{generator_forward.29} parent=0 // pred_fallthru
    _
  // Predicated region
  $region10: #{generator_forward.29} parent=0 // pred_check
    _
  $region11: #{generator_forward.29} parent=0 // pred_check_branch
    %14 = sbr.rel (0) target = $region13
  $region12: #{generator_forward.29} parent=0 // pred_region
    _
  $region13: #{generator_forward.29} parent=0 // pred_fallthru
    _
  // Predicated region
  $region14: #{generator_forward.29} parent=0 // pred_check
    _
  $region15: #{generator_forward.29} parent=0 // pred_check_branch
    %16 = sbr.rel (0) target = $region17
  $region16: #{generator_forward.29} parent=0 // pred_region
    _
  $region17: #{generator_forward.29} parent=0 // pred_fallthru
    _
  %v17 = vld [vmem:[%s0] sm:$0xff]
  %v18 = vld [vmem:[%s0 + $0x8] sm:$0xff]
  %v19 = vld [vmem:[%s0 + $0x10] sm:$0xff]
  %v20 = vld [vmem:[%s0 + $0x18] sm:$0xff]
  %v21 = vunpack.c.l.bf16 %v17
  %v22 = vunpack.c.h.bf16 %v17
  %v23 = vunpack.c.l.bf16 %v18
  %v24 = vunpack.c.h.bf16 %v18
  %v25 = vunpack.c.l.bf16 %v19
  %v26 = vunpack.c.h.bf16 %v19
  %v27 = vunpack.c.l.bf16 %v20
  %v28 = vunpack.c.h.bf16 %v20
  %v29 = vld [vmem:[%s1] sm:$0xff]
  %v31 = vlaneseq
  %v32 = vshrl.u32 %v31, 7
  %v33 = vsub.s32 0, %v32
  %v34 = vrot.slane %v29, %v33
  %v35 = vlaneseq
  %v36 = vshrl.u32 %v35, 7
  %v37 = vsub.s32 1, %v36
  %v38 = vrot.slane %v29, %v37
  %v39 = vlaneseq
  %v40 = vshrl.u32 %v39, 7
  %v41 = vsub.s32 2, %v40
  %v42 = vrot.slane %v29, %v41
  %v43 = vlaneseq
  %v44 = vshrl.u32 %v43, 7
  %v45 = vsub.s32 3, %v44
  %v46 = vrot.slane %v29, %v45
  %v47 = vlaneseq
  %v48 = vshrl.u32 %v47, 7
  %v49 = vsub.s32 4, %v48
  %v50 = vrot.slane %v29, %v49
  %v51 = vlaneseq
  %v52 = vshrl.u32 %v51, 7
  %v53 = vsub.s32 5, %v52
  %v54 = vrot.slane %v29, %v53
  %v55 = vlaneseq
  %v56 = vshrl.u32 %v55, 7
  %v57 = vsub.s32 6, %v56
  %v58 = vrot.slane %v29, %v57
  %v59 = vlaneseq
  %v60 = vshrl.u32 %v59, 7
  %v61 = vsub.s32 7, %v60
  %v62 = vrot.slane %v29, %v61
  %v71 = vmul.f32 %v21, %v34
  %v72 = vmul.f32 %v22, %v38
  %v73 = vmul.f32 %v23, %v42
  %v74 = vmul.f32 %v24, %v46
  %v75 = vmul.f32 %v25, %v50
  %v76 = vmul.f32 %v26, %v54
  %v77 = vmul.f32 %v27, %v58
  %v78 = vmul.f32 %v28, %v62
  %v79 = vld [vmem:[%s2] sm:$0xff]
  %v81 = vlaneseq
  %v82 = vshrl.u32 %v81, 7
  %v83 = vsub.s32 0, %v82
  %v84 = vrot.slane %v79, %v83
  %v85 = vlaneseq
  %v86 = vshrl.u32 %v85, 7
  %v87 = vsub.s32 1, %v86
  %v88 = vrot.slane %v79, %v87
  %v89 = vlaneseq
  %v90 = vshrl.u32 %v89, 7
  %v91 = vsub.s32 2, %v90
  %v92 = vrot.slane %v79, %v91
  %v93 = vlaneseq
  %v94 = vshrl.u32 %v93, 7
  %v95 = vsub.s32 3, %v94
  %v96 = vrot.slane %v79, %v95
  %v97 = vlaneseq
  %v98 = vshrl.u32 %v97, 7
  %v99 = vsub.s32 4, %v98
  %v100 = vrot.slane %v79, %v99
  %v101 = vlaneseq
  %v102 = vshrl.u32 %v101, 7
  %v103 = vsub.s32 5, %v102
  %v104 = vrot.slane %v79, %v103
  %v105 = vlaneseq
  %v106 = vshrl.u32 %v105, 7
  %v107 = vsub.s32 6, %v106
  %v108 = vrot.slane %v79, %v107
  %v109 = vlaneseq
  %v110 = vshrl.u32 %v109, 7
  %v111 = vsub.s32 7, %v110
  %v112 = vrot.slane %v79, %v111
  %v121 = vadd.f32 %v71, %v84
  %v122 = vadd.f32 %v72, %v88
  %v123 = vadd.f32 %v73, %v92
  %v124 = vadd.f32 %v74, %v96
  %v125 = vadd.f32 %v75, %v100
  %v126 = vadd.f32 %v76, %v104
  %v127 = vadd.f32 %v77, %v108
  %v128 = vadd.f32 %v78, %v112
  %v129 = vld [vmem:[%s3] sm:$0xff]
  %v130 = vld [vmem:[%s3 + $0x8] sm:$0xff]
  %v131 = vld [vmem:[%s3 + $0x10] sm:$0xff]
  %v132 = vld [vmem:[%s3 + $0x18] sm:$0xff]
  %v133 = vunpack.c.l.bf16 %v129
  %v134 = vunpack.c.h.bf16 %v129
  %v135 = vunpack.c.l.bf16 %v130
  %v136 = vunpack.c.h.bf16 %v130
  %v137 = vunpack.c.l.bf16 %v131
  %v138 = vunpack.c.h.bf16 %v131
  %v139 = vunpack.c.l.bf16 %v132
  %v140 = vunpack.c.h.bf16 %v132
  %v141 = vadd.f32 %v121, %v133
  %v142 = vadd.f32 %v122, %v134
  %v143 = vadd.f32 %v123, %v135
  %v144 = vadd.f32 %v124, %v136
  %v145 = vadd.f32 %v125, %v137
  %v146 = vadd.f32 %v126, %v138
  %v147 = vadd.f32 %v127, %v139
  %v148 = vadd.f32 %v128, %v140
  %v149 = vpack.c.bf16 %v141, %v141
  %v150 = vpack.c.bf16 %v142, %v142
  %v151 = vpack.c.bf16 %v143, %v143
  %v152 = vpack.c.bf16 %v144, %v144
  %v153 = vpack.c.bf16 %v145, %v145
  %v154 = vpack.c.bf16 %v146, %v146
  %v155 = vpack.c.bf16 %v147, %v147
  %v156 = vpack.c.bf16 %v148, %v148
  %v165 = vunpack.c.l.b16 %v149
  %v166 = vunpack.c.l.b16 %v150
  %v167 = vunpack.c.l.b16 %v151
  %v168 = vunpack.c.l.b16 %v152
  %v169 = vunpack.c.l.b16 %v153
  %v170 = vunpack.c.l.b16 %v154
  %v171 = vunpack.c.l.b16 %v155
  %v172 = vunpack.c.l.b16 %v156
  %v173 = vpack.c.b16 %v166, %v165
  %v174 = vpack.c.b16 %v168, %v167
  %v175 = vpack.c.b16 %v170, %v169
  %v176 = vpack.c.b16 %v172, %v171
  %181 = vst [vmem:[%s4] sm:$0xff] %v173
  %182 = vst [vmem:[%s4 + $0x8] sm:$0xff] %v174
  %183 = vst [vmem:[%s4 + $0x10] sm:$0xff] %v175
  %184 = vst [vmem:[%s4 + $0x18] sm:$0xff] %v176
  // Predicated region
  $region18: #{generator_forward.29} parent=0 // pred_check
    _
  $region19: #{generator_forward.29} parent=0 // pred_check_branch
    %186 = sbr.rel (0) target = $region21
  $region20: #{generator_forward.29} parent=0 // pred_region
    _
  $region21: #{generator_forward.29} parent=0 // pred_fallthru
    _
  // Predicated region
  $region22: #{generator_forward.29} parent=0 // pred_check
    _
  $region23: #{generator_forward.29} parent=0 // pred_check_branch
    %188 = sbr.rel (0) target = $region25
  $region24: #{generator_forward.29} parent=0 // pred_region
    _
  $region25: #{generator_forward.29} parent=0 // pred_fallthru
    _

// kernel: tile.201
$region0: #{tile.201}
  #allocation0 [shape = 's32[1]{0}', space=sflag, size = 0x4, scoped, tag = 'scoped memory for tile.201']
  %s0 = inlined_call_operand.vmem [shape: f32[16], index: 0, kind: input, shape index: {}]
  %s1 = inlined_call_operand.vmem [shape: f32[4,16], index: 1, kind: output, shape index: {}]
  // Predicated region
  $region2: #{tile.201} parent=0 // pred_check
    _
  $region3: #{tile.201} parent=0 // pred_check_branch
    %3 = sbr.rel (0) target = $region5
  $region4: #{tile.201} parent=0 // pred_region
    _
  $region5: #{tile.201} parent=0 // pred_fallthru
    _
  %v4 = vld [vmem:[%s0] ss:$0 sm:$0xff]
  %5 = vst [vmem:[%s1] sm:$0xf] %v4

// kernel: tile.208
$region0: #{tile.208}
  %s0 = inlined_call_operand.vmem [shape: f32[4,16], index: 0, kind: input, shape index: {}]
  %s1 = inlined_call_operand.vmem [shape: f32[64], index: 1, kind: output, shape index: {}]
  $region1: #{tile.208} parent=0
    #allocation0 [shape = 'u8[4096]{0}', space=vmem, size = 0x1000, scoped, tag = 'scoped mem for output reshape']
    #allocation1 [shape = 'u8[4096]{0}', space=vmem, size = 0x1000, scoped, tag = 'scoped mem for input reshape']
    %s3 = sshll.u32 1, 4
    %s4 = ssub.s32 %s3, 1
    %v5 = vld [vmem:[%s0] sm:%s4]
    %6 = vst [vmem:[#allocation1] sm:%s4] %v5
    %v7 = vld [vmem:[#allocation1] sm:$0x1]
    %vm8 = vcmask 130048
    %9 = vst.msk [vmem:[#allocation0] sm:$0x1] %vm8, %v7
    %s10 = scalar_lea.vmem [#allocation1], 3
    %v11 = vld [vmem:[%s10] sm:$0x1]
    %12 = vrot.lane.b32.xlu0 %v11, 48
    %v13 = vpop.permute.xlu0 %12
    %vm14 = vcmask 523648
    %15 = vst.msk [vmem:[#allocation0] sm:$0x1] %vm14, %v13
    %s16 = scalar_lea.vmem [#allocation1], 2
    %v17 = vld [vmem:[%s16] sm:$0x1]
    %18 = vrot.lane.b32.xlu0 %v17, 32
    %v19 = vpop.permute.xlu0 %18
    %vm20 = vcmask 392448
    %21 = vst.msk [vmem:[#allocation0] sm:$0x1] %vm20, %v19
    %s22 = scalar_lea.vmem [#allocation1], 1
    %v23 = vld [vmem:[%s22] sm:$0x1]
    %24 = vrot.lane.b32.xlu0 %v23, 16
    %v25 = vpop.permute.xlu0 %24
    %vm26 = vcmask 261248
    %27 = vst.msk [vmem:[#allocation0] sm:$0x1] %vm26, %v25
    %s29 = sshll.u32 1, 1
    %s30 = ssub.s32 %s29, 1
    %v32 = vld [vmem:[#allocation0] sm:%s30]
    %s33 = sshll.u32 1, 1
    %s34 = ssub.s32 %s33, 1
    %35 = vst [vmem:[%s1] sm:%s34] %v32

// kernel: tile.205
$region0: #{tile.205}
  #allocation0 [shape = 's32[1]{0}', space=sflag, size = 0x4, scoped, tag = 'scoped memory for tile.205']
  %s0 = inlined_call_operand.vmem [shape: f32[64], index: 0, kind: input, shape index: {}]
  %s1 = inlined_call_operand.vmem [shape: f32[16,64], index: 1, kind: output, shape index: {}]
  // Predicated region
  $region2: #{tile.205} parent=0 // pred_check
    _
  $region3: #{tile.205} parent=0 // pred_check_branch
    %3 = sbr.rel (0) target = $region5
  $region4: #{tile.205} parent=0 // pred_region
    _
  $region5: #{tile.205} parent=0 // pred_fallthru
    _
  %v4 = vld [vmem:[%s0] ss:$0 sm:$0xff]
  %5 = vst [vmem:[%s1] sm:$0xff] %v4
  %s6 = scalar_lea.vmem %s1, 8
  %7 = vst [vmem:[%s6] sm:$0xff] %v4

// kernel: generator_forward.27
$region0: #{generator_forward.27}
  #allocation0 [shape = 'u32[]', space=smem, size = 0x4, offset = 0x4, fixed_abs, tag = 'smem constant byte address 0x4 - core index']
  #allocation1 [shape = 'u32[144,128]{1,0:T(1,128)}', space=vmem, size = 0x12000, scoped, tag = 'internal scratch']
  %s0 = inlined_call_operand.vmem [shape: bf16[8,1024], index: 0, kind: input, shape index: {}]
  %s1 = inlined_call_operand.vmem [shape: f32[1,1024], index: 1, kind: input, shape index: {}]
  %s2 = inlined_call_operand.vmem [shape: f32[1,1024], index: 2, kind: input, shape index: {}]
  %s3 = inlined_call_operand.vmem [shape: bf16[8,1024], index: 3, kind: output, shape index: {}]
  %s4 = sld [smem:[#allocation0]]
  $region22: #{generator_forward.27} parent=0
    _
  %s6 = ssub.s32 1, %s4
  %s7 = scalar_select 0, %s6, %s4
  // Predicated region
  $region2: #{generator_forward.27} parent=0 // pred_check
    _
  $region3: #{generator_forward.27} parent=0 // pred_check_branch
    %9 = sbr.rel (0) target = $region5
  $region4: #{generator_forward.27} parent=0 // pred_region
    _
  $region5: #{generator_forward.27} parent=0 // pred_fallthru
    _
  // Predicated region
  $region6: #{generator_forward.27} parent=0 // pred_check
    _
  $region7: #{generator_forward.27} parent=0 // pred_check_branch
    %11 = sbr.rel (0) target = $region9
  $region8: #{generator_forward.27} parent=0 // pred_region
    _
  $region9: #{generator_forward.27} parent=0 // pred_fallthru
    _
  // Predicated region
  $region10: #{generator_forward.27} parent=0 // pred_check
    _
  $region11: #{generator_forward.27} parent=0 // pred_check_branch
    %13 = sbr.rel (0) target = $region13
  $region12: #{generator_forward.27} parent=0 // pred_region
    _
  $region13: #{generator_forward.27} parent=0 // pred_fallthru
    _
  %v14 = vld [vmem:[%s0] sm:$0xff]
  %v15 = vld [vmem:[%s0 + $0x8] sm:$0xff]
  %v16 = vld [vmem:[%s0 + $0x10] sm:$0xff]
  %v17 = vld [vmem:[%s0 + $0x18] sm:$0xff]
  %v18 = vunpack.c.l.bf16 %v14
  %v19 = vunpack.c.h.bf16 %v14
  %v20 = vunpack.c.l.bf16 %v15
  %v21 = vunpack.c.h.bf16 %v15
  %v22 = vunpack.c.l.bf16 %v16
  %v23 = vunpack.c.h.bf16 %v16
  %v24 = vunpack.c.l.bf16 %v17
  %v25 = vunpack.c.h.bf16 %v17
  %v26 = vld [vmem:[%s1] sm:$0xff]
  %v28 = vlaneseq
  %v29 = vshrl.u32 %v28, 7
  %v30 = vsub.s32 0, %v29
  %v31 = vrot.slane %v26, %v30
  %v32 = vlaneseq
  %v33 = vshrl.u32 %v32, 7
  %v34 = vsub.s32 1, %v33
  %v35 = vrot.slane %v26, %v34
  %v36 = vlaneseq
  %v37 = vshrl.u32 %v36, 7
  %v38 = vsub.s32 2, %v37
  %v39 = vrot.slane %v26, %v38
  %v40 = vlaneseq
  %v41 = vshrl.u32 %v40, 7
  %v42 = vsub.s32 3, %v41
  %v43 = vrot.slane %v26, %v42
  %v44 = vlaneseq
  %v45 = vshrl.u32 %v44, 7
  %v46 = vsub.s32 4, %v45
  %v47 = vrot.slane %v26, %v46
  %v48 = vlaneseq
  %v49 = vshrl.u32 %v48, 7
  %v50 = vsub.s32 5, %v49
  %v51 = vrot.slane %v26, %v50
  %v52 = vlaneseq
  %v53 = vshrl.u32 %v52, 7
  %v54 = vsub.s32 6, %v53
  %v55 = vrot.slane %v26, %v54
  %v56 = vlaneseq
  %v57 = vshrl.u32 %v56, 7
  %v58 = vsub.s32 7, %v57
  %v59 = vrot.slane %v26, %v58
  %v68 = vmul.f32 %v18, %v31
  %v69 = vmul.f32 %v19, %v35
  %v70 = vmul.f32 %v20, %v39
  %v71 = vmul.f32 %v21, %v43
  %v72 = vmul.f32 %v22, %v47
  %v73 = vmul.f32 %v23, %v51
  %v74 = vmul.f32 %v24, %v55
  %v75 = vmul.f32 %v25, %v59
  %v76 = vld [vmem:[%s2] sm:$0xff]
  %v78 = vlaneseq
  %v79 = vshrl.u32 %v78, 7
  %v80 = vsub.s32 0, %v79
  %v81 = vrot.slane %v76, %v80
  %v82 = vlaneseq
  %v83 = vshrl.u32 %v82, 7
  %v84 = vsub.s32 1, %v83
  %v85 = vrot.slane %v76, %v84
  %v86 = vlaneseq
  %v87 = vshrl.u32 %v86, 7
  %v88 = vsub.s32 2, %v87
  %v89 = vrot.slane %v76, %v88
  %v90 = vlaneseq
  %v91 = vshrl.u32 %v90, 7
  %v92 = vsub.s32 3, %v91
  %v93 = vrot.slane %v76, %v92
  %v94 = vlaneseq
  %v95 = vshrl.u32 %v94, 7
  %v96 = vsub.s32 4, %v95
  %v97 = vrot.slane %v76, %v96
  %v98 = vlaneseq
  %v99 = vshrl.u32 %v98, 7
  %v100 = vsub.s32 5, %v99
  %v101 = vrot.slane %v76, %v100
  %v102 = vlaneseq
  %v103 = vshrl.u32 %v102, 7
  %v104 = vsub.s32 6, %v103
  %v105 = vrot.slane %v76, %v104
  %v106 = vlaneseq
  %v107 = vshrl.u32 %v106, 7
  %v108 = vsub.s32 7, %v107
  %v109 = vrot.slane %v76, %v108
  %v118 = vadd.f32 %v68, %v81
  %v119 = vadd.f32 %v69, %v85
  %v120 = vadd.f32 %v70, %v89
  %v121 = vadd.f32 %v71, %v93
  %v122 = vadd.f32 %v72, %v97
  %v123 = vadd.f32 %v73, %v101
  %v124 = vadd.f32 %v74, %v105
  %v125 = vadd.f32 %v75, %v109
  %v126 = vmax.f32 %v118, 0.0
  %v127 = vmax.f32 %v119, 0.0
  %v128 = vmax.f32 %v120, 0.0
  %v129 = vmax.f32 %v121, 0.0
  %v130 = vmax.f32 %v122, 0.0
  %v131 = vmax.f32 %v123, 0.0
  %v132 = vmax.f32 %v124, 0.0
  %v133 = vmax.f32 %v125, 0.0
  %v134 = vpack.c.bf16 %v126, %v126
  %v135 = vpack.c.bf16 %v127, %v127
  %v136 = vpack.c.bf16 %v128, %v128
  %v137 = vpack.c.bf16 %v129, %v129
  %v138 = vpack.c.bf16 %v130, %v130
  %v139 = vpack.c.bf16 %v131, %v131
  %v140 = vpack.c.bf16 %v132, %v132
  %v141 = vpack.c.bf16 %v133, %v133
  %v150 = vunpack.c.l.b16 %v134
  %v151 = vunpack.c.l.b16 %v135
  %v152 = vunpack.c.l.b16 %v136
  %v153 = vunpack.c.l.b16 %v137
  %v154 = vunpack.c.l.b16 %v138
  %v155 = vunpack.c.l.b16 %v139
  %v156 = vunpack.c.l.b16 %v140
  %v157 = vunpack.c.l.b16 %v141
  %v158 = vpack.c.b16 %v151, %v150
  %v159 = vpack.c.b16 %v153, %v152
  %v160 = vpack.c.b16 %v155, %v154
  %v161 = vpack.c.b16 %v157, %v156
  %166 = vst [vmem:[%s3] sm:$0xff] %v158
  %167 = vst [vmem:[%s3 + $0x8] sm:$0xff] %v159
  %168 = vst [vmem:[%s3 + $0x10] sm:$0xff] %v160
  %169 = vst [vmem:[%s3 + $0x18] sm:$0xff] %v161
  // Predicated region
  $region14: #{generator_forward.27} parent=0 // pred_check
    _
  $region15: #{generator_forward.27} parent=0 // pred_check_branch
    %171 = sbr.rel (0) target = $region17
  $region16: #{generator_forward.27} parent=0 // pred_region
    _
  $region17: #{generator_forward.27} parent=0 // pred_fallthru
    _
  // Predicated region
  $region18: #{generator_forward.27} parent=0 // pred_check
    _
  $region19: #{generator_forward.27} parent=0 // pred_check_branch
    %173 = sbr.rel (0) target = $region21
  $region20: #{generator_forward.27} parent=0 // pred_region
    _
  $region21: #{generator_forward.27} parent=0 // pred_fallthru
    _

// kernel: tile.210
$region0: #{tile.210}
  %s0 = inlined_call_operand.vmem [shape: f32[16,64], index: 0, kind: input, shape index: {}]
  %s1 = inlined_call_operand.vmem [shape: f32[1,1024], index: 1, kind: output, shape index: {}]
  $region1: #{tile.210} parent=0
    #allocation0 [shape = 'u8[32768]{0}', space=vmem, size = 0x8000, scoped, tag = 'scoped mem for output reshape']
    %v2 = vld [vmem:[%s0] ss:$2 sm:$0xff]
    %vm3 = vcmask 523264
    %4 = vst.msk [vmem:[#allocation0] ss:$8 sm:$0xf] %vm3, %v2
    %5 = vst.msk [vmem:[#allocation0] ss:$8 sm:$0xf0] %vm3, %v2
    %s6 = scalar_lea.vmem %s0, 1
    %v7 = vld [vmem:[%s6] ss:$2 sm:$0xff]
    %8 = vrot.lane.b32.xlu0 %v7, 64
    %v9 = vpop.permute.xlu0 %8
    %vm10 = vcmask 1048064
    %11 = vst.msk [vmem:[#allocation0] ss:$8 sm:$0xf] %vm10, %v9
    %12 = vst.msk [vmem:[#allocation0] ss:$8 sm:$0xf0] %vm10, %v9
    %s14 = sshll.u32 1, 1
    %s15 = ssub.s32 %s14, 1
    %v17 = vld [vmem:[#allocation0] sm:%s15]
    %s18 = sshll.u32 1, 1
    %s19 = ssub.s32 %s18, 1
    %20 = vst [vmem:[%s1] sm:%s19] %v17
    %s21 = scalar_lea.vmem [#allocation0], 8
    %v22 = vld [vmem:[%s21] sm:%s15]
    %s23 = sshll.u32 1, 1
    %s24 = ssub.s32 %s23, 1
    %s25 = scalar_lea.vmem %s1, 1
    %26 = vst [vmem:[%s25] sm:%s24] %v22
    %s27 = scalar_lea.vmem [#allocation0], 16
    %v28 = vld [vmem:[%s27] sm:%s15]
    %s29 = sshll.u32 1, 1
    %s30 = ssub.s32 %s29, 1
    %s31 = smul.addr 1, 2
    %s32 = scalar_lea.vmem %s1, %s31
    %33 = vst [vmem:[%s32] sm:%s30] %v28
    %s34 = scalar_lea.vmem [#allocation0], 24
    %v35 = vld [vmem:[%s34] sm:%s15]
    %s36 = sshll.u32 1, 1
    %s37 = ssub.s32 %s36, 1
    %s38 = smul.addr 1, 3
    %s39 = scalar_lea.vmem %s1, %s38
    %40 = vst [vmem:[%s39] sm:%s37] %v35
    %s41 = scalar_lea.vmem [#allocation0], 32
    %v42 = vld [vmem:[%s41] sm:%s15]
    %s43 = sshll.u32 1, 1
    %s44 = ssub.s32 %s43, 1
    %s45 = smul.addr 1, 4
    %s46 = scalar_lea.vmem %s1, %s45
    %47 = vst [vmem:[%s46] sm:%s44] %v42
    %s48 = scalar_lea.vmem [#allocation0], 40
    %v49 = vld [vmem:[%s48] sm:%s15]
    %s50 = sshll.u32 1, 1
    %s51 = ssub.s32 %s50, 1
    %s52 = smul.addr 1, 5
    %s53 = scalar_lea.vmem %s1, %s52
    %54 = vst [vmem:[%s53] sm:%s51] %v49
    %s55 = scalar_lea.vmem [#allocation0], 48
    %v56 = vld [vmem:[%s55] sm:%s15]
    %s57 = sshll.u32 1, 1
    %s58 = ssub.s32 %s57, 1
    %s59 = smul.addr 1, 6
    %s60 = scalar_lea.vmem %s1, %s59
    %61 = vst [vmem:[%s60] sm:%s58] %v56
    %s62 = scalar_lea.vmem [#allocation0], 56
    %v63 = vld [vmem:[%s62] sm:%s15]
    %s64 = sshll.u32 1, 1
    %s65 = ssub.s32 %s64, 1
    %s66 = smul.addr 1, 7
    %s67 = scalar_lea.vmem %s1, %s66
    %68 = vst [vmem:[%s67] sm:%s65] %v63

// kernel: generator_forward.34
$region0: #{generator_forward.34}
  #allocation0 [shape = 'u32[]', space=smem, size = 0x4, offset = 0x4, fixed_abs, tag = 'smem constant byte address 0x4 - core index']
  #allocation1 [shape = 'u32[144,128]{1,0:T(1,128)}', space=vmem, size = 0x12000, scoped, tag = 'internal scratch']
  %s0 = inlined_call_operand.vmem [shape: bf16[32,288], index: 0, kind: input, shape index: {}]
  %s1 = inlined_call_operand.vmem [shape: bf16[288,64], index: 1, kind: input, shape index: {}]
  %s2 = inlined_call_operand.vmem [shape: bf16[32,64], index: 2, kind: output, shape index: {0}]
  %s3 = inlined_call_operand.vmem [shape: f32[16,64], index: 3, kind: output, shape index: {1}]
  %s4 = inlined_call_operand.vmem [shape: f32[16,64], index: 4, kind: output, shape index: {2}]
  %5 = xla_tuple %s2, %s3, %s4
  %s6 = sld [smem:[#allocation0]]
  $region57: #{generator_forward.34} parent=0
    _
  %s8 = ssub.s32 1, %s6
  %s9 = scalar_select 0, %s8, %s6
  loop: start=0, step=1, limit=4
  $region2: #{generator_forward.34} parent=0 // loop_pre_header
    _
  $region3: #{generator_forward.34} parent=0 // loop_header
    %s11 = sphi 0, %s15
    %p12 = scmp.ge.s32.totalorder %s11, 4
    %s21 = sphi 0, %s23
    %s24 = sphi 0, %s21
    %s25 = sphi 0, %s24
    %s41 = sphi 0, %s25
    %s45 = sphi 0, %s45
    %s47 = sphi 0, %s45
    %s48 = sphi 0, %s47
    %s62 = sphi 0, %s48
    %s68 = sphi 0, %s70
    %s71 = sphi 0, %s68
    %s72 = sphi 0, %s71
    %s88 = sphi 0, %s72
    %s94 = sphi 0, %s96
    %s97 = sphi 0, %s94
    %s98 = sphi 0, %s97
    %s114 = sphi 0, %s98
    %s120 = sphi 0, %s122
    %s123 = sphi 0, %s120
    %s124 = sphi 0, %s123
    %s140 = sphi 0, %s124
  $region4: #{generator_forward.34} parent=0 // loop_header_branch
    %14 = sbr.rel (%p12) target = $region8
  $region5: #{generator_forward.34} parent=0 // loop_body
    %s16 = ssub.s32 %s11, 1
    %s17 = ssub.s32 %s11, 2
    %s18 = sadd.s32 %s11, 1
    %s19 = ssub.s32 %s11, %s18
    %p20 = scmp.eq.s32.totalorder %s19, 0
    %s22 = sadd.s32 %s21, 1
    %s23 = scalar_select %p20, %s21, %s22
    %p26 = pneg %p20
    %p27 = scmp.eq.s32.totalorder %s11, 1
    %p28 = por %p26, %p27
    %p29 = scmp.ne.s32.totalorder %s21, %s24
    %p30 = scmp.eq.s32.totalorder %s11, 0
    %p31 = por %p29, %p30
    %p32 = scmp.ne.s32.totalorder %s21, %s24
    %p33 = scmp.eq.s32.totalorder %s16, 1
    %p34 = por %p32, %p33
    %p35 = scmp.ne.s32.totalorder %s24, %s25
    %p36 = scmp.eq.s32.totalorder %s16, 0
    %p37 = por %p35, %p36
    %p38 = scmp.ne.s32.totalorder %s24, %s25
    %p39 = scmp.eq.s32.totalorder %s17, 1
    %p40 = por %p38, %p39
    %p42 = scmp.ne.s32.totalorder %s25, %s41
    %p43 = scmp.eq.s32.totalorder %s17, 0
    %p44 = por %p42, %p43
    %s46 = sadd.s32 %s45, 1
    %p49 = scmp.eq.s32.totalorder %s11, 1
    %p50 = scmp.ne.s32.totalorder %s45, %s47
    %p51 = scmp.eq.s32.totalorder %s11, 0
    %p52 = por %p50, %p51
    %p53 = scmp.ne.s32.totalorder %s45, %s47
    %p54 = scmp.eq.s32.totalorder %s16, 1
    %p55 = por %p53, %p54
    %p56 = scmp.ne.s32.totalorder %s47, %s48
    %p57 = scmp.eq.s32.totalorder %s16, 0
    %p58 = por %p56, %p57
    %p59 = scmp.ne.s32.totalorder %s47, %s48
    %p60 = scmp.eq.s32.totalorder %s17, 1
    %p61 = por %p59, %p60
    %p63 = scmp.ne.s32.totalorder %s48, %s62
    %p64 = scmp.eq.s32.totalorder %s17, 0
    %p65 = por %p63, %p64
    %s66 = ssub.s32 %s11, %s18
    %p67 = scmp.eq.s32.totalorder %s66, 0
    %s69 = sadd.s32 %s68, 1
    %s70 = scalar_select %p67, %s68, %s69
    %p73 = pneg %p67
    %p74 = scmp.eq.s32.totalorder %s11, 1
    %p75 = por %p73, %p74
    %p76 = scmp.ne.s32.totalorder %s68, %s71
    %p77 = scmp.eq.s32.totalorder %s11, 0
    %p78 = por %p76, %p77
    %p79 = scmp.ne.s32.totalorder %s68, %s71
    %p80 = scmp.eq.s32.totalorder %s16, 1
    %p81 = por %p79, %p80
    %p82 = scmp.ne.s32.totalorder %s71, %s72
    %p83 = scmp.eq.s32.totalorder %s16, 0
    %p84 = por %p82, %p83
    %p85 = scmp.ne.s32.totalorder %s71, %s72
    %p86 = scmp.eq.s32.totalorder %s17, 1
    %p87 = por %p85, %p86
    %p89 = scmp.ne.s32.totalorder %s72, %s88
    %p90 = scmp.eq.s32.totalorder %s17, 0
    %p91 = por %p89, %p90
    %s92 = ssub.s32 %s11, %s18
    %p93 = scmp.eq.s32.totalorder %s92, 0
    %s95 = sadd.s32 %s94, 1
    %s96 = scalar_select %p93, %s94, %s95
    %p99 = pneg %p93
    %p100 = scmp.eq.s32.totalorder %s11, 1
    %p101 = por %p99, %p100
    %p102 = scmp.ne.s32.totalorder %s94, %s97
    %p103 = scmp.eq.s32.totalorder %s11, 0
    %p104 = por %p102, %p103
    %p105 = scmp.ne.s32.totalorder %s94, %s97
    %p106 = scmp.eq.s32.totalorder %s16, 1
    %p107 = por %p105, %p106
    %p108 = scmp.ne.s32.totalorder %s97, %s98
    %p109 = scmp.eq.s32.totalorder %s16, 0
    %p110 = por %p108, %p109
    %p111 = scmp.ne.s32.totalorder %s97, %s98
    %p112 = scmp.eq.s32.totalorder %s17, 1
    %p113 = por %p111, %p112
    %p115 = scmp.ne.s32.totalorder %s98, %s114
    %p116 = scmp.eq.s32.totalorder %s17, 0
    %p117 = por %p115, %p116
    %s118 = ssub.s32 %s11, %s18
    %p119 = scmp.eq.s32.totalorder %s118, 0
    %s121 = sadd.s32 %s120, 1
    %s122 = scalar_select %p119, %s120, %s121
    %p125 = pneg %p119
    %p126 = scmp.eq.s32.totalorder %s11, 1
    %p127 = por %p125, %p126
    %p128 = scmp.ne.s32.totalorder %s120, %s123
    %p129 = scmp.eq.s32.totalorder %s11, 0
    %p130 = por %p128, %p129
    %p131 = scmp.ne.s32.totalorder %s120, %s123
    %p132 = scmp.eq.s32.totalorder %s16, 1
    %p133 = por %p131, %p132
    %p134 = scmp.ne.s32.totalorder %s123, %s124
    %p135 = scmp.eq.s32.totalorder %s16, 0
    %p136 = por %p134, %p135
    %p137 = scmp.ne.s32.totalorder %s123, %s124
    %p138 = scmp.eq.s32.totalorder %s17, 1
    %p139 = por %p137, %p138
    %p141 = scmp.ne.s32.totalorder %s124, %s140
    %p142 = scmp.eq.s32.totalorder %s17, 0
    %p143 = por %p141, %p142
    %p144 = scmp.le.s32.totalorder 1, %s11
    %p145 = scmp.lt.s32.totalorder %s11, 3
    %p146 = pnand %p144, %p145
    %p147 = pneg %p146
    // Predicated region
    $region9: #{generator_forward.34} parent=5 // pred_check
      _
    $region10: #{generator_forward.34} parent=5 // pred_check_branch
      %149 = sbr.rel (%p146) target = $region12
    $region11: #{generator_forward.34} parent=5 // pred_region
      %s150 = ssub.s32 %s11, 1
      // Predicated region
      $region13: #{generator_forward.34} parent=11 // pred_check
        %p151 = pneg %p58
      $region14: #{generator_forward.34} parent=11 // pred_check_branch
        %153 = sbr.rel (%p151) target = $region16
      $region15: #{generator_forward.34} parent=11 // pred_region
        _
      $region16: #{generator_forward.34} parent=11 // pred_fallthru
        _
    $region12: #{generator_forward.34} parent=5 // pred_fallthru
      _
    %p154 = scmp.lt.s32.totalorder %s11, 2
    // Predicated region
    $region17: #{generator_forward.34} parent=5 // pred_check
      %p155 = pneg %p154
    $region18: #{generator_forward.34} parent=5 // pred_check_branch
      %157 = sbr.rel (%p155) target = $region20
    $region19: #{generator_forward.34} parent=5 // pred_region
      // Predicated region
      $region21: #{generator_forward.34} parent=19 // pred_check
        %p158 = pneg %p31
      $region22: #{generator_forward.34} parent=19 // pred_check_branch
        %160 = sbr.rel (%p158) target = $region24
      $region23: #{generator_forward.34} parent=19 // pred_region
        %s161 = smul.u32 2, %s11
        %p162 = scmp.lt.s32.totalorder %s161, 3
        %s163 = scalar_select %p162, %s161, 3
        %s164 = smul.addr %s163, 3
        %s165 = smul.addr %s164, 4
        %s166 = scalar_lea.vmem %s0, %s165
        %s167 = smul.u32 2, %s11
      $region24: #{generator_forward.34} parent=19 // pred_fallthru
        _
    $region20: #{generator_forward.34} parent=5 // pred_fallthru
      _
    %p168 = scmp.le.s32.totalorder 1, %s11
    %p169 = scmp.lt.s32.totalorder %s11, 3
    %p170 = pnand %p168, %p169
    %p171 = pneg %p170
    // Predicated region
    $region25: #{generator_forward.34} parent=5 // pred_check
      _
    $region26: #{generator_forward.34} parent=5 // pred_check_branch
      %173 = sbr.rel (%p170) target = $region28
    $region27: #{generator_forward.34} parent=5 // pred_region
      %s174 = ssub.s32 %s11, 1
      %s175 = smul.u32 2, %s16
      %p176 = scmp.lt.s32.totalorder %s175, 3
      %s177 = scalar_select %p176, %s175, 3
      %s178 = smul.addr %s177, 3
      %s179 = smul.addr %s178, 4
      %s180 = scalar_lea.vmem %s0, %s179
      %p181 = pneg %p37
      %p182 = pneg %p34
      %p183 = pneg %p58
      %p184 = pneg %p55
      %p185 = pneg %p84
      %p186 = pneg %p81
      %s187 = smul.u32 2, %s16
      %p188 = scmp.lt.s32.totalorder %s187, 3
      %s189 = scalar_select %p188, %s187, 3
      %s190 = smul.addr %s189, 4
      %s191 = scalar_lea.vmem %s2, %s190
      %p192 = pneg %p110
      %p193 = pneg %p107
      %p194 = scmp.lt.s32.totalorder %s16, 1
      %s195 = scalar_select %p194, %s16, 1
      %s196 = smul.addr %s195, 8
      %s197 = scalar_lea.vmem %s3, %s196
      %p198 = pneg %p136
      %p199 = pneg %p133
      %p200 = scmp.lt.s32.totalorder %s16, 1
      %s201 = scalar_select %p200, %s16, 1
      %s202 = smul.addr %s201, 8
      %s203 = scalar_lea.vmem %s4, %s202
      %s204 = smul.u32 2, %s16
      %p205 = scmp.lt.s32.totalorder %s204, 3
      %s206 = scalar_select %p205, %s204, 3
      %s207 = smul.addr %s206, 3
      %s208 = smul.addr %s207, 4
      %s209 = scalar_lea.vmem %s0, %s208
      %s210 = smul.u32 2, %s16
      %s211 = smul.u32 2, %s16
      %p212 = scmp.lt.s32.totalorder %s211, 3
      %s213 = scalar_select %p212, %s211, 3
      %s214 = smul.addr %s213, 4
      %s215 = scalar_lea.vmem %s2, %s214
      %s216 = smul.u32 2, %s16
      %p217 = scmp.lt.s32.totalorder %s16, 1
      %s218 = scalar_select %p217, %s16, 1
      %s219 = smul.addr %s218, 8
      %s220 = scalar_lea.vmem %s3, %s219
      %p221 = scmp.lt.s32.totalorder %s16, 1
      %s222 = scalar_select %p221, %s16, 1
      %s223 = smul.addr %s222, 8
      %s224 = scalar_lea.vmem %s4, %s223
      %v226 = vld [vmem:[%s209] sm:$0xff]
      %v227 = vld [vmem:[%s209 + $0x8] sm:$0xf]
      %v228 = vld [vmem:[%s209 + $0xc] sm:$0xff]
      %v229 = vld [vmem:[%s209 + $0x14] sm:$0xf]
      %v230 = vld [vmem:[%s1] sm:$0xf]
      %v231 = vld [vmem:[%s1 + $0x4] sm:$0xf]
      %v232 = vld [vmem:[%s1 + $0x8] sm:$0xf]
      %v233 = vld [vmem:[%s1 + $0xc] sm:$0xf]
      %v234 = vld [vmem:[%s1 + $0x10] sm:$0xf]
      %v235 = vld [vmem:[%s1 + $0x14] sm:$0xf]
      %v236 = vld [vmem:[%s1 + $0x18] sm:$0xf]
      %v237 = vld [vmem:[%s1 + $0x1c] sm:$0xf]
      %v238 = vld [vmem:[%s1 + $0x20] sm:$0xf]
      %v239 = vld [vmem:[%s1 + $0x24] sm:$0xf]
      %v240 = vld [vmem:[%s1 + $0x28] sm:$0xf]
      %v241 = vld [vmem:[%s1 + $0x2c] sm:$0xf]
      %v242 = vld [vmem:[%s1 + $0x30] sm:$0xf]
      %v243 = vld [vmem:[%s1 + $0x34] sm:$0xf]
      %v244 = vld [vmem:[%s1 + $0x38] sm:$0xf]
      %v245 = vld [vmem:[%s1 + $0x3c] sm:$0xf]
      %v246 = vld [vmem:[%s1 + $0x40] sm:$0xf]
      %v247 = vld [vmem:[%s1 + $0x44] sm:$0xf]
      %v248 = vld [vmem:[%s1 + $0x48] sm:$0xf]
      %v249 = vld [vmem:[%s1 + $0x4c] sm:$0xf]
      %v250 = vld [vmem:[%s1 + $0x50] sm:$0xf]
      %v251 = vld [vmem:[%s1 + $0x54] sm:$0xf]
      %v252 = vld [vmem:[%s1 + $0x58] sm:$0xf]
      %v253 = vld [vmem:[%s1 + $0x5c] sm:$0xf]
      %v254 = vld [vmem:[%s1 + $0x60] sm:$0xf]
      %v255 = vld [vmem:[%s1 + $0x64] sm:$0xf]
      %v256 = vld [vmem:[%s1 + $0x68] sm:$0xf]
      %v257 = vld [vmem:[%s1 + $0x6c] sm:$0xf]
      %v258 = vld [vmem:[%s1 + $0x70] sm:$0xf]
      %v259 = vld [vmem:[%s1 + $0x74] sm:$0xf]
      %v260 = vld [vmem:[%s1 + $0x78] sm:$0xf]
      %v261 = vld [vmem:[%s1 + $0x7c] sm:$0xf]
      %v262 = vld [vmem:[%s1 + $0x80] sm:$0xf]
      %v263 = vld [vmem:[%s1 + $0x84] sm:$0xf]
      %v264 = vld [vmem:[%s1 + $0x88] sm:$0xf]
      %v265 = vld [vmem:[%s1 + $0x8c] sm:$0xf]
      %v270 = vunpack.c.l.b16 %v226
      %v271 = vunpack.c.h.b16 %v226
      %v272 = vunpack.c.l.b16 %v227
      %v273 = vunpack.c.l.b16 %v228
      %v274 = vunpack.c.h.b16 %v228
      %v275 = vunpack.c.l.b16 %v229
      %v276 = vpack.c.b16 %v273, %v270
      %v277 = vpack.c.b16 %v274, %v271
      %v278 = vpack.c.b16 %v275, %v272
      %v317 = vunpack.c.l.b16 %v230
      %v318 = vunpack.c.l.b16 %v231
      %v319 = vunpack.c.l.b16 %v232
      %v320 = vunpack.c.l.b16 %v233
      %v321 = vunpack.c.l.b16 %v234
      %v322 = vunpack.c.l.b16 %v235
      %v323 = vunpack.c.l.b16 %v236
      %v324 = vunpack.c.l.b16 %v237
      %v325 = vunpack.c.l.b16 %v238
      %v326 = vunpack.c.l.b16 %v239
      %v327 = vunpack.c.l.b16 %v240
      %v328 = vunpack.c.l.b16 %v241
      %v329 = vunpack.c.l.b16 %v242
      %v330 = vunpack.c.l.b16 %v243
      %v331 = vunpack.c.l.b16 %v244
      %v332 = vunpack.c.l.b16 %v245
      %v333 = vunpack.c.l.b16 %v246
      %v334 = vunpack.c.l.b16 %v247
      %v335 = vunpack.c.l.b16 %v248
      %v336 = vunpack.c.l.b16 %v249
      %v337 = vunpack.c.l.b16 %v250
      %v338 = vunpack.c.l.b16 %v251
      %v339 = vunpack.c.l.b16 %v252
      %v340 = vunpack.c.l.b16 %v253
      %v341 = vunpack.c.l.b16 %v254
      %v342 = vunpack.c.l.b16 %v255
      %v343 = vunpack.c.l.b16 %v256
      %v344 = vunpack.c.l.b16 %v257
      %v345 = vunpack.c.l.b16 %v258
      %v346 = vunpack.c.l.b16 %v259
      %v347 = vunpack.c.l.b16 %v260
      %v348 = vunpack.c.l.b16 %v261
      %v349 = vunpack.c.l.b16 %v262
      %v350 = vunpack.c.l.b16 %v263
      %v351 = vunpack.c.l.b16 %v264
      %v352 = vunpack.c.l.b16 %v265
      %v353 = vpack.c.b16 %v318, %v317
      %v354 = vpack.c.b16 %v320, %v319
      %v355 = vpack.c.b16 %v322, %v321
      %v356 = vpack.c.b16 %v324, %v323
      %v357 = vpack.c.b16 %v326, %v325
      %v358 = vpack.c.b16 %v328, %v327
      %v359 = vpack.c.b16 %v330, %v329
      %v360 = vpack.c.b16 %v332, %v331
      %v361 = vpack.c.b16 %v334, %v333
      %v362 = vpack.c.b16 %v336, %v335
      %v363 = vpack.c.b16 %v338, %v337
      %v364 = vpack.c.b16 %v340, %v339
      %v365 = vpack.c.b16 %v342, %v341
      %v366 = vpack.c.b16 %v344, %v343
      %v367 = vpack.c.b16 %v346, %v345
      %v368 = vpack.c.b16 %v348, %v347
      %v369 = vpack.c.b16 %v350, %v349
      %v370 = vpack.c.b16 %v352, %v351
      %vm389 = vcmask 261120
      %v391 = vsel %vm389, %v278, 0
      %393 = vmatprep.subr.bf16.mxu0 0
      %394 = vmatpush1.bf16.msra.mxu0 %v360
      %395 = vmatprep.subr.bf16.mxu0 0
      %396 = vmatpush1.bf16.msra.mxu0 %v359
      %397 = vmatprep.subr.bf16.mxu0 0
      %398 = vmatpush1.bf16.msra.mxu0 %v358
      %399 = vmatprep.subr.bf16.mxu0 0
      %400 = vmatpush1.bf16.msra.mxu0 %v357
      %401 = vmatprep.subr.bf16.mxu0 0
      %402 = vmatpush1.bf16.msra.mxu0 %v356
      %403 = vmatprep.subr.bf16.mxu0 0
      %404 = vmatpush1.bf16.msra.mxu0 %v355
      %405 = vmatprep.subr.bf16.mxu0 0
      %406 = vmatpush1.bf16.msra.mxu0 %v354
      %407 = vmatprep.subr.bf16.mxu0 0
      %408 = vmatpush1.bf16.msra.mxu0 %v353
      %409 = vmatprep.subr.bf16.mxu0 0
      %410 = vmatpush2.bf16.msra.mxu0 %v368
      %411 = vmatprep.subr.bf16.mxu0 0
      %412 = vmatpush2.bf16.msra.mxu0 %v367
      %413 = vmatprep.subr.bf16.mxu0 0
      %414 = vmatpush2.bf16.msra.mxu0 %v366
      %415 = vmatprep.subr.bf16.mxu0 0
      %416 = vmatpush2.bf16.msra.mxu0 %v365
      %417 = vmatprep.subr.bf16.mxu0 0
      %418 = vmatpush2.bf16.msra.mxu0 %v364
      %419 = vmatprep.subr.bf16.mxu0 0
      %420 = vmatpush2.bf16.msra.mxu0 %v363
      %421 = vmatprep.subr.bf16.mxu0 0
      %422 = vmatpush2.bf16.msra.mxu0 %v362
      %423 = vmatprep.subr.bf16.mxu0 0
      %424 = vmatpush2.bf16.msra.mxu0 %v361
      %425 = vmatprep.mubr.bf16.mxu0 %v277
      %426 = vmatmul.mubr.bf16.gmra.mxu0 %v276
      %v427 = vpop.f32.mrf.mxu0
      %v428 = vadd.f32 0.0, %v427
      %v429 = vpop.f32.mrf.mxu0
      %v430 = vpop.f32.mrf.mxu0
      %v431 = vadd.f32 0.0, %v430
      %v432 = vpop.f32.mrf.mxu0
      %433 = vdwg.mxu0
      %434 = vmatprep.subr.bf16.mxu0 0
      %435 = vmatpush1.bf16.msra.mxu0 0
      %436 = vmatprep.subr.bf16.mxu0 0
      %437 = vmatpush1.bf16.msra.mxu0 0
      %438 = vmatprep.subr.bf16.mxu0 0
      %439 = vmatpush1.bf16.msra.mxu0 0
      %440 = vmatprep.subr.bf16.mxu0 0
      %441 = vmatpush1.bf16.msra.mxu0 0
      %442 = vmatprep.subr.bf16.mxu0 0
      %443 = vmatpush1.bf16.msra.mxu0 0
      %444 = vmatprep.subr.bf16.mxu0 0
      %445 = vmatpush1.bf16.msra.mxu0 0
      %446 = vmatprep.subr.bf16.mxu0 0
      %447 = vmatpush1.bf16.msra.mxu0 %v370
      %448 = vmatprep.subr.bf16.mxu0 0
      %449 = vmatpush1.bf16.msra.mxu0 %v369
      %450 = vmatprep.subr.bf16.mxu0 0
      %451 = vmatpush2.bf16.msra.mxu0 0
      %452 = vmatprep.subr.bf16.mxu0 0
      %453 = vmatpush2.bf16.msra.mxu0 0
      %454 = vmatprep.subr.bf16.mxu0 0
      %455 = vmatpush2.bf16.msra.mxu0 0
      %456 = vmatprep.subr.bf16.mxu0 0
      %457 = vmatpush2.bf16.msra.mxu0 0
      %458 = vmatprep.subr.bf16.mxu0 0
      %459 = vmatpush2.bf16.msra.mxu0 0
      %460 = vmatprep.subr.bf16.mxu0 0
      %461 = vmatpush2.bf16.msra.mxu0 0
      %462 = vmatprep.subr.bf16.mxu0 0
      %463 = vmatpush2.bf16.msra.mxu0 0
      %464 = vmatprep.subr.bf16.mxu0 0
      %465 = vmatpush2.bf16.msra.mxu0 0
      %466 = vmatprep.mubr.bf16.mxu0 0
      %467 = vmatmul.mubr.bf16.gmra.mxu0 %v391
      %v468 = vpop.f32.mrf.mxu0
      %v469 = vadd.f32 %v428, %v468
      %v470 = vpop.f32.mrf.mxu0
      %v471 = vpop.f32.mrf.mxu0
      %v472 = vadd.f32 %v431, %v471
      %v473 = vpop.f32.mrf.mxu0
      %474 = vdwg.mxu0
      %v475 = vpack.c.bf16 %v472, %v469
      %v477 = vunpack.c.l.b16 %v475
      %v478 = vunpack.c.h.b16 %v475
      %v479 = vpack.c.b16 %v477, %v477
      %v480 = vpack.c.b16 %v478, %v478
      %vm483 = vcmask 519168
      %484 = vst.msk [vmem:[%s215] sm:$0xf] %vm483, %v479
      %485 = vst.msk [vmem:[%s215 + $0x4] sm:$0xf] %vm483, %v480
      %vm486 = vcmask 523264
      %v487 = vsel %vm486, %v469, 0.0
      %v488 = vsel %vm486, %v472, 0.0
      %v489 = vadd.f32 %v487, %v488
      %v490 = vrot.slane %v489, 4
      %v491 = vadd.f32 %v489, %v490
      %v492 = vrot.slane %v491, 2
      %v493 = vadd.f32 %v491, %v492
      %v494 = vrot.slane %v493, 1
      %v495 = vadd.f32 %v493, %v494
      %v496 = vmul.f32 %v469, %v469
      %v497 = vmul.f32 %v472, %v472
      %v498 = vsel %vm486, %v496, 0.0
      %v499 = vsel %vm486, %v497, 0.0
      %v500 = vadd.f32 %v498, %v499
      %v501 = vrot.slane %v500, 4
      %v502 = vadd.f32 %v500, %v501
      %v503 = vrot.slane %v502, 2
      %v504 = vadd.f32 %v502, %v503
      %v505 = vrot.slane %v504, 1
      %v506 = vadd.f32 %v504, %v505
      %507 = vst.msk [vmem:[%s220] sm:$0xff] %vm486, %v495
      %508 = vst.msk [vmem:[%s224] sm:$0xff] %vm486, %v506
      %s509 = smul.u32 2, %s16
      %p510 = scmp.lt.s32.totalorder %s509, 3
      %s511 = scalar_select %p510, %s509, 3
      %s512 = smul.addr %s511, 4
      %s513 = scalar_lea.vmem %s2, %s512
      %p514 = scmp.lt.s32.totalorder %s16, 1
      %s515 = scalar_select %p514, %s16, 1
      %s516 = smul.addr %s515, 8
      %s517 = scalar_lea.vmem %s3, %s516
      %p518 = scmp.lt.s32.totalorder %s16, 1
      %s519 = scalar_select %p518, %s16, 1
      %s520 = smul.addr %s519, 8
      %s521 = scalar_lea.vmem %s4, %s520
      // Predicated region
      $region29: #{generator_forward.34} parent=27 // pred_check
        %p522 = pneg %p81
      $region30: #{generator_forward.34} parent=27 // pred_check_branch
        %524 = sbr.rel (%p522) target = $region32
      $region31: #{generator_forward.34} parent=27 // pred_region
        %s525 = smul.u32 2, %s16
      $region32: #{generator_forward.34} parent=27 // pred_fallthru
        _
      // Predicated region
      $region33: #{generator_forward.34} parent=27 // pred_check
        %p526 = pneg %p107
      $region34: #{generator_forward.34} parent=27 // pred_check_branch
        %528 = sbr.rel (%p526) target = $region36
      $region35: #{generator_forward.34} parent=27 // pred_region
        _
      $region36: #{generator_forward.34} parent=27 // pred_fallthru
        _
      // Predicated region
      $region37: #{generator_forward.34} parent=27 // pred_check
        %p529 = pneg %p133
      $region38: #{generator_forward.34} parent=27 // pred_check_branch
        %531 = sbr.rel (%p529) target = $region40
      $region39: #{generator_forward.34} parent=27 // pred_region
        _
      $region40: #{generator_forward.34} parent=27 // pred_fallthru
        _
    $region28: #{generator_forward.34} parent=5 // pred_fallthru
      _
    %p532 = scmp.le.s32.totalorder 2, %s11
    // Predicated region
    $region41: #{generator_forward.34} parent=5 // pred_check
      %p533 = pneg %p532
    $region42: #{generator_forward.34} parent=5 // pred_check_branch
      %535 = sbr.rel (%p533) target = $region44
    $region43: #{generator_forward.34} parent=5 // pred_region
      %s536 = ssub.s32 %s11, 2
      // Predicated region
      $region45: #{generator_forward.34} parent=43 // pred_check
        %p537 = pneg %p87
      $region46: #{generator_forward.34} parent=43 // pred_check_branch
        %539 = sbr.rel (%p537) target = $region48
      $region47: #{generator_forward.34} parent=43 // pred_region
        %s540 = smul.u32 2, %s17
        %p541 = scmp.lt.s32.totalorder %s540, 3
        %s542 = scalar_select %p541, %s540, 3
        %s543 = smul.addr %s542, 4
        %s544 = scalar_lea.vmem %s2, %s543
      $region48: #{generator_forward.34} parent=43 // pred_fallthru
        _
      // Predicated region
      $region49: #{generator_forward.34} parent=43 // pred_check
        %p545 = pneg %p113
      $region50: #{generator_forward.34} parent=43 // pred_check_branch
        %547 = sbr.rel (%p545) target = $region52
      $region51: #{generator_forward.34} parent=43 // pred_region
        %p548 = scmp.lt.s32.totalorder %s17, 1
        %s549 = scalar_select %p548, %s17, 1
        %s550 = smul.addr %s549, 8
        %s551 = scalar_lea.vmem %s3, %s550
      $region52: #{generator_forward.34} parent=43 // pred_fallthru
        _
      // Predicated region
      $region53: #{generator_forward.34} parent=43 // pred_check
        %p552 = pneg %p139
      $region54: #{generator_forward.34} parent=43 // pred_check_branch
        %554 = sbr.rel (%p552) target = $region56
      $region55: #{generator_forward.34} parent=43 // pred_region
        %p555 = scmp.lt.s32.totalorder %s17, 1
        %s556 = scalar_select %p555, %s17, 1
        %s557 = smul.addr %s556, 8
        %s558 = scalar_lea.vmem %s4, %s557
      $region56: #{generator_forward.34} parent=43 // pred_fallthru
        _
    $region44: #{generator_forward.34} parent=5 // pred_fallthru
      _
  $region6: #{generator_forward.34} parent=0 // loop_footer
    %s15 = sadd.s32 1, %s11
  $region7: #{generator_forward.34} parent=0 // loop_footer_branch
    %10 = sbr.rel target = $region3
  $region8: #{generator_forward.34} parent=0 // loop_exit
    _

// kernel: tile.219
$region0: #{tile.219}
  #allocation0 [shape = 's32[1]{0}', space=sflag, size = 0x4, scoped, tag = 'scoped memory for tile.219']
  %s0 = inlined_call_operand.vmem [shape: f32[8], index: 0, kind: input, shape index: {}]
  %s1 = inlined_call_operand.vmem [shape: f32[4,8], index: 1, kind: output, shape index: {}]
  // Predicated region
  $region2: #{tile.219} parent=0 // pred_check
    _
  $region3: #{tile.219} parent=0 // pred_check_branch
    %3 = sbr.rel (0) target = $region5
  $region4: #{tile.219} parent=0 // pred_region
    _
  $region5: #{tile.219} parent=0 // pred_fallthru
    _
  %v4 = vld [vmem:[%s0] ss:$0 sm:$0xff]
  %5 = vst [vmem:[%s1] sm:$0xf] %v4

// kernel: tile.226
$region0: #{tile.226}
  %s0 = inlined_call_operand.vmem [shape: f32[4,8], index: 0, kind: input, shape index: {}]
  %s1 = inlined_call_operand.vmem [shape: f32[32], index: 1, kind: output, shape index: {}]
  $region1: #{tile.226} parent=0
    #allocation0 [shape = 'u8[4096]{0}', space=vmem, size = 0x1000, scoped, tag = 'scoped mem for output reshape']
    #allocation1 [shape = 'u8[4096]{0}', space=vmem, size = 0x1000, scoped, tag = 'scoped mem for input reshape']
    %s3 = sshll.u32 1, 4
    %s4 = ssub.s32 %s3, 1
    %v5 = vld [vmem:[%s0] sm:%s4]
    %6 = vst [vmem:[#allocation1] sm:%s4] %v5
    %v7 = vld [vmem:[#allocation1] sm:$0x1]
    %vm8 = vcmask 64512
    %9 = vst.msk [vmem:[#allocation0] sm:$0x1] %vm8, %v7
    %s10 = scalar_lea.vmem [#allocation1], 3
    %v11 = vld [vmem:[%s10] sm:$0x1]
    %12 = vrot.lane.b32.xlu0 %v11, 24
    %v13 = vpop.permute.xlu0 %12
    %vm14 = vcmask 261312
    %15 = vst.msk [vmem:[#allocation0] sm:$0x1] %vm14, %v13
    %s16 = scalar_lea.vmem [#allocation1], 2
    %v17 = vld [vmem:[%s16] sm:$0x1]
    %18 = vrot.lane.b32.xlu0 %v17, 16
    %v19 = vpop.permute.xlu0 %18
    %vm20 = vcmask 195712
    %21 = vst.msk [vmem:[#allocation0] sm:$0x1] %vm20, %v19
    %s22 = scalar_lea.vmem [#allocation1], 1
    %v23 = vld [vmem:[%s22] sm:$0x1]
    %24 = vrot.lane.b32.xlu0 %v23, 8
    %v25 = vpop.permute.xlu0 %24
    %vm26 = vcmask 130112
    %27 = vst.msk [vmem:[#allocation0] sm:$0x1] %vm26, %v25
    %s29 = sshll.u32 1, 1
    %s30 = ssub.s32 %s29, 1
    %v32 = vld [vmem:[#allocation0] sm:%s30]
    %s33 = sshll.u32 1, 1
    %s34 = ssub.s32 %s33, 1
    %35 = vst [vmem:[%s1] sm:%s34] %v32

// kernel: generator_forward.36
$region0: #{generator_forward.36}
  #allocation0 [shape = 'u32[]', space=smem, size = 0x4, offset = 0x4, fixed_abs, tag = 'smem constant byte address 0x4 - core index']
  #allocation1 [shape = 'u32[144,128]{1,0:T(1,128)}', space=vmem, size = 0x12000, scoped, tag = 'internal scratch']
  %s0 = inlined_call_operand.vmem [shape: bf16[128,144], index: 0, kind: input, shape index: {}]
  %s1 = inlined_call_operand.vmem [shape: bf16[144,32], index: 1, kind: input, shape index: {}]
  %s2 = inlined_call_operand.vmem [shape: bf16[128,32], index: 2, kind: output, shape index: {0}]
  %s3 = inlined_call_operand.vmem [shape: f32[16,32], index: 3, kind: output, shape index: {1}]
  %s4 = inlined_call_operand.vmem [shape: f32[16,32], index: 4, kind: output, shape index: {2}]
  %5 = xla_tuple %s2, %s3, %s4
  %s6 = sld [smem:[#allocation0]]
  $region57: #{generator_forward.36} parent=0
    _
  %s8 = ssub.s32 1, %s6
  %s9 = scalar_select 0, %s8, %s6
  loop: start=0, step=1, limit=4
  $region2: #{generator_forward.36} parent=0 // loop_pre_header
    _
  $region3: #{generator_forward.36} parent=0 // loop_header
    %s11 = sphi 0, %s15
    %p12 = scmp.ge.s32.totalorder %s11, 4
    %s21 = sphi 0, %s23
    %s24 = sphi 0, %s21
    %s25 = sphi 0, %s24
    %s41 = sphi 0, %s25
    %s45 = sphi 0, %s45
    %s47 = sphi 0, %s45
    %s48 = sphi 0, %s47
    %s62 = sphi 0, %s48
    %s68 = sphi 0, %s70
    %s71 = sphi 0, %s68
    %s72 = sphi 0, %s71
    %s88 = sphi 0, %s72
    %s94 = sphi 0, %s96
    %s97 = sphi 0, %s94
    %s98 = sphi 0, %s97
    %s114 = sphi 0, %s98
    %s120 = sphi 0, %s122
    %s123 = sphi 0, %s120
    %s124 = sphi 0, %s123
    %s140 = sphi 0, %s124
  $region4: #{generator_forward.36} parent=0 // loop_header_branch
    %14 = sbr.rel (%p12) target = $region8
  $region5: #{generator_forward.36} parent=0 // loop_body
    %s16 = ssub.s32 %s11, 1
    %s17 = ssub.s32 %s11, 2
    %s18 = sadd.s32 %s11, 1
    %s19 = ssub.s32 %s11, %s18
    %p20 = scmp.eq.s32.totalorder %s19, 0
    %s22 = sadd.s32 %s21, 1
    %s23 = scalar_select %p20, %s21, %s22
    %p26 = pneg %p20
    %p27 = scmp.eq.s32.totalorder %s11, 1
    %p28 = por %p26, %p27
    %p29 = scmp.ne.s32.totalorder %s21, %s24
    %p30 = scmp.eq.s32.totalorder %s11, 0
    %p31 = por %p29, %p30
    %p32 = scmp.ne.s32.totalorder %s21, %s24
    %p33 = scmp.eq.s32.totalorder %s16, 1
    %p34 = por %p32, %p33
    %p35 = scmp.ne.s32.totalorder %s24, %s25
    %p36 = scmp.eq.s32.totalorder %s16, 0
    %p37 = por %p35, %p36
    %p38 = scmp.ne.s32.totalorder %s24, %s25
    %p39 = scmp.eq.s32.totalorder %s17, 1
    %p40 = por %p38, %p39
    %p42 = scmp.ne.s32.totalorder %s25, %s41
    %p43 = scmp.eq.s32.totalorder %s17, 0
    %p44 = por %p42, %p43
    %s46 = sadd.s32 %s45, 1
    %p49 = scmp.eq.s32.totalorder %s11, 1
    %p50 = scmp.ne.s32.totalorder %s45, %s47
    %p51 = scmp.eq.s32.totalorder %s11, 0
    %p52 = por %p50, %p51
    %p53 = scmp.ne.s32.totalorder %s45, %s47
    %p54 = scmp.eq.s32.totalorder %s16, 1
    %p55 = por %p53, %p54
    %p56 = scmp.ne.s32.totalorder %s47, %s48
    %p57 = scmp.eq.s32.totalorder %s16, 0
    %p58 = por %p56, %p57
    %p59 = scmp.ne.s32.totalorder %s47, %s48
    %p60 = scmp.eq.s32.totalorder %s17, 1
    %p61 = por %p59, %p60
    %p63 = scmp.ne.s32.totalorder %s48, %s62
    %p64 = scmp.eq.s32.totalorder %s17, 0
    %p65 = por %p63, %p64
    %s66 = ssub.s32 %s11, %s18
    %p67 = scmp.eq.s32.totalorder %s66, 0
    %s69 = sadd.s32 %s68, 1
    %s70 = scalar_select %p67, %s68, %s69
    %p73 = pneg %p67
    %p74 = scmp.eq.s32.totalorder %s11, 1
    %p75 = por %p73, %p74
    %p76 = scmp.ne.s32.totalorder %s68, %s71
    %p77 = scmp.eq.s32.totalorder %s11, 0
    %p78 = por %p76, %p77
    %p79 = scmp.ne.s32.totalorder %s68, %s71
    %p80 = scmp.eq.s32.totalorder %s16, 1
    %p81 = por %p79, %p80
    %p82 = scmp.ne.s32.totalorder %s71, %s72
    %p83 = scmp.eq.s32.totalorder %s16, 0
    %p84 = por %p82, %p83
    %p85 = scmp.ne.s32.totalorder %s71, %s72
    %p86 = scmp.eq.s32.totalorder %s17, 1
    %p87 = por %p85, %p86
    %p89 = scmp.ne.s32.totalorder %s72, %s88
    %p90 = scmp.eq.s32.totalorder %s17, 0
    %p91 = por %p89, %p90
    %s92 = ssub.s32 %s11, %s18
    %p93 = scmp.eq.s32.totalorder %s92, 0
    %s95 = sadd.s32 %s94, 1
    %s96 = scalar_select %p93, %s94, %s95
    %p99 = pneg %p93
    %p100 = scmp.eq.s32.totalorder %s11, 1
    %p101 = por %p99, %p100
    %p102 = scmp.ne.s32.totalorder %s94, %s97
    %p103 = scmp.eq.s32.totalorder %s11, 0
    %p104 = por %p102, %p103
    %p105 = scmp.ne.s32.totalorder %s94, %s97
    %p106 = scmp.eq.s32.totalorder %s16, 1
    %p107 = por %p105, %p106
    %p108 = scmp.ne.s32.totalorder %s97, %s98
    %p109 = scmp.eq.s32.totalorder %s16, 0
    %p110 = por %p108, %p109
    %p111 = scmp.ne.s32.totalorder %s97, %s98
    %p112 = scmp.eq.s32.totalorder %s17, 1
    %p113 = por %p111, %p112
    %p115 = scmp.ne.s32.totalorder %s98, %s114
    %p116 = scmp.eq.s32.totalorder %s17, 0
    %p117 = por %p115, %p116
    %s118 = ssub.s32 %s11, %s18
    %p119 = scmp.eq.s32.totalorder %s118, 0
    %s121 = sadd.s32 %s120, 1
    %s122 = scalar_select %p119, %s120, %s121
    %p125 = pneg %p119
    %p126 = scmp.eq.s32.totalorder %s11, 1
    %p127 = por %p125, %p126
    %p128 = scmp.ne.s32.totalorder %s120, %s123
    %p129 = scmp.eq.s32.totalorder %s11, 0
    %p130 = por %p128, %p129
    %p131 = scmp.ne.s32.totalorder %s120, %s123
    %p132 = scmp.eq.s32.totalorder %s16, 1
    %p133 = por %p131, %p132
    %p134 = scmp.ne.s32.totalorder %s123, %s124
    %p135 = scmp.eq.s32.totalorder %s16, 0
    %p136 = por %p134, %p135
    %p137 = scmp.ne.s32.totalorder %s123, %s124
    %p138 = scmp.eq.s32.totalorder %s17, 1
    %p139 = por %p137, %p138
    %p141 = scmp.ne.s32.totalorder %s124, %s140
    %p142 = scmp.eq.s32.totalorder %s17, 0
    %p143 = por %p141, %p142
    %p144 = scmp.le.s32.totalorder 1, %s11
    %p145 = scmp.lt.s32.totalorder %s11, 3
    %p146 = pnand %p144, %p145
    %p147 = pneg %p146
    // Predicated region
    $region9: #{generator_forward.36} parent=5 // pred_check
      _
    $region10: #{generator_forward.36} parent=5 // pred_check_branch
      %149 = sbr.rel (%p146) target = $region12
    $region11: #{generator_forward.36} parent=5 // pred_region
      %s150 = ssub.s32 %s11, 1
      // Predicated region
      $region13: #{generator_forward.36} parent=11 // pred_check
        %p151 = pneg %p58
      $region14: #{generator_forward.36} parent=11 // pred_check_branch
        %153 = sbr.rel (%p151) target = $region16
      $region15: #{generator_forward.36} parent=11 // pred_region
        _
      $region16: #{generator_forward.36} parent=11 // pred_fallthru
        _
    $region12: #{generator_forward.36} parent=5 // pred_fallthru
      _
    %p154 = scmp.lt.s32.totalorder %s11, 2
    // Predicated region
    $region17: #{generator_forward.36} parent=5 // pred_check
      %p155 = pneg %p154
    $region18: #{generator_forward.36} parent=5 // pred_check_branch
      %157 = sbr.rel (%p155) target = $region20
    $region19: #{generator_forward.36} parent=5 // pred_region
      // Predicated region
      $region21: #{generator_forward.36} parent=19 // pred_check
        %p158 = pneg %p31
      $region22: #{generator_forward.36} parent=19 // pred_check_branch
        %160 = sbr.rel (%p158) target = $region24
      $region23: #{generator_forward.36} parent=19 // pred_region
        %s161 = smul.u32 8, %s11
        %p162 = scmp.lt.s32.totalorder %s161, 15
        %s163 = scalar_select %p162, %s161, 15
        %s164 = smul.addr %s163, 2
        %s165 = smul.addr %s164, 4
        %s166 = scalar_lea.vmem %s0, %s165
        %s167 = smul.u32 8, %s11
      $region24: #{generator_forward.36} parent=19 // pred_fallthru
        _
    $region20: #{generator_forward.36} parent=5 // pred_fallthru
      _
    %p168 = scmp.le.s32.totalorder 1, %s11
    %p169 = scmp.lt.s32.totalorder %s11, 3
    %p170 = pnand %p168, %p169
    %p171 = pneg %p170
    // Predicated region
    $region25: #{generator_forward.36} parent=5 // pred_check
      _
    $region26: #{generator_forward.36} parent=5 // pred_check_branch
      %173 = sbr.rel (%p170) target = $region28
    $region27: #{generator_forward.36} parent=5 // pred_region
      %s174 = ssub.s32 %s11, 1
      %s175 = smul.u32 8, %s16
      %p176 = scmp.lt.s32.totalorder %s175, 15
      %s177 = scalar_select %p176, %s175, 15
      %s178 = smul.addr %s177, 2
      %s179 = smul.addr %s178, 4
      %s180 = scalar_lea.vmem %s0, %s179
      %p181 = pneg %p37
      %p182 = pneg %p34
      %p183 = pneg %p58
      %p184 = pneg %p55
      %p185 = pneg %p84
      %p186 = pneg %p81
      %s187 = smul.u32 8, %s16
      %p188 = scmp.lt.s32.totalorder %s187, 15
      %s189 = scalar_select %p188, %s187, 15
      %s190 = smul.addr %s189, 4
      %s191 = scalar_lea.vmem %s2, %s190
      %p192 = pneg %p110
      %p193 = pneg %p107
      %p194 = scmp.lt.s32.totalorder %s16, 1
      %s195 = scalar_select %p194, %s16, 1
      %s196 = smul.addr %s195, 8
      %s197 = scalar_lea.vmem %s3, %s196
      %p198 = pneg %p136
      %p199 = pneg %p133
      %p200 = scmp.lt.s32.totalorder %s16, 1
      %s201 = scalar_select %p200, %s16, 1
      %s202 = smul.addr %s201, 8
      %s203 = scalar_lea.vmem %s4, %s202
      %s204 = smul.u32 8, %s16
      %p205 = scmp.lt.s32.totalorder %s204, 15
      %s206 = scalar_select %p205, %s204, 15
      %s207 = smul.addr %s206, 2
      %s208 = smul.addr %s207, 4
      %s209 = scalar_lea.vmem %s0, %s208
      %s210 = smul.u32 8, %s16
      %s211 = smul.u32 8, %s16
      %p212 = scmp.lt.s32.totalorder %s211, 15
      %s213 = scalar_select %p212, %s211, 15
      %s214 = smul.addr %s213, 4
      %s215 = scalar_lea.vmem %s2, %s214
      %s216 = smul.u32 8, %s16
      %p217 = scmp.lt.s32.totalorder %s16, 1
      %s218 = scalar_select %p217, %s16, 1
      %s219 = smul.addr %s218, 8
      %s220 = scalar_lea.vmem %s3, %s219
      %p221 = scmp.lt.s32.totalorder %s16, 1
      %s222 = scalar_select %p221, %s16, 1
      %s223 = smul.addr %s222, 8
      %s224 = scalar_lea.vmem %s4, %s223
      %v226 = vld [vmem:[%s209] sm:$0xff]
      %v227 = vld [vmem:[%s209 + $0x8] sm:$0xff]
      %v228 = vld [vmem:[%s209 + $0x10] sm:$0xff]
      %v229 = vld [vmem:[%s209 + $0x18] sm:$0xff]
      %v230 = vld [vmem:[%s209 + $0x20] sm:$0xff]
      %v231 = vld [vmem:[%s209 + $0x28] sm:$0xff]
      %v232 = vld [vmem:[%s209 + $0x30] sm:$0xff]
      %v233 = vld [vmem:[%s209 + $0x38] sm:$0xff]
      %v234 = vld [vmem:[%s1] sm:$0xf]
      %v235 = vld [vmem:[%s1 + $0x4] sm:$0xf]
      %v236 = vld [vmem:[%s1 + $0x8] sm:$0xf]
      %v237 = vld [vmem:[%s1 + $0xc] sm:$0xf]
      %v238 = vld [vmem:[%s1 + $0x10] sm:$0xf]
      %v239 = vld [vmem:[%s1 + $0x14] sm:$0xf]
      %v240 = vld [vmem:[%s1 + $0x18] sm:$0xf]
      %v241 = vld [vmem:[%s1 + $0x1c] sm:$0xf]
      %v242 = vld [vmem:[%s1 + $0x20] sm:$0xf]
      %v243 = vld [vmem:[%s1 + $0x24] sm:$0xf]
      %v244 = vld [vmem:[%s1 + $0x28] sm:$0xf]
      %v245 = vld [vmem:[%s1 + $0x2c] sm:$0xf]
      %v246 = vld [vmem:[%s1 + $0x30] sm:$0xf]
      %v247 = vld [vmem:[%s1 + $0x34] sm:$0xf]
      %v248 = vld [vmem:[%s1 + $0x38] sm:$0xf]
      %v249 = vld [vmem:[%s1 + $0x3c] sm:$0xf]
      %v250 = vld [vmem:[%s1 + $0x40] sm:$0xf]
      %v251 = vld [vmem:[%s1 + $0x44] sm:$0xf]
      %v260 = vunpack.c.l.b16 %v226
      %v261 = vunpack.c.h.b16 %v226
      %v262 = vunpack.c.l.b16 %v227
      %v263 = vunpack.c.h.b16 %v227
      %v264 = vunpack.c.l.b16 %v228
      %v265 = vunpack.c.h.b16 %v228
      %v266 = vunpack.c.l.b16 %v229
      %v267 = vunpack.c.h.b16 %v229
      %v268 = vunpack.c.l.b16 %v230
      %v269 = vunpack.c.h.b16 %v230
      %v270 = vunpack.c.l.b16 %v231
      %v271 = vunpack.c.h.b16 %v231
      %v272 = vunpack.c.l.b16 %v232
      %v273 = vunpack.c.h.b16 %v232
      %v274 = vunpack.c.l.b16 %v233
      %v275 = vunpack.c.h.b16 %v233
      %v276 = vpack.c.b16 %v262, %v260
      %v277 = vpack.c.b16 %v263, %v261
      %v278 = vpack.c.b16 %v266, %v264
      %v279 = vpack.c.b16 %v267, %v265
      %v280 = vpack.c.b16 %v270, %v268
      %v281 = vpack.c.b16 %v271, %v269
      %v282 = vpack.c.b16 %v274, %v272
      %v283 = vpack.c.b16 %v275, %v273
      %v306 = vunpack.c.l.b16 %v234
      %v307 = vunpack.c.l.b16 %v235
      %v308 = vunpack.c.l.b16 %v236
      %v309 = vunpack.c.l.b16 %v237
      %v310 = vunpack.c.l.b16 %v238
      %v311 = vunpack.c.l.b16 %v239
      %v312 = vunpack.c.l.b16 %v240
      %v313 = vunpack.c.l.b16 %v241
      %v314 = vunpack.c.l.b16 %v242
      %v315 = vunpack.c.l.b16 %v243
      %v316 = vunpack.c.l.b16 %v244
      %v317 = vunpack.c.l.b16 %v245
      %v318 = vunpack.c.l.b16 %v246
      %v319 = vunpack.c.l.b16 %v247
      %v320 = vunpack.c.l.b16 %v248
      %v321 = vunpack.c.l.b16 %v249
      %v322 = vunpack.c.l.b16 %v250
      %v323 = vunpack.c.l.b16 %v251
      %v324 = vpack.c.b16 %v307, %v306
      %v325 = vpack.c.b16 %v309, %v308
      %v326 = vpack.c.b16 %v311, %v310
      %v327 = vpack.c.b16 %v313, %v312
      %v328 = vpack.c.b16 %v315, %v314
      %v329 = vpack.c.b16 %v317, %v316
      %v330 = vpack.c.b16 %v319, %v318
      %v331 = vpack.c.b16 %v321, %v320
      %v332 = vpack.c.b16 %v323, %v322
      %vm342 = vcmask 130048
      %v344 = vsel %vm342, %v277, 0
      %v347 = vsel %vm342, %v279, 0
      %v350 = vsel %vm342, %v281, 0
      %v353 = vsel %vm342, %v283, 0
      %355 = vmatprep.subr.bf16.mxu0 0
      %356 = vmatpush1.bf16.msra.mxu0 %v331
      %357 = vmatprep.subr.bf16.mxu0 0
      %358 = vmatpush1.bf16.msra.mxu0 %v330
      %359 = vmatprep.subr.bf16.mxu0 0
      %360 = vmatpush1.bf16.msra.mxu0 %v329
      %361 = vmatprep.subr.bf16.mxu0 0
      %362 = vmatpush1.bf16.msra.mxu0 %v328
      %363 = vmatprep.subr.bf16.mxu0 0
      %364 = vmatpush1.bf16.msra.mxu0 %v327
      %365 = vmatprep.subr.bf16.mxu0 0
      %366 = vmatpush1.bf16.msra.mxu0 %v326
      %367 = vmatprep.subr.bf16.mxu0 0
      %368 = vmatpush1.bf16.msra.mxu0 %v325
      %369 = vmatprep.subr.bf16.mxu0 0
      %370 = vmatpush1.bf16.msra.mxu0 %v324
      %371 = vmatprep.subr.bf16.mxu0 0
      %372 = vmatpush2.bf16.msra.mxu0 0
      %373 = vmatprep.subr.bf16.mxu0 0
      %374 = vmatpush2.bf16.msra.mxu0 0
      %375 = vmatprep.subr.bf16.mxu0 0
      %376 = vmatpush2.bf16.msra.mxu0 0
      %377 = vmatprep.subr.bf16.mxu0 0
      %378 = vmatpush2.bf16.msra.mxu0 0
      %379 = vmatprep.subr.bf16.mxu0 0
      %380 = vmatpush2.bf16.msra.mxu0 0
      %381 = vmatprep.subr.bf16.mxu0 0
      %382 = vmatpush2.bf16.msra.mxu0 0
      %383 = vmatprep.subr.bf16.mxu0 0
      %384 = vmatpush2.bf16.msra.mxu0 0
      %385 = vmatprep.subr.bf16.mxu0 0
      %386 = vmatpush2.bf16.msra.mxu0 %v332
      %387 = vmatprep.mubr.bf16.mxu0 %v344
      %388 = vmatmul.mubr.bf16.gmra.mxu0 %v276
      %v389 = vpop.f32.mrf.mxu0
      %v390 = vadd.f32 0.0, %v389
      %v391 = vpop.f32.mrf.mxu0
      %v392 = vpop.f32.mrf.mxu0
      %v393 = vadd.f32 0.0, %v392
      %v394 = vpop.f32.mrf.mxu0
      %395 = vmatprep.mubr.bf16.mxu0 %v347
      %396 = vmatmul.mubr.bf16.gmra.mxu0 %v278
      %v397 = vpop.f32.mrf.mxu0
      %v398 = vadd.f32 0.0, %v397
      %v399 = vpop.f32.mrf.mxu0
      %v400 = vpop.f32.mrf.mxu0
      %v401 = vadd.f32 0.0, %v400
      %v402 = vpop.f32.mrf.mxu0
      %403 = vmatprep.mubr.bf16.mxu0 %v350
      %404 = vmatmul.mubr.bf16.gmra.mxu0 %v280
      %v405 = vpop.f32.mrf.mxu0
      %v406 = vadd.f32 0.0, %v405
      %v407 = vpop.f32.mrf.mxu0
      %v408 = vpop.f32.mrf.mxu0
      %v409 = vadd.f32 0.0, %v408
      %v410 = vpop.f32.mrf.mxu0
      %411 = vmatprep.mubr.bf16.mxu0 %v353
      %412 = vmatmul.mubr.bf16.gmra.mxu0 %v282
      %v413 = vpop.f32.mrf.mxu0
      %v414 = vadd.f32 0.0, %v413
      %v415 = vpop.f32.mrf.mxu0
      %v416 = vpop.f32.mrf.mxu0
      %v417 = vadd.f32 0.0, %v416
      %v418 = vpop.f32.mrf.mxu0
      %419 = vdwg.mxu0
      %v420 = vpack.c.bf16 %v393, %v390
      %v421 = vpack.c.bf16 %v401, %v398
      %v422 = vpack.c.bf16 %v409, %v406
      %v423 = vpack.c.bf16 %v417, %v414
      %v428 = vunpack.c.l.b16 %v420
      %v429 = vunpack.c.h.b16 %v420
      %v430 = vunpack.c.l.b16 %v421
      %v431 = vunpack.c.h.b16 %v421
      %v432 = vunpack.c.l.b16 %v422
      %v433 = vunpack.c.h.b16 %v422
      %v434 = vunpack.c.l.b16 %v423
      %v435 = vunpack.c.h.b16 %v423
      %v436 = vpack.c.b16 %v428, %v428
      %v437 = vpack.c.b16 %v429, %v429
      %v438 = vpack.c.b16 %v430, %v430
      %v439 = vpack.c.b16 %v431, %v431
      %v440 = vpack.c.b16 %v432, %v432
      %v441 = vpack.c.b16 %v433, %v433
      %v442 = vpack.c.b16 %v434, %v434
      %v443 = vpack.c.b16 %v435, %v435
      %vm452 = vcmask 257024
      %453 = vst.msk [vmem:[%s215] sm:$0xf] %vm452, %v436
      %454 = vst.msk [vmem:[%s215 + $0x4] sm:$0xf] %vm452, %v437
      %455 = vst.msk [vmem:[%s215 + $0x8] sm:$0xf] %vm452, %v438
      %456 = vst.msk [vmem:[%s215 + $0xc] sm:$0xf] %vm452, %v439
      %457 = vst.msk [vmem:[%s215 + $0x10] sm:$0xf] %vm452, %v440
      %458 = vst.msk [vmem:[%s215 + $0x14] sm:$0xf] %vm452, %v441
      %459 = vst.msk [vmem:[%s215 + $0x18] sm:$0xf] %vm452, %v442
      %460 = vst.msk [vmem:[%s215 + $0x1c] sm:$0xf] %vm452, %v443
      %vm461 = vcmask 261120
      %v462 = vsel %vm461, %v390, 0.0
      %v463 = vsel %vm461, %v393, 0.0
      %v464 = vadd.f32 %v462, %v463
      %v465 = vsel %vm461, %v398, 0.0
      %v466 = vadd.f32 %v464, %v465
      %v467 = vsel %vm461, %v401, 0.0
      %v468 = vadd.f32 %v466, %v467
      %v469 = vsel %vm461, %v406, 0.0
      %v470 = vadd.f32 %v468, %v469
      %v471 = vsel %vm461, %v409, 0.0
      %v472 = vadd.f32 %v470, %v471
      %v473 = vsel %vm461, %v414, 0.0
      %v474 = vadd.f32 %v472, %v473
      %v475 = vsel %vm461, %v417, 0.0
      %v476 = vadd.f32 %v474, %v475
      %v477 = vrot.slane %v476, 4
      %v478 = vadd.f32 %v476, %v477
      %v479 = vrot.slane %v478, 2
      %v480 = vadd.f32 %v478, %v479
      %v481 = vrot.slane %v480, 1
      %v482 = vadd.f32 %v480, %v481
      %v483 = vmul.f32 %v390, %v390
      %v484 = vmul.f32 %v393, %v393
      %v485 = vmul.f32 %v398, %v398
      %v486 = vmul.f32 %v401, %v401
      %v487 = vmul.f32 %v406, %v406
      %v488 = vmul.f32 %v409, %v409
      %v489 = vmul.f32 %v414, %v414
      %v490 = vmul.f32 %v417, %v417
      %v491 = vsel %vm461, %v483, 0.0
      %v492 = vsel %vm461, %v484, 0.0
      %v493 = vadd.f32 %v491, %v492
      %v494 = vsel %vm461, %v485, 0.0
      %v495 = vadd.f32 %v493, %v494
      %v496 = vsel %vm461, %v486, 0.0
      %v497 = vadd.f32 %v495, %v496
      %v498 = vsel %vm461, %v487, 0.0
      %v499 = vadd.f32 %v497, %v498
      %v500 = vsel %vm461, %v488, 0.0
      %v501 = vadd.f32 %v499, %v500
      %v502 = vsel %vm461, %v489, 0.0
      %v503 = vadd.f32 %v501, %v502
      %v504 = vsel %vm461, %v490, 0.0
      %v505 = vadd.f32 %v503, %v504
      %v506 = vrot.slane %v505, 4
      %v507 = vadd.f32 %v505, %v506
      %v508 = vrot.slane %v507, 2
      %v509 = vadd.f32 %v507, %v508
      %v510 = vrot.slane %v509, 1
      %v511 = vadd.f32 %v509, %v510
      %512 = vst.msk [vmem:[%s220] sm:$0xff] %vm461, %v482
      %513 = vst.msk [vmem:[%s224] sm:$0xff] %vm461, %v511
      %s514 = smul.u32 8, %s16
      %p515 = scmp.lt.s32.totalorder %s514, 15
      %s516 = scalar_select %p515, %s514, 15
      %s517 = smul.addr %s516, 4
      %s518 = scalar_lea.vmem %s2, %s517
      %p519 = scmp.lt.s32.totalorder %s16, 1
      %s520 = scalar_select %p519, %s16, 1
      %s521 = smul.addr %s520, 8
      %s522 = scalar_lea.vmem %s3, %s521
      %p523 = scmp.lt.s32.totalorder %s16, 1
      %s524 = scalar_select %p523, %s16, 1
      %s525 = smul.addr %s524, 8
      %s526 = scalar_lea.vmem %s4, %s525
      // Predicated region
      $region29: #{generator_forward.36} parent=27 // pred_check
        %p527 = pneg %p81
      $region30: #{generator_forward.36} parent=27 // pred_check_branch
        %529 = sbr.rel (%p527) target = $region32
      $region31: #{generator_forward.36} parent=27 // pred_region
        %s530 = smul.u32 8, %s16
      $region32: #{generator_forward.36} parent=27 // pred_fallthru
        _
      // Predicated region
      $region33: #{generator_forward.36} parent=27 // pred_check
        %p531 = pneg %p107
      $region34: #{generator_forward.36} parent=27 // pred_check_branch
        %533 = sbr.rel (%p531) target = $region36
      $region35: #{generator_forward.36} parent=27 // pred_region
        _
      $region36: #{generator_forward.36} parent=27 // pred_fallthru
        _
      // Predicated region
      $region37: #{generator_forward.36} parent=27 // pred_check
        %p534 = pneg %p133
      $region38: #{generator_forward.36} parent=27 // pred_check_branch
        %536 = sbr.rel (%p534) target = $region40
      $region39: #{generator_forward.36} parent=27 // pred_region
        _
      $region40: #{generator_forward.36} parent=27 // pred_fallthru
        _
    $region28: #{generator_forward.36} parent=5 // pred_fallthru
      _
    %p537 = scmp.le.s32.totalorder 2, %s11
    // Predicated region
    $region41: #{generator_forward.36} parent=5 // pred_check
      %p538 = pneg %p537
    $region42: #{generator_forward.36} parent=5 // pred_check_branch
      %540 = sbr.rel (%p538) target = $region44
    $region43: #{generator_forward.36} parent=5 // pred_region
      %s541 = ssub.s32 %s11, 2
      // Predicated region
      $region45: #{generator_forward.36} parent=43 // pred_check
        %p542 = pneg %p87
      $region46: #{generator_forward.36} parent=43 // pred_check_branch
        %544 = sbr.rel (%p542) target = $region48
      $region47: #{generator_forward.36} parent=43 // pred_region
        %s545 = smul.u32 8, %s17
        %p546 = scmp.lt.s32.totalorder %s545, 15
        %s547 = scalar_select %p546, %s545, 15
        %s548 = smul.addr %s547, 4
        %s549 = scalar_lea.vmem %s2, %s548
      $region48: #{generator_forward.36} parent=43 // pred_fallthru
        _
      // Predicated region
      $region49: #{generator_forward.36} parent=43 // pred_check
        %p550 = pneg %p113
      $region50: #{generator_forward.36} parent=43 // pred_check_branch
        %552 = sbr.rel (%p550) target = $region52
      $region51: #{generator_forward.36} parent=43 // pred_region
        %p553 = scmp.lt.s32.totalorder %s17, 1
        %s554 = scalar_select %p553, %s17, 1
        %s555 = smul.addr %s554, 8
        %s556 = scalar_lea.vmem %s3, %s555
      $region52: #{generator_forward.36} parent=43 // pred_fallthru
        _
      // Predicated region
      $region53: #{generator_forward.36} parent=43 // pred_check
        %p557 = pneg %p139
      $region54: #{generator_forward.36} parent=43 // pred_check_branch
        %559 = sbr.rel (%p557) target = $region56
      $region55: #{generator_forward.36} parent=43 // pred_region
        %p560 = scmp.lt.s32.totalorder %s17, 1
        %s561 = scalar_select %p560, %s17, 1
        %s562 = smul.addr %s561, 8
        %s563 = scalar_lea.vmem %s4, %s562
      $region56: #{generator_forward.36} parent=43 // pred_fallthru
        _
    $region44: #{generator_forward.36} parent=5 // pred_fallthru
      _
  $region6: #{generator_forward.36} parent=0 // loop_footer
    %s15 = sadd.s32 1, %s11
  $region7: #{generator_forward.36} parent=0 // loop_footer_branch
    %10 = sbr.rel target = $region3
  $region8: #{generator_forward.36} parent=0 // loop_exit
    _

// kernel: generator_forward.38
$region0: #{generator_forward.38}
  #allocation0 [shape = 'u32[]', space=smem, size = 0x4, offset = 0x4, fixed_abs, tag = 'smem constant byte address 0x4 - core index']
  #allocation1 [shape = 'u32[144,128]{1,0:T(1,128)}', space=vmem, size = 0x12000, scoped, tag = 'internal scratch']
  %s0 = inlined_call_operand.vmem [shape: bf16[512,72], index: 0, kind: input, shape index: {}]
  %s1 = inlined_call_operand.vmem [shape: bf16[72,12], index: 1, kind: input, shape index: {}]
  %s2 = inlined_call_operand.vmem [shape: bf16[512,12], index: 2, kind: output, shape index: {0}]
  %s3 = inlined_call_operand.vmem [shape: f32[16,12], index: 3, kind: output, shape index: {1}]
  %s4 = inlined_call_operand.vmem [shape: f32[16,12], index: 4, kind: output, shape index: {2}]
  %5 = xla_tuple %s2, %s3, %s4
  %s6 = sld [smem:[#allocation0]]
  $region57: #{generator_forward.38} parent=0
    _
  %s8 = ssub.s32 1, %s6
  %s9 = scalar_select 0, %s8, %s6
  loop: start=0, step=1, limit=4
  $region2: #{generator_forward.38} parent=0 // loop_pre_header
    _
  $region3: #{generator_forward.38} parent=0 // loop_header
    %s11 = sphi 0, %s15
    %p12 = scmp.ge.s32.totalorder %s11, 4
    %s21 = sphi 0, %s23
    %s24 = sphi 0, %s21
    %s25 = sphi 0, %s24
    %s41 = sphi 0, %s25
    %s45 = sphi 0, %s45
    %s47 = sphi 0, %s45
    %s48 = sphi 0, %s47
    %s62 = sphi 0, %s48
    %s68 = sphi 0, %s70
    %s71 = sphi 0, %s68
    %s72 = sphi 0, %s71
    %s88 = sphi 0, %s72
    %s94 = sphi 0, %s96
    %s97 = sphi 0, %s94
    %s98 = sphi 0, %s97
    %s114 = sphi 0, %s98
    %s120 = sphi 0, %s122
    %s123 = sphi 0, %s120
    %s124 = sphi 0, %s123
    %s140 = sphi 0, %s124
  $region4: #{generator_forward.38} parent=0 // loop_header_branch
    %14 = sbr.rel (%p12) target = $region8
  $region5: #{generator_forward.38} parent=0 // loop_body
    %s16 = ssub.s32 %s11, 1
    %s17 = ssub.s32 %s11, 2
    %s18 = sadd.s32 %s11, 1
    %s19 = ssub.s32 %s11, %s18
    %p20 = scmp.eq.s32.totalorder %s19, 0
    %s22 = sadd.s32 %s21, 1
    %s23 = scalar_select %p20, %s21, %s22
    %p26 = pneg %p20
    %p27 = scmp.eq.s32.totalorder %s11, 1
    %p28 = por %p26, %p27
    %p29 = scmp.ne.s32.totalorder %s21, %s24
    %p30 = scmp.eq.s32.totalorder %s11, 0
    %p31 = por %p29, %p30
    %p32 = scmp.ne.s32.totalorder %s21, %s24
    %p33 = scmp.eq.s32.totalorder %s16, 1
    %p34 = por %p32, %p33
    %p35 = scmp.ne.s32.totalorder %s24, %s25
    %p36 = scmp.eq.s32.totalorder %s16, 0
    %p37 = por %p35, %p36
    %p38 = scmp.ne.s32.totalorder %s24, %s25
    %p39 = scmp.eq.s32.totalorder %s17, 1
    %p40 = por %p38, %p39
    %p42 = scmp.ne.s32.totalorder %s25, %s41
    %p43 = scmp.eq.s32.totalorder %s17, 0
    %p44 = por %p42, %p43
    %s46 = sadd.s32 %s45, 1
    %p49 = scmp.eq.s32.totalorder %s11, 1
    %p50 = scmp.ne.s32.totalorder %s45, %s47
    %p51 = scmp.eq.s32.totalorder %s11, 0
    %p52 = por %p50, %p51
    %p53 = scmp.ne.s32.totalorder %s45, %s47
    %p54 = scmp.eq.s32.totalorder %s16, 1
    %p55 = por %p53, %p54
    %p56 = scmp.ne.s32.totalorder %s47, %s48
    %p57 = scmp.eq.s32.totalorder %s16, 0
    %p58 = por %p56, %p57
    %p59 = scmp.ne.s32.totalorder %s47, %s48
    %p60 = scmp.eq.s32.totalorder %s17, 1
    %p61 = por %p59, %p60
    %p63 = scmp.ne.s32.totalorder %s48, %s62
    %p64 = scmp.eq.s32.totalorder %s17, 0
    %p65 = por %p63, %p64
    %s66 = ssub.s32 %s11, %s18
    %p67 = scmp.eq.s32.totalorder %s66, 0
    %s69 = sadd.s32 %s68, 1
    %s70 = scalar_select %p67, %s68, %s69
    %p73 = pneg %p67
    %p74 = scmp.eq.s32.totalorder %s11, 1
    %p75 = por %p73, %p74
    %p76 = scmp.ne.s32.totalorder %s68, %s71
    %p77 = scmp.eq.s32.totalorder %s11, 0
    %p78 = por %p76, %p77
    %p79 = scmp.ne.s32.totalorder %s68, %s71
    %p80 = scmp.eq.s32.totalorder %s16, 1
    %p81 = por %p79, %p80
    %p82 = scmp.ne.s32.totalorder %s71, %s72
    %p83 = scmp.eq.s32.totalorder %s16, 0
    %p84 = por %p82, %p83
    %p85 = scmp.ne.s32.totalorder %s71, %s72
    %p86 = scmp.eq.s32.totalorder %s17, 1
    %p87 = por %p85, %p86
    %p89 = scmp.ne.s32.totalorder %s72, %s88
    %p90 = scmp.eq.s32.totalorder %s17, 0
    %p91 = por %p89, %p90
    %s92 = ssub.s32 %s11, %s18
    %p93 = scmp.eq.s32.totalorder %s92, 0
    %s95 = sadd.s32 %s94, 1
    %s96 = scalar_select %p93, %s94, %s95
    %p99 = pneg %p93
    %p100 = scmp.eq.s32.totalorder %s11, 1
    %p101 = por %p99, %p100
    %p102 = scmp.ne.s32.totalorder %s94, %s97
    %p103 = scmp.eq.s32.totalorder %s11, 0
    %p104 = por %p102, %p103
    %p105 = scmp.ne.s32.totalorder %s94, %s97
    %p106 = scmp.eq.s32.totalorder %s16, 1
    %p107 = por %p105, %p106
    %p108 = scmp.ne.s32.totalorder %s97, %s98
    %p109 = scmp.eq.s32.totalorder %s16, 0
    %p110 = por %p108, %p109
    %p111 = scmp.ne.s32.totalorder %s97, %s98
    %p112 = scmp.eq.s32.totalorder %s17, 1
    %p113 = por %p111, %p112
    %p115 = scmp.ne.s32.totalorder %s98, %s114
    %p116 = scmp.eq.s32.totalorder %s17, 0
    %p117 = por %p115, %p116
    %s118 = ssub.s32 %s11, %s18
    %p119 = scmp.eq.s32.totalorder %s118, 0
    %s121 = sadd.s32 %s120, 1
    %s122 = scalar_select %p119, %s120, %s121
    %p125 = pneg %p119
    %p126 = scmp.eq.s32.totalorder %s11, 1
    %p127 = por %p125, %p126
    %p128 = scmp.ne.s32.totalorder %s120, %s123
    %p129 = scmp.eq.s32.totalorder %s11, 0
    %p130 = por %p128, %p129
    %p131 = scmp.ne.s32.totalorder %s120, %s123
    %p132 = scmp.eq.s32.totalorder %s16, 1
    %p133 = por %p131, %p132
    %p134 = scmp.ne.s32.totalorder %s123, %s124
    %p135 = scmp.eq.s32.totalorder %s16, 0
    %p136 = por %p134, %p135
    %p137 = scmp.ne.s32.totalorder %s123, %s124
    %p138 = scmp.eq.s32.totalorder %s17, 1
    %p139 = por %p137, %p138
    %p141 = scmp.ne.s32.totalorder %s124, %s140
    %p142 = scmp.eq.s32.totalorder %s17, 0
    %p143 = por %p141, %p142
    %p144 = scmp.le.s32.totalorder 1, %s11
    %p145 = scmp.lt.s32.totalorder %s11, 3
    %p146 = pnand %p144, %p145
    %p147 = pneg %p146
    // Predicated region
    $region9: #{generator_forward.38} parent=5 // pred_check
      _
    $region10: #{generator_forward.38} parent=5 // pred_check_branch
      %149 = sbr.rel (%p146) target = $region12
    $region11: #{generator_forward.38} parent=5 // pred_region
      %s150 = ssub.s32 %s11, 1
      // Predicated region
      $region13: #{generator_forward.38} parent=11 // pred_check
        %p151 = pneg %p58
      $region14: #{generator_forward.38} parent=11 // pred_check_branch
        %153 = sbr.rel (%p151) target = $region16
      $region15: #{generator_forward.38} parent=11 // pred_region
        _
      $region16: #{generator_forward.38} parent=11 // pred_fallthru
        _
    $region12: #{generator_forward.38} parent=5 // pred_fallthru
      _
    %p154 = scmp.lt.s32.totalorder %s11, 2
    // Predicated region
    $region17: #{generator_forward.38} parent=5 // pred_check
      %p155 = pneg %p154
    $region18: #{generator_forward.38} parent=5 // pred_check_branch
      %157 = sbr.rel (%p155) target = $region20
    $region19: #{generator_forward.38} parent=5 // pred_region
      // Predicated region
      $region21: #{generator_forward.38} parent=19 // pred_check
        %p158 = pneg %p31
      $region22: #{generator_forward.38} parent=19 // pred_check_branch
        %160 = sbr.rel (%p158) target = $region24
      $region23: #{generator_forward.38} parent=19 // pred_region
        %s161 = smul.u32 32, %s11
        %p162 = scmp.lt.s32.totalorder %s161, 63
        %s163 = scalar_select %p162, %s161, 63
        %s164 = smul.addr %s163, 4
        %s165 = scalar_lea.vmem %s0, %s164
        %s166 = smul.u32 32, %s11
      $region24: #{generator_forward.38} parent=19 // pred_fallthru
        _
    $region20: #{generator_forward.38} parent=5 // pred_fallthru
      _
    %p167 = scmp.le.s32.totalorder 1, %s11
    %p168 = scmp.lt.s32.totalorder %s11, 3
    %p169 = pnand %p167, %p168
    %p170 = pneg %p169
    // Predicated region
    $region25: #{generator_forward.38} parent=5 // pred_check
      _
    $region26: #{generator_forward.38} parent=5 // pred_check_branch
      %172 = sbr.rel (%p169) target = $region28
    $region27: #{generator_forward.38} parent=5 // pred_region
      %s173 = ssub.s32 %s11, 1
      %s174 = smul.u32 32, %s16
      %p175 = scmp.lt.s32.totalorder %s174, 63
      %s176 = scalar_select %p175, %s174, 63
      %s177 = smul.addr %s176, 4
      %s178 = scalar_lea.vmem %s0, %s177
      %p179 = pneg %p37
      %p180 = pneg %p34
      %p181 = pneg %p58
      %p182 = pneg %p55
      %p183 = pneg %p84
      %p184 = pneg %p81
      %s185 = smul.u32 32, %s16
      %p186 = scmp.lt.s32.totalorder %s185, 63
      %s187 = scalar_select %p186, %s185, 63
      %s188 = smul.addr %s187, 4
      %s189 = scalar_lea.vmem %s2, %s188
      %p190 = pneg %p110
      %p191 = pneg %p107
      %p192 = scmp.lt.s32.totalorder %s16, 1
      %s193 = scalar_select %p192, %s16, 1
      %s194 = smul.addr %s193, 8
      %s195 = scalar_lea.vmem %s3, %s194
      %p196 = pneg %p136
      %p197 = pneg %p133
      %p198 = scmp.lt.s32.totalorder %s16, 1
      %s199 = scalar_select %p198, %s16, 1
      %s200 = smul.addr %s199, 8
      %s201 = scalar_lea.vmem %s4, %s200
      %s202 = smul.u32 32, %s16
      %p203 = scmp.lt.s32.totalorder %s202, 63
      %s204 = scalar_select %p203, %s202, 63
      %s205 = smul.addr %s204, 4
      %s206 = scalar_lea.vmem %s0, %s205
      %s207 = smul.u32 32, %s16
      %s208 = smul.u32 32, %s16
      %p209 = scmp.lt.s32.totalorder %s208, 63
      %s210 = scalar_select %p209, %s208, 63
      %s211 = smul.addr %s210, 4
      %s212 = scalar_lea.vmem %s2, %s211
      %s213 = smul.u32 32, %s16
      %p214 = scmp.lt.s32.totalorder %s16, 1
      %s215 = scalar_select %p214, %s16, 1
      %s216 = smul.addr %s215, 8
      %s217 = scalar_lea.vmem %s3, %s216
      %p218 = scmp.lt.s32.totalorder %s16, 1
      %s219 = scalar_select %p218, %s16, 1
      %s220 = smul.addr %s219, 8
      %s221 = scalar_lea.vmem %s4, %s220
      %v223 = vld [vmem:[%s206] sm:$0xf]
      %v224 = vld [vmem:[%s206 + $0x4] sm:$0xf]
      %v225 = vld [vmem:[%s206 + $0x8] sm:$0xf]
      %v226 = vld [vmem:[%s206 + $0xc] sm:$0xf]
      %v227 = vld [vmem:[%s206 + $0x10] sm:$0xf]
      %v228 = vld [vmem:[%s206 + $0x14] sm:$0xf]
      %v229 = vld [vmem:[%s206 + $0x18] sm:$0xf]
      %v230 = vld [vmem:[%s206 + $0x1c] sm:$0xf]
      %v231 = vld [vmem:[%s206 + $0x20] sm:$0xf]
      %v232 = vld [vmem:[%s206 + $0x24] sm:$0xf]
      %v233 = vld [vmem:[%s206 + $0x28] sm:$0xf]
      %v234 = vld [vmem:[%s206 + $0x2c] sm:$0xf]
      %v235 = vld [vmem:[%s206 + $0x30] sm:$0xf]
      %v236 = vld [vmem:[%s206 + $0x34] sm:$0xf]
      %v237 = vld [vmem:[%s206 + $0x38] sm:$0xf]
      %v238 = vld [vmem:[%s206 + $0x3c] sm:$0xf]
      %v239 = vld [vmem:[%s206 + $0x40] sm:$0xf]
      %v240 = vld [vmem:[%s206 + $0x44] sm:$0xf]
      %v241 = vld [vmem:[%s206 + $0x48] sm:$0xf]
      %v242 = vld [vmem:[%s206 + $0x4c] sm:$0xf]
      %v243 = vld [vmem:[%s206 + $0x50] sm:$0xf]
      %v244 = vld [vmem:[%s206 + $0x54] sm:$0xf]
      %v245 = vld [vmem:[%s206 + $0x58] sm:$0xf]
      %v246 = vld [vmem:[%s206 + $0x5c] sm:$0xf]
      %v247 = vld [vmem:[%s206 + $0x60] sm:$0xf]
      %v248 = vld [vmem:[%s206 + $0x64] sm:$0xf]
      %v249 = vld [vmem:[%s206 + $0x68] sm:$0xf]
      %v250 = vld [vmem:[%s206 + $0x6c] sm:$0xf]
      %v251 = vld [vmem:[%s206 + $0x70] sm:$0xf]
      %v252 = vld [vmem:[%s206 + $0x74] sm:$0xf]
      %v253 = vld [vmem:[%s206 + $0x78] sm:$0xf]
      %v254 = vld [vmem:[%s206 + $0x7c] sm:$0xf]
      %v255 = vld [vmem:[%s1] sm:$0xf]
      %v256 = vld [vmem:[%s1 + $0x4] sm:$0xf]
      %v257 = vld [vmem:[%s1 + $0x8] sm:$0xf]
      %v258 = vld [vmem:[%s1 + $0xc] sm:$0xf]
      %v259 = vld [vmem:[%s1 + $0x10] sm:$0xf]
      %v260 = vld [vmem:[%s1 + $0x14] sm:$0xf]
      %v261 = vld [vmem:[%s1 + $0x18] sm:$0xf]
      %v262 = vld [vmem:[%s1 + $0x1c] sm:$0xf]
      %v263 = vld [vmem:[%s1 + $0x20] sm:$0xf]
      %v296 = vunpack.c.l.b16 %v223
      %v297 = vunpack.c.l.b16 %v224
      %v298 = vunpack.c.l.b16 %v225
      %v299 = vunpack.c.l.b16 %v226
      %v300 = vunpack.c.l.b16 %v227
      %v301 = vunpack.c.l.b16 %v228
      %v302 = vunpack.c.l.b16 %v229
      %v303 = vunpack.c.l.b16 %v230
      %v304 = vunpack.c.l.b16 %v231
      %v305 = vunpack.c.l.b16 %v232
      %v306 = vunpack.c.l.b16 %v233
      %v307 = vunpack.c.l.b16 %v234
      %v308 = vunpack.c.l.b16 %v235
      %v309 = vunpack.c.l.b16 %v236
      %v310 = vunpack.c.l.b16 %v237
      %v311 = vunpack.c.l.b16 %v238
      %v312 = vunpack.c.l.b16 %v239
      %v313 = vunpack.c.l.b16 %v240
      %v314 = vunpack.c.l.b16 %v241
      %v315 = vunpack.c.l.b16 %v242
      %v316 = vunpack.c.l.b16 %v243
      %v317 = vunpack.c.l.b16 %v244
      %v318 = vunpack.c.l.b16 %v245
      %v319 = vunpack.c.l.b16 %v246
      %v320 = vunpack.c.l.b16 %v247
      %v321 = vunpack.c.l.b16 %v248
      %v322 = vunpack.c.l.b16 %v249
      %v323 = vunpack.c.l.b16 %v250
      %v324 = vunpack.c.l.b16 %v251
      %v325 = vunpack.c.l.b16 %v252
      %v326 = vunpack.c.l.b16 %v253
      %v327 = vunpack.c.l.b16 %v254
      %v328 = vpack.c.b16 %v297, %v296
      %v329 = vpack.c.b16 %v299, %v298
      %v330 = vpack.c.b16 %v301, %v300
      %v331 = vpack.c.b16 %v303, %v302
      %v332 = vpack.c.b16 %v305, %v304
      %v333 = vpack.c.b16 %v307, %v306
      %v334 = vpack.c.b16 %v309, %v308
      %v335 = vpack.c.b16 %v311, %v310
      %v336 = vpack.c.b16 %v313, %v312
      %v337 = vpack.c.b16 %v315, %v314
      %v338 = vpack.c.b16 %v317, %v316
      %v339 = vpack.c.b16 %v319, %v318
      %v340 = vpack.c.b16 %v321, %v320
      %v341 = vpack.c.b16 %v323, %v322
      %v342 = vpack.c.b16 %v325, %v324
      %v343 = vpack.c.b16 %v327, %v326
      %v353 = vunpack.c.l.b16 %v255
      %v354 = vunpack.c.l.b16 %v256
      %v355 = vunpack.c.l.b16 %v257
      %v356 = vunpack.c.l.b16 %v258
      %v357 = vunpack.c.l.b16 %v259
      %v358 = vunpack.c.l.b16 %v260
      %v359 = vunpack.c.l.b16 %v261
      %v360 = vunpack.c.l.b16 %v262
      %v361 = vunpack.c.l.b16 %v263
      %v362 = vpack.c.b16 %v354, %v353
      %v363 = vpack.c.b16 %v356, %v355
      %v364 = vpack.c.b16 %v358, %v357
      %v365 = vpack.c.b16 %v360, %v359
      %v366 = vpack.c.b16 %v361, %v361
      %vm371 = vcmask 588800
      %v373 = vsel %vm371, %v328, 0
      %v376 = vsel %vm371, %v329, 0
      %v379 = vsel %vm371, %v330, 0
      %v382 = vsel %vm371, %v331, 0
      %v385 = vsel %vm371, %v332, 0
      %v388 = vsel %vm371, %v333, 0
      %v391 = vsel %vm371, %v334, 0
      %v394 = vsel %vm371, %v335, 0
      %v397 = vsel %vm371, %v336, 0
      %v400 = vsel %vm371, %v337, 0
      %v403 = vsel %vm371, %v338, 0
      %v406 = vsel %vm371, %v339, 0
      %v409 = vsel %vm371, %v340, 0
      %v412 = vsel %vm371, %v341, 0
      %v415 = vsel %vm371, %v342, 0
      %v418 = vsel %vm371, %v343, 0
      %vm420 = vcmask 1043456
      %v422 = vsel %vm420, %v366, 0
      %424 = vmatprep.subr.bf16.mxu0 0
      %425 = vmatpush1.bf16.msra.mxu0 0
      %426 = vmatprep.subr.bf16.mxu0 0
      %427 = vmatpush1.bf16.msra.mxu0 0
      %428 = vmatprep.subr.bf16.mxu0 0
      %429 = vmatpush1.bf16.msra.mxu0 0
      %430 = vmatprep.subr.bf16.mxu0 0
      %431 = vmatpush1.bf16.msra.mxu0 %v422
      %432 = vmatprep.subr.bf16.mxu0 0
      %433 = vmatpush1.bf16.msra.mxu0 %v365
      %434 = vmatprep.subr.bf16.mxu0 0
      %435 = vmatpush1.bf16.msra.mxu0 %v364
      %436 = vmatprep.subr.bf16.mxu0 0
      %437 = vmatpush1.bf16.msra.mxu0 %v363
      %438 = vmatprep.subr.bf16.mxu0 0
      %439 = vmatpush1.bf16.msra.mxu0 %v362
      %440 = vmatprep.subr.bf16.mxu0 0
      %441 = vmatpush2.bf16.msra.mxu0 0
      %442 = vmatprep.subr.bf16.mxu0 0
      %443 = vmatpush2.bf16.msra.mxu0 0
      %444 = vmatprep.subr.bf16.mxu0 0
      %445 = vmatpush2.bf16.msra.mxu0 0
      %446 = vmatprep.subr.bf16.mxu0 0
      %447 = vmatpush2.bf16.msra.mxu0 0
      %448 = vmatprep.subr.bf16.mxu0 0
      %449 = vmatpush2.bf16.msra.mxu0 0
      %450 = vmatprep.subr.bf16.mxu0 0
      %451 = vmatpush2.bf16.msra.mxu0 0
      %452 = vmatprep.subr.bf16.mxu0 0
      %453 = vmatpush2.bf16.msra.mxu0 0
      %454 = vmatprep.subr.bf16.mxu0 0
      %455 = vmatpush2.bf16.msra.mxu0 0
      %456 = vmatprep.mubr.bf16.mxu0 0
      %457 = vmatmul.mubr.bf16.gmra.mxu0 %v373
      %v458 = vpop.f32.mrf.mxu0
      %v459 = vadd.f32 0.0, %v458
      %v460 = vpop.f32.mrf.mxu0
      %v461 = vpop.f32.mrf.mxu0
      %v462 = vadd.f32 0.0, %v461
      %v463 = vpop.f32.mrf.mxu0
      %464 = vmatprep.mubr.bf16.mxu0 0
      %465 = vmatmul.mubr.bf16.gmra.mxu0 %v376
      %v466 = vpop.f32.mrf.mxu0
      %v467 = vadd.f32 0.0, %v466
      %v468 = vpop.f32.mrf.mxu0
      %v469 = vpop.f32.mrf.mxu0
      %v470 = vadd.f32 0.0, %v469
      %v471 = vpop.f32.mrf.mxu0
      %472 = vmatprep.mubr.bf16.mxu0 0
      %473 = vmatmul.mubr.bf16.gmra.mxu0 %v379
      %v474 = vpop.f32.mrf.mxu0
      %v475 = vadd.f32 0.0, %v474
      %v476 = vpop.f32.mrf.mxu0
      %v477 = vpop.f32.mrf.mxu0
      %v478 = vadd.f32 0.0, %v477
      %v479 = vpop.f32.mrf.mxu0
      %480 = vmatprep.mubr.bf16.mxu0 0
      %481 = vmatmul.mubr.bf16.gmra.mxu0 %v382
      %v482 = vpop.f32.mrf.mxu0
      %v483 = vadd.f32 0.0, %v482
      %v484 = vpop.f32.mrf.mxu0
      %v485 = vpop.f32.mrf.mxu0
      %v486 = vadd.f32 0.0, %v485
      %v487 = vpop.f32.mrf.mxu0
      %488 = vmatprep.mubr.bf16.mxu0 0
      %489 = vmatmul.mubr.bf16.gmra.mxu0 %v385
      %v490 = vpop.f32.mrf.mxu0
      %v491 = vadd.f32 0.0, %v490
      %v492 = vpop.f32.mrf.mxu0
      %v493 = vpop.f32.mrf.mxu0
      %v494 = vadd.f32 0.0, %v493
      %v495 = vpop.f32.mrf.mxu0
      %496 = vmatprep.mubr.bf16.mxu0 0
      %497 = vmatmul.mubr.bf16.gmra.mxu0 %v388
      %v498 = vpop.f32.mrf.mxu0
      %v499 = vadd.f32 0.0, %v498
      %v500 = vpop.f32.mrf.mxu0
      %v501 = vpop.f32.mrf.mxu0
      %v502 = vadd.f32 0.0, %v501
      %v503 = vpop.f32.mrf.mxu0
      %504 = vmatprep.mubr.bf16.mxu0 0
      %505 = vmatmul.mubr.bf16.gmra.mxu0 %v391
      %v506 = vpop.f32.mrf.mxu0
      %v507 = vadd.f32 0.0, %v506
      %v508 = vpop.f32.mrf.mxu0
      %v509 = vpop.f32.mrf.mxu0
      %v510 = vadd.f32 0.0, %v509
      %v511 = vpop.f32.mrf.mxu0
      %512 = vmatprep.mubr.bf16.mxu0 0
      %513 = vmatmul.mubr.bf16.gmra.mxu0 %v394
      %v514 = vpop.f32.mrf.mxu0
      %v515 = vadd.f32 0.0, %v514
      %v516 = vpop.f32.mrf.mxu0
      %v517 = vpop.f32.mrf.mxu0
      %v518 = vadd.f32 0.0, %v517
      %v519 = vpop.f32.mrf.mxu0
      %520 = vmatprep.mubr.bf16.mxu0 0
      %521 = vmatmul.mubr.bf16.gmra.mxu0 %v397
      %v522 = vpop.f32.mrf.mxu0
      %v523 = vadd.f32 0.0, %v522
      %v524 = vpop.f32.mrf.mxu0
      %v525 = vpop.f32.mrf.mxu0
      %v526 = vadd.f32 0.0, %v525
      %v527 = vpop.f32.mrf.mxu0
      %528 = vmatprep.mubr.bf16.mxu0 0
      %529 = vmatmul.mubr.bf16.gmra.mxu0 %v400
      %v530 = vpop.f32.mrf.mxu0
      %v531 = vadd.f32 0.0, %v530
      %v532 = vpop.f32.mrf.mxu0
      %v533 = vpop.f32.mrf.mxu0
      %v534 = vadd.f32 0.0, %v533
      %v535 = vpop.f32.mrf.mxu0
      %536 = vmatprep.mubr.bf16.mxu0 0
      %537 = vmatmul.mubr.bf16.gmra.mxu0 %v403
      %v538 = vpop.f32.mrf.mxu0
      %v539 = vadd.f32 0.0, %v538
      %v540 = vpop.f32.mrf.mxu0
      %v541 = vpop.f32.mrf.mxu0
      %v542 = vadd.f32 0.0, %v541
      %v543 = vpop.f32.mrf.mxu0
      %544 = vmatprep.mubr.bf16.mxu0 0
      %545 = vmatmul.mubr.bf16.gmra.mxu0 %v406
      %v546 = vpop.f32.mrf.mxu0
      %v547 = vadd.f32 0.0, %v546
      %v548 = vpop.f32.mrf.mxu0
      %v549 = vpop.f32.mrf.mxu0
      %v550 = vadd.f32 0.0, %v549
      %v551 = vpop.f32.mrf.mxu0
      %552 = vmatprep.mubr.bf16.mxu0 0
      %553 = vmatmul.mubr.bf16.gmra.mxu0 %v409
      %v554 = vpop.f32.mrf.mxu0
      %v555 = vadd.f32 0.0, %v554
      %v556 = vpop.f32.mrf.mxu0
      %v557 = vpop.f32.mrf.mxu0
      %v558 = vadd.f32 0.0, %v557
      %v559 = vpop.f32.mrf.mxu0
      %560 = vmatprep.mubr.bf16.mxu0 0
      %561 = vmatmul.mubr.bf16.gmra.mxu0 %v412
      %v562 = vpop.f32.mrf.mxu0
      %v563 = vadd.f32 0.0, %v562
      %v564 = vpop.f32.mrf.mxu0
      %v565 = vpop.f32.mrf.mxu0
      %v566 = vadd.f32 0.0, %v565
      %v567 = vpop.f32.mrf.mxu0
      %568 = vmatprep.mubr.bf16.mxu0 0
      %569 = vmatmul.mubr.bf16.gmra.mxu0 %v415
      %v570 = vpop.f32.mrf.mxu0
      %v571 = vadd.f32 0.0, %v570
      %v572 = vpop.f32.mrf.mxu0
      %v573 = vpop.f32.mrf.mxu0
      %v574 = vadd.f32 0.0, %v573
      %v575 = vpop.f32.mrf.mxu0
      %576 = vmatprep.mubr.bf16.mxu0 0
      %577 = vmatmul.mubr.bf16.gmra.mxu0 %v418
      %v578 = vpop.f32.mrf.mxu0
      %v579 = vadd.f32 0.0, %v578
      %v580 = vpop.f32.mrf.mxu0
      %v581 = vpop.f32.mrf.mxu0
      %v582 = vadd.f32 0.0, %v581
      %v583 = vpop.f32.mrf.mxu0
      %584 = vdwg.mxu0
      %v585 = vpack.c.bf16 %v462, %v459
      %v586 = vpack.c.bf16 %v470, %v467
      %v587 = vpack.c.bf16 %v478, %v475
      %v588 = vpack.c.bf16 %v486, %v483
      %v589 = vpack.c.bf16 %v494, %v491
      %v590 = vpack.c.bf16 %v502, %v499
      %v591 = vpack.c.bf16 %v510, %v507
      %v592 = vpack.c.bf16 %v518, %v515
      %v593 = vpack.c.bf16 %v526, %v523
      %v594 = vpack.c.bf16 %v534, %v531
      %v595 = vpack.c.bf16 %v542, %v539
      %v596 = vpack.c.bf16 %v550, %v547
      %v597 = vpack.c.bf16 %v558, %v555
      %v598 = vpack.c.bf16 %v566, %v563
      %v599 = vpack.c.bf16 %v574, %v571
      %v600 = vpack.c.bf16 %v582, %v579
      %v617 = vunpack.c.l.b16 %v585
      %v618 = vunpack.c.h.b16 %v585
      %v619 = vunpack.c.l.b16 %v586
      %v620 = vunpack.c.h.b16 %v586
      %v621 = vunpack.c.l.b16 %v587
      %v622 = vunpack.c.h.b16 %v587
      %v623 = vunpack.c.l.b16 %v588
      %v624 = vunpack.c.h.b16 %v588
      %v625 = vunpack.c.l.b16 %v589
      %v626 = vunpack.c.h.b16 %v589
      %v627 = vunpack.c.l.b16 %v590
      %v628 = vunpack.c.h.b16 %v590
      %v629 = vunpack.c.l.b16 %v591
      %v630 = vunpack.c.h.b16 %v591
      %v631 = vunpack.c.l.b16 %v592
      %v632 = vunpack.c.h.b16 %v592
      %v633 = vunpack.c.l.b16 %v593
      %v634 = vunpack.c.h.b16 %v593
      %v635 = vunpack.c.l.b16 %v594
      %v636 = vunpack.c.h.b16 %v594
      %v637 = vunpack.c.l.b16 %v595
      %v638 = vunpack.c.h.b16 %v595
      %v639 = vunpack.c.l.b16 %v596
      %v640 = vunpack.c.h.b16 %v596
      %v641 = vunpack.c.l.b16 %v597
      %v642 = vunpack.c.h.b16 %v597
      %v643 = vunpack.c.l.b16 %v598
      %v644 = vunpack.c.h.b16 %v598
      %v645 = vunpack.c.l.b16 %v599
      %v646 = vunpack.c.h.b16 %v599
      %v647 = vunpack.c.l.b16 %v600
      %v648 = vunpack.c.h.b16 %v600
      %v649 = vpack.c.b16 %v617, %v617
      %v650 = vpack.c.b16 %v618, %v618
      %v651 = vpack.c.b16 %v619, %v619
      %v652 = vpack.c.b16 %v620, %v620
      %v653 = vpack.c.b16 %v621, %v621
      %v654 = vpack.c.b16 %v622, %v622
      %v655 = vpack.c.b16 %v623, %v623
      %v656 = vpack.c.b16 %v624, %v624
      %v657 = vpack.c.b16 %v625, %v625
      %v658 = vpack.c.b16 %v626, %v626
      %v659 = vpack.c.b16 %v627, %v627
      %v660 = vpack.c.b16 %v628, %v628
      %v661 = vpack.c.b16 %v629, %v629
      %v662 = vpack.c.b16 %v630, %v630
      %v663 = vpack.c.b16 %v631, %v631
      %v664 = vpack.c.b16 %v632, %v632
      %v665 = vpack.c.b16 %v633, %v633
      %v666 = vpack.c.b16 %v634, %v634
      %v667 = vpack.c.b16 %v635, %v635
      %v668 = vpack.c.b16 %v636, %v636
      %v669 = vpack.c.b16 %v637, %v637
      %v670 = vpack.c.b16 %v638, %v638
      %v671 = vpack.c.b16 %v639, %v639
      %v672 = vpack.c.b16 %v640, %v640
      %v673 = vpack.c.b16 %v641, %v641
      %v674 = vpack.c.b16 %v642, %v642
      %v675 = vpack.c.b16 %v643, %v643
      %v676 = vpack.c.b16 %v644, %v644
      %v677 = vpack.c.b16 %v645, %v645
      %v678 = vpack.c.b16 %v646, %v646
      %v679 = vpack.c.b16 %v647, %v647
      %v680 = vpack.c.b16 %v648, %v648
      %vm713 = vcmask 93184
      %714 = vst.msk [vmem:[%s212] sm:$0xf] %vm713, %v649
      %715 = vst.msk [vmem:[%s212 + $0x4] sm:$0xf] %vm713, %v650
      %716 = vst.msk [vmem:[%s212 + $0x8] sm:$0xf] %vm713, %v651
      %717 = vst.msk [vmem:[%s212 + $0xc] sm:$0xf] %vm713, %v652
      %718 = vst.msk [vmem:[%s212 + $0x10] sm:$0xf] %vm713, %v653
      %719 = vst.msk [vmem:[%s212 + $0x14] sm:$0xf] %vm713, %v654
      %720 = vst.msk [vmem:[%s212 + $0x18] sm:$0xf] %vm713, %v655
      %721 = vst.msk [vmem:[%s212 + $0x1c] sm:$0xf] %vm713, %v656
      %722 = vst.msk [vmem:[%s212 + $0x20] sm:$0xf] %vm713, %v657
      %723 = vst.msk [vmem:[%s212 + $0x24] sm:$0xf] %vm713, %v658
      %724 = vst.msk [vmem:[%s212 + $0x28] sm:$0xf] %vm713, %v659
      %725 = vst.msk [vmem:[%s212 + $0x2c] sm:$0xf] %vm713, %v660
      %726 = vst.msk [vmem:[%s212 + $0x30] sm:$0xf] %vm713, %v661
      %727 = vst.msk [vmem:[%s212 + $0x34] sm:$0xf] %vm713, %v662
      %728 = vst.msk [vmem:[%s212 + $0x38] sm:$0xf] %vm713, %v663
      %729 = vst.msk [vmem:[%s212 + $0x3c] sm:$0xf] %vm713, %v664
      %730 = vst.msk [vmem:[%s212 + $0x40] sm:$0xf] %vm713, %v665
      %731 = vst.msk [vmem:[%s212 + $0x44] sm:$0xf] %vm713, %v666
      %732 = vst.msk [vmem:[%s212 + $0x48] sm:$0xf] %vm713, %v667
      %733 = vst.msk [vmem:[%s212 + $0x4c] sm:$0xf] %vm713, %v668
      %734 = vst.msk [vmem:[%s212 + $0x50] sm:$0xf] %vm713, %v669
      %735 = vst.msk [vmem:[%s212 + $0x54] sm:$0xf] %vm713, %v670
      %736 = vst.msk [vmem:[%s212 + $0x58] sm:$0xf] %vm713, %v671
      %737 = vst.msk [vmem:[%s212 + $0x5c] sm:$0xf] %vm713, %v672
      %738 = vst.msk [vmem:[%s212 + $0x60] sm:$0xf] %vm713, %v673
      %739 = vst.msk [vmem:[%s212 + $0x64] sm:$0xf] %vm713, %v674
      %740 = vst.msk [vmem:[%s212 + $0x68] sm:$0xf] %vm713, %v675
      %741 = vst.msk [vmem:[%s212 + $0x6c] sm:$0xf] %vm713, %v676
      %742 = vst.msk [vmem:[%s212 + $0x70] sm:$0xf] %vm713, %v677
      %743 = vst.msk [vmem:[%s212 + $0x74] sm:$0xf] %vm713, %v678
      %744 = vst.msk [vmem:[%s212 + $0x78] sm:$0xf] %vm713, %v679
      %745 = vst.msk [vmem:[%s212 + $0x7c] sm:$0xf] %vm713, %v680
      %vm746 = vcmask 97280
      %v747 = vsel %vm746, %v459, 0.0
      %v748 = vsel %vm746, %v462, 0.0
      %v749 = vadd.f32 %v747, %v748
      %v750 = vsel %vm746, %v467, 0.0
      %v751 = vadd.f32 %v749, %v750
      %v752 = vsel %vm746, %v470, 0.0
      %v753 = vadd.f32 %v751, %v752
      %v754 = vsel %vm746, %v475, 0.0
      %v755 = vadd.f32 %v753, %v754
      %v756 = vsel %vm746, %v478, 0.0
      %v757 = vadd.f32 %v755, %v756
      %v758 = vsel %vm746, %v483, 0.0
      %v759 = vadd.f32 %v757, %v758
      %v760 = vsel %vm746, %v486, 0.0
      %v761 = vadd.f32 %v759, %v760
      %v762 = vsel %vm746, %v491, 0.0
      %v763 = vadd.f32 %v761, %v762
      %v764 = vsel %vm746, %v494, 0.0
      %v765 = vadd.f32 %v763, %v764
      %v766 = vsel %vm746, %v499, 0.0
      %v767 = vadd.f32 %v765, %v766
      %v768 = vsel %vm746, %v502, 0.0
      %v769 = vadd.f32 %v767, %v768
      %v770 = vsel %vm746, %v507, 0.0
      %v771 = vadd.f32 %v769, %v770
      %v772 = vsel %vm746, %v510, 0.0
      %v773 = vadd.f32 %v771, %v772
      %v774 = vsel %vm746, %v515, 0.0
      %v775 = vadd.f32 %v773, %v774
      %v776 = vsel %vm746, %v518, 0.0
      %v777 = vadd.f32 %v775, %v776
      %v778 = vsel %vm746, %v523, 0.0
      %v779 = vadd.f32 %v777, %v778
      %v780 = vsel %vm746, %v526, 0.0
      %v781 = vadd.f32 %v779, %v780
      %v782 = vsel %vm746, %v531, 0.0
      %v783 = vadd.f32 %v781, %v782
      %v784 = vsel %vm746, %v534, 0.0
      %v785 = vadd.f32 %v783, %v784
      %v786 = vsel %vm746, %v539, 0.0
      %v787 = vadd.f32 %v785, %v786
      %v788 = vsel %vm746, %v542, 0.0
      %v789 = vadd.f32 %v787, %v788
      %v790 = vsel %vm746, %v547, 0.0
      %v791 = vadd.f32 %v789, %v790
      %v792 = vsel %vm746, %v550, 0.0
      %v793 = vadd.f32 %v791, %v792
      %v794 = vsel %vm746, %v555, 0.0
      %v795 = vadd.f32 %v793, %v794
      %v796 = vsel %vm746, %v558, 0.0
      %v797 = vadd.f32 %v795, %v796
      %v798 = vsel %vm746, %v563, 0.0
      %v799 = vadd.f32 %v797, %v798
      %v800 = vsel %vm746, %v566, 0.0
      %v801 = vadd.f32 %v799, %v800
      %v802 = vsel %vm746, %v571, 0.0
      %v803 = vadd.f32 %v801, %v802
      %v804 = vsel %vm746, %v574, 0.0
      %v805 = vadd.f32 %v803, %v804
      %v806 = vsel %vm746, %v579, 0.0
      %v807 = vadd.f32 %v805, %v806
      %v808 = vsel %vm746, %v582, 0.0
      %v809 = vadd.f32 %v807, %v808
      %v810 = vrot.slane %v809, 4
      %v811 = vadd.f32 %v809, %v810
      %v812 = vrot.slane %v811, 2
      %v813 = vadd.f32 %v811, %v812
      %v814 = vrot.slane %v813, 1
      %v815 = vadd.f32 %v813, %v814
      %v816 = vmul.f32 %v459, %v459
      %v817 = vmul.f32 %v462, %v462
      %v818 = vmul.f32 %v467, %v467
      %v819 = vmul.f32 %v470, %v470
      %v820 = vmul.f32 %v475, %v475
      %v821 = vmul.f32 %v478, %v478
      %v822 = vmul.f32 %v483, %v483
      %v823 = vmul.f32 %v486, %v486
      %v824 = vmul.f32 %v491, %v491
      %v825 = vmul.f32 %v494, %v494
      %v826 = vmul.f32 %v499, %v499
      %v827 = vmul.f32 %v502, %v502
      %v828 = vmul.f32 %v507, %v507
      %v829 = vmul.f32 %v510, %v510
      %v830 = vmul.f32 %v515, %v515
      %v831 = vmul.f32 %v518, %v518
      %v832 = vmul.f32 %v523, %v523
      %v833 = vmul.f32 %v526, %v526
      %v834 = vmul.f32 %v531, %v531
      %v835 = vmul.f32 %v534, %v534
      %v836 = vmul.f32 %v539, %v539
      %v837 = vmul.f32 %v542, %v542
      %v838 = vmul.f32 %v547, %v547
      %v839 = vmul.f32 %v550, %v550
      %v840 = vmul.f32 %v555, %v555
      %v841 = vmul.f32 %v558, %v558
      %v842 = vmul.f32 %v563, %v563
      %v843 = vmul.f32 %v566, %v566
      %v844 = vmul.f32 %v571, %v571
      %v845 = vmul.f32 %v574, %v574
      %v846 = vmul.f32 %v579, %v579
      %v847 = vmul.f32 %v582, %v582
      %v848 = vsel %vm746, %v816, 0.0
      %v849 = vsel %vm746, %v817, 0.0
      %v850 = vadd.f32 %v848, %v849
      %v851 = vsel %vm746, %v818, 0.0
      %v852 = vadd.f32 %v850, %v851
      %v853 = vsel %vm746, %v819, 0.0
      %v854 = vadd.f32 %v852, %v853
      %v855 = vsel %vm746, %v820, 0.0
      %v856 = vadd.f32 %v854, %v855
      %v857 = vsel %vm746, %v821, 0.0
      %v858 = vadd.f32 %v856, %v857
      %v859 = vsel %vm746, %v822, 0.0
      %v860 = vadd.f32 %v858, %v859
      %v861 = vsel %vm746, %v823, 0.0
      %v862 = vadd.f32 %v860, %v861
      %v863 = vsel %vm746, %v824, 0.0
      %v864 = vadd.f32 %v862, %v863
      %v865 = vsel %vm746, %v825, 0.0
      %v866 = vadd.f32 %v864, %v865
      %v867 = vsel %vm746, %v826, 0.0
      %v868 = vadd.f32 %v866, %v867
      %v869 = vsel %vm746, %v827, 0.0
      %v870 = vadd.f32 %v868, %v869
      %v871 = vsel %vm746, %v828, 0.0
      %v872 = vadd.f32 %v870, %v871
      %v873 = vsel %vm746, %v829, 0.0
      %v874 = vadd.f32 %v872, %v873
      %v875 = vsel %vm746, %v830, 0.0
      %v876 = vadd.f32 %v874, %v875
      %v877 = vsel %vm746, %v831, 0.0
      %v878 = vadd.f32 %v876, %v877
      %v879 = vsel %vm746, %v832, 0.0
      %v880 = vadd.f32 %v878, %v879
      %v881 = vsel %vm746, %v833, 0.0
      %v882 = vadd.f32 %v880, %v881
      %v883 = vsel %vm746, %v834, 0.0
      %v884 = vadd.f32 %v882, %v883
      %v885 = vsel %vm746, %v835, 0.0
      %v886 = vadd.f32 %v884, %v885
      %v887 = vsel %vm746, %v836, 0.0
      %v888 = vadd.f32 %v886, %v887
      %v889 = vsel %vm746, %v837, 0.0
      %v890 = vadd.f32 %v888, %v889
      %v891 = vsel %vm746, %v838, 0.0
      %v892 = vadd.f32 %v890, %v891
      %v893 = vsel %vm746, %v839, 0.0
      %v894 = vadd.f32 %v892, %v893
      %v895 = vsel %vm746, %v840, 0.0
      %v896 = vadd.f32 %v894, %v895
      %v897 = vsel %vm746, %v841, 0.0
      %v898 = vadd.f32 %v896, %v897
      %v899 = vsel %vm746, %v842, 0.0
      %v900 = vadd.f32 %v898, %v899
      %v901 = vsel %vm746, %v843, 0.0
      %v902 = vadd.f32 %v900, %v901
      %v903 = vsel %vm746, %v844, 0.0
      %v904 = vadd.f32 %v902, %v903
      %v905 = vsel %vm746, %v845, 0.0
      %v906 = vadd.f32 %v904, %v905
      %v907 = vsel %vm746, %v846, 0.0
      %v908 = vadd.f32 %v906, %v907
      %v909 = vsel %vm746, %v847, 0.0
      %v910 = vadd.f32 %v908, %v909
      %v911 = vrot.slane %v910, 4
      %v912 = vadd.f32 %v910, %v911
      %v913 = vrot.slane %v912, 2
      %v914 = vadd.f32 %v912, %v913
      %v915 = vrot.slane %v914, 1
      %v916 = vadd.f32 %v914, %v915
      %917 = vst.msk [vmem:[%s217] sm:$0xff] %vm746, %v815
      %918 = vst.msk [vmem:[%s221] sm:$0xff] %vm746, %v916
      %s919 = smul.u32 32, %s16
      %p920 = scmp.lt.s32.totalorder %s919, 63
      %s921 = scalar_select %p920, %s919, 63
      %s922 = smul.addr %s921, 4
      %s923 = scalar_lea.vmem %s2, %s922
      %p924 = scmp.lt.s32.totalorder %s16, 1
      %s925 = scalar_select %p924, %s16, 1
      %s926 = smul.addr %s925, 8
      %s927 = scalar_lea.vmem %s3, %s926
      %p928 = scmp.lt.s32.totalorder %s16, 1
      %s929 = scalar_select %p928, %s16, 1
      %s930 = smul.addr %s929, 8
      %s931 = scalar_lea.vmem %s4, %s930
      // Predicated region
      $region29: #{generator_forward.38} parent=27 // pred_check
        %p932 = pneg %p81
      $region30: #{generator_forward.38} parent=27 // pred_check_branch
        %934 = sbr.rel (%p932) target = $region32
      $region31: #{generator_forward.38} parent=27 // pred_region
        %s935 = smul.u32 32, %s16
      $region32: #{generator_forward.38} parent=27 // pred_fallthru
        _
      // Predicated region
      $region33: #{generator_forward.38} parent=27 // pred_check
        %p936 = pneg %p107
      $region34: #{generator_forward.38} parent=27 // pred_check_branch
        %938 = sbr.rel (%p936) target = $region36
      $region35: #{generator_forward.38} parent=27 // pred_region
        _
      $region36: #{generator_forward.38} parent=27 // pred_fallthru
        _
      // Predicated region
      $region37: #{generator_forward.38} parent=27 // pred_check
        %p939 = pneg %p133
      $region38: #{generator_forward.38} parent=27 // pred_check_branch
        %941 = sbr.rel (%p939) target = $region40
      $region39: #{generator_forward.38} parent=27 // pred_region
        _
      $region40: #{generator_forward.38} parent=27 // pred_fallthru
        _
    $region28: #{generator_forward.38} parent=5 // pred_fallthru
      _
    %p942 = scmp.le.s32.totalorder 2, %s11
    // Predicated region
    $region41: #{generator_forward.38} parent=5 // pred_check
      %p943 = pneg %p942
    $region42: #{generator_forward.38} parent=5 // pred_check_branch
      %945 = sbr.rel (%p943) target = $region44
    $region43: #{generator_forward.38} parent=5 // pred_region
      %s946 = ssub.s32 %s11, 2
      // Predicated region
      $region45: #{generator_forward.38} parent=43 // pred_check
        %p947 = pneg %p87
      $region46: #{generator_forward.38} parent=43 // pred_check_branch
        %949 = sbr.rel (%p947) target = $region48
      $region47: #{generator_forward.38} parent=43 // pred_region
        %s950 = smul.u32 32, %s17
        %p951 = scmp.lt.s32.totalorder %s950, 63
        %s952 = scalar_select %p951, %s950, 63
        %s953 = smul.addr %s952, 4
        %s954 = scalar_lea.vmem %s2, %s953
      $region48: #{generator_forward.38} parent=43 // pred_fallthru
        _
      // Predicated region
      $region49: #{generator_forward.38} parent=43 // pred_check
        %p955 = pneg %p113
      $region50: #{generator_forward.38} parent=43 // pred_check_branch
        %957 = sbr.rel (%p955) target = $region52
      $region51: #{generator_forward.38} parent=43 // pred_region
        %p958 = scmp.lt.s32.totalorder %s17, 1
        %s959 = scalar_select %p958, %s17, 1
        %s960 = smul.addr %s959, 8
        %s961 = scalar_lea.vmem %s3, %s960
      $region52: #{generator_forward.38} parent=43 // pred_fallthru
        _
      // Predicated region
      $region53: #{generator_forward.38} parent=43 // pred_check
        %p962 = pneg %p139
      $region54: #{generator_forward.38} parent=43 // pred_check_branch
        %964 = sbr.rel (%p962) target = $region56
      $region55: #{generator_forward.38} parent=43 // pred_region
        %p965 = scmp.lt.s32.totalorder %s17, 1
        %s966 = scalar_select %p965, %s17, 1
        %s967 = smul.addr %s966, 8
        %s968 = scalar_lea.vmem %s4, %s967
      $region56: #{generator_forward.38} parent=43 // pred_fallthru
        _
    $region44: #{generator_forward.38} parent=5 // pred_fallthru
      _
  $region6: #{generator_forward.38} parent=0 // loop_footer
    %s15 = sadd.s32 1, %s11
  $region7: #{generator_forward.38} parent=0 // loop_footer_branch
    %10 = sbr.rel target = $region3
  $region8: #{generator_forward.38} parent=0 // loop_exit
    _

// kernel: tile.237
$region0: #{tile.237}
  #allocation0 [shape = 's32[1]{0}', space=sflag, size = 0x4, scoped, tag = 'scoped memory for tile.237']
  %s0 = inlined_call_operand.vmem [shape: f32[3], index: 0, kind: input, shape index: {}]
  %s1 = inlined_call_operand.vmem [shape: f32[4,3], index: 1, kind: output, shape index: {}]
  // Predicated region
  $region2: #{tile.237} parent=0 // pred_check
    _
  $region3: #{tile.237} parent=0 // pred_check_branch
    %3 = sbr.rel (0) target = $region5
  $region4: #{tile.237} parent=0 // pred_region
    _
  $region5: #{tile.237} parent=0 // pred_fallthru
    _
  %v4 = vld [vmem:[%s0] ss:$0 sm:$0xff]
  %5 = vst [vmem:[%s1] sm:$0xf] %v4

// kernel: tile.244
$region0: #{tile.244}
  %s0 = inlined_call_operand.vmem [shape: f32[4,3], index: 0, kind: input, shape index: {}]
  %s1 = inlined_call_operand.vmem [shape: f32[12], index: 1, kind: output, shape index: {}]
  $region1: #{tile.244} parent=0
    #allocation0 [shape = 'u8[4096]{0}', space=vmem, size = 0x1000, scoped, tag = 'scoped mem for output reshape']
    #allocation1 [shape = 'u8[4096]{0}', space=vmem, size = 0x1000, scoped, tag = 'scoped mem for input reshape']
    %s3 = sshll.u32 1, 4
    %s4 = ssub.s32 %s3, 1
    %v5 = vld [vmem:[%s0] sm:%s4]
    %6 = vst [vmem:[#allocation1] sm:%s4] %v5
    %v7 = vld [vmem:[#allocation1] sm:$0x1]
    %vm8 = vcmask 23552
    %9 = vst.msk [vmem:[#allocation0] sm:$0x1] %vm8, %v7
    %s10 = scalar_lea.vmem [#allocation1], 3
    %v11 = vld [vmem:[%s10] sm:$0x1]
    %12 = vrot.lane.b32.xlu0 %v11, 9
    %v13 = vpop.permute.xlu0 %12
    %vm14 = vcmask 97352
    %15 = vst.msk [vmem:[#allocation0] sm:$0x1] %vm14, %v13
    %s16 = scalar_lea.vmem [#allocation1], 2
    %v17 = vld [vmem:[%s16] sm:$0x1]
    %18 = vrot.lane.b32.xlu0 %v17, 6
    %v19 = vpop.permute.xlu0 %18
    %vm20 = vcmask 72752
    %21 = vst.msk [vmem:[#allocation0] sm:$0x1] %vm20, %v19
    %s22 = scalar_lea.vmem [#allocation1], 1
    %v23 = vld [vmem:[%s22] sm:$0x1]
    %24 = vrot.lane.b32.xlu0 %v23, 3
    %v25 = vpop.permute.xlu0 %24
    %vm26 = vcmask 48152
    %27 = vst.msk [vmem:[#allocation0] sm:$0x1] %vm26, %v25
    %s29 = sshll.u32 1, 1
    %s30 = ssub.s32 %s29, 1
    %v32 = vld [vmem:[#allocation0] sm:%s30]
    %s33 = sshll.u32 1, 1
    %s34 = ssub.s32 %s33, 1
    %35 = vst [vmem:[%s1] sm:%s34] %v32

// kernel: tile.241
$region0: #{tile.241}
  #allocation0 [shape = 's32[1]{0}', space=sflag, size = 0x4, scoped, tag = 'scoped memory for tile.241']
  %s0 = inlined_call_operand.vmem [shape: f32[12], index: 0, kind: input, shape index: {}]
  %s1 = inlined_call_operand.vmem [shape: f32[128,12], index: 1, kind: output, shape index: {}]
  // Predicated region
  $region2: #{tile.241} parent=0 // pred_check
    _
  $region3: #{tile.241} parent=0 // pred_check_branch
    %3 = sbr.rel (0) target = $region5
  $region4: #{tile.241} parent=0 // pred_region
    _
  $region5: #{tile.241} parent=0 // pred_fallthru
    _
  %v4 = vld [vmem:[%s0] ss:$0 sm:$0xff]
  %5 = vst [vmem:[%s1] sm:$0xff] %v4
  %s6 = scalar_lea.vmem %s1, 8
  %7 = vst [vmem:[%s6] sm:$0xff] %v4
  %s8 = scalar_lea.vmem %s1, 16
  %9 = vst [vmem:[%s8] sm:$0xff] %v4
  %s10 = scalar_lea.vmem %s1, 24
  %11 = vst [vmem:[%s10] sm:$0xff] %v4
  %s12 = scalar_lea.vmem %s1, 32
  %13 = vst [vmem:[%s12] sm:$0xff] %v4
  %s14 = scalar_lea.vmem %s1, 40
  %15 = vst [vmem:[%s14] sm:$0xff] %v4
  %s16 = scalar_lea.vmem %s1, 48
  %17 = vst [vmem:[%s16] sm:$0xff] %v4
  %s18 = scalar_lea.vmem %s1, 56
  %19 = vst [vmem:[%s18] sm:$0xff] %v4
  %s20 = scalar_lea.vmem %s1, 64
  %21 = vst [vmem:[%s20] sm:$0xff] %v4
  %s22 = scalar_lea.vmem %s1, 72
  %23 = vst [vmem:[%s22] sm:$0xff] %v4
  %s24 = scalar_lea.vmem %s1, 80
  %25 = vst [vmem:[%s24] sm:$0xff] %v4
  %s26 = scalar_lea.vmem %s1, 88
  %27 = vst [vmem:[%s26] sm:$0xff] %v4
  %s28 = scalar_lea.vmem %s1, 96
  %29 = vst [vmem:[%s28] sm:$0xff] %v4
  %s30 = scalar_lea.vmem %s1, 104
  %31 = vst [vmem:[%s30] sm:$0xff] %v4
  %s32 = scalar_lea.vmem %s1, 112
  %33 = vst [vmem:[%s32] sm:$0xff] %v4
  %s34 = scalar_lea.vmem %s1, 120
  %35 = vst [vmem:[%s34] sm:$0xff] %v4

// kernel: tile.246
$region0: #{tile.246}
  %s0 = inlined_call_operand.vmem [shape: f32[128,12], index: 0, kind: input, shape index: {}]
  %s1 = inlined_call_operand.vmem [shape: f32[1,1536], index: 1, kind: output, shape index: {}]
  $region1: #{tile.246} parent=0
    #allocation0 [shape = 'u8[49152]{0}', space=vmem, size = 0xc000, scoped, tag = 'scoped mem for output reshape']
    %v2 = vld [vmem:[%s0] sm:$0x1]
    %s3 = scalar_lea.vmem %s0, 31
    %v4 = vld [vmem:[%s3] sm:$0x2]
    %vm5 = vcmask 1041409
    %v6 = vsel %vm5, %v4, %v2
    %s7 = scalar_lea.vmem %s0, 62
    %v8 = vld [vmem:[%s7] sm:$0x4]
    %vm9 = vcmask 1042434
    %v10 = vsel %vm9, %v8, %v6
    %s11 = scalar_lea.vmem %s0, 93
    %v12 = vld [vmem:[%s11] sm:$0x8]
    %vm13 = vcmask 1043459
    %v14 = vsel %vm13, %v12, %v10
    %vm15 = vcmask 97280
    %16 = vst.msk [vmem:[#allocation0] ss:$24 sm:$0xf] %vm15, %v14
    %s17 = scalar_lea.vmem %s0, 85
    %v18 = vld [vmem:[%s17] sm:$0x1]
    %s19 = scalar_lea.vmem %s0, 52
    %v20 = vld [vmem:[%s19] sm:$0x2]
    %vm21 = vcmask 1041409
    %v22 = vsel %vm21, %v20, %v18
    %s23 = scalar_lea.vmem %s0, 19
    %v24 = vld [vmem:[%s23] sm:$0x4]
    %vm25 = vcmask 1042434
    %v26 = vsel %vm25, %v24, %v22
    %s27 = scalar_lea.vmem %s0, 114
    %v28 = vld [vmem:[%s27] sm:$0x8]
    %vm29 = vcmask 1043459
    %v30 = vsel %vm29, %v28, %v26
    %s31 = scalar_lea.vmem %s0, 53
    %v32 = vld [vmem:[%s31] sm:$0x1]
    %s33 = scalar_lea.vmem %s0, 20
    %v34 = vld [vmem:[%s33] sm:$0x2]
    %vm35 = vcmask 1041409
    %v36 = vsel %vm35, %v34, %v32
    %s37 = scalar_lea.vmem %s0, 115
    %v38 = vld [vmem:[%s37] sm:$0x4]
    %vm39 = vcmask 1042434
    %v40 = vsel %vm39, %v38, %v36
    %s41 = scalar_lea.vmem %s0, 82
    %v42 = vld [vmem:[%s41] sm:$0x8]
    %vm43 = vcmask 1043459
    %v44 = vsel %vm43, %v42, %v40
    %vm45 = vcmask 31744
    %v46 = vsel %vm45, %v44, %v30
    %47 = vrot.lane.b32.xlu0 %v46, 124
    %v48 = vpop.permute.xlu0 %47
    %vm49 = vcmask 64512
    %s50 = scalar_lea.vmem [#allocation0], 64
    %51 = vst.msk [vmem:[%s50] ss:$-24 sm:$0x7] %vm49, %v48
    %s52 = scalar_lea.vmem [#allocation0], 85
    %53 = vst.msk [vmem:[%s52] sm:$0x8] %vm49, %v48
    %vm54 = vcmask 1048544
    %s55 = scalar_lea.vmem [#allocation0], 32
    %56 = vst.msk [vmem:[%s55] ss:$-24 sm:$0x3] %vm54, %v48
    %s57 = scalar_lea.vmem [#allocation0], 128
    %58 = vst.msk [vmem:[%s57] ss:$-24 sm:$0xc] %vm54, %v48
    %s59 = scalar_lea.vmem %s0, 42
    %v60 = vld [vmem:[%s59] sm:$0x1]
    %s61 = scalar_lea.vmem %s0, 9
    %v62 = vld [vmem:[%s61] sm:$0x2]
    %vm63 = vcmask 1041409
    %v64 = vsel %vm63, %v62, %v60
    %s65 = scalar_lea.vmem %s0, 104
    %v66 = vld [vmem:[%s65] sm:$0x4]
    %vm67 = vcmask 1042434
    %v68 = vsel %vm67, %v66, %v64
    %s69 = scalar_lea.vmem %s0, 71
    %v70 = vld [vmem:[%s69] sm:$0x8]
    %vm71 = vcmask 1043459
    %v72 = vsel %vm71, %v70, %v68
    %s73 = scalar_lea.vmem %s0, 10
    %v74 = vld [vmem:[%s73] sm:$0x1]
    %s75 = scalar_lea.vmem %s0, 105
    %v76 = vld [vmem:[%s75] sm:$0x2]
    %vm77 = vcmask 1041409
    %v78 = vsel %vm77, %v76, %v74
    %s79 = scalar_lea.vmem %s0, 72
    %v80 = vld [vmem:[%s79] sm:$0x4]
    %vm81 = vcmask 1042434
    %v82 = vsel %vm81, %v80, %v78
    %s83 = scalar_lea.vmem %s0, 39
    %v84 = vld [vmem:[%s83] sm:$0x8]
    %vm85 = vcmask 1043459
    %v86 = vsel %vm85, %v84, %v82
    %vm87 = vcmask 64512
    %v88 = vsel %vm87, %v86, %v72
    %89 = vrot.lane.b32.xlu0 %v88, 120
    %v90 = vpop.permute.xlu0 %89
    %vm91 = vcmask 31744
    %s92 = scalar_lea.vmem [#allocation0], 32
    %93 = vst.msk [vmem:[%s92] ss:$-24 sm:$0x3] %vm91, %v90
    %s94 = scalar_lea.vmem [#allocation0], 128
    %95 = vst.msk [vmem:[%s94] ss:$-24 sm:$0xc] %vm91, %v90
    %vm96 = vcmask 1048512
    %97 = vst.msk [vmem:[#allocation0] ss:$72 sm:$0x3] %vm96, %v90
    %s98 = scalar_lea.vmem [#allocation0], 96
    %99 = vst.msk [vmem:[%s98] ss:$-24 sm:$0xc] %vm96, %v90
    %s100 = scalar_lea.vmem %s0, 95
    %v101 = vld [vmem:[%s100] sm:$0x1]
    %s102 = scalar_lea.vmem %s0, 62
    %v103 = vld [vmem:[%s102] sm:$0x2]
    %vm104 = vcmask 1041409
    %v105 = vsel %vm104, %v103, %v101
    %s106 = scalar_lea.vmem %s0, 29
    %v107 = vld [vmem:[%s106] sm:$0x4]
    %vm108 = vcmask 1042434
    %v109 = vsel %vm108, %v107, %v105
    %s110 = scalar_lea.vmem %s0, 124
    %v111 = vld [vmem:[%s110] sm:$0x8]
    %vm112 = vcmask 1043459
    %v113 = vsel %vm112, %v111, %v109
    %114 = vrot.lane.b32.xlu0 %v113, 116
    %v115 = vpop.permute.xlu0 %114
    %vm116 = vcmask 1048480
    %s117 = scalar_lea.vmem [#allocation0], 64
    %118 = vst.msk [vmem:[%s117] ss:$-24 sm:$0x7] %vm116, %v115
    %s119 = scalar_lea.vmem [#allocation0], 85
    %120 = vst.msk [vmem:[%s119] sm:$0x8] %vm116, %v115
    %s121 = scalar_lea.vmem %s0, 52
    %v122 = vld [vmem:[%s121] sm:$0x1]
    %s123 = scalar_lea.vmem %s0, 19
    %v124 = vld [vmem:[%s123] sm:$0x2]
    %vm125 = vcmask 1041409
    %v126 = vsel %vm125, %v124, %v122
    %s127 = scalar_lea.vmem %s0, 114
    %v128 = vld [vmem:[%s127] sm:$0x4]
    %vm129 = vcmask 1042434
    %v130 = vsel %vm129, %v128, %v126
    %s131 = scalar_lea.vmem %s0, 81
    %v132 = vld [vmem:[%s131] sm:$0x8]
    %vm133 = vcmask 1043459
    %v134 = vsel %vm133, %v132, %v130
    %135 = vrot.lane.b32.xlu0 %v134, 112
    %v136 = vpop.permute.xlu0 %135
    %vm137 = vcmask 1015680
    %s138 = scalar_lea.vmem [#allocation0], 32
    %139 = vst.msk [vmem:[%s138] ss:$-24 sm:$0x3] %vm137, %v136
    %s140 = scalar_lea.vmem [#allocation0], 128
    %141 = vst.msk [vmem:[%s140] ss:$-24 sm:$0xc] %vm137, %v136
    %s142 = scalar_lea.vmem %s0, 9
    %v143 = vld [vmem:[%s142] sm:$0x1]
    %s144 = scalar_lea.vmem %s0, 104
    %v145 = vld [vmem:[%s144] sm:$0x2]
    %vm146 = vcmask 1041409
    %v147 = vsel %vm146, %v145, %v143
    %s148 = scalar_lea.vmem %s0, 71
    %v149 = vld [vmem:[%s148] sm:$0x4]
    %vm150 = vcmask 1042434
    %v151 = vsel %vm150, %v149, %v147
    %s152 = scalar_lea.vmem %s0, 38
    %v153 = vld [vmem:[%s152] sm:$0x8]
    %vm154 = vcmask 1043459
    %v155 = vsel %vm154, %v153, %v151
    %156 = vrot.lane.b32.xlu0 %v155, 108
    %v157 = vpop.permute.xlu0 %156
    %vm158 = vcmask 982880
    %159 = vst.msk [vmem:[#allocation0] ss:$72 sm:$0x3] %vm158, %v157
    %s160 = scalar_lea.vmem [#allocation0], 96
    %161 = vst.msk [vmem:[%s160] ss:$-24 sm:$0xc] %vm158, %v157
    %s162 = scalar_lea.vmem %s0, 94
    %v163 = vld [vmem:[%s162] sm:$0x1]
    %s164 = scalar_lea.vmem %s0, 61
    %v165 = vld [vmem:[%s164] sm:$0x2]
    %vm166 = vcmask 1041409
    %v167 = vsel %vm166, %v165, %v163
    %s168 = scalar_lea.vmem %s0, 28
    %v169 = vld [vmem:[%s168] sm:$0x4]
    %vm170 = vcmask 1042434
    %v171 = vsel %vm170, %v169, %v167
    %s172 = scalar_lea.vmem %s0, 123
    %v173 = vld [vmem:[%s172] sm:$0x8]
    %vm174 = vcmask 1043459
    %v175 = vsel %vm174, %v173, %v171
    %176 = vrot.lane.b32.xlu0 %v175, 104
    %v177 = vpop.permute.xlu0 %176
    %vm178 = vcmask 950080
    %s179 = scalar_lea.vmem [#allocation0], 64
    %180 = vst.msk [vmem:[%s179] ss:$-24 sm:$0x7] %vm178, %v177
    %s181 = scalar_lea.vmem [#allocation0], 85
    %182 = vst.msk [vmem:[%s181] sm:$0x8] %vm178, %v177
    %s183 = scalar_lea.vmem %s0, 51
    %v184 = vld [vmem:[%s183] sm:$0x1]
    %s185 = scalar_lea.vmem %s0, 18
    %v186 = vld [vmem:[%s185] sm:$0x2]
    %vm187 = vcmask 1041409
    %v188 = vsel %vm187, %v186, %v184
    %s189 = scalar_lea.vmem %s0, 113
    %v190 = vld [vmem:[%s189] sm:$0x4]
    %vm191 = vcmask 1042434
    %v192 = vsel %vm191, %v190, %v188
    %s193 = scalar_lea.vmem %s0, 80
    %v194 = vld [vmem:[%s193] sm:$0x8]
    %vm195 = vcmask 1043459
    %v196 = vsel %vm195, %v194, %v192
    %197 = vrot.lane.b32.xlu0 %v196, 100
    %v198 = vpop.permute.xlu0 %197
    %vm199 = vcmask 917280
    %s200 = scalar_lea.vmem [#allocation0], 32
    %201 = vst.msk [vmem:[%s200] ss:$-24 sm:$0x3] %vm199, %v198
    %s202 = scalar_lea.vmem [#allocation0], 128
    %203 = vst.msk [vmem:[%s202] ss:$-24 sm:$0xc] %vm199, %v198
    %s204 = scalar_lea.vmem %s0, 8
    %v205 = vld [vmem:[%s204] sm:$0x1]
    %s206 = scalar_lea.vmem %s0, 103
    %v207 = vld [vmem:[%s206] sm:$0x2]
    %vm208 = vcmask 1041409
    %v209 = vsel %vm208, %v207, %v205
    %s210 = scalar_lea.vmem %s0, 70
    %v211 = vld [vmem:[%s210] sm:$0x4]
    %vm212 = vcmask 1042434
    %v213 = vsel %vm212, %v211, %v209
    %s214 = scalar_lea.vmem %s0, 37
    %v215 = vld [vmem:[%s214] sm:$0x8]
    %vm216 = vcmask 1043459
    %v217 = vsel %vm216, %v215, %v213
    %218 = vrot.lane.b32.xlu0 %v217, 96
    %v219 = vpop.permute.xlu0 %218
    %vm220 = vcmask 884480
    %221 = vst.msk [vmem:[#allocation0] ss:$72 sm:$0x3] %vm220, %v219
    %s222 = scalar_lea.vmem [#allocation0], 96
    %223 = vst.msk [vmem:[%s222] ss:$-24 sm:$0xc] %vm220, %v219
    %s224 = scalar_lea.vmem %s0, 93
    %v225 = vld [vmem:[%s224] sm:$0x1]
    %s226 = scalar_lea.vmem %s0, 60
    %v227 = vld [vmem:[%s226] sm:$0x2]
    %vm228 = vcmask 1041409
    %v229 = vsel %vm228, %v227, %v225
    %s230 = scalar_lea.vmem %s0, 27
    %v231 = vld [vmem:[%s230] sm:$0x4]
    %vm232 = vcmask 1042434
    %v233 = vsel %vm232, %v231, %v229
    %s234 = scalar_lea.vmem %s0, 122
    %v235 = vld [vmem:[%s234] sm:$0x8]
    %vm236 = vcmask 1043459
    %v237 = vsel %vm236, %v235, %v233
    %238 = vrot.lane.b32.xlu0 %v237, 92
    %v239 = vpop.permute.xlu0 %238
    %vm240 = vcmask 851680
    %s241 = scalar_lea.vmem [#allocation0], 64
    %242 = vst.msk [vmem:[%s241] ss:$-24 sm:$0x7] %vm240, %v239
    %s243 = scalar_lea.vmem [#allocation0], 85
    %244 = vst.msk [vmem:[%s243] sm:$0x8] %vm240, %v239
    %s245 = scalar_lea.vmem %s0, 50
    %v246 = vld [vmem:[%s245] sm:$0x1]
    %s247 = scalar_lea.vmem %s0, 17
    %v248 = vld [vmem:[%s247] sm:$0x2]
    %vm249 = vcmask 1041409
    %v250 = vsel %vm249, %v248, %v246
    %s251 = scalar_lea.vmem %s0, 112
    %v252 = vld [vmem:[%s251] sm:$0x4]
    %vm253 = vcmask 1042434
    %v254 = vsel %vm253, %v252, %v250
    %s255 = scalar_lea.vmem %s0, 79
    %v256 = vld [vmem:[%s255] sm:$0x8]
    %vm257 = vcmask 1043459
    %v258 = vsel %vm257, %v256, %v254
    %259 = vrot.lane.b32.xlu0 %v258, 88
    %v260 = vpop.permute.xlu0 %259
    %vm261 = vcmask 818880
    %s262 = scalar_lea.vmem [#allocation0], 32
    %263 = vst.msk [vmem:[%s262] ss:$-24 sm:$0x3] %vm261, %v260
    %s264 = scalar_lea.vmem [#allocation0], 128
    %265 = vst.msk [vmem:[%s264] ss:$-24 sm:$0xc] %vm261, %v260
    %s266 = scalar_lea.vmem %s0, 7
    %v267 = vld [vmem:[%s266] sm:$0x1]
    %s268 = scalar_lea.vmem %s0, 102
    %v269 = vld [vmem:[%s268] sm:$0x2]
    %vm270 = vcmask 1041409
    %v271 = vsel %vm270, %v269, %v267
    %s272 = scalar_lea.vmem %s0, 69
    %v273 = vld [vmem:[%s272] sm:$0x4]
    %vm274 = vcmask 1042434
    %v275 = vsel %vm274, %v273, %v271
    %s276 = scalar_lea.vmem %s0, 36
    %v277 = vld [vmem:[%s276] sm:$0x8]
    %vm278 = vcmask 1043459
    %v279 = vsel %vm278, %v277, %v275
    %280 = vrot.lane.b32.xlu0 %v279, 84
    %v281 = vpop.permute.xlu0 %280
    %vm282 = vcmask 786080
    %283 = vst.msk [vmem:[#allocation0] ss:$72 sm:$0x3] %vm282, %v281
    %s284 = scalar_lea.vmem [#allocation0], 96
    %285 = vst.msk [vmem:[%s284] ss:$-24 sm:$0xc] %vm282, %v281
    %s286 = scalar_lea.vmem %s0, 92
    %v287 = vld [vmem:[%s286] sm:$0x1]
    %s288 = scalar_lea.vmem %s0, 59
    %v289 = vld [vmem:[%s288] sm:$0x2]
    %vm290 = vcmask 1041409
    %v291 = vsel %vm290, %v289, %v287
    %s292 = scalar_lea.vmem %s0, 26
    %v293 = vld [vmem:[%s292] sm:$0x4]
    %vm294 = vcmask 1042434
    %v295 = vsel %vm294, %v293, %v291
    %s296 = scalar_lea.vmem %s0, 121
    %v297 = vld [vmem:[%s296] sm:$0x8]
    %vm298 = vcmask 1043459
    %v299 = vsel %vm298, %v297, %v295
    %300 = vrot.lane.b32.xlu0 %v299, 80
    %v301 = vpop.permute.xlu0 %300
    %vm302 = vcmask 753280
    %s303 = scalar_lea.vmem [#allocation0], 64
    %304 = vst.msk [vmem:[%s303] ss:$-24 sm:$0x7] %vm302, %v301
    %s305 = scalar_lea.vmem [#allocation0], 85
    %306 = vst.msk [vmem:[%s305] sm:$0x8] %vm302, %v301
    %s307 = scalar_lea.vmem %s0, 49
    %v308 = vld [vmem:[%s307] sm:$0x1]
    %s309 = scalar_lea.vmem %s0, 16
    %v310 = vld [vmem:[%s309] sm:$0x2]
    %vm311 = vcmask 1041409
    %v312 = vsel %vm311, %v310, %v308
    %s313 = scalar_lea.vmem %s0, 111
    %v314 = vld [vmem:[%s313] sm:$0x4]
    %vm315 = vcmask 1042434
    %v316 = vsel %vm315, %v314, %v312
    %s317 = scalar_lea.vmem %s0, 78
    %v318 = vld [vmem:[%s317] sm:$0x8]
    %vm319 = vcmask 1043459
    %v320 = vsel %vm319, %v318, %v316
    %321 = vrot.lane.b32.xlu0 %v320, 76
    %v322 = vpop.permute.xlu0 %321
    %vm323 = vcmask 720480
    %s324 = scalar_lea.vmem [#allocation0], 32
    %325 = vst.msk [vmem:[%s324] ss:$-24 sm:$0x3] %vm323, %v322
    %s326 = scalar_lea.vmem [#allocation0], 128
    %327 = vst.msk [vmem:[%s326] ss:$-24 sm:$0xc] %vm323, %v322
    %s328 = scalar_lea.vmem %s0, 6
    %v329 = vld [vmem:[%s328] sm:$0x1]
    %s330 = scalar_lea.vmem %s0, 101
    %v331 = vld [vmem:[%s330] sm:$0x2]
    %vm332 = vcmask 1041409
    %v333 = vsel %vm332, %v331, %v329
    %s334 = scalar_lea.vmem %s0, 68
    %v335 = vld [vmem:[%s334] sm:$0x4]
    %vm336 = vcmask 1042434
    %v337 = vsel %vm336, %v335, %v333
    %s338 = scalar_lea.vmem %s0, 35
    %v339 = vld [vmem:[%s338] sm:$0x8]
    %vm340 = vcmask 1043459
    %v341 = vsel %vm340, %v339, %v337
    %342 = vrot.lane.b32.xlu0 %v341, 72
    %v343 = vpop.permute.xlu0 %342
    %vm344 = vcmask 687680
    %345 = vst.msk [vmem:[#allocation0] ss:$72 sm:$0x3] %vm344, %v343
    %s346 = scalar_lea.vmem [#allocation0], 96
    %347 = vst.msk [vmem:[%s346] ss:$-24 sm:$0xc] %vm344, %v343
    %s348 = scalar_lea.vmem %s0, 91
    %v349 = vld [vmem:[%s348] sm:$0x1]
    %s350 = scalar_lea.vmem %s0, 58
    %v351 = vld [vmem:[%s350] sm:$0x2]
    %vm352 = vcmask 1041409
    %v353 = vsel %vm352, %v351, %v349
    %s354 = scalar_lea.vmem %s0, 25
    %v355 = vld [vmem:[%s354] sm:$0x4]
    %vm356 = vcmask 1042434
    %v357 = vsel %vm356, %v355, %v353
    %s358 = scalar_lea.vmem %s0, 120
    %v359 = vld [vmem:[%s358] sm:$0x8]
    %vm360 = vcmask 1043459
    %v361 = vsel %vm360, %v359, %v357
    %362 = vrot.lane.b32.xlu0 %v361, 68
    %v363 = vpop.permute.xlu0 %362
    %vm364 = vcmask 654880
    %s365 = scalar_lea.vmem [#allocation0], 64
    %366 = vst.msk [vmem:[%s365] ss:$-24 sm:$0x7] %vm364, %v363
    %s367 = scalar_lea.vmem [#allocation0], 85
    %368 = vst.msk [vmem:[%s367] sm:$0x8] %vm364, %v363
    %s369 = scalar_lea.vmem %s0, 48
    %v370 = vld [vmem:[%s369] sm:$0x1]
    %s371 = scalar_lea.vmem %s0, 15
    %v372 = vld [vmem:[%s371] sm:$0x2]
    %vm373 = vcmask 1041409
    %v374 = vsel %vm373, %v372, %v370
    %s375 = scalar_lea.vmem %s0, 110
    %v376 = vld [vmem:[%s375] sm:$0x4]
    %vm377 = vcmask 1042434
    %v378 = vsel %vm377, %v376, %v374
    %s379 = scalar_lea.vmem %s0, 77
    %v380 = vld [vmem:[%s379] sm:$0x8]
    %vm381 = vcmask 1043459
    %v382 = vsel %vm381, %v380, %v378
    %383 = vrot.lane.b32.xlu0 %v382, 64
    %v384 = vpop.permute.xlu0 %383
    %vm385 = vcmask 622080
    %s386 = scalar_lea.vmem [#allocation0], 32
    %387 = vst.msk [vmem:[%s386] ss:$-24 sm:$0x3] %vm385, %v384
    %s388 = scalar_lea.vmem [#allocation0], 128
    %389 = vst.msk [vmem:[%s388] ss:$-24 sm:$0xc] %vm385, %v384
    %s390 = scalar_lea.vmem %s0, 5
    %v391 = vld [vmem:[%s390] sm:$0x1]
    %s392 = scalar_lea.vmem %s0, 100
    %v393 = vld [vmem:[%s392] sm:$0x2]
    %vm394 = vcmask 1041409
    %v395 = vsel %vm394, %v393, %v391
    %s396 = scalar_lea.vmem %s0, 67
    %v397 = vld [vmem:[%s396] sm:$0x4]
    %vm398 = vcmask 1042434
    %v399 = vsel %vm398, %v397, %v395
    %s400 = scalar_lea.vmem %s0, 34
    %v401 = vld [vmem:[%s400] sm:$0x8]
    %vm402 = vcmask 1043459
    %v403 = vsel %vm402, %v401, %v399
    %404 = vrot.lane.b32.xlu0 %v403, 60
    %v405 = vpop.permute.xlu0 %404
    %vm406 = vcmask 589280
    %407 = vst.msk [vmem:[#allocation0] ss:$72 sm:$0x3] %vm406, %v405
    %s408 = scalar_lea.vmem [#allocation0], 96
    %409 = vst.msk [vmem:[%s408] ss:$-24 sm:$0xc] %vm406, %v405
    %s410 = scalar_lea.vmem %s0, 90
    %v411 = vld [vmem:[%s410] sm:$0x1]
    %s412 = scalar_lea.vmem %s0, 57
    %v413 = vld [vmem:[%s412] sm:$0x2]
    %vm414 = vcmask 1041409
    %v415 = vsel %vm414, %v413, %v411
    %s416 = scalar_lea.vmem %s0, 24
    %v417 = vld [vmem:[%s416] sm:$0x4]
    %vm418 = vcmask 1042434
    %v419 = vsel %vm418, %v417, %v415
    %s420 = scalar_lea.vmem %s0, 119
    %v421 = vld [vmem:[%s420] sm:$0x8]
    %vm422 = vcmask 1043459
    %v423 = vsel %vm422, %v421, %v419
    %424 = vrot.lane.b32.xlu0 %v423, 56
    %v425 = vpop.permute.xlu0 %424
    %vm426 = vcmask 556480
    %s427 = scalar_lea.vmem [#allocation0], 64
    %428 = vst.msk [vmem:[%s427] ss:$-24 sm:$0x7] %vm426, %v425
    %s429 = scalar_lea.vmem [#allocation0], 85
    %430 = vst.msk [vmem:[%s429] sm:$0x8] %vm426, %v425
    %s431 = scalar_lea.vmem %s0, 47
    %v432 = vld [vmem:[%s431] sm:$0x1]
    %s433 = scalar_lea.vmem %s0, 14
    %v434 = vld [vmem:[%s433] sm:$0x2]
    %vm435 = vcmask 1041409
    %v436 = vsel %vm435, %v434, %v432
    %s437 = scalar_lea.vmem %s0, 109
    %v438 = vld [vmem:[%s437] sm:$0x4]
    %vm439 = vcmask 1042434
    %v440 = vsel %vm439, %v438, %v436
    %s441 = scalar_lea.vmem %s0, 76
    %v442 = vld [vmem:[%s441] sm:$0x8]
    %vm443 = vcmask 1043459
    %v444 = vsel %vm443, %v442, %v440
    %445 = vrot.lane.b32.xlu0 %v444, 52
    %v446 = vpop.permute.xlu0 %445
    %vm447 = vcmask 523680
    %s448 = scalar_lea.vmem [#allocation0], 32
    %449 = vst.msk [vmem:[%s448] ss:$-24 sm:$0x3] %vm447, %v446
    %s450 = scalar_lea.vmem [#allocation0], 128
    %451 = vst.msk [vmem:[%s450] ss:$-24 sm:$0xc] %vm447, %v446
    %s452 = scalar_lea.vmem %s0, 4
    %v453 = vld [vmem:[%s452] sm:$0x1]
    %s454 = scalar_lea.vmem %s0, 99
    %v455 = vld [vmem:[%s454] sm:$0x2]
    %vm456 = vcmask 1041409
    %v457 = vsel %vm456, %v455, %v453
    %s458 = scalar_lea.vmem %s0, 66
    %v459 = vld [vmem:[%s458] sm:$0x4]
    %vm460 = vcmask 1042434
    %v461 = vsel %vm460, %v459, %v457
    %s462 = scalar_lea.vmem %s0, 33
    %v463 = vld [vmem:[%s462] sm:$0x8]
    %vm464 = vcmask 1043459
    %v465 = vsel %vm464, %v463, %v461
    %466 = vrot.lane.b32.xlu0 %v465, 48
    %v467 = vpop.permute.xlu0 %466
    %vm468 = vcmask 490880
    %469 = vst.msk [vmem:[#allocation0] ss:$72 sm:$0x3] %vm468, %v467
    %s470 = scalar_lea.vmem [#allocation0], 96
    %471 = vst.msk [vmem:[%s470] ss:$-24 sm:$0xc] %vm468, %v467
    %s472 = scalar_lea.vmem %s0, 89
    %v473 = vld [vmem:[%s472] sm:$0x1]
    %s474 = scalar_lea.vmem %s0, 56
    %v475 = vld [vmem:[%s474] sm:$0x2]
    %vm476 = vcmask 1041409
    %v477 = vsel %vm476, %v475, %v473
    %s478 = scalar_lea.vmem %s0, 23
    %v479 = vld [vmem:[%s478] sm:$0x4]
    %vm480 = vcmask 1042434
    %v481 = vsel %vm480, %v479, %v477
    %s482 = scalar_lea.vmem %s0, 118
    %v483 = vld [vmem:[%s482] sm:$0x8]
    %vm484 = vcmask 1043459
    %v485 = vsel %vm484, %v483, %v481
    %486 = vrot.lane.b32.xlu0 %v485, 44
    %v487 = vpop.permute.xlu0 %486
    %vm488 = vcmask 458080
    %s489 = scalar_lea.vmem [#allocation0], 64
    %490 = vst.msk [vmem:[%s489] ss:$-24 sm:$0x7] %vm488, %v487
    %s491 = scalar_lea.vmem [#allocation0], 85
    %492 = vst.msk [vmem:[%s491] sm:$0x8] %vm488, %v487
    %s493 = scalar_lea.vmem %s0, 46
    %v494 = vld [vmem:[%s493] sm:$0x1]
    %s495 = scalar_lea.vmem %s0, 13
    %v496 = vld [vmem:[%s495] sm:$0x2]
    %vm497 = vcmask 1041409
    %v498 = vsel %vm497, %v496, %v494
    %s499 = scalar_lea.vmem %s0, 108
    %v500 = vld [vmem:[%s499] sm:$0x4]
    %vm501 = vcmask 1042434
    %v502 = vsel %vm501, %v500, %v498
    %s503 = scalar_lea.vmem %s0, 75
    %v504 = vld [vmem:[%s503] sm:$0x8]
    %vm505 = vcmask 1043459
    %v506 = vsel %vm505, %v504, %v502
    %507 = vrot.lane.b32.xlu0 %v506, 40
    %v508 = vpop.permute.xlu0 %507
    %vm509 = vcmask 425280
    %s510 = scalar_lea.vmem [#allocation0], 32
    %511 = vst.msk [vmem:[%s510] ss:$-24 sm:$0x3] %vm509, %v508
    %s512 = scalar_lea.vmem [#allocation0], 128
    %513 = vst.msk [vmem:[%s512] ss:$-24 sm:$0xc] %vm509, %v508
    %s514 = scalar_lea.vmem %s0, 3
    %v515 = vld [vmem:[%s514] sm:$0x1]
    %s516 = scalar_lea.vmem %s0, 98
    %v517 = vld [vmem:[%s516] sm:$0x2]
    %vm518 = vcmask 1041409
    %v519 = vsel %vm518, %v517, %v515
    %s520 = scalar_lea.vmem %s0, 65
    %v521 = vld [vmem:[%s520] sm:$0x4]
    %vm522 = vcmask 1042434
    %v523 = vsel %vm522, %v521, %v519
    %s524 = scalar_lea.vmem %s0, 32
    %v525 = vld [vmem:[%s524] sm:$0x8]
    %vm526 = vcmask 1043459
    %v527 = vsel %vm526, %v525, %v523
    %528 = vrot.lane.b32.xlu0 %v527, 36
    %v529 = vpop.permute.xlu0 %528
    %vm530 = vcmask 392480
    %531 = vst.msk [vmem:[#allocation0] ss:$72 sm:$0x3] %vm530, %v529
    %s532 = scalar_lea.vmem [#allocation0], 96
    %533 = vst.msk [vmem:[%s532] ss:$-24 sm:$0xc] %vm530, %v529
    %s534 = scalar_lea.vmem %s0, 88
    %v535 = vld [vmem:[%s534] sm:$0x1]
    %s536 = scalar_lea.vmem %s0, 55
    %v537 = vld [vmem:[%s536] sm:$0x2]
    %vm538 = vcmask 1041409
    %v539 = vsel %vm538, %v537, %v535
    %s540 = scalar_lea.vmem %s0, 22
    %v541 = vld [vmem:[%s540] sm:$0x4]
    %vm542 = vcmask 1042434
    %v543 = vsel %vm542, %v541, %v539
    %s544 = scalar_lea.vmem %s0, 117
    %v545 = vld [vmem:[%s544] sm:$0x8]
    %vm546 = vcmask 1043459
    %v547 = vsel %vm546, %v545, %v543
    %548 = vrot.lane.b32.xlu0 %v547, 32
    %v549 = vpop.permute.xlu0 %548
    %vm550 = vcmask 359680
    %s551 = scalar_lea.vmem [#allocation0], 64
    %552 = vst.msk [vmem:[%s551] ss:$-24 sm:$0x7] %vm550, %v549
    %s553 = scalar_lea.vmem [#allocation0], 85
    %554 = vst.msk [vmem:[%s553] sm:$0x8] %vm550, %v549
    %s555 = scalar_lea.vmem %s0, 45
    %v556 = vld [vmem:[%s555] sm:$0x1]
    %s557 = scalar_lea.vmem %s0, 12
    %v558 = vld [vmem:[%s557] sm:$0x2]
    %vm559 = vcmask 1041409
    %v560 = vsel %vm559, %v558, %v556
    %s561 = scalar_lea.vmem %s0, 107
    %v562 = vld [vmem:[%s561] sm:$0x4]
    %vm563 = vcmask 1042434
    %v564 = vsel %vm563, %v562, %v560
    %s565 = scalar_lea.vmem %s0, 74
    %v566 = vld [vmem:[%s565] sm:$0x8]
    %vm567 = vcmask 1043459
    %v568 = vsel %vm567, %v566, %v564
    %569 = vrot.lane.b32.xlu0 %v568, 28
    %v570 = vpop.permute.xlu0 %569
    %vm571 = vcmask 326880
    %s572 = scalar_lea.vmem [#allocation0], 32
    %573 = vst.msk [vmem:[%s572] ss:$-24 sm:$0x3] %vm571, %v570
    %s574 = scalar_lea.vmem [#allocation0], 128
    %575 = vst.msk [vmem:[%s574] ss:$-24 sm:$0xc] %vm571, %v570
    %s576 = scalar_lea.vmem %s0, 2
    %v577 = vld [vmem:[%s576] sm:$0x1]
    %s578 = scalar_lea.vmem %s0, 97
    %v579 = vld [vmem:[%s578] sm:$0x2]
    %vm580 = vcmask 1041409
    %v581 = vsel %vm580, %v579, %v577
    %s582 = scalar_lea.vmem %s0, 64
    %v583 = vld [vmem:[%s582] sm:$0x4]
    %vm584 = vcmask 1042434
    %v585 = vsel %vm584, %v583, %v581
    %s586 = scalar_lea.vmem %s0, 31
    %v587 = vld [vmem:[%s586] sm:$0x8]
    %vm588 = vcmask 1043459
    %v589 = vsel %vm588, %v587, %v585
    %590 = vrot.lane.b32.xlu0 %v589, 24
    %v591 = vpop.permute.xlu0 %590
    %vm592 = vcmask 294080
    %593 = vst.msk [vmem:[#allocation0] ss:$72 sm:$0x3] %vm592, %v591
    %s594 = scalar_lea.vmem [#allocation0], 96
    %595 = vst.msk [vmem:[%s594] ss:$-24 sm:$0xc] %vm592, %v591
    %s596 = scalar_lea.vmem %s0, 87
    %v597 = vld [vmem:[%s596] sm:$0x1]
    %s598 = scalar_lea.vmem %s0, 54
    %v599 = vld [vmem:[%s598] sm:$0x2]
    %vm600 = vcmask 1041409
    %v601 = vsel %vm600, %v599, %v597
    %s602 = scalar_lea.vmem %s0, 21
    %v603 = vld [vmem:[%s602] sm:$0x4]
    %vm604 = vcmask 1042434
    %v605 = vsel %vm604, %v603, %v601
    %s606 = scalar_lea.vmem %s0, 116
    %v607 = vld [vmem:[%s606] sm:$0x8]
    %vm608 = vcmask 1043459
    %v609 = vsel %vm608, %v607, %v605
    %610 = vrot.lane.b32.xlu0 %v609, 20
    %v611 = vpop.permute.xlu0 %610
    %vm612 = vcmask 261280
    %s613 = scalar_lea.vmem [#allocation0], 64
    %614 = vst.msk [vmem:[%s613] ss:$-24 sm:$0x7] %vm612, %v611
    %s615 = scalar_lea.vmem [#allocation0], 85
    %616 = vst.msk [vmem:[%s615] sm:$0x8] %vm612, %v611
    %s617 = scalar_lea.vmem %s0, 44
    %v618 = vld [vmem:[%s617] sm:$0x1]
    %s619 = scalar_lea.vmem %s0, 11
    %v620 = vld [vmem:[%s619] sm:$0x2]
    %vm621 = vcmask 1041409
    %v622 = vsel %vm621, %v620, %v618
    %s623 = scalar_lea.vmem %s0, 106
    %v624 = vld [vmem:[%s623] sm:$0x4]
    %vm625 = vcmask 1042434
    %v626 = vsel %vm625, %v624, %v622
    %s627 = scalar_lea.vmem %s0, 73
    %v628 = vld [vmem:[%s627] sm:$0x8]
    %vm629 = vcmask 1043459
    %v630 = vsel %vm629, %v628, %v626
    %631 = vrot.lane.b32.xlu0 %v630, 16
    %v632 = vpop.permute.xlu0 %631
    %vm633 = vcmask 228480
    %s634 = scalar_lea.vmem [#allocation0], 32
    %635 = vst.msk [vmem:[%s634] ss:$-24 sm:$0x3] %vm633, %v632
    %s636 = scalar_lea.vmem [#allocation0], 128
    %637 = vst.msk [vmem:[%s636] ss:$-24 sm:$0xc] %vm633, %v632
    %s638 = scalar_lea.vmem %s0, 1
    %v639 = vld [vmem:[%s638] sm:$0x1]
    %s640 = scalar_lea.vmem %s0, 96
    %v641 = vld [vmem:[%s640] sm:$0x2]
    %vm642 = vcmask 1041409
    %v643 = vsel %vm642, %v641, %v639
    %s644 = scalar_lea.vmem %s0, 63
    %v645 = vld [vmem:[%s644] sm:$0x4]
    %vm646 = vcmask 1042434
    %v647 = vsel %vm646, %v645, %v643
    %s648 = scalar_lea.vmem %s0, 30
    %v649 = vld [vmem:[%s648] sm:$0x8]
    %vm650 = vcmask 1043459
    %v651 = vsel %vm650, %v649, %v647
    %652 = vrot.lane.b32.xlu0 %v651, 12
    %v653 = vpop.permute.xlu0 %652
    %vm654 = vcmask 195680
    %655 = vst.msk [vmem:[#allocation0] ss:$72 sm:$0x3] %vm654, %v653
    %s656 = scalar_lea.vmem [#allocation0], 96
    %657 = vst.msk [vmem:[%s656] ss:$-24 sm:$0xc] %vm654, %v653
    %s658 = scalar_lea.vmem %s0, 86
    %v659 = vld [vmem:[%s658] sm:$0x1]
    %s660 = scalar_lea.vmem %s0, 53
    %v661 = vld [vmem:[%s660] sm:$0x2]
    %vm662 = vcmask 1041409
    %v663 = vsel %vm662, %v661, %v659
    %s664 = scalar_lea.vmem %s0, 20
    %v665 = vld [vmem:[%s664] sm:$0x4]
    %vm666 = vcmask 1042434
    %v667 = vsel %vm666, %v665, %v663
    %s668 = scalar_lea.vmem %s0, 115
    %v669 = vld [vmem:[%s668] sm:$0x8]
    %vm670 = vcmask 1043459
    %v671 = vsel %vm670, %v669, %v667
    %672 = vrot.lane.b32.xlu0 %v671, 8
    %v673 = vpop.permute.xlu0 %672
    %vm674 = vcmask 162880
    %s675 = scalar_lea.vmem [#allocation0], 64
    %676 = vst.msk [vmem:[%s675] ss:$-24 sm:$0x7] %vm674, %v673
    %s677 = scalar_lea.vmem [#allocation0], 85
    %678 = vst.msk [vmem:[%s677] sm:$0x8] %vm674, %v673
    %s679 = scalar_lea.vmem %s0, 43
    %v680 = vld [vmem:[%s679] sm:$0x1]
    %s681 = scalar_lea.vmem %s0, 10
    %v682 = vld [vmem:[%s681] sm:$0x2]
    %vm683 = vcmask 1041409
    %v684 = vsel %vm683, %v682, %v680
    %s685 = scalar_lea.vmem %s0, 105
    %v686 = vld [vmem:[%s685] sm:$0x4]
    %vm687 = vcmask 1042434
    %v688 = vsel %vm687, %v686, %v684
    %s689 = scalar_lea.vmem %s0, 72
    %v690 = vld [vmem:[%s689] sm:$0x8]
    %vm691 = vcmask 1043459
    %v692 = vsel %vm691, %v690, %v688
    %693 = vrot.lane.b32.xlu0 %v692, 4
    %v694 = vpop.permute.xlu0 %693
    %vm695 = vcmask 130080
    %s696 = scalar_lea.vmem [#allocation0], 32
    %697 = vst.msk [vmem:[%s696] ss:$-24 sm:$0x3] %vm695, %v694
    %s698 = scalar_lea.vmem [#allocation0], 128
    %699 = vst.msk [vmem:[%s698] ss:$-24 sm:$0xc] %vm695, %v694
    %s701 = sshll.u32 1, 1
    %s702 = ssub.s32 %s701, 1
    %v704 = vld [vmem:[#allocation0] sm:%s702]
    %s705 = sshll.u32 1, 1
    %s706 = ssub.s32 %s705, 1
    %707 = vst [vmem:[%s1] sm:%s706] %v704
    %s708 = scalar_lea.vmem [#allocation0], 8
    %v709 = vld [vmem:[%s708] sm:%s702]
    %s710 = sshll.u32 1, 1
    %s711 = ssub.s32 %s710, 1
    %s712 = scalar_lea.vmem %s1, 1
    %713 = vst [vmem:[%s712] sm:%s711] %v709
    %s714 = scalar_lea.vmem [#allocation0], 16
    %v715 = vld [vmem:[%s714] sm:%s702]
    %s716 = sshll.u32 1, 1
    %s717 = ssub.s32 %s716, 1
    %s718 = smul.addr 1, 2
    %s719 = scalar_lea.vmem %s1, %s718
    %720 = vst [vmem:[%s719] sm:%s717] %v715
    %s721 = scalar_lea.vmem [#allocation0], 24
    %v722 = vld [vmem:[%s721] sm:%s702]
    %s723 = sshll.u32 1, 1
    %s724 = ssub.s32 %s723, 1
    %s725 = smul.addr 1, 3
    %s726 = scalar_lea.vmem %s1, %s725
    %727 = vst [vmem:[%s726] sm:%s724] %v722
    %s728 = scalar_lea.vmem [#allocation0], 32
    %v729 = vld [vmem:[%s728] sm:%s702]
    %s730 = sshll.u32 1, 1
    %s731 = ssub.s32 %s730, 1
    %s732 = smul.addr 1, 4
    %s733 = scalar_lea.vmem %s1, %s732
    %734 = vst [vmem:[%s733] sm:%s731] %v729
    %s735 = scalar_lea.vmem [#allocation0], 40
    %v736 = vld [vmem:[%s735] sm:%s702]
    %s737 = sshll.u32 1, 1
    %s738 = ssub.s32 %s737, 1
    %s739 = smul.addr 1, 5
    %s740 = scalar_lea.vmem %s1, %s739
    %741 = vst [vmem:[%s740] sm:%s738] %v736
    %s742 = scalar_lea.vmem [#allocation0], 48
    %v743 = vld [vmem:[%s742] sm:%s702]
    %s744 = sshll.u32 1, 1
    %s745 = ssub.s32 %s744, 1
    %s746 = smul.addr 1, 6
    %s747 = scalar_lea.vmem %s1, %s746
    %748 = vst [vmem:[%s747] sm:%s745] %v743
    %s749 = scalar_lea.vmem [#allocation0], 56
    %v750 = vld [vmem:[%s749] sm:%s702]
    %s751 = sshll.u32 1, 1
    %s752 = ssub.s32 %s751, 1
    %s753 = smul.addr 1, 7
    %s754 = scalar_lea.vmem %s1, %s753
    %755 = vst [vmem:[%s754] sm:%s752] %v750
    %s756 = scalar_lea.vmem [#allocation0], 64
    %v757 = vld [vmem:[%s756] sm:%s702]
    %s758 = sshll.u32 1, 1
    %s759 = ssub.s32 %s758, 1
    %s760 = smul.addr 1, 8
    %s761 = scalar_lea.vmem %s1, %s760
    %762 = vst [vmem:[%s761] sm:%s759] %v757
    %s763 = scalar_lea.vmem [#allocation0], 72
    %v764 = vld [vmem:[%s763] sm:%s702]
    %s765 = sshll.u32 1, 1
    %s766 = ssub.s32 %s765, 1
    %s767 = smul.addr 1, 9
    %s768 = scalar_lea.vmem %s1, %s767
    %769 = vst [vmem:[%s768] sm:%s766] %v764
    %s770 = scalar_lea.vmem [#allocation0], 80
    %v771 = vld [vmem:[%s770] sm:%s702]
    %s772 = sshll.u32 1, 1
    %s773 = ssub.s32 %s772, 1
    %s774 = smul.addr 1, 10
    %s775 = scalar_lea.vmem %s1, %s774
    %776 = vst [vmem:[%s775] sm:%s773] %v771
    %s777 = scalar_lea.vmem [#allocation0], 88
    %v778 = vld [vmem:[%s777] sm:%s702]
    %s779 = sshll.u32 1, 1
    %s780 = ssub.s32 %s779, 1
    %s781 = smul.addr 1, 11
    %s782 = scalar_lea.vmem %s1, %s781
    %783 = vst [vmem:[%s782] sm:%s780] %v778

// kernel: generator_forward.39
$region0: #{generator_forward.39}
  #allocation0 [shape = 'u32[]', space=smem, size = 0x4, offset = 0x4, fixed_abs, tag = 'smem constant byte address 0x4 - core index']
  #allocation1 [shape = 'u32[144,128]{1,0:T(1,128)}', space=vmem, size = 0x12000, scoped, tag = 'internal scratch']
  %s0 = inlined_call_operand.vmem [shape: bf16[8,1536], index: 0, kind: input, shape index: {}]
  %s1 = inlined_call_operand.vmem [shape: f32[1,1536], index: 1, kind: input, shape index: {}]
  %s2 = inlined_call_operand.vmem [shape: f32[1,1536], index: 2, kind: input, shape index: {}]
  %s3 = inlined_call_operand.vmem [shape: f32[8,1536], index: 3, kind: output, shape index: {}]
  %s4 = sld [smem:[#allocation0]]
  $region22: #{generator_forward.39} parent=0
    _
  %s6 = ssub.s32 1, %s4
  %s7 = scalar_select 0, %s6, %s4
  // Predicated region
  $region2: #{generator_forward.39} parent=0 // pred_check
    _
  $region3: #{generator_forward.39} parent=0 // pred_check_branch
    %9 = sbr.rel (0) target = $region5
  $region4: #{generator_forward.39} parent=0 // pred_region
    _
  $region5: #{generator_forward.39} parent=0 // pred_fallthru
    _
  // Predicated region
  $region6: #{generator_forward.39} parent=0 // pred_check
    _
  $region7: #{generator_forward.39} parent=0 // pred_check_branch
    %11 = sbr.rel (0) target = $region9
  $region8: #{generator_forward.39} parent=0 // pred_region
    _
  $region9: #{generator_forward.39} parent=0 // pred_fallthru
    _
  // Predicated region
  $region10: #{generator_forward.39} parent=0 // pred_check
    _
  $region11: #{generator_forward.39} parent=0 // pred_check_branch
    %13 = sbr.rel (0) target = $region13
  $region12: #{generator_forward.39} parent=0 // pred_region
    _
  $region13: #{generator_forward.39} parent=0 // pred_fallthru
    _
  %v14 = vld [vmem:[%s0] sm:$0xff]
  %v15 = vld [vmem:[%s0 + $0x8] sm:$0xff]
  %v16 = vld [vmem:[%s0 + $0x10] sm:$0xff]
  %v17 = vld [vmem:[%s0 + $0x18] sm:$0xff]
  %v18 = vld [vmem:[%s0 + $0x20] sm:$0xff]
  %v19 = vld [vmem:[%s0 + $0x28] sm:$0xff]
  %v20 = vunpack.c.l.bf16 %v14
  %v21 = vunpack.c.h.bf16 %v14
  %v22 = vunpack.c.l.bf16 %v15
  %v23 = vunpack.c.h.bf16 %v15
  %v24 = vunpack.c.l.bf16 %v16
  %v25 = vunpack.c.h.bf16 %v16
  %v26 = vunpack.c.l.bf16 %v17
  %v27 = vunpack.c.h.bf16 %v17
  %v28 = vunpack.c.l.bf16 %v18
  %v29 = vunpack.c.h.bf16 %v18
  %v30 = vunpack.c.l.bf16 %v19
  %v31 = vunpack.c.h.bf16 %v19
  %v32 = vld [vmem:[%s1] sm:$0xff]
  %v33 = vld [vmem:[%s1 + $0x8] sm:$0xf]
  %v36 = vlaneseq
  %v37 = vshrl.u32 %v36, 7
  %v38 = vsub.s32 0, %v37
  %v39 = vrot.slane %v32, %v38
  %v40 = vlaneseq
  %v41 = vshrl.u32 %v40, 7
  %v42 = vsub.s32 1, %v41
  %v43 = vrot.slane %v32, %v42
  %v44 = vlaneseq
  %v45 = vshrl.u32 %v44, 7
  %v46 = vsub.s32 2, %v45
  %v47 = vrot.slane %v32, %v46
  %v48 = vlaneseq
  %v49 = vshrl.u32 %v48, 7
  %v50 = vsub.s32 3, %v49
  %v51 = vrot.slane %v32, %v50
  %v52 = vlaneseq
  %v53 = vshrl.u32 %v52, 7
  %v54 = vsub.s32 4, %v53
  %v55 = vrot.slane %v32, %v54
  %v56 = vlaneseq
  %v57 = vshrl.u32 %v56, 7
  %v58 = vsub.s32 5, %v57
  %v59 = vrot.slane %v32, %v58
  %v60 = vlaneseq
  %v61 = vshrl.u32 %v60, 7
  %v62 = vsub.s32 6, %v61
  %v63 = vrot.slane %v32, %v62
  %v64 = vlaneseq
  %v65 = vshrl.u32 %v64, 7
  %v66 = vsub.s32 7, %v65
  %v67 = vrot.slane %v32, %v66
  %v68 = vlaneseq
  %v69 = vshrl.u32 %v68, 7
  %v70 = vsub.s32 0, %v69
  %v71 = vrot.slane %v33, %v70
  %v72 = vlaneseq
  %v73 = vshrl.u32 %v72, 7
  %v74 = vsub.s32 1, %v73
  %v75 = vrot.slane %v33, %v74
  %v76 = vlaneseq
  %v77 = vshrl.u32 %v76, 7
  %v78 = vsub.s32 2, %v77
  %v79 = vrot.slane %v33, %v78
  %v80 = vlaneseq
  %v81 = vshrl.u32 %v80, 7
  %v82 = vsub.s32 3, %v81
  %v83 = vrot.slane %v33, %v82
  %v96 = vmul.f32 %v20, %v39
  %v97 = vmul.f32 %v21, %v43
  %v98 = vmul.f32 %v22, %v47
  %v99 = vmul.f32 %v23, %v51
  %v100 = vmul.f32 %v24, %v55
  %v101 = vmul.f32 %v25, %v59
  %v102 = vmul.f32 %v26, %v63
  %v103 = vmul.f32 %v27, %v67
  %v104 = vmul.f32 %v28, %v71
  %v105 = vmul.f32 %v29, %v75
  %v106 = vmul.f32 %v30, %v79
  %v107 = vmul.f32 %v31, %v83
  %v108 = vld [vmem:[%s2] sm:$0xff]
  %v109 = vld [vmem:[%s2 + $0x8] sm:$0xf]
  %v112 = vlaneseq
  %v113 = vshrl.u32 %v112, 7
  %v114 = vsub.s32 0, %v113
  %v115 = vrot.slane %v108, %v114
  %v116 = vlaneseq
  %v117 = vshrl.u32 %v116, 7
  %v118 = vsub.s32 1, %v117
  %v119 = vrot.slane %v108, %v118
  %v120 = vlaneseq
  %v121 = vshrl.u32 %v120, 7
  %v122 = vsub.s32 2, %v121
  %v123 = vrot.slane %v108, %v122
  %v124 = vlaneseq
  %v125 = vshrl.u32 %v124, 7
  %v126 = vsub.s32 3, %v125
  %v127 = vrot.slane %v108, %v126
  %v128 = vlaneseq
  %v129 = vshrl.u32 %v128, 7
  %v130 = vsub.s32 4, %v129
  %v131 = vrot.slane %v108, %v130
  %v132 = vlaneseq
  %v133 = vshrl.u32 %v132, 7
  %v134 = vsub.s32 5, %v133
  %v135 = vrot.slane %v108, %v134
  %v136 = vlaneseq
  %v137 = vshrl.u32 %v136, 7
  %v138 = vsub.s32 6, %v137
  %v139 = vrot.slane %v108, %v138
  %v140 = vlaneseq
  %v141 = vshrl.u32 %v140, 7
  %v142 = vsub.s32 7, %v141
  %v143 = vrot.slane %v108, %v142
  %v144 = vlaneseq
  %v145 = vshrl.u32 %v144, 7
  %v146 = vsub.s32 0, %v145
  %v147 = vrot.slane %v109, %v146
  %v148 = vlaneseq
  %v149 = vshrl.u32 %v148, 7
  %v150 = vsub.s32 1, %v149
  %v151 = vrot.slane %v109, %v150
  %v152 = vlaneseq
  %v153 = vshrl.u32 %v152, 7
  %v154 = vsub.s32 2, %v153
  %v155 = vrot.slane %v109, %v154
  %v156 = vlaneseq
  %v157 = vshrl.u32 %v156, 7
  %v158 = vsub.s32 3, %v157
  %v159 = vrot.slane %v109, %v158
  %v172 = vadd.f32 %v96, %v115
  %v173 = vadd.f32 %v97, %v119
  %v174 = vadd.f32 %v98, %v123
  %v175 = vadd.f32 %v99, %v127
  %v176 = vadd.f32 %v100, %v131
  %v177 = vadd.f32 %v101, %v135
  %v178 = vadd.f32 %v102, %v139
  %v179 = vadd.f32 %v103, %v143
  %v180 = vadd.f32 %v104, %v147
  %v181 = vadd.f32 %v105, %v151
  %v182 = vadd.f32 %v106, %v155
  %v183 = vadd.f32 %v107, %v159
  %v184 = vtanh.pop %v172
  %v185 = vtanh.pop %v173
  %v186 = vtanh.pop %v174
  %v187 = vtanh.pop %v175
  %v188 = vtanh.pop %v176
  %v189 = vtanh.pop %v177
  %v190 = vtanh.pop %v178
  %v191 = vtanh.pop %v179
  %v192 = vtanh.pop %v180
  %v193 = vtanh.pop %v181
  %v194 = vtanh.pop %v182
  %v195 = vtanh.pop %v183
  %196 = vst [vmem:[%s3] sm:$0xff] %v184
  %197 = vst [vmem:[%s3 + $0x8] sm:$0xff] %v185
  %198 = vst [vmem:[%s3 + $0x10] sm:$0xff] %v186
  %199 = vst [vmem:[%s3 + $0x18] sm:$0xff] %v187
  %200 = vst [vmem:[%s3 + $0x20] sm:$0xff] %v188
  %201 = vst [vmem:[%s3 + $0x28] sm:$0xff] %v189
  %202 = vst [vmem:[%s3 + $0x30] sm:$0xff] %v190
  %203 = vst [vmem:[%s3 + $0x38] sm:$0xff] %v191
  %204 = vst [vmem:[%s3 + $0x40] sm:$0xff] %v192
  %205 = vst [vmem:[%s3 + $0x48] sm:$0xff] %v193
  %206 = vst [vmem:[%s3 + $0x50] sm:$0xff] %v194
  %207 = vst [vmem:[%s3 + $0x58] sm:$0xff] %v195
  // Predicated region
  $region14: #{generator_forward.39} parent=0 // pred_check
    _
  $region15: #{generator_forward.39} parent=0 // pred_check_branch
    %209 = sbr.rel (0) target = $region17
  $region16: #{generator_forward.39} parent=0 // pred_region
    _
  $region17: #{generator_forward.39} parent=0 // pred_fallthru
    _
  // Predicated region
  $region18: #{generator_forward.39} parent=0 // pred_check
    _
  $region19: #{generator_forward.39} parent=0 // pred_check_branch
    %211 = sbr.rel (0) target = $region21
  $region20: #{generator_forward.39} parent=0 // pred_region
    _
  $region21: #{generator_forward.39} parent=0 // pred_fallthru
    _

</llo_original>
